<compile_context>
chip_gen: v6e
topology: v6e:2x2x1
jax: 0.10.0
libtpu: 0.0.40
codegen_flags: <defaults>
</compile_context>

<pallas_src>
import functools

import numpy as np

import jax
import jax.numpy as jnp
from jax import lax
from jax.experimental import pallas as pl
from jax.experimental.pallas import tpu as pltpu

C_PAD = 128  # lane-dense channel padding used throughout the conv stack

# (Cin, Cout, stride) for the 8 conv layers of Model1.
CONV_CFG = [
    (1, 16, 2), (16, 16, 1), (16, 32, 1), (32, 32, 2),
    (32, 64, 1), (64, 64, 1), (64, 128, 1), (128, 128, 1),
]


def _ru(x, m):
    return (x + m - 1) // m * m


# ----------------------------------------------------------------------------
# Generic tiled MXU kernel: out = [relu](x @ w + b)
# ----------------------------------------------------------------------------
def _matmul_bias_act_kernel(x_ref, w_ref, b_ref, o_ref, acc_ref, *, relu):
    @pl.when(pl.program_id(2) == 0)
    def _():
        acc_ref[...] = jnp.zeros_like(acc_ref)

    acc_ref[...] += jnp.dot(x_ref[...], w_ref[...],
                            preferred_element_type=jnp.float32)

    @pl.when(pl.program_id(2) == pl.num_programs(2) - 1)
    def _():
        out = acc_ref[...] + b_ref[...]          # bias only in the epilogue
        if relu:
            out = jnp.maximum(out, 0.0)
        o_ref[...] = out.astype(o_ref.dtype)


def matmul_bias_act(x, w, b, *, relu, tm=256, tk=512, tn=128):
    """relu(x @ w + b) on the MXU in bf16 / f32-acc.

    x:(M,K) w:(K,N) b:(N,). Returns (M, round_up(N,128)) f32 -- padded output
    columns are exact zeros (zero weight cols + zero bias); callers slice.
    """
    m, k = x.shape
    k2, n = w.shape
    assert k == k2
    if m > tm:
        mp, tm_e = _ru(m, tm), tm
    else:
        mp = _ru(m, 16)
        tm_e = mp
    if k > tk:
        kp, tk_e = _ru(k, tk), tk
    else:
        kp = _ru(k, 128)
        tk_e = kp
    n_p = _ru(n, tn)
    tn_e = tn

    x_p = jnp.pad(x, ((0, mp - m), (0, kp - k))).astype(jnp.bfloat16)
    w_p = jnp.pad(w, ((0, kp - k), (0, n_p - n))).astype(jnp.bfloat16)
    b_p = jnp.pad(b.astype(jnp.float32), (0, n_p - n)).reshape(1, n_p)

    grid = (mp // tm_e, n_p // tn_e, kp // tk_e)
    out = pl.pallas_call(
        functools.partial(_matmul_bias_act_kernel, relu=relu),
        out_shape=jax.ShapeDtypeStruct((mp, n_p), jnp.float32),
        grid=grid,
        in_specs=[
            pl.BlockSpec((tm_e, tk_e), lambda i, j, kk: (i, kk)),
            pl.BlockSpec((tk_e, tn_e), lambda i, j, kk: (kk, j)),
            pl.BlockSpec((1, tn_e), lambda i, j, kk: (0, j)),
        ],
        out_specs=pl.BlockSpec((tm_e, tn_e), lambda i, j, kk: (i, j)),
        scratch_shapes=[pltpu.VMEM((tm_e, tn_e), jnp.float32)],
        compiler_params=pltpu.CompilerParams(
            dimension_semantics=("parallel", "parallel", "arbitrary")),
    )(x_p, w_p, b_p)
    return out[:m, :]


# ----------------------------------------------------------------------------
# Fused stride-1 3x3 conv + ReLU (no im2col).
#
# Activations are kept as a flat (rows, 128) buffer per image: rows
# [pre, pre + hp*wp) hold the spatially padded (hp x wp) feature map flattened
# row-major, every other row is zero.  A shift of (ki, kj) in the 3x3 window is
# then a *static* row offset ki*wp + kj, so the 9-tap reduction is 9 shifted
# row-slices of the VMEM-resident block fed straight to the MXU.  The kernel
# writes the next layer's buffer in the same layout (border rows masked to 0).
# ----------------------------------------------------------------------------
class _Segment:
    def __init__(self, h, w):
        self.h, self.w = h, w
        self.hp, self.wp = h + 2, w + 2
        self.hw = self.hp * self.wp                       # real (padded) rows
        self.m = _ru(self.hw, 16)                         # rows computed
        self.pre = _ru(self.wp + 1, 16)                   # room for -1 row/col taps
        self.rows = _ru(self.pre + self.m + self.wp + 1, 16)
        r = np.arange(self.m)
        ii, jj = r // self.wp, r % self.wp
        valid = (r < self.hw) & (ii >= 1) & (ii <= h) & (jj >= 1) & (jj <= w)
        self.mask = valid.astype(np.float32).reshape(self.m, 1)


SEG14 = _Segment(14, 14)   # conv2, conv3
SEG7 = _Segment(7, 7)      # conv5..conv8


def _conv3x3_fused_kernel(x_ref, w_ref, b_ref, mask_ref, o_ref, acc_ref,
                          *, wp, pre):
    m, c = acc_ref.shape
    rows = o_ref.shape[0]
    base = pre - wp - 1
    for t in range(9):                                    # unrolled, static
        ki, kj = divmod(t, 3)
        start = base + ki * wp + kj
        xt = x_ref[start:start + m, :].astype(jnp.bfloat16)
        contrib = jnp.dot(xt, w_ref[t], preferred_element_type=jnp.float32)
        if t == 0:
            acc_ref[...] = contrib
        else:
            acc_ref[...] += contrib
    out = jnp.maximum(acc_ref[...] + b_ref[...], 0.0) * mask_ref[...]
    o_ref[pre:pre + m, :] = out.astype(o_ref.dtype)
    o_ref[0:pre, :] = jnp.zeros((pre, c), o_ref.dtype)
    if rows > pre + m:
        o_ref[pre + m:rows, :] = jnp.zeros((rows - pre - m, c), o_ref.dtype)


def conv3x3_fused(buf, w_oihw, b, seg):
    bsz, rows, c = buf.shape
    cout, cin = w_oihw.shape[0], w_oihw.shape[1]
    wt = jnp.transpose(w_oihw, (2, 3, 1, 0))              # (3,3,Cin,Cout)
    wt = jnp.pad(wt, ((0, 0), (0, 0), (0, c - cin), (0, c - cout)))
    wt = wt.reshape(9, c, c).astype(jnp.bfloat16)
    b_p = jnp.pad(b.astype(jnp.float32), (0, c - cout)).reshape(1, c)
    kernel = functools.partial(_conv3x3_fused_kernel, wp=seg.wp, pre=seg.pre)
    return pl.pallas_call(
        kernel,
        out_shape=jax.ShapeDtypeStruct((bsz, rows, c), jnp.float32),
        grid=(bsz,),
        in_specs=[
            pl.BlockSpec((None, rows, c), lambda i: (i, 0, 0)),   # per image
            pl.BlockSpec((9, c, c), lambda i: (0, 0, 0)),         # all 9 taps
            pl.BlockSpec((1, c), lambda i: (0, 0)),
            pl.BlockSpec((seg.m, 1), lambda i: (0, 0)),
        ],
        out_specs=pl.BlockSpec((None, rows, c), lambda i: (i, 0, 0)),
        scratch_shapes=[pltpu.VMEM((seg.m, c), jnp.float32)],
        compiler_params=pltpu.CompilerParams(
            dimension_semantics=("parallel",)),
    )(buf, wt, b_p, jnp.asarray(seg.mask))


def to_flat(x_nhwc, seg):
    bsz, h, w, c = x_nhwc.shape
    xp = jnp.pad(x_nhwc, ((0, 0), (1, 1), (1, 1), (0, 0)))
    flat = xp.reshape(bsz, seg.hw, c)
    return jnp.pad(flat, ((0, 0), (seg.pre, seg.rows - seg.pre - seg.hw), (0, 0)))


def from_flat(buf, seg):
    bsz, _, c = buf.shape
    core = buf[:, seg.pre:seg.pre + seg.hw, :].reshape(bsz, seg.hp, seg.wp, c)
    return core[:, 1:1 + seg.h, 1:1 + seg.w, :]


# ----------------------------------------------------------------------------
# Stride-2 conv via XLA im2col feeding the tiled MXU kernel.
# ----------------------------------------------------------------------------
def conv_im2col(x_nhwc, w_oihw, b, *, stride, relu=True):
    bsz, h, w, c_buf = x_nhwc.shape
    cout, cin = w_oihw.shape[0], w_oihw.shape[1]
    xp = jnp.pad(x_nhwc, ((0, 0), (1, 1), (1, 1), (0, 0)))
    ho = (h + 2 - 3) // stride + 1
    wo = (w + 2 - 3) // stride + 1
    cols = []
    for ki in range(3):
        for kj in range(3):
            cols.append(xp[:, ki:ki + stride * (ho - 1) + 1:stride,
                              kj:kj + stride * (wo - 1) + 1:stride, :])
    patches = jnp.stack(cols, axis=3)                     # (B,Ho,Wo,9,Cbuf)
    xm = patches.reshape(bsz * ho * wo, 9 * c_buf)
    wt = jnp.transpose(w_oihw, (2, 3, 1, 0))              # (3,3,Cin,Cout)
    wt = jnp.pad(wt, ((0, 0), (0, 0), (0, c_buf - cin), (0, 0)))
    wm = wt.reshape(9 * c_buf, cout)
    out = matmul_bias_act(xm, wm, b, relu=relu)           # (M, 128)
    return out.reshape(bsz, ho, wo, -1)


# ----------------------------------------------------------------------------
# Parameter init (xavier_uniform, gain=sqrt(2), PyTorch-default bias init).
# ----------------------------------------------------------------------------
def _xavier_uniform(key, shape, gain):
    if len(shape) == 4:
        fan_in = shape[1] * shape[2] * shape[3]
        fan_out = shape[0] * shape[2] * shape[3]
    else:
        fan_in, fan_out = shape[1], shape[0]
    bound = gain * (6.0 / (fan_in + fan_out)) ** 0.5
    return jax.random.uniform(key, shape, jnp.float32, -bound, bound)


def init_params(key):
    gain = 2.0 ** 0.5
    conv_params = []
    for cin, cout, _ in CONV_CFG:
        key, kw, kb = jax.random.split(key, 3)
        w = _xavier_uniform(kw, (cout, cin, 3, 3), gain)
        bb = 1.0 / (cin * 9) ** 0.5
        b = jax.random.uniform(kb, (cout,), jnp.float32, -bb, bb)
        conv_params.append((w, b))
    key, kw, kb = jax.random.split(key, 3)
    wl = _xavier_uniform(kw, (10, 7 * 7 * 128), gain)
    bb = 1.0 / (7 * 7 * 128) ** 0.5
    bl = jax.random.uniform(kb, (10,), jnp.float32, -bb, bb)
    return conv_params, (wl, bl)


# ----------------------------------------------------------------------------
# Full Model1 forward (Pallas path).
# ----------------------------------------------------------------------------
def model1_forward(x, conv_params, linear_params):
    x = x.reshape(-1, 1, 28, 28)                 # torch: [-1,1,28,28] NCHW
    bsz = x.shape[0]
    x = jnp.transpose(x, (0, 2, 3, 1))           # NHWC

    # conv1 (1->16, stride 2): im2col + tiled matmul, channels padded to 128.
    w, b = conv_params[0]
    y = conv_im2col(x, w, b, stride=2)           # (B,14,14,128)

    # conv2, conv3 (stride 1 @ 14x14): fused 9-tap kernels, no im2col.
    buf = to_flat(y, SEG14)
    for idx in (1, 2):
        w, b = conv_params[idx]
        buf = conv3x3_fused(buf, w, b, SEG14)
    y = from_flat(buf, SEG14)                    # (B,14,14,128)

    # conv4 (32->32, stride 2): im2col + tiled matmul.
    w, b = conv_params[3]
    y = conv_im2col(y, w, b, stride=2)           # (B,7,7,128)

    # conv5..conv8 (stride 1 @ 7x7): fused.
    buf = to_flat(y, SEG7)
    for idx in (4, 5, 6, 7):
        w, b = conv_params[idx]
        buf = conv3x3_fused(buf, w, b, SEG7)
    y = from_flat(buf, SEG7)                     # (B,7,7,128) real channels

    # nn.Flatten flattens NCHW -> Linear(6272, 10).
    feat = jnp.transpose(y, (0, 3, 1, 2)).reshape(bsz, 7 * 7 * 128)
    wl, bl = linear_params
    out = matmul_bias_act(feat, wl.T, bl, relu=False)     # (B, 128)
    return out[:, :10]


# ----------------------------------------------------------------------------
# Pure-XLA reference with matched numerics (bf16 operands, f32 accumulation).
# ----------------------------------------------------------------------------
def reference_forward(x, conv_params, linear_params):
    x = x.reshape(-1, 1, 28, 28)
    act = jnp.transpose(x, (0, 2, 3, 1))
    for (w, b), (_, _, s) in zip(conv_params, CONV_CFG):
        out = lax.conv_general_dilated(
            act.astype(jnp.bfloat16),
            jnp.transpose(w, (2, 3, 1, 0)).astype(jnp.bfloat16),
            window_strides=(s, s), padding=((1, 1), (1, 1)),
            dimension_numbers=("NHWC", "HWIO", "NHWC"),
            preferred_element_type=jnp.float32)
        act = jnp.maximum(out + b.astype(jnp.float32), 0.0)
    bsz = act.shape[0]
    feat = jnp.transpose(act, (0, 3, 1, 2)).reshape(bsz, -1)
    wl, bl = linear_params
    return jnp.dot(feat.astype(jnp.bfloat16), wl.T.astype(jnp.bfloat16),
                   preferred_element_type=jnp.float32) + bl.astype(jnp.float32)


if __name__ == "__main__":
    key = jax.random.PRNGKey(0)
    kp, kx = jax.random.split(key)
    conv_params, linear_params = init_params(kp)

    x = jax.random.normal(kx, (2, 1, 28, 28), jnp.float32)

    fwd = jax.jit(lambda xx: model1_forward(xx, conv_params, linear_params))
    y = fwd(x)
    jax.block_until_ready(y)

    assert y.shape == (2, 10) and y.dtype == jnp.float32
    assert bool(jnp.all(jnp.isfinite(y)))

    # Sanity check against an XLA reference with matched (bf16/f32) numerics.
    y_ref = jax.jit(lambda xx: reference_forward(xx, conv_params,
                                                 linear_params))(x)
    err = float(jnp.max(jnp.abs(y - y_ref)))
    scale = float(jnp.max(jnp.abs(y_ref))) + 1e-6
    assert err <= 0.05 * scale + 1e-3, f"mismatch: err={err} scale={scale}"

    print("KERNEL_OK")
</pallas_src>

<mosaic_0001>
module attributes {stable_mosaic.version = 11 : i64} {
  func.func @_matmul_bias_act_kernel(%arg0: i32, %arg1: i32, %arg2: i32, %arg3: memref<256x128xbf16, #tpu.memory_space<vmem>>, %arg4: memref<128x128xbf16, #tpu.memory_space<vmem>>, %arg5: memref<1x128xf32, #tpu.memory_space<vmem>>, %arg6: memref<256x128xf32, #tpu.memory_space<vmem>>, %arg7: memref<256x128xf32, #tpu.memory_space<vmem>>) attributes {dimension_semantics = [#tpu.dimension_semantics<parallel>, #tpu.dimension_semantics<parallel>, #tpu.dimension_semantics<arbitrary>], iteration_bounds = array<i64: 2, 1, 1>, scalar_prefetch = 0 : i64, scratch_operands = 1 : i64, tpu.core_type = #tpu.core_type<tc>, window_params = [{transform_indices = @transform_0, window_bounds = array<i64: 256, 128>}, {transform_indices = @transform_1, window_bounds = array<i64: 128, 128>}, {transform_indices = @transform_2, window_bounds = array<i64: 1, 128>}, {transform_indices = @transform_3, window_bounds = array<i64: 256, 128>}]} {
    %c0_i32 = arith.constant 0 : i32
    %0 = arith.cmpi eq, %arg2, %c0_i32 : i32
    %1 = arith.extui %0 : i1 to i32
    %c0_i32_0 = arith.constant 0 : i32
    %2 = arith.cmpi ne, %1, %c0_i32_0 : i32
    scf.if %2 {
      %cst_10 = arith.constant 0.000000e+00 : f32
      %12 = vector.broadcast %cst_10 : f32 to vector<256x128xf32>
      %c0_11 = arith.constant 0 : index
      %c0_12 = arith.constant 0 : index
      %13 = vector.load %arg7[%c0_11, %c0_12] : memref<256x128xf32, #tpu.memory_space<vmem>>, vector<256x128xf32>
      tpu.vector_store %arg7[%c0_11, %c0_12], %12 {strides = array<i32>} : memref<256x128xf32, #tpu.memory_space<vmem>>, vector<256x128xf32>,
    } else {
    }
    %c0 = arith.constant 0 : index
    %c0_1 = arith.constant 0 : index
    %3 = vector.load %arg7[%c0, %c0_1] : memref<256x128xf32, #tpu.memory_space<vmem>>, vector<256x128xf32>
    %c0_2 = arith.constant 0 : index
    %c0_3 = arith.constant 0 : index
    %4 = vector.load %arg3[%c0_2, %c0_3] : memref<256x128xbf16, #tpu.memory_space<vmem>>, vector<256x128xbf16>
    %c0_4 = arith.constant 0 : index
    %c0_5 = arith.constant 0 : index
    %5 = vector.load %arg4[%c0_4, %c0_5] : memref<128x128xbf16, #tpu.memory_space<vmem>>, vector<128x128xbf16>
    %cst = arith.constant dense<0.000000e+00> : vector<256x128xf32>
    %6 = tpu.matmul %4, %5, %cst {dimension_numbers = #tpu.dot_dimension_numbers<[1], [0], [0], [1], [0, 0, 1, 1], [], []>} : vector<256x128xbf16>, vector<128x128xbf16>, vector<256x128xf32> -> vector<256x128xf32>
    %7 = arith.addf %3, %6 : vector<256x128xf32>
    %c0_6 = arith.constant 0 : index
    %c0_7 = arith.constant 0 : index
    %8 = vector.load %arg7[%c0_6, %c0_7] : memref<256x128xf32, #tpu.memory_space<vmem>>, vector<256x128xf32>
    tpu.vector_store %arg7[%c0_6, %c0_7], %7 {strides = array<i32>} : memref<256x128xf32, #tpu.memory_space<vmem>>, vector<256x128xf32>,
    %c0_i32_8 = arith.constant 0 : i32
    %9 = arith.cmpi eq, %arg2, %c0_i32_8 : i32
    %10 = arith.extui %9 : i1 to i32
    %c0_i32_9 = arith.constant 0 : i32
    %11 = arith.cmpi ne, %10, %c0_i32_9 : i32
    scf.if %11 {
      %c0_10 = arith.constant 0 : index
      %c0_11 = arith.constant 0 : index
      %12 = vector.load %arg7[%c0_10, %c0_11] : memref<256x128xf32, #tpu.memory_space<vmem>>, vector<256x128xf32>
      %c0_12 = arith.constant 0 : index
      %c0_13 = arith.constant 0 : index
      %13 = vector.load %arg5[%c0_12, %c0_13] : memref<1x128xf32, #tpu.memory_space<vmem>>, vector<1x128xf32>
      %14 = vector.broadcast %13 : vector<1x128xf32> to vector<256x128xf32>
      %15 = arith.addf %12, %14 : vector<256x128xf32>
      %cst_14 = arith.constant 0.000000e+00 : f32
      %16 = vector.broadcast %cst_14 : f32 to vector<256x128xf32>
      %17 = arith.maximumf %15, %16 : vector<256x128xf32>
      %c0_15 = arith.constant 0 : index
      %c0_16 = arith.constant 0 : index
      %18 = vector.load %arg6[%c0_15, %c0_16] : memref<256x128xf32, #tpu.memory_space<vmem>>, vector<256x128xf32>
      tpu.vector_store %arg6[%c0_15, %c0_16], %17 {strides = array<i32>} : memref<256x128xf32, #tpu.memory_space<vmem>>, vector<256x128xf32>,
    } else {
    }
    return
  }
  func.func @transform_0(%arg0: i32, %arg1: i32, %arg2: i32) -> (i32, i32) {
    %c0_i32 = arith.constant 0 : i32
    return %arg0, %arg2 : i32, i32
  }
  func.func @transform_1(%arg0: i32, %arg1: i32, %arg2: i32) -> (i32, i32) {
    %c0_i32 = arith.constant 0 : i32
    return %arg2, %arg1 : i32, i32
  }
  func.func @transform_2(%arg0: i32, %arg1: i32, %arg2: i32) -> (i32, i32) {
    %c0_i32 = arith.constant 0 : i32
    %c0_i32_0 = arith.constant 0 : i32
    return %c0_i32, %arg1 : i32, i32
  }
  func.func @transform_3(%arg0: i32, %arg1: i32, %arg2: i32) -> (i32, i32) {
    %c0_i32 = arith.constant 0 : i32
    return %arg0, %arg1 : i32, i32
  }
}

module attributes {stable_mosaic.version = 11 : i64} {
  func.func @_conv3x3_fused_kernel(%arg0: i32, %arg1: memref<1x320x128xf32, #tpu.memory_space<vmem>>, %arg2: memref<9x128x128xbf16, #tpu.memory_space<vmem>>, %arg3: memref<1x128xf32, #tpu.memory_space<vmem>>, %arg4: memref<256x1xf32, #tpu.memory_space<vmem>>, %arg5: memref<1x320x128xf32, #tpu.memory_space<vmem>>, %arg6: memref<256x128xf32, #tpu.memory_space<vmem>>) attributes {dimension_semantics = [#tpu.dimension_semantics<parallel>], iteration_bounds = array<i64: 2>, scalar_prefetch = 0 : i64, scratch_operands = 1 : i64, tpu.core_type = #tpu.core_type<tc>, window_params = [{transform_indices = @transform_0, window_bounds = array<i64: 1, 320, 128>}, {pipeline_mode = #tpu.pipeline_mode<synchronous>, transform_indices = @transform_1, window_bounds = array<i64: 9, 128, 128>}, {pipeline_mode = #tpu.pipeline_mode<synchronous>, transform_indices = @transform_2, window_bounds = array<i64: 1, 128>}, {pipeline_mode = #tpu.pipeline_mode<synchronous>, transform_indices = @transform_3, window_bounds = array<i64: 256, 1>}, {transform_indices = @transform_4, window_bounds = array<i64: 1, 320, 128>}]} {
    %c0 = arith.constant 0 : index
    %c15 = arith.constant 15 : index
    %c0_0 = arith.constant 0 : index
    %0 = vector.load %arg1[%c0, %c15, %c0_0] : memref<1x320x128xf32, #tpu.memory_space<vmem>>, vector<1x256x128xf32>
    %1 = vector.shape_cast %0 : vector<1x256x128xf32> to vector<256x128xf32>
    %2 = arith.truncf %1 : vector<256x128xf32> to vector<256x128xbf16>
    %c0_1 = arith.constant 0 : index
    %c0_2 = arith.constant 0 : index
    %c0_3 = arith.constant 0 : index
    %3 = vector.load %arg2[%c0_1, %c0_2, %c0_3] : memref<9x128x128xbf16, #tpu.memory_space<vmem>>, vector<1x128x128xbf16>
    %4 = vector.shape_cast %3 : vector<1x128x128xbf16> to vector<128x128xbf16>
    %cst = arith.constant dense<0.000000e+00> : vector<256x128xf32>
    %5 = tpu.matmul %2, %4, %cst {dimension_numbers = #tpu.dot_dimension_numbers<[1], [0], [0], [1], [0, 0, 1, 1], [], []>} : vector<256x128xbf16>, vector<128x128xbf16>, vector<256x128xf32> -> vector<256x128xf32>
    %c0_4 = arith.constant 0 : index
    %c0_5 = arith.constant 0 : index
    %6 = vector.load %arg6[%c0_4, %c0_5] : memref<256x128xf32, #tpu.memory_space<vmem>>, vector<256x128xf32>
    tpu.vector_store %arg6[%c0_4, %c0_5], %5 {strides = array<i32>} : memref<256x128xf32, #tpu.memory_space<vmem>>, vector<256x128xf32>,
    %c0_6 = arith.constant 0 : index
    %c16 = arith.constant 16 : index
    %c0_7 = arith.constant 0 : index
    %7 = vector.load %arg1[%c0_6, %c16, %c0_7] : memref<1x320x128xf32, #tpu.memory_space<vmem>>, vector<1x256x128xf32>
    %8 = vector.shape_cast %7 : vector<1x256x128xf32> to vector<256x128xf32>
    %9 = arith.truncf %8 : vector<256x128xf32> to vector<256x128xbf16>
    %c1 = arith.constant 1 : index
    %c0_8 = arith.constant 0 : index
    %c0_9 = arith.constant 0 : index
    %10 = vector.load %arg2[%c1, %c0_8, %c0_9] : memref<9x128x128xbf16, #tpu.memory_space<vmem>>, vector<1x128x128xbf16>
    %11 = vector.shape_cast %10 : vector<1x128x128xbf16> to vector<128x128xbf16>
    %cst_10 = arith.constant dense<0.000000e+00> : vector<256x128xf32>
    %12 = tpu.matmul %9, %11, %cst_10 {dimension_numbers = #tpu.dot_dimension_numbers<[1], [0], [0], [1], [0, 0, 1, 1], [], []>} : vector<256x128xbf16>, vector<128x128xbf16>, vector<256x128xf32> -> vector<256x128xf32>
    %c0_11 = arith.constant 0 : index
    %c0_12 = arith.constant 0 : index
    %13 = vector.load %arg6[%c0_11, %c0_12] : memref<256x128xf32, #tpu.memory_space<vmem>>, vector<256x128xf32>
    %14 = arith.addf %13, %12 : vector<256x128xf32>
    %c0_13 = arith.constant 0 : index
    %c0_14 = arith.constant 0 : index
    %15 = vector.load %arg6[%c0_13, %c0_14] : memref<256x128xf32, #tpu.memory_space<vmem>>, vector<256x128xf32>
    tpu.vector_store %arg6[%c0_13, %c0_14], %14 {strides = array<i32>} : memref<256x128xf32, #tpu.memory_space<vmem>>, vector<256x128xf32>,
    %c0_15 = arith.constant 0 : index
    %c17 = arith.constant 17 : index
    %c0_16 = arith.constant 0 : index
    %16 = vector.load %arg1[%c0_15, %c17, %c0_16] : memref<1x320x128xf32, #tpu.memory_space<vmem>>, vector<1x256x128xf32>
    %17 = vector.shape_cast %16 : vector<1x256x128xf32> to vector<256x128xf32>
    %18 = arith.truncf %17 : vector<256x128xf32> to vector<256x128xbf16>
    %c2 = arith.constant 2 : index
    %c0_17 = arith.constant 0 : index
    %c0_18 = arith.constant 0 : index
    %19 = vector.load %arg2[%c2, %c0_17, %c0_18] : memref<9x128x128xbf16, #tpu.memory_space<vmem>>, vector<1x128x128xbf16>
    %20 = vector.shape_cast %19 : vector<1x128x128xbf16> to vector<128x128xbf16>
    %cst_19 = arith.constant dense<0.000000e+00> : vector<256x128xf32>
    %21 = tpu.matmul %18, %20, %cst_19 {dimension_numbers = #tpu.dot_dimension_numbers<[1], [0], [0], [1], [0, 0, 1, 1], [], []>} : vector<256x128xbf16>, vector<128x128xbf16>, vector<256x128xf32> -> vector<256x128xf32>
    %c0_20 = arith.constant 0 : index
    %c0_21 = arith.constant 0 : index
    %22 = vector.load %arg6[%c0_20, %c0_21] : memref<256x128xf32, #tpu.memory_space<vmem>>, vector<256x128xf32>
    %23 = arith.addf %22, %21 : vector<256x128xf32>
    %c0_22 = arith.constant 0 : index
    %c0_23 = arith.constant 0 : index
    %24 = vector.load %arg6[%c0_22, %c0_23] : memref<256x128xf32, #tpu.memory_space<vmem>>, vector<256x128xf32>
    tpu.vector_store %arg6[%c0_22, %c0_23], %23 {strides = array<i32>} : memref<256x128xf32, #tpu.memory_space<vmem>>, vector<256x128xf32>,
    %c0_24 = arith.constant 0 : index
    %c31 = arith.constant 31 : index
    %c0_25 = arith.constant 0 : index
    %25 = vector.load %arg1[%c0_24, %c31, %c0_25] : memref<1x320x128xf32, #tpu.memory_space<vmem>>, vector<1x256x128xf32>
    %26 = vector.shape_cast %25 : vector<1x256x128xf32> to vector<256x128xf32>
    %27 = arith.truncf %26 : vector<256x128xf32> to vector<256x128xbf16>
    %c3 = arith.constant 3 : index
    %c0_26 = arith.constant 0 : index
    %c0_27 = arith.constant 0 : index
    %28 = vector.load %arg2[%c3, %c0_26, %c0_27] : memref<9x128x128xbf16, #tpu.memory_space<vmem>>, vector<1x128x128xbf16>
    %29 = vector.shape_cast %28 : vector<1x128x128xbf16> to vector<128x128xbf16>
    %cst_28 = arith.constant dense<0.000000e+00> : vector<256x128xf32>
    %30 = tpu.matmul %27, %29, %cst_28 {dimension_numbers = #tpu.dot_dimension_numbers<[1], [0], [0], [1], [0, 0, 1, 1], [], []>} : vector<256x128xbf16>, vector<128x128xbf16>, vector<256x128xf32> -> vector<256x128xf32>
    %c0_29 = arith.constant 0 : index
    %c0_30 = arith.constant 0 : index
    %31 = vector.load %arg6[%c0_29, %c0_30] : memref<256x128xf32, #tpu.memory_space<vmem>>, vector<256x128xf32>
    %32 = arith.addf %31, %30 : vector<256x128xf32>
    %c0_31 = arith.constant 0 : index
    %c0_32 = arith.constant 0 : index
    %33 = vector.load %arg6[%c0_31, %c0_32] : memref<256x128xf32, #tpu.memory_space<vmem>>, vector<256x128xf32>
    tpu.vector_store %arg6[%c0_31, %c0_32], %32 {strides = array<i32>} : memref<256x128xf32, #tpu.memory_space<vmem>>, vector<256x128xf32>,
    %c0_33 = arith.constant 0 : index
    %c32 = arith.constant 32 : index
    %c0_34 = arith.constant 0 : index
    %34 = vector.load %arg1[%c0_33, %c32, %c0_34] : memref<1x320x128xf32, #tpu.memory_space<vmem>>, vector<1x256x128xf32>
    %35 = vector.shape_cast %34 : vector<1x256x128xf32> to vector<256x128xf32>
    %36 = arith.truncf %35 : vector<256x128xf32> to vector<256x128xbf16>
    %c4 = arith.constant 4 : index
    %c0_35 = arith.constant 0 : index
    %c0_36 = arith.constant 0 : index
    %37 = vector.load %arg2[%c4, %c0_35, %c0_36] : memref<9x128x128xbf16, #tpu.memory_space<vmem>>, vector<1x128x128xbf16>
    %38 = vector.shape_cast %37 : vector<1x128x128xbf16> to vector<128x128xbf16>
    %cst_37 = arith.constant dense<0.000000e+00> : vector<256x128xf32>
    %39 = tpu.matmul %36, %38, %cst_37 {dimension_numbers = #tpu.dot_dimension_numbers<[1], [0], [0], [1], [0, 0, 1, 1], [], []>} : vector<256x128xbf16>, vector<128x128xbf16>, vector<256x128xf32> -> vector<256x128xf32>
    %c0_38 = arith.constant 0 : index
    %c0_39 = arith.constant 0 : index
    %40 = vector.load %arg6[%c0_38, %c0_39] : memref<256x128xf32, #tpu.memory_space<vmem>>, vector<256x128xf32>
    %41 = arith.addf %40, %39 : vector<256x128xf32>
    %c0_40 = arith.constant 0 : index
    %c0_41 = arith.constant 0 : index
    %42 = vector.load %arg6[%c0_40, %c0_41] : memref<256x128xf32, #tpu.memory_space<vmem>>, vector<256x128xf32>
    tpu.vector_store %arg6[%c0_40, %c0_41], %41 {strides = array<i32>} : memref<256x128xf32, #tpu.memory_space<vmem>>, vector<256x128xf32>,
    %c0_42 = arith.constant 0 : index
    %c33 = arith.constant 33 : index
    %c0_43 = arith.constant 0 : index
    %43 = vector.load %arg1[%c0_42, %c33, %c0_43] : memref<1x320x128xf32, #tpu.memory_space<vmem>>, vector<1x256x128xf32>
    %44 = vector.shape_cast %43 : vector<1x256x128xf32> to vector<256x128xf32>
    %45 = arith.truncf %44 : vector<256x128xf32> to vector<256x128xbf16>
    %c5 = arith.constant 5 : index
    %c0_44 = arith.constant 0 : index
    %c0_45 = arith.constant 0 : index
    %46 = vector.load %arg2[%c5, %c0_44, %c0_45] : memref<9x128x128xbf16, #tpu.memory_space<vmem>>, vector<1x128x128xbf16>
    %47 = vector.shape_cast %46 : vector<1x128x128xbf16> to vector<128x128xbf16>
    %cst_46 = arith.constant dense<0.000000e+00> : vector<256x128xf32>
    %48 = tpu.matmul %45, %47, %cst_46 {dimension_numbers = #tpu.dot_dimension_numbers<[1], [0], [0], [1], [0, 0, 1, 1], [], []>} : vector<256x128xbf16>, vector<128x128xbf16>, vector<256x128xf32> -> vector<256x128xf32>
    %c0_47 = arith.constant 0 : index
    %c0_48 = arith.constant 0 : index
    %49 = vector.load %arg6[%c0_47, %c0_48] : memref<256x128xf32, #tpu.memory_space<vmem>>, vector<256x128xf32>
    %50 = arith.addf %49, %48 : vector<256x128xf32>
    %c0_49 = arith.constant 0 : index
    %c0_50 = arith.constant 0 : index
    %51 = vector.load %arg6[%c0_49, %c0_50] : memref<256x128xf32, #tpu.memory_space<vmem>>, vector<256x128xf32>
    tpu.vector_store %arg6[%c0_49, %c0_50], %50 {strides = array<i32>} : memref<256x128xf32, #tpu.memory_space<vmem>>, vector<256x128xf32>,
    %c0_51 = arith.constant 0 : index
    %c47 = arith.constant 47 : index
    %c0_52 = arith.constant 0 : index
    %52 = vector.load %arg1[%c0_51, %c47, %c0_52] : memref<1x320x128xf32, #tpu.memory_space<vmem>>, vector<1x256x128xf32>
    %53 = vector.shape_cast %52 : vector<1x256x128xf32> to vector<256x128xf32>
    %54 = arith.truncf %53 : vector<256x128xf32> to vector<256x128xbf16>
    %c6 = arith.constant 6 : index
    %c0_53 = arith.constant 0 : index
    %c0_54 = arith.constant 0 : index
    %55 = vector.load %arg2[%c6, %c0_53, %c0_54] : memref<9x128x128xbf16, #tpu.memory_space<vmem>>, vector<1x128x128xbf16>
    %56 = vector.shape_cast %55 : vector<1x128x128xbf16> to vector<128x128xbf16>
    %cst_55 = arith.constant dense<0.000000e+00> : vector<256x128xf32>
    %57 = tpu.matmul %54, %56, %cst_55 {dimension_numbers = #tpu.dot_dimension_numbers<[1], [0], [0], [1], [0, 0, 1, 1], [], []>} : vector<256x128xbf16>, vector<128x128xbf16>, vector<256x128xf32> -> vector<256x128xf32>
    %c0_56 = arith.constant 0 : index
    %c0_57 = arith.constant 0 : index
    %58 = vector.load %arg6[%c0_56, %c0_57] : memref<256x128xf32, #tpu.memory_space<vmem>>, vector<256x128xf32>
    %59 = arith.addf %58, %57 : vector<256x128xf32>
    %c0_58 = arith.constant 0 : index
    %c0_59 = arith.constant 0 : index
    %60 = vector.load %arg6[%c0_58, %c0_59] : memref<256x128xf32, #tpu.memory_space<vmem>>, vector<256x128xf32>
    tpu.vector_store %arg6[%c0_58, %c0_59], %59 {strides = array<i32>} : memref<256x128xf32, #tpu.memory_space<vmem>>, vector<256x128xf32>,
    %c0_60 = arith.constant 0 : index
    %c48 = arith.constant 48 : index
    %c0_61 = arith.constant 0 : index
    %61 = vector.load %arg1[%c0_60, %c48, %c0_61] : memref<1x320x128xf32, #tpu.memory_space<vmem>>, vector<1x256x128xf32>
    %62 = vector.shape_cast %61 : vector<1x256x128xf32> to vector<256x128xf32>
    %63 = arith.truncf %62 : vector<256x128xf32> to vector<256x128xbf16>
    %c7 = arith.constant 7 : index
    %c0_62 = arith.constant 0 : index
    %c0_63 = arith.constant 0 : index
    %64 = vector.load %arg2[%c7, %c0_62, %c0_63] : memref<9x128x128xbf16, #tpu.memory_space<vmem>>, vector<1x128x128xbf16>
    %65 = vector.shape_cast %64 : vector<1x128x128xbf16> to vector<128x128xbf16>
    %cst_64 = arith.constant dense<0.000000e+00> : vector<256x128xf32>
    %66 = tpu.matmul %63, %65, %cst_64 {dimension_numbers = #tpu.dot_dimension_numbers<[1], [0], [0], [1], [0, 0, 1, 1], [], []>} : vector<256x128xbf16>, vector<128x128xbf16>, vector<256x128xf32> -> vector<256x128xf32>
    %c0_65 = arith.constant 0 : index
    %c0_66 = arith.constant 0 : index
    %67 = vector.load %arg6[%c0_65, %c0_66] : memref<256x128xf32, #tpu.memory_space<vmem>>, vector<256x128xf32>
    %68 = arith.addf %67, %66 : vector<256x128xf32>
    %c0_67 = arith.constant 0 : index
    %c0_68 = arith.constant 0 : index
    %69 = vector.load %arg6[%c0_67, %c0_68] : memref<256x128xf32, #tpu.memory_space<vmem>>, vector<256x128xf32>
    tpu.vector_store %arg6[%c0_67, %c0_68], %68 {strides = array<i32>} : memref<256x128xf32, #tpu.memory_space<vmem>>, vector<256x128xf32>,
    %c0_69 = arith.constant 0 : index
    %c49 = arith.constant 49 : index
    %c0_70 = arith.constant 0 : index
    %70 = vector.load %arg1[%c0_69, %c49, %c0_70] : memref<1x320x128xf32, #tpu.memory_space<vmem>>, vector<1x256x128xf32>
    %71 = vector.shape_cast %70 : vector<1x256x128xf32> to vector<256x128xf32>
    %72 = arith.truncf %71 : vector<256x128xf32> to vector<256x128xbf16>
    %c8 = arith.constant 8 : index
    %c0_71 = arith.constant 0 : index
    %c0_72 = arith.constant 0 : index
    %73 = vector.load %arg2[%c8, %c0_71, %c0_72] : memref<9x128x128xbf16, #tpu.memory_space<vmem>>, vector<1x128x128xbf16>
    %74 = vector.shape_cast %73 : vector<1x128x128xbf16> to vector<128x128xbf16>
    %cst_73 = arith.constant dense<0.000000e+00> : vector<256x128xf32>
    %75 = tpu.matmul %72, %74, %cst_73 {dimension_numbers = #tpu.dot_dimension_numbers<[1], [0], [0], [1], [0, 0, 1, 1], [], []>} : vector<256x128xbf16>, vector<128x128xbf16>, vector<256x128xf32> -> vector<256x128xf32>
    %c0_74 = arith.constant 0 : index
    %c0_75 = arith.constant 0 : index
    %76 = vector.load %arg6[%c0_74, %c0_75] : memref<256x128xf32, #tpu.memory_space<vmem>>, vector<256x128xf32>
    %77 = arith.addf %76, %75 : vector<256x128xf32>
    %c0_76 = arith.constant 0 : index
    %c0_77 = arith.constant 0 : index
    %78 = vector.load %arg6[%c0_76, %c0_77] : memref<256x128xf32, #tpu.memory_space<vmem>>, vector<256x128xf32>
    tpu.vector_store %arg6[%c0_76, %c0_77], %77 {strides = array<i32>} : memref<256x128xf32, #tpu.memory_space<vmem>>, vector<256x128xf32>,
    %c0_78 = arith.constant 0 : index
    %c0_79 = arith.constant 0 : index
    %79 = vector.load %arg6[%c0_78, %c0_79] : memref<256x128xf32, #tpu.memory_space<vmem>>, vector<256x128xf32>
    %c0_80 = arith.constant 0 : index
    %c0_81 = arith.constant 0 : index
    %80 = vector.load %arg3[%c0_80, %c0_81] : memref<1x128xf32, #tpu.memory_space<vmem>>, vector<1x128xf32>
    %81 = vector.broadcast %80 : vector<1x128xf32> to vector<256x128xf32>
    %82 = arith.addf %79, %81 : vector<256x128xf32>
    %cst_82 = arith.constant 0.000000e+00 : f32
    %83 = vector.broadcast %cst_82 : f32 to vector<256x128xf32>
    %84 = arith.maximumf %82, %83 : vector<256x128xf32>
    %c0_83 = arith.constant 0 : index
    %c0_84 = arith.constant 0 : index
    %85 = vector.load %arg4[%c0_83, %c0_84] : memref<256x1xf32, #tpu.memory_space<vmem>>, vector<256x1xf32>
    %86 = vector.broadcast %85 : vector<256x1xf32> to vector<256x128xf32>
    %87 = arith.mulf %84, %86 : vector<256x128xf32>
    %c0_85 = arith.constant 0 : index
    %c32_86 = arith.constant 32 : index
    %c0_87 = arith.constant 0 : index
    %88 = vector.load %arg5[%c0_85, %c32_86, %c0_87] : memref<1x320x128xf32, #tpu.memory_space<vmem>>, vector<1x256x128xf32>
    %89 = vector.shape_cast %88 : vector<1x256x128xf32> to vector<256x128xf32>
    %90 = vector.shape_cast %87 : vector<256x128xf32> to vector<1x256x128xf32>
    tpu.vector_store %arg5[%c0_85, %c32_86, %c0_87], %90 {strides = array<i32>} : memref<1x320x128xf32, #tpu.memory_space<vmem>>, vector<1x256x128xf32>,
    %cst_88 = arith.constant 0.000000e+00 : f32
    %91 = vector.broadcast %cst_88 : f32 to vector<32x128xf32>
    %c0_89 = arith.constant 0 : index
    %c0_90 = arith.constant 0 : index
    %c0_91 = arith.constant 0 : index
    %92 = vector.load %arg5[%c0_89, %c0_90, %c0_91] : memref<1x320x128xf32, #tpu.memory_space<vmem>>, vector<1x32x128xf32>
    %93 = vector.shape_cast %92 : vector<1x32x128xf32> to vector<32x128xf32>
    %94 = vector.shape_cast %91 : vector<32x128xf32> to vector<1x32x128xf32>
    tpu.vector_store %arg5[%c0_89, %c0_90, %c0_91], %94 {strides = array<i32>} : memref<1x320x128xf32, #tpu.memory_space<vmem>>, vector<1x32x128xf32>,
    %cst_92 = arith.constant 0.000000e+00 : f32
    %95 = vector.broadcast %cst_92 : f32 to vector<32x128xf32>
    %c0_93 = arith.constant 0 : index
    %c288 = arith.constant 288 : index
    %c0_94 = arith.constant 0 : index
    %96 = vector.load %arg5[%c0_93, %c288, %c0_94] : memref<1x320x128xf32, #tpu.memory_space<vmem>>, vector<1x32x128xf32>
    %97 = vector.shape_cast %96 : vector<1x32x128xf32> to vector<32x128xf32>
    %98 = vector.shape_cast %95 : vector<32x128xf32> to vector<1x32x128xf32>
    tpu.vector_store %arg5[%c0_93, %c288, %c0_94], %98 {strides = array<i32>} : memref<1x320x128xf32, #tpu.memory_space<vmem>>, vector<1x32x128xf32>,
    return
  }
  func.func @transform_0(%arg0: i32) -> (i32, i32, i32) {
    %c0_i32 = arith.constant 0 : i32
    %c0_i32_0 = arith.constant 0 : i32
    %c0_i32_1 = arith.constant 0 : i32
    return %arg0, %c0_i32, %c0_i32_0 : i32, i32, i32
  }
  func.func @transform_1(%arg0: i32) -> (i32, i32, i32) {
    %c0_i32 = arith.constant 0 : i32
    %c0_i32_0 = arith.constant 0 : i32
    %c0_i32_1 = arith.constant 0 : i32
    %c0_i32_2 = arith.constant 0 : i32
    return %c0_i32, %c0_i32_0, %c0_i32_1 : i32, i32, i32
  }
  func.func @transform_2(%arg0: i32) -> (i32, i32) {
    %c0_i32 = arith.constant 0 : i32
    %c0_i32_0 = arith.constant 0 : i32
    %c0_i32_1 = arith.constant 0 : i32
    return %c0_i32, %c0_i32_0 : i32, i32
  }
  func.func @transform_3(%arg0: i32) -> (i32, i32) {
    %c0_i32 = arith.constant 0 : i32
    %c0_i32_0 = arith.constant 0 : i32
    %c0_i32_1 = arith.constant 0 : i32
    return %c0_i32, %c0_i32_0 : i32, i32
  }
  func.func @transform_4(%arg0: i32) -> (i32, i32, i32) {
    %c0_i32 = arith.constant 0 : i32
    %c0_i32_0 = arith.constant 0 : i32
    %c0_i32_1 = arith.constant 0 : i32
    return %arg0, %c0_i32, %c0_i32_0 : i32, i32, i32
  }
}

module attributes {stable_mosaic.version = 11 : i64} {
  func.func @_matmul_bias_act_kernel(%arg0: i32, %arg1: i32, %arg2: i32, %arg3: memref<112x512xbf16, #tpu.memory_space<vmem>>, %arg4: memref<512x128xbf16, #tpu.memory_space<vmem>>, %arg5: memref<1x128xf32, #tpu.memory_space<vmem>>, %arg6: memref<112x128xf32, #tpu.memory_space<vmem>>, %arg7: memref<112x128xf32, #tpu.memory_space<vmem>>) attributes {dimension_semantics = [#tpu.dimension_semantics<parallel>, #tpu.dimension_semantics<parallel>, #tpu.dimension_semantics<arbitrary>], iteration_bounds = array<i64: 1, 1, 3>, scalar_prefetch = 0 : i64, scratch_operands = 1 : i64, tpu.core_type = #tpu.core_type<tc>, window_params = [{transform_indices = @transform_0, window_bounds = array<i64: 112, 512>}, {transform_indices = @transform_1, window_bounds = array<i64: 512, 128>}, {transform_indices = @transform_2, window_bounds = array<i64: 1, 128>}, {transform_indices = @transform_3, window_bounds = array<i64: 112, 128>}]} {
    %c0_i32 = arith.constant 0 : i32
    %0 = arith.cmpi eq, %arg2, %c0_i32 : i32
    %1 = arith.extui %0 : i1 to i32
    %c0_i32_0 = arith.constant 0 : i32
    %2 = arith.cmpi ne, %1, %c0_i32_0 : i32
    scf.if %2 {
      %cst_9 = arith.constant 0.000000e+00 : f32
      %12 = vector.broadcast %cst_9 : f32 to vector<112x128xf32>
      %c0_10 = arith.constant 0 : index
      %c0_11 = arith.constant 0 : index
      %13 = vector.load %arg7[%c0_10, %c0_11] : memref<112x128xf32, #tpu.memory_space<vmem>>, vector<112x128xf32>
      tpu.vector_store %arg7[%c0_10, %c0_11], %12 {strides = array<i32>} : memref<112x128xf32, #tpu.memory_space<vmem>>, vector<112x128xf32>,
    } else {
    }
    %c0 = arith.constant 0 : index
    %c0_1 = arith.constant 0 : index
    %3 = vector.load %arg7[%c0, %c0_1] : memref<112x128xf32, #tpu.memory_space<vmem>>, vector<112x128xf32>
    %c0_2 = arith.constant 0 : index
    %c0_3 = arith.constant 0 : index
    %4 = vector.load %arg3[%c0_2, %c0_3] : memref<112x512xbf16, #tpu.memory_space<vmem>>, vector<112x512xbf16>
    %c0_4 = arith.constant 0 : index
    %c0_5 = arith.constant 0 : index
    %5 = vector.load %arg4[%c0_4, %c0_5] : memref<512x128xbf16, #tpu.memory_space<vmem>>, vector<512x128xbf16>
    %cst = arith.constant dense<0.000000e+00> : vector<112x128xf32>
    %6 = tpu.matmul %4, %5, %cst {dimension_numbers = #tpu.dot_dimension_numbers<[1], [0], [0], [1], [0, 0, 1, 1], [], []>} : vector<112x512xbf16>, vector<512x128xbf16>, vector<112x128xf32> -> vector<112x128xf32>
    %7 = arith.addf %3, %6 : vector<112x128xf32>
    %c0_6 = arith.constant 0 : index
    %c0_7 = arith.constant 0 : index
    %8 = vector.load %arg7[%c0_6, %c0_7] : memref<112x128xf32, #tpu.memory_space<vmem>>, vector<112x128xf32>
    tpu.vector_store %arg7[%c0_6, %c0_7], %7 {strides = array<i32>} : memref<112x128xf32, #tpu.memory_space<vmem>>, vector<112x128xf32>,
    %c2_i32 = arith.constant 2 : i32
    %9 = arith.cmpi eq, %arg2, %c2_i32 : i32
    %10 = arith.extui %9 : i1 to i32
    %c0_i32_8 = arith.constant 0 : i32
    %11 = arith.cmpi ne, %10, %c0_i32_8 : i32
    scf.if %11 {
      %c0_9 = arith.constant 0 : index
      %c0_10 = arith.constant 0 : index
      %12 = vector.load %arg7[%c0_9, %c0_10] : memref<112x128xf32, #tpu.memory_space<vmem>>, vector<112x128xf32>
      %c0_11 = arith.constant 0 : index
      %c0_12 = arith.constant 0 : index
      %13 = vector.load %arg5[%c0_11, %c0_12] : memref<1x128xf32, #tpu.memory_space<vmem>>, vector<1x128xf32>
      %14 = vector.broadcast %13 : vector<1x128xf32> to vector<112x128xf32>
      %15 = arith.addf %12, %14 : vector<112x128xf32>
      %cst_13 = arith.constant 0.000000e+00 : f32
      %16 = vector.broadcast %cst_13 : f32 to vector<112x128xf32>
      %17 = arith.maximumf %15, %16 : vector<112x128xf32>
      %c0_14 = arith.constant 0 : index
      %c0_15 = arith.constant 0 : index
      %18 = vector.load %arg6[%c0_14, %c0_15] : memref<112x128xf32, #tpu.memory_space<vmem>>, vector<112x128xf32>
      tpu.vector_store %arg6[%c0_14, %c0_15], %17 {strides = array<i32>} : memref<112x128xf32, #tpu.memory_space<vmem>>, vector<112x128xf32>,
    } else {
    }
    return
  }
  func.func @transform_0(%arg0: i32, %arg1: i32, %arg2: i32) -> (i32, i32) {
    %c0_i32 = arith.constant 0 : i32
    return %arg0, %arg2 : i32, i32
  }
  func.func @transform_1(%arg0: i32, %arg1: i32, %arg2: i32) -> (i32, i32) {
    %c0_i32 = arith.constant 0 : i32
    return %arg2, %arg1 : i32, i32
  }
  func.func @transform_2(%arg0: i32, %arg1: i32, %arg2: i32) -> (i32, i32) {
    %c0_i32 = arith.constant 0 : i32
    %c0_i32_0 = arith.constant 0 : i32
    return %c0_i32, %arg1 : i32, i32
  }
  func.func @transform_3(%arg0: i32, %arg1: i32, %arg2: i32) -> (i32, i32) {
    %c0_i32 = arith.constant 0 : i32
    return %arg0, %arg1 : i32, i32
  }
}

module attributes {stable_mosaic.version = 11 : i64} {
  func.func @_conv3x3_fused_kernel(%arg0: i32, %arg1: memref<1x128x128xf32, #tpu.memory_space<vmem>>, %arg2: memref<9x128x128xbf16, #tpu.memory_space<vmem>>, %arg3: memref<1x128xf32, #tpu.memory_space<vmem>>, %arg4: memref<96x1xf32, #tpu.memory_space<vmem>>, %arg5: memref<1x128x128xf32, #tpu.memory_space<vmem>>, %arg6: memref<96x128xf32, #tpu.memory_space<vmem>>) attributes {dimension_semantics = [#tpu.dimension_semantics<parallel>], iteration_bounds = array<i64: 2>, scalar_prefetch = 0 : i64, scratch_operands = 1 : i64, tpu.core_type = #tpu.core_type<tc>, window_params = [{transform_indices = @transform_0, window_bounds = array<i64: 1, 128, 128>}, {pipeline_mode = #tpu.pipeline_mode<synchronous>, transform_indices = @transform_1, window_bounds = array<i64: 9, 128, 128>}, {pipeline_mode = #tpu.pipeline_mode<synchronous>, transform_indices = @transform_2, window_bounds = array<i64: 1, 128>}, {pipeline_mode = #tpu.pipeline_mode<synchronous>, transform_indices = @transform_3, window_bounds = array<i64: 96, 1>}, {transform_indices = @transform_4, window_bounds = array<i64: 1, 128, 128>}]} {
    %c0 = arith.constant 0 : index
    %c6 = arith.constant 6 : index
    %c0_0 = arith.constant 0 : index
    %0 = vector.load %arg1[%c0, %c6, %c0_0] : memref<1x128x128xf32, #tpu.memory_space<vmem>>, vector<1x96x128xf32>
    %1 = vector.shape_cast %0 : vector<1x96x128xf32> to vector<96x128xf32>
    %2 = arith.truncf %1 : vector<96x128xf32> to vector<96x128xbf16>
    %c0_1 = arith.constant 0 : index
    %c0_2 = arith.constant 0 : index
    %c0_3 = arith.constant 0 : index
    %3 = vector.load %arg2[%c0_1, %c0_2, %c0_3] : memref<9x128x128xbf16, #tpu.memory_space<vmem>>, vector<1x128x128xbf16>
    %4 = vector.shape_cast %3 : vector<1x128x128xbf16> to vector<128x128xbf16>
    %cst = arith.constant dense<0.000000e+00> : vector<96x128xf32>
    %5 = tpu.matmul %2, %4, %cst {dimension_numbers = #tpu.dot_dimension_numbers<[1], [0], [0], [1], [0, 0, 1, 1], [], []>} : vector<96x128xbf16>, vector<128x128xbf16>, vector<96x128xf32> -> vector<96x128xf32>
    %c0_4 = arith.constant 0 : index
    %c0_5 = arith.constant 0 : index
    %6 = vector.load %arg6[%c0_4, %c0_5] : memref<96x128xf32, #tpu.memory_space<vmem>>, vector<96x128xf32>
    tpu.vector_store %arg6[%c0_4, %c0_5], %5 {strides = array<i32>} : memref<96x128xf32, #tpu.memory_space<vmem>>, vector<96x128xf32>,
    %c0_6 = arith.constant 0 : index
    %c7 = arith.constant 7 : index
    %c0_7 = arith.constant 0 : index
    %7 = vector.load %arg1[%c0_6, %c7, %c0_7] : memref<1x128x128xf32, #tpu.memory_space<vmem>>, vector<1x96x128xf32>
    %8 = vector.shape_cast %7 : vector<1x96x128xf32> to vector<96x128xf32>
    %9 = arith.truncf %8 : vector<96x128xf32> to vector<96x128xbf16>
    %c1 = arith.constant 1 : index
    %c0_8 = arith.constant 0 : index
    %c0_9 = arith.constant 0 : index
    %10 = vector.load %arg2[%c1, %c0_8, %c0_9] : memref<9x128x128xbf16, #tpu.memory_space<vmem>>, vector<1x128x128xbf16>
    %11 = vector.shape_cast %10 : vector<1x128x128xbf16> to vector<128x128xbf16>
    %cst_10 = arith.constant dense<0.000000e+00> : vector<96x128xf32>
    %12 = tpu.matmul %9, %11, %cst_10 {dimension_numbers = #tpu.dot_dimension_numbers<[1], [0], [0], [1], [0, 0, 1, 1], [], []>} : vector<96x128xbf16>, vector<128x128xbf16>, vector<96x128xf32> -> vector<96x128xf32>
    %c0_11 = arith.constant 0 : index
    %c0_12 = arith.constant 0 : index
    %13 = vector.load %arg6[%c0_11, %c0_12] : memref<96x128xf32, #tpu.memory_space<vmem>>, vector<96x128xf32>
    %14 = arith.addf %13, %12 : vector<96x128xf32>
    %c0_13 = arith.constant 0 : index
    %c0_14 = arith.constant 0 : index
    %15 = vector.load %arg6[%c0_13, %c0_14] : memref<96x128xf32, #tpu.memory_space<vmem>>, vector<96x128xf32>
    tpu.vector_store %arg6[%c0_13, %c0_14], %14 {strides = array<i32>} : memref<96x128xf32, #tpu.memory_space<vmem>>, vector<96x128xf32>,
    %c0_15 = arith.constant 0 : index
    %c8 = arith.constant 8 : index
    %c0_16 = arith.constant 0 : index
    %16 = vector.load %arg1[%c0_15, %c8, %c0_16] : memref<1x128x128xf32, #tpu.memory_space<vmem>>, vector<1x96x128xf32>
    %17 = vector.shape_cast %16 : vector<1x96x128xf32> to vector<96x128xf32>
    %18 = arith.truncf %17 : vector<96x128xf32> to vector<96x128xbf16>
    %c2 = arith.constant 2 : index
    %c0_17 = arith.constant 0 : index
    %c0_18 = arith.constant 0 : index
    %19 = vector.load %arg2[%c2, %c0_17, %c0_18] : memref<9x128x128xbf16, #tpu.memory_space<vmem>>, vector<1x128x128xbf16>
    %20 = vector.shape_cast %19 : vector<1x128x128xbf16> to vector<128x128xbf16>
    %cst_19 = arith.constant dense<0.000000e+00> : vector<96x128xf32>
    %21 = tpu.matmul %18, %20, %cst_19 {dimension_numbers = #tpu.dot_dimension_numbers<[1], [0], [0], [1], [0, 0, 1, 1], [], []>} : vector<96x128xbf16>, vector<128x128xbf16>, vector<96x128xf32> -> vector<96x128xf32>
    %c0_20 = arith.constant 0 : index
    %c0_21 = arith.constant 0 : index
    %22 = vector.load %arg6[%c0_20, %c0_21] : memref<96x128xf32, #tpu.memory_space<vmem>>, vector<96x128xf32>
    %23 = arith.addf %22, %21 : vector<96x128xf32>
    %c0_22 = arith.constant 0 : index
    %c0_23 = arith.constant 0 : index
    %24 = vector.load %arg6[%c0_22, %c0_23] : memref<96x128xf32, #tpu.memory_space<vmem>>, vector<96x128xf32>
    tpu.vector_store %arg6[%c0_22, %c0_23], %23 {strides = array<i32>} : memref<96x128xf32, #tpu.memory_space<vmem>>, vector<96x128xf32>,
    %c0_24 = arith.constant 0 : index
    %c15 = arith.constant 15 : index
    %c0_25 = arith.constant 0 : index
    %25 = vector.load %arg1[%c0_24, %c15, %c0_25] : memref<1x128x128xf32, #tpu.memory_space<vmem>>, vector<1x96x128xf32>
    %26 = vector.shape_cast %25 : vector<1x96x128xf32> to vector<96x128xf32>
    %27 = arith.truncf %26 : vector<96x128xf32> to vector<96x128xbf16>
    %c3 = arith.constant 3 : index
    %c0_26 = arith.constant 0 : index
    %c0_27 = arith.constant 0 : index
    %28 = vector.load %arg2[%c3, %c0_26, %c0_27] : memref<9x128x128xbf16, #tpu.memory_space<vmem>>, vector<1x128x128xbf16>
    %29 = vector.shape_cast %28 : vector<1x128x128xbf16> to vector<128x128xbf16>
    %cst_28 = arith.constant dense<0.000000e+00> : vector<96x128xf32>
    %30 = tpu.matmul %27, %29, %cst_28 {dimension_numbers = #tpu.dot_dimension_numbers<[1], [0], [0], [1], [0, 0, 1, 1], [], []>} : vector<96x128xbf16>, vector<128x128xbf16>, vector<96x128xf32> -> vector<96x128xf32>
    %c0_29 = arith.constant 0 : index
    %c0_30 = arith.constant 0 : index
    %31 = vector.load %arg6[%c0_29, %c0_30] : memref<96x128xf32, #tpu.memory_space<vmem>>, vector<96x128xf32>
    %32 = arith.addf %31, %30 : vector<96x128xf32>
    %c0_31 = arith.constant 0 : index
    %c0_32 = arith.constant 0 : index
    %33 = vector.load %arg6[%c0_31, %c0_32] : memref<96x128xf32, #tpu.memory_space<vmem>>, vector<96x128xf32>
    tpu.vector_store %arg6[%c0_31, %c0_32], %32 {strides = array<i32>} : memref<96x128xf32, #tpu.memory_space<vmem>>, vector<96x128xf32>,
    %c0_33 = arith.constant 0 : index
    %c16 = arith.constant 16 : index
    %c0_34 = arith.constant 0 : index
    %34 = vector.load %arg1[%c0_33, %c16, %c0_34] : memref<1x128x128xf32, #tpu.memory_space<vmem>>, vector<1x96x128xf32>
    %35 = vector.shape_cast %34 : vector<1x96x128xf32> to vector<96x128xf32>
    %36 = arith.truncf %35 : vector<96x128xf32> to vector<96x128xbf16>
    %c4 = arith.constant 4 : index
    %c0_35 = arith.constant 0 : index
    %c0_36 = arith.constant 0 : index
    %37 = vector.load %arg2[%c4, %c0_35, %c0_36] : memref<9x128x128xbf16, #tpu.memory_space<vmem>>, vector<1x128x128xbf16>
    %38 = vector.shape_cast %37 : vector<1x128x128xbf16> to vector<128x128xbf16>
    %cst_37 = arith.constant dense<0.000000e+00> : vector<96x128xf32>
    %39 = tpu.matmul %36, %38, %cst_37 {dimension_numbers = #tpu.dot_dimension_numbers<[1], [0], [0], [1], [0, 0, 1, 1], [], []>} : vector<96x128xbf16>, vector<128x128xbf16>, vector<96x128xf32> -> vector<96x128xf32>
    %c0_38 = arith.constant 0 : index
    %c0_39 = arith.constant 0 : index
    %40 = vector.load %arg6[%c0_38, %c0_39] : memref<96x128xf32, #tpu.memory_space<vmem>>, vector<96x128xf32>
    %41 = arith.addf %40, %39 : vector<96x128xf32>
    %c0_40 = arith.constant 0 : index
    %c0_41 = arith.constant 0 : index
    %42 = vector.load %arg6[%c0_40, %c0_41] : memref<96x128xf32, #tpu.memory_space<vmem>>, vector<96x128xf32>
    tpu.vector_store %arg6[%c0_40, %c0_41], %41 {strides = array<i32>} : memref<96x128xf32, #tpu.memory_space<vmem>>, vector<96x128xf32>,
    %c0_42 = arith.constant 0 : index
    %c17 = arith.constant 17 : index
    %c0_43 = arith.constant 0 : index
    %43 = vector.load %arg1[%c0_42, %c17, %c0_43] : memref<1x128x128xf32, #tpu.memory_space<vmem>>, vector<1x96x128xf32>
    %44 = vector.shape_cast %43 : vector<1x96x128xf32> to vector<96x128xf32>
    %45 = arith.truncf %44 : vector<96x128xf32> to vector<96x128xbf16>
    %c5 = arith.constant 5 : index
    %c0_44 = arith.constant 0 : index
    %c0_45 = arith.constant 0 : index
    %46 = vector.load %arg2[%c5, %c0_44, %c0_45] : memref<9x128x128xbf16, #tpu.memory_space<vmem>>, vector<1x128x128xbf16>
    %47 = vector.shape_cast %46 : vector<1x128x128xbf16> to vector<128x128xbf16>
    %cst_46 = arith.constant dense<0.000000e+00> : vector<96x128xf32>
    %48 = tpu.matmul %45, %47, %cst_46 {dimension_numbers = #tpu.dot_dimension_numbers<[1], [0], [0], [1], [0, 0, 1, 1], [], []>} : vector<96x128xbf16>, vector<128x128xbf16>, vector<96x128xf32> -> vector<96x128xf32>
    %c0_47 = arith.constant 0 : index
    %c0_48 = arith.constant 0 : index
    %49 = vector.load %arg6[%c0_47, %c0_48] : memref<96x128xf32, #tpu.memory_space<vmem>>, vector<96x128xf32>
    %50 = arith.addf %49, %48 : vector<96x128xf32>
    %c0_49 = arith.constant 0 : index
    %c0_50 = arith.constant 0 : index
    %51 = vector.load %arg6[%c0_49, %c0_50] : memref<96x128xf32, #tpu.memory_space<vmem>>, vector<96x128xf32>
    tpu.vector_store %arg6[%c0_49, %c0_50], %50 {strides = array<i32>} : memref<96x128xf32, #tpu.memory_space<vmem>>, vector<96x128xf32>,
    %c0_51 = arith.constant 0 : index
    %c24 = arith.constant 24 : index
    %c0_52 = arith.constant 0 : index
    %52 = vector.load %arg1[%c0_51, %c24, %c0_52] : memref<1x128x128xf32, #tpu.memory_space<vmem>>, vector<1x96x128xf32>
    %53 = vector.shape_cast %52 : vector<1x96x128xf32> to vector<96x128xf32>
    %54 = arith.truncf %53 : vector<96x128xf32> to vector<96x128xbf16>
    %c6_53 = arith.constant 6 : index
    %c0_54 = arith.constant 0 : index
    %c0_55 = arith.constant 0 : index
    %55 = vector.load %arg2[%c6_53, %c0_54, %c0_55] : memref<9x128x128xbf16, #tpu.memory_space<vmem>>, vector<1x128x128xbf16>
    %56 = vector.shape_cast %55 : vector<1x128x128xbf16> to vector<128x128xbf16>
    %cst_56 = arith.constant dense<0.000000e+00> : vector<96x128xf32>
    %57 = tpu.matmul %54, %56, %cst_56 {dimension_numbers = #tpu.dot_dimension_numbers<[1], [0], [0], [1], [0, 0, 1, 1], [], []>} : vector<96x128xbf16>, vector<128x128xbf16>, vector<96x128xf32> -> vector<96x128xf32>
    %c0_57 = arith.constant 0 : index
    %c0_58 = arith.constant 0 : index
    %58 = vector.load %arg6[%c0_57, %c0_58] : memref<96x128xf32, #tpu.memory_space<vmem>>, vector<96x128xf32>
    %59 = arith.addf %58, %57 : vector<96x128xf32>
    %c0_59 = arith.constant 0 : index
    %c0_60 = arith.constant 0 : index
    %60 = vector.load %arg6[%c0_59, %c0_60] : memref<96x128xf32, #tpu.memory_space<vmem>>, vector<96x128xf32>
    tpu.vector_store %arg6[%c0_59, %c0_60], %59 {strides = array<i32>} : memref<96x128xf32, #tpu.memory_space<vmem>>, vector<96x128xf32>,
    %c0_61 = arith.constant 0 : index
    %c25 = arith.constant 25 : index
    %c0_62 = arith.constant 0 : index
    %61 = vector.load %arg1[%c0_61, %c25, %c0_62] : memref<1x128x128xf32, #tpu.memory_space<vmem>>, vector<1x96x128xf32>
    %62 = vector.shape_cast %61 : vector<1x96x128xf32> to vector<96x128xf32>
    %63 = arith.truncf %62 : vector<96x128xf32> to vector<96x128xbf16>
    %c7_63 = arith.constant 7 : index
    %c0_64 = arith.constant 0 : index
    %c0_65 = arith.constant 0 : index
    %64 = vector.load %arg2[%c7_63, %c0_64, %c0_65] : memref<9x128x128xbf16, #tpu.memory_space<vmem>>, vector<1x128x128xbf16>
    %65 = vector.shape_cast %64 : vector<1x128x128xbf16> to vector<128x128xbf16>
    %cst_66 = arith.constant dense<0.000000e+00> : vector<96x128xf32>
    %66 = tpu.matmul %63, %65, %cst_66 {dimension_numbers = #tpu.dot_dimension_numbers<[1], [0], [0], [1], [0, 0, 1, 1], [], []>} : vector<96x128xbf16>, vector<128x128xbf16>, vector<96x128xf32> -> vector<96x128xf32>
    %c0_67 = arith.constant 0 : index
    %c0_68 = arith.constant 0 : index
    %67 = vector.load %arg6[%c0_67, %c0_68] : memref<96x128xf32, #tpu.memory_space<vmem>>, vector<96x128xf32>
    %68 = arith.addf %67, %66 : vector<96x128xf32>
    %c0_69 = arith.constant 0 : index
    %c0_70 = arith.constant 0 : index
    %69 = vector.load %arg6[%c0_69, %c0_70] : memref<96x128xf32, #tpu.memory_space<vmem>>, vector<96x128xf32>
    tpu.vector_store %arg6[%c0_69, %c0_70], %68 {strides = array<i32>} : memref<96x128xf32, #tpu.memory_space<vmem>>, vector<96x128xf32>,
    %c0_71 = arith.constant 0 : index
    %c26 = arith.constant 26 : index
    %c0_72 = arith.constant 0 : index
    %70 = vector.load %arg1[%c0_71, %c26, %c0_72] : memref<1x128x128xf32, #tpu.memory_space<vmem>>, vector<1x96x128xf32>
    %71 = vector.shape_cast %70 : vector<1x96x128xf32> to vector<96x128xf32>
    %72 = arith.truncf %71 : vector<96x128xf32> to vector<96x128xbf16>
    %c8_73 = arith.constant 8 : index
    %c0_74 = arith.constant 0 : index
    %c0_75 = arith.constant 0 : index
    %73 = vector.load %arg2[%c8_73, %c0_74, %c0_75] : memref<9x128x128xbf16, #tpu.memory_space<vmem>>, vector<1x128x128xbf16>
    %74 = vector.shape_cast %73 : vector<1x128x128xbf16> to vector<128x128xbf16>
    %cst_76 = arith.constant dense<0.000000e+00> : vector<96x128xf32>
    %75 = tpu.matmul %72, %74, %cst_76 {dimension_numbers = #tpu.dot_dimension_numbers<[1], [0], [0], [1], [0, 0, 1, 1], [], []>} : vector<96x128xbf16>, vector<128x128xbf16>, vector<96x128xf32> -> vector<96x128xf32>
    %c0_77 = arith.constant 0 : index
    %c0_78 = arith.constant 0 : index
    %76 = vector.load %arg6[%c0_77, %c0_78] : memref<96x128xf32, #tpu.memory_space<vmem>>, vector<96x128xf32>
    %77 = arith.addf %76, %75 : vector<96x128xf32>
    %c0_79 = arith.constant 0 : index
    %c0_80 = arith.constant 0 : index
    %78 = vector.load %arg6[%c0_79, %c0_80] : memref<96x128xf32, #tpu.memory_space<vmem>>, vector<96x128xf32>
    tpu.vector_store %arg6[%c0_79, %c0_80], %77 {strides = array<i32>} : memref<96x128xf32, #tpu.memory_space<vmem>>, vector<96x128xf32>,
    %c0_81 = arith.constant 0 : index
    %c0_82 = arith.constant 0 : index
    %79 = vector.load %arg6[%c0_81, %c0_82] : memref<96x128xf32, #tpu.memory_space<vmem>>, vector<96x128xf32>
    %c0_83 = arith.constant 0 : index
    %c0_84 = arith.constant 0 : index
    %80 = vector.load %arg3[%c0_83, %c0_84] : memref<1x128xf32, #tpu.memory_space<vmem>>, vector<1x128xf32>
    %81 = vector.broadcast %80 : vector<1x128xf32> to vector<96x128xf32>
    %82 = arith.addf %79, %81 : vector<96x128xf32>
    %cst_85 = arith.constant 0.000000e+00 : f32
    %83 = vector.broadcast %cst_85 : f32 to vector<96x128xf32>
    %84 = arith.maximumf %82, %83 : vector<96x128xf32>
    %c0_86 = arith.constant 0 : index
    %c0_87 = arith.constant 0 : index
    %85 = vector.load %arg4[%c0_86, %c0_87] : memref<96x1xf32, #tpu.memory_space<vmem>>, vector<96x1xf32>
    %86 = vector.broadcast %85 : vector<96x1xf32> to vector<96x128xf32>
    %87 = arith.mulf %84, %86 : vector<96x128xf32>
    %c0_88 = arith.constant 0 : index
    %c16_89 = arith.constant 16 : index
    %c0_90 = arith.constant 0 : index
    %88 = vector.load %arg5[%c0_88, %c16_89, %c0_90] : memref<1x128x128xf32, #tpu.memory_space<vmem>>, vector<1x96x128xf32>
    %89 = vector.shape_cast %88 : vector<1x96x128xf32> to vector<96x128xf32>
    %90 = vector.shape_cast %87 : vector<96x128xf32> to vector<1x96x128xf32>
    tpu.vector_store %arg5[%c0_88, %c16_89, %c0_90], %90 {strides = array<i32>} : memref<1x128x128xf32, #tpu.memory_space<vmem>>, vector<1x96x128xf32>,
    %cst_91 = arith.constant 0.000000e+00 : f32
    %91 = vector.broadcast %cst_91 : f32 to vector<16x128xf32>
    %c0_92 = arith.constant 0 : index
    %c0_93 = arith.constant 0 : index
    %c0_94 = arith.constant 0 : index
    %92 = vector.load %arg5[%c0_92, %c0_93, %c0_94] : memref<1x128x128xf32, #tpu.memory_space<vmem>>, vector<1x16x128xf32>
    %93 = vector.shape_cast %92 : vector<1x16x128xf32> to vector<16x128xf32>
    %94 = vector.shape_cast %91 : vector<16x128xf32> to vector<1x16x128xf32>
    tpu.vector_store %arg5[%c0_92, %c0_93, %c0_94], %94 {strides = array<i32>} : memref<1x128x128xf32, #tpu.memory_space<vmem>>, vector<1x16x128xf32>,
    %cst_95 = arith.constant 0.000000e+00 : f32
    %95 = vector.broadcast %cst_95 : f32 to vector<16x128xf32>
    %c0_96 = arith.constant 0 : index
    %c112 = arith.constant 112 : index
    %c0_97 = arith.constant 0 : index
    %96 = vector.load %arg5[%c0_96, %c112, %c0_97] : memref<1x128x128xf32, #tpu.memory_space<vmem>>, vector<1x16x128xf32>
    %97 = vector.shape_cast %96 : vector<1x16x128xf32> to vector<16x128xf32>
    %98 = vector.shape_cast %95 : vector<16x128xf32> to vector<1x16x128xf32>
    tpu.vector_store %arg5[%c0_96, %c112, %c0_97], %98 {strides = array<i32>} : memref<1x128x128xf32, #tpu.memory_space<vmem>>, vector<1x16x128xf32>,
    return
  }
  func.func @transform_0(%arg0: i32) -> (i32, i32, i32) {
    %c0_i32 = arith.constant 0 : i32
    %c0_i32_0 = arith.constant 0 : i32
    %c0_i32_1 = arith.constant 0 : i32
    return %arg0, %c0_i32, %c0_i32_0 : i32, i32, i32
  }
  func.func @transform_1(%arg0: i32) -> (i32, i32, i32) {
    %c0_i32 = arith.constant 0 : i32
    %c0_i32_0 = arith.constant 0 : i32
    %c0_i32_1 = arith.constant 0 : i32
    %c0_i32_2 = arith.constant 0 : i32
    return %c0_i32, %c0_i32_0, %c0_i32_1 : i32, i32, i32
  }
  func.func @transform_2(%arg0: i32) -> (i32, i32) {
    %c0_i32 = arith.constant 0 : i32
    %c0_i32_0 = arith.constant 0 : i32
    %c0_i32_1 = arith.constant 0 : i32
    return %c0_i32, %c0_i32_0 : i32, i32
  }
  func.func @transform_3(%arg0: i32) -> (i32, i32) {
    %c0_i32 = arith.constant 0 : i32
    %c0_i32_0 = arith.constant 0 : i32
    %c0_i32_1 = arith.constant 0 : i32
    return %c0_i32, %c0_i32_0 : i32, i32
  }
  func.func @transform_4(%arg0: i32) -> (i32, i32, i32) {
    %c0_i32 = arith.constant 0 : i32
    %c0_i32_0 = arith.constant 0 : i32
    %c0_i32_1 = arith.constant 0 : i32
    return %arg0, %c0_i32, %c0_i32_0 : i32, i32, i32
  }
}

module attributes {stable_mosaic.version = 11 : i64} {
  func.func @_matmul_bias_act_kernel(%arg0: i32, %arg1: i32, %arg2: i32, %arg3: memref<16x512xbf16, #tpu.memory_space<vmem>>, %arg4: memref<512x128xbf16, #tpu.memory_space<vmem>>, %arg5: memref<1x128xf32, #tpu.memory_space<vmem>>, %arg6: memref<16x128xf32, #tpu.memory_space<vmem>>, %arg7: memref<16x128xf32, #tpu.memory_space<vmem>>) attributes {dimension_semantics = [#tpu.dimension_semantics<parallel>, #tpu.dimension_semantics<parallel>, #tpu.dimension_semantics<arbitrary>], iteration_bounds = array<i64: 1, 1, 13>, scalar_prefetch = 0 : i64, scratch_operands = 1 : i64, tpu.core_type = #tpu.core_type<tc>, window_params = [{transform_indices = @transform_0, window_bounds = array<i64: 16, 512>}, {transform_indices = @transform_1, window_bounds = array<i64: 512, 128>}, {transform_indices = @transform_2, window_bounds = array<i64: 1, 128>}, {transform_indices = @transform_3, window_bounds = array<i64: 16, 128>}]} {
    %c0_i32 = arith.constant 0 : i32
    %0 = arith.cmpi eq, %arg2, %c0_i32 : i32
    %1 = arith.extui %0 : i1 to i32
    %c0_i32_0 = arith.constant 0 : i32
    %2 = arith.cmpi ne, %1, %c0_i32_0 : i32
    scf.if %2 {
      %cst_9 = arith.constant 0.000000e+00 : f32
      %12 = vector.broadcast %cst_9 : f32 to vector<16x128xf32>
      %c0_10 = arith.constant 0 : index
      %c0_11 = arith.constant 0 : index
      %13 = vector.load %arg7[%c0_10, %c0_11] : memref<16x128xf32, #tpu.memory_space<vmem>>, vector<16x128xf32>
      tpu.vector_store %arg7[%c0_10, %c0_11], %12 {strides = array<i32>} : memref<16x128xf32, #tpu.memory_space<vmem>>, vector<16x128xf32>,
    } else {
    }
    %c0 = arith.constant 0 : index
    %c0_1 = arith.constant 0 : index
    %3 = vector.load %arg7[%c0, %c0_1] : memref<16x128xf32, #tpu.memory_space<vmem>>, vector<16x128xf32>
    %c0_2 = arith.constant 0 : index
    %c0_3 = arith.constant 0 : index
    %4 = vector.load %arg3[%c0_2, %c0_3] : memref<16x512xbf16, #tpu.memory_space<vmem>>, vector<16x512xbf16>
    %c0_4 = arith.constant 0 : index
    %c0_5 = arith.constant 0 : index
    %5 = vector.load %arg4[%c0_4, %c0_5] : memref<512x128xbf16, #tpu.memory_space<vmem>>, vector<512x128xbf16>
    %cst = arith.constant dense<0.000000e+00> : vector<16x128xf32>
    %6 = tpu.matmul %4, %5, %cst {dimension_numbers = #tpu.dot_dimension_numbers<[1], [0], [0], [1], [0, 0, 1, 1], [], []>} : vector<16x512xbf16>, vector<512x128xbf16>, vector<16x128xf32> -> vector<16x128xf32>
    %7 = arith.addf %3, %6 : vector<16x128xf32>
    %c0_6 = arith.constant 0 : index
    %c0_7 = arith.constant 0 : index
    %8 = vector.load %arg7[%c0_6, %c0_7] : memref<16x128xf32, #tpu.memory_space<vmem>>, vector<16x128xf32>
    tpu.vector_store %arg7[%c0_6, %c0_7], %7 {strides = array<i32>} : memref<16x128xf32, #tpu.memory_space<vmem>>, vector<16x128xf32>,
    %c12_i32 = arith.constant 12 : i32
    %9 = arith.cmpi eq, %arg2, %c12_i32 : i32
    %10 = arith.extui %9 : i1 to i32
    %c0_i32_8 = arith.constant 0 : i32
    %11 = arith.cmpi ne, %10, %c0_i32_8 : i32
    scf.if %11 {
      %c0_9 = arith.constant 0 : index
      %c0_10 = arith.constant 0 : index
      %12 = vector.load %arg7[%c0_9, %c0_10] : memref<16x128xf32, #tpu.memory_space<vmem>>, vector<16x128xf32>
      %c0_11 = arith.constant 0 : index
      %c0_12 = arith.constant 0 : index
      %13 = vector.load %arg5[%c0_11, %c0_12] : memref<1x128xf32, #tpu.memory_space<vmem>>, vector<1x128xf32>
      %14 = vector.broadcast %13 : vector<1x128xf32> to vector<16x128xf32>
      %15 = arith.addf %12, %14 : vector<16x128xf32>
      %c0_13 = arith.constant 0 : index
      %c0_14 = arith.constant 0 : index
      %16 = vector.load %arg6[%c0_13, %c0_14] : memref<16x128xf32, #tpu.memory_space<vmem>>, vector<16x128xf32>
      tpu.vector_store %arg6[%c0_13, %c0_14], %15 {strides = array<i32>} : memref<16x128xf32, #tpu.memory_space<vmem>>, vector<16x128xf32>,
    } else {
    }
    return
  }
  func.func @transform_0(%arg0: i32, %arg1: i32, %arg2: i32) -> (i32, i32) {
    %c0_i32 = arith.constant 0 : i32
    return %arg0, %arg2 : i32, i32
  }
  func.func @transform_1(%arg0: i32, %arg1: i32, %arg2: i32) -> (i32, i32) {
    %c0_i32 = arith.constant 0 : i32
    return %arg2, %arg1 : i32, i32
  }
  func.func @transform_2(%arg0: i32, %arg1: i32, %arg2: i32) -> (i32, i32) {
    %c0_i32 = arith.constant 0 : i32
    %c0_i32_0 = arith.constant 0 : i32
    return %c0_i32, %arg1 : i32, i32
  }
  func.func @transform_3(%arg0: i32, %arg1: i32, %arg2: i32) -> (i32, i32) {
    %c0_i32 = arith.constant 0 : i32
    return %arg0, %arg1 : i32, i32
  }
}

</mosaic_0001>

<llo_original>
// kernel: _lambda_.9
$region0: #{_lambda_.9}
  #allocation0 [shape = 'u32[]', space=smem, size = 0x4, offset = 0x4, fixed_abs, tag = 'smem constant byte address 0x4 - core index']
  #allocation1 [shape = 'u32[144,128]{1,0:T(1,128)}', space=vmem, size = 0x12000, scoped, tag = 'internal scratch']
  #allocation2 [shape = 'f32[256,128]{1,0:T(8,128)}', space=vmem, size = 0x20000, scoped, tag = 'scratch operand']
  %s0 = inlined_call_operand.vmem [shape: bf16[512,128], index: 0, kind: input, shape index: {}]
  %s1 = inlined_call_operand.hbm [shape: bf16[128,128], index: 1, kind: input, shape index: {}]
  %s2 = inlined_call_operand.hbm [shape: f32[1,128], index: 2, kind: input, shape index: {}]
  %s3 = inlined_call_operand.vmem [shape: f32[512,128], index: 3, kind: output, shape index: {}]
  %s4 = sld [smem:[#allocation0]]
  $region61: #{_lambda_.9} parent=0
    _
  %s6 = ssub.s32 1, %s4
  %s7 = scalar_select 0, %s6, %s4
  $region1: #{_lambda_.9} parent=0
    #allocation3 [shape = 'u8[32768]{0}', space=vmem, size = 0x8000, scoped, tag = 'input window, operand 1, single buffered']
    #allocation4 [shape = 's32[2]{0}', space=sflag, size = 0x8, scoped, tag = 'scoped memory for _lambda_.9']
    #allocation5 [shape = 'u8[512]{0}', space=vmem, size = 0x400, scoped, tag = 'input window, operand 2, single buffered']
    #allocation6 [shape = 's32[1]{0}', space=sflag, size = 0x4, scoped, tag = 'scoped memory for _lambda_.9']
    %8 = vsyncpa [#allocation4], 0
    %9 = vsyncpa [#allocation6], 0
    loop: start=0, step=1, limit=4
    $region2: #{_lambda_.9} parent=1 // loop_pre_header
      _
    $region3: #{_lambda_.9} parent=1 // loop_header
      %s11 = sphi 0, %s15
      %p12 = scmp.ge.s32.totalorder %s11, 4
      %s18 = sphi 0, %s37
      %s19 = sphi 0, %s33
      %s20 = sphi 0, %s29
      %s21 = sphi 0, %s18
      %s22 = sphi 0, %s19
      %s23 = sphi 0, %s20
      %s24 = sphi 0, %s21
      %s25 = sphi 0, %s22
      %s26 = sphi 0, %s23
      %s42 = sphi 0, %s44
      %s45 = sphi 0, %s42
      %s46 = sphi 0, %s45
      %s62 = sphi 0, %s46
      %s70 = sphi 0, %s72
      %s73 = sphi 0, %s70
      %s74 = sphi 0, %s73
      %s90 = sphi 0, %s74
      %s96 = sphi 0, %s98
      %s99 = sphi 0, %s96
      %s100 = sphi 0, %s99
      %s116 = sphi 0, %s100
      %s124 = sphi 0, %s126
      %s127 = sphi 0, %s124
      %s128 = sphi 0, %s127
      %s144 = sphi 0, %s128
    $region4: #{_lambda_.9} parent=1 // loop_header_branch
      %14 = sbr.rel (%p12) target = $region8
    $region5: #{_lambda_.9} parent=1 // loop_body
      %s16 = ssub.s32 %s11, 1
      %s17 = ssub.s32 %s11, 2
      %s27 = sadd.s32 1, %s20
      %p28 = scmp.ge.s32.totalorder %s27, 1
      %s29 = scalar_select %p28, 0, %s27
      %s30 = sadd.s32 1, %s19
      %s31 = scalar_select %p28, %s30, %s19
      %p32 = scmp.ge.s32.totalorder %s31, 1
      %s33 = scalar_select %p32, 0, %s31
      %s34 = sadd.s32 1, %s18
      %s35 = scalar_select %p32, %s34, %s18
      %p36 = scmp.ge.s32.totalorder %s35, 2
      %s37 = scalar_select %p36, 0, %s35
      %s38 = ssub.s32 %s18, %s37
      %s39 = ssub.s32 %s20, %s29
      %s40 = sor.u32 %s38, %s39
      %p41 = scmp.eq.s32.totalorder %s40, 0
      %s43 = sadd.s32 %s42, 1
      %s44 = scalar_select %p41, %s42, %s43
      %p47 = pneg %p41
      %p48 = scmp.eq.s32.totalorder %s11, 1
      %p49 = por %p47, %p48
      %p50 = scmp.ne.s32.totalorder %s42, %s45
      %p51 = scmp.eq.s32.totalorder %s11, 0
      %p52 = por %p50, %p51
      %p53 = scmp.ne.s32.totalorder %s42, %s45
      %p54 = scmp.eq.s32.totalorder %s16, 1
      %p55 = por %p53, %p54
      %p56 = scmp.ne.s32.totalorder %s45, %s46
      %p57 = scmp.eq.s32.totalorder %s16, 0
      %p58 = por %p56, %p57
      %p59 = scmp.ne.s32.totalorder %s45, %s46
      %p60 = scmp.eq.s32.totalorder %s17, 1
      %p61 = por %p59, %p60
      %p63 = scmp.ne.s32.totalorder %s46, %s62
      %p64 = scmp.eq.s32.totalorder %s17, 0
      %p65 = por %p63, %p64
      %s66 = ssub.s32 %s20, %s29
      %s67 = ssub.s32 %s19, %s33
      %s68 = sor.u32 %s66, %s67
      %p69 = scmp.eq.s32.totalorder %s68, 0
      %s71 = sadd.s32 %s70, 1
      %s72 = scalar_select %p69, %s70, %s71
      %p75 = pneg %p69
      %p76 = scmp.eq.s32.totalorder %s11, 1
      %p77 = por %p75, %p76
      %p78 = scmp.ne.s32.totalorder %s70, %s73
      %p79 = scmp.eq.s32.totalorder %s11, 0
      %p80 = por %p78, %p79
      %p81 = scmp.ne.s32.totalorder %s70, %s73
      %p82 = scmp.eq.s32.totalorder %s16, 1
      %p83 = por %p81, %p82
      %p84 = scmp.ne.s32.totalorder %s73, %s74
      %p85 = scmp.eq.s32.totalorder %s16, 0
      %p86 = por %p84, %p85
      %p87 = scmp.ne.s32.totalorder %s73, %s74
      %p88 = scmp.eq.s32.totalorder %s17, 1
      %p89 = por %p87, %p88
      %p91 = scmp.ne.s32.totalorder %s74, %s90
      %p92 = scmp.eq.s32.totalorder %s17, 0
      %p93 = por %p91, %p92
      %s94 = ssub.s32 %s19, %s33
      %p95 = scmp.eq.s32.totalorder %s94, 0
      %s97 = sadd.s32 %s96, 1
      %s98 = scalar_select %p95, %s96, %s97
      %p101 = pneg %p95
      %p102 = scmp.eq.s32.totalorder %s11, 1
      %p103 = por %p101, %p102
      %p104 = scmp.ne.s32.totalorder %s96, %s99
      %p105 = scmp.eq.s32.totalorder %s11, 0
      %p106 = por %p104, %p105
      %p107 = scmp.ne.s32.totalorder %s96, %s99
      %p108 = scmp.eq.s32.totalorder %s16, 1
      %p109 = por %p107, %p108
      %p110 = scmp.ne.s32.totalorder %s99, %s100
      %p111 = scmp.eq.s32.totalorder %s16, 0
      %p112 = por %p110, %p111
      %p113 = scmp.ne.s32.totalorder %s99, %s100
      %p114 = scmp.eq.s32.totalorder %s17, 1
      %p115 = por %p113, %p114
      %p117 = scmp.ne.s32.totalorder %s100, %s116
      %p118 = scmp.eq.s32.totalorder %s17, 0
      %p119 = por %p117, %p118
      %s120 = ssub.s32 %s18, %s37
      %s121 = ssub.s32 %s19, %s33
      %s122 = sor.u32 %s120, %s121
      %p123 = scmp.eq.s32.totalorder %s122, 0
      %s125 = sadd.s32 %s124, 1
      %s126 = scalar_select %p123, %s124, %s125
      %p129 = pneg %p123
      %p130 = scmp.eq.s32.totalorder %s11, 1
      %p131 = por %p129, %p130
      %p132 = scmp.ne.s32.totalorder %s124, %s127
      %p133 = scmp.eq.s32.totalorder %s11, 0
      %p134 = por %p132, %p133
      %p135 = scmp.ne.s32.totalorder %s124, %s127
      %p136 = scmp.eq.s32.totalorder %s16, 1
      %p137 = por %p135, %p136
      %p138 = scmp.ne.s32.totalorder %s127, %s128
      %p139 = scmp.eq.s32.totalorder %s16, 0
      %p140 = por %p138, %p139
      %p141 = scmp.ne.s32.totalorder %s127, %s128
      %p142 = scmp.eq.s32.totalorder %s17, 1
      %p143 = por %p141, %p142
      %p145 = scmp.ne.s32.totalorder %s128, %s144
      %p146 = scmp.eq.s32.totalorder %s17, 0
      %p147 = por %p145, %p146
      %p148 = scmp.le.s32.totalorder 1, %s11
      %p149 = scmp.lt.s32.totalorder %s11, 3
      %p150 = pnand %p148, %p149
      %p151 = pneg %p150
      // Predicated region
      $region9: #{_lambda_.9} parent=5 // pred_check
        _
      $region10: #{_lambda_.9} parent=5 // pred_check_branch
        %153 = sbr.rel (%p150) target = $region12
      $region11: #{_lambda_.9} parent=5 // pred_region
        %s154 = ssub.s32 %s11, 1
        // Predicated region
        $region13: #{_lambda_.9} parent=11 // pred_check
          %p155 = pneg %p86
        $region14: #{_lambda_.9} parent=11 // pred_check_branch
          %157 = sbr.rel (%p155) target = $region16
        $region15: #{_lambda_.9} parent=11 // pred_region
          %s158 = smul.u32 16, %s23
          %s160 = ssub.s32 1024, 1024
          %161 = vsyncadd [#allocation4], %s160
          %s162 = sadd.s32 %s22, %s158
          %s163 = smul.addr %s162, 64
          %s164 = scalar_lea.hbm %s1, %s163
          %s165 = sshll.u32 [#allocation3], 4
          %s166 = int_to_ptr.vmem [resolvable:$true] %s165
          %171 = dma.hbm_to_vmem [thread:$0]  %s164, 1024, %s166, [#allocation4], 64, 64, 4
        $region16: #{_lambda_.9} parent=11 // pred_fallthru
          _
        // Predicated region
        $region17: #{_lambda_.9} parent=11 // pred_check
          %p172 = pneg %p112
        $region18: #{_lambda_.9} parent=11 // pred_check_branch
          %174 = sbr.rel (%p172) target = $region20
        $region19: #{_lambda_.9} parent=11 // pred_region
          %s176 = ssub.s32 16, 16
          %177 = vsyncadd [#allocation6], %s176
          %s178 = smul.addr %s22, 16
          %s179 = scalar_lea.hbm %s2, %s178
          %s181 = sshll.u32 [#allocation5], 4
          %s182 = int_to_ptr.vmem [resolvable:$true] %s181
          %184 = dma.hbm_to_vmem [thread:$0]  %s179, 16, %s182, [#allocation6]
        $region20: #{_lambda_.9} parent=11 // pred_fallthru
          _
      $region12: #{_lambda_.9} parent=5 // pred_fallthru
        _
      %p185 = scmp.lt.s32.totalorder %s11, 2
      // Predicated region
      $region21: #{_lambda_.9} parent=5 // pred_check
        %p186 = pneg %p185
      $region22: #{_lambda_.9} parent=5 // pred_check_branch
        %188 = sbr.rel (%p186) target = $region24
      $region23: #{_lambda_.9} parent=5 // pred_region
        // Predicated region
        $region25: #{_lambda_.9} parent=23 // pred_check
          %p189 = pneg %p52
        $region26: #{_lambda_.9} parent=23 // pred_check_branch
          %191 = sbr.rel (%p189) target = $region28
        $region27: #{_lambda_.9} parent=23 // pred_region
          %s192 = smul.u32 32, %s18
          %p193 = scmp.lt.s32.totalorder %s192, 63
          %s194 = scalar_select %p193, %s192, 63
          %p195 = scmp.lt.s32.totalorder %s20, 0
          %s196 = scalar_select %p195, %s20, 0
          %s197 = sadd.s32 %s196, %s194
          %s198 = smul.addr %s197, 4
          %s199 = scalar_lea.vmem %s0, %s198
          %s200 = smul.u32 32, %s18
        $region28: #{_lambda_.9} parent=23 // pred_fallthru
          _
      $region24: #{_lambda_.9} parent=5 // pred_fallthru
        _
      %p201 = scmp.le.s32.totalorder 1, %s11
      %p202 = scmp.lt.s32.totalorder %s11, 3
      %p203 = pnand %p201, %p202
      %p204 = pneg %p203
      // Predicated region
      $region29: #{_lambda_.9} parent=5 // pred_check
        _
      $region30: #{_lambda_.9} parent=5 // pred_check_branch
        %206 = sbr.rel (%p203) target = $region32
      $region31: #{_lambda_.9} parent=5 // pred_region
        %s207 = ssub.s32 %s11, 1
        // Predicated region
        $region33: #{_lambda_.9} parent=31 // pred_check
          %p208 = pneg %p86
        $region34: #{_lambda_.9} parent=31 // pred_check_branch
          %210 = sbr.rel (%p208) target = $region36
        $region35: #{_lambda_.9} parent=31 // pred_region
          %211 = dma.done [#allocation4], 1024
        $region36: #{_lambda_.9} parent=31 // pred_fallthru
          _
        // Predicated region
        $region37: #{_lambda_.9} parent=31 // pred_check
          %p212 = pneg %p112
        $region38: #{_lambda_.9} parent=31 // pred_check_branch
          %214 = sbr.rel (%p212) target = $region40
        $region39: #{_lambda_.9} parent=31 // pred_region
          %215 = dma.done [#allocation6], 16
        $region40: #{_lambda_.9} parent=31 // pred_fallthru
          _
        %s216 = smul.u32 32, %s21
        %p217 = scmp.lt.s32.totalorder %s216, 63
        %s218 = scalar_select %p217, %s216, 63
        %p219 = scmp.lt.s32.totalorder %s23, 0
        %s220 = scalar_select %p219, %s23, 0
        %s221 = sadd.s32 %s220, %s218
        %s222 = smul.addr %s221, 4
        %s223 = scalar_lea.vmem %s0, %s222
        %p224 = pneg %p58
        %p225 = pneg %p55
        %p226 = pneg %p86
        %p227 = pneg %p83
        %p228 = pneg %p112
        %p229 = pneg %p109
        %p230 = pneg %p140
        %p231 = pneg %p137
        %s232 = smul.u32 32, %s21
        %p233 = scmp.lt.s32.totalorder %s232, 63
        %s234 = scalar_select %p233, %s232, 63
        %p235 = scmp.lt.s32.totalorder %s22, 0
        %s236 = scalar_select %p235, %s22, 0
        %s237 = sadd.s32 %s236, %s234
        %s238 = smul.addr %s237, 8
        %s239 = scalar_lea.vmem %s3, %s238
        %s240 = smul.u32 32, %s21
        %p241 = scmp.lt.s32.totalorder %s240, 63
        %s242 = scalar_select %p241, %s240, 63
        %p243 = scmp.lt.s32.totalorder %s23, 0
        %s244 = scalar_select %p243, %s23, 0
        %s245 = sadd.s32 %s244, %s242
        %s246 = smul.addr %s245, 4
        %s247 = scalar_lea.vmem %s0, %s246
        %s248 = smul.u32 32, %s21
        %s249 = smul.u32 16, %s23
        %s250 = smul.u32 32, %s21
        %p251 = scmp.lt.s32.totalorder %s250, 63
        %s252 = scalar_select %p251, %s250, 63
        %p253 = scmp.lt.s32.totalorder %s22, 0
        %s254 = scalar_select %p253, %s22, 0
        %s255 = sadd.s32 %s254, %s252
        %s256 = smul.addr %s255, 8
        %s257 = scalar_lea.vmem %s3, %s256
        %s258 = smul.u32 32, %s21
        %p260 = scmp.eq.s32.totalorder %s23, 0
        // Predicated region
        $region41: #{_lambda_.9} parent=31 // pred_check
          %p261 = pneg %p260
        $region42: #{_lambda_.9} parent=31 // pred_check_branch
          %263 = sbr.rel (%p261) target = $region44
        $region43: #{_lambda_.9} parent=31 // pred_region
          %264 = vst [vmem:[#allocation2] sm:$0xff] 0.0
          %265 = vst [vmem:[#allocation2 + $0x8] sm:$0xff] 0.0
          %266 = vst [vmem:[#allocation2 + $0x10] sm:$0xff] 0.0
          %267 = vst [vmem:[#allocation2 + $0x18] sm:$0xff] 0.0
          %268 = vst [vmem:[#allocation2 + $0x20] sm:$0xff] 0.0
          %269 = vst [vmem:[#allocation2 + $0x28] sm:$0xff] 0.0
          %270 = vst [vmem:[#allocation2 + $0x30] sm:$0xff] 0.0
          %271 = vst [vmem:[#allocation2 + $0x38] sm:$0xff] 0.0
          %272 = vst [vmem:[#allocation2 + $0x40] sm:$0xff] 0.0
          %273 = vst [vmem:[#allocation2 + $0x48] sm:$0xff] 0.0
          %274 = vst [vmem:[#allocation2 + $0x50] sm:$0xff] 0.0
          %275 = vst [vmem:[#allocation2 + $0x58] sm:$0xff] 0.0
          %276 = vst [vmem:[#allocation2 + $0x60] sm:$0xff] 0.0
          %277 = vst [vmem:[#allocation2 + $0x68] sm:$0xff] 0.0
          %278 = vst [vmem:[#allocation2 + $0x70] sm:$0xff] 0.0
          %279 = vst [vmem:[#allocation2 + $0x78] sm:$0xff] 0.0
          %280 = vst [vmem:[#allocation2 + $0x80] sm:$0xff] 0.0
          %281 = vst [vmem:[#allocation2 + $0x88] sm:$0xff] 0.0
          %282 = vst [vmem:[#allocation2 + $0x90] sm:$0xff] 0.0
          %283 = vst [vmem:[#allocation2 + $0x98] sm:$0xff] 0.0
          %284 = vst [vmem:[#allocation2 + $0xa0] sm:$0xff] 0.0
          %285 = vst [vmem:[#allocation2 + $0xa8] sm:$0xff] 0.0
          %286 = vst [vmem:[#allocation2 + $0xb0] sm:$0xff] 0.0
          %287 = vst [vmem:[#allocation2 + $0xb8] sm:$0xff] 0.0
          %288 = vst [vmem:[#allocation2 + $0xc0] sm:$0xff] 0.0
          %289 = vst [vmem:[#allocation2 + $0xc8] sm:$0xff] 0.0
          %290 = vst [vmem:[#allocation2 + $0xd0] sm:$0xff] 0.0
          %291 = vst [vmem:[#allocation2 + $0xd8] sm:$0xff] 0.0
          %292 = vst [vmem:[#allocation2 + $0xe0] sm:$0xff] 0.0
          %293 = vst [vmem:[#allocation2 + $0xe8] sm:$0xff] 0.0
          %294 = vst [vmem:[#allocation2 + $0xf0] sm:$0xff] 0.0
          %295 = vst [vmem:[#allocation2 + $0xf8] sm:$0xff] 0.0
        $region44: #{_lambda_.9} parent=31 // pred_fallthru
          _
        %v296 = vld [vmem:[#allocation2] sm:$0xff]
        %v297 = vld [vmem:[#allocation2 + $0x8] sm:$0xff]
        %v298 = vld [vmem:[#allocation2 + $0x10] sm:$0xff]
        %v299 = vld [vmem:[#allocation2 + $0x18] sm:$0xff]
        %v300 = vld [vmem:[#allocation2 + $0x20] sm:$0xff]
        %v301 = vld [vmem:[#allocation2 + $0x28] sm:$0xff]
        %v302 = vld [vmem:[#allocation2 + $0x30] sm:$0xff]
        %v303 = vld [vmem:[#allocation2 + $0x38] sm:$0xff]
        %v304 = vld [vmem:[#allocation2 + $0x40] sm:$0xff]
        %v305 = vld [vmem:[#allocation2 + $0x48] sm:$0xff]
        %v306 = vld [vmem:[#allocation2 + $0x50] sm:$0xff]
        %v307 = vld [vmem:[#allocation2 + $0x58] sm:$0xff]
        %v308 = vld [vmem:[#allocation2 + $0x60] sm:$0xff]
        %v309 = vld [vmem:[#allocation2 + $0x68] sm:$0xff]
        %v310 = vld [vmem:[#allocation2 + $0x70] sm:$0xff]
        %v311 = vld [vmem:[#allocation2 + $0x78] sm:$0xff]
        %v312 = vld [vmem:[#allocation2 + $0x80] sm:$0xff]
        %v313 = vld [vmem:[#allocation2 + $0x88] sm:$0xff]
        %v314 = vld [vmem:[#allocation2 + $0x90] sm:$0xff]
        %v315 = vld [vmem:[#allocation2 + $0x98] sm:$0xff]
        %v316 = vld [vmem:[#allocation2 + $0xa0] sm:$0xff]
        %v317 = vld [vmem:[#allocation2 + $0xa8] sm:$0xff]
        %v318 = vld [vmem:[#allocation2 + $0xb0] sm:$0xff]
        %v319 = vld [vmem:[#allocation2 + $0xb8] sm:$0xff]
        %v320 = vld [vmem:[#allocation2 + $0xc0] sm:$0xff]
        %v321 = vld [vmem:[#allocation2 + $0xc8] sm:$0xff]
        %v322 = vld [vmem:[#allocation2 + $0xd0] sm:$0xff]
        %v323 = vld [vmem:[#allocation2 + $0xd8] sm:$0xff]
        %v324 = vld [vmem:[#allocation2 + $0xe0] sm:$0xff]
        %v325 = vld [vmem:[#allocation2 + $0xe8] sm:$0xff]
        %v326 = vld [vmem:[#allocation2 + $0xf0] sm:$0xff]
        %v327 = vld [vmem:[#allocation2 + $0xf8] sm:$0xff]
        %v328 = vld [vmem:[%s247] sm:$0xf]
        %v329 = vld [vmem:[%s247 + $0x4] sm:$0xf]
        %v330 = vld [vmem:[%s247 + $0x8] sm:$0xf]
        %v331 = vld [vmem:[%s247 + $0xc] sm:$0xf]
        %v332 = vld [vmem:[%s247 + $0x10] sm:$0xf]
        %v333 = vld [vmem:[%s247 + $0x14] sm:$0xf]
        %v334 = vld [vmem:[%s247 + $0x18] sm:$0xf]
        %v335 = vld [vmem:[%s247 + $0x1c] sm:$0xf]
        %v336 = vld [vmem:[%s247 + $0x20] sm:$0xf]
        %v337 = vld [vmem:[%s247 + $0x24] sm:$0xf]
        %v338 = vld [vmem:[%s247 + $0x28] sm:$0xf]
        %v339 = vld [vmem:[%s247 + $0x2c] sm:$0xf]
        %v340 = vld [vmem:[%s247 + $0x30] sm:$0xf]
        %v341 = vld [vmem:[%s247 + $0x34] sm:$0xf]
        %v342 = vld [vmem:[%s247 + $0x38] sm:$0xf]
        %v343 = vld [vmem:[%s247 + $0x3c] sm:$0xf]
        %v344 = vld [vmem:[%s247 + $0x40] sm:$0xf]
        %v345 = vld [vmem:[%s247 + $0x44] sm:$0xf]
        %v346 = vld [vmem:[%s247 + $0x48] sm:$0xf]
        %v347 = vld [vmem:[%s247 + $0x4c] sm:$0xf]
        %v348 = vld [vmem:[%s247 + $0x50] sm:$0xf]
        %v349 = vld [vmem:[%s247 + $0x54] sm:$0xf]
        %v350 = vld [vmem:[%s247 + $0x58] sm:$0xf]
        %v351 = vld [vmem:[%s247 + $0x5c] sm:$0xf]
        %v352 = vld [vmem:[%s247 + $0x60] sm:$0xf]
        %v353 = vld [vmem:[%s247 + $0x64] sm:$0xf]
        %v354 = vld [vmem:[%s247 + $0x68] sm:$0xf]
        %v355 = vld [vmem:[%s247 + $0x6c] sm:$0xf]
        %v356 = vld [vmem:[%s247 + $0x70] sm:$0xf]
        %v357 = vld [vmem:[%s247 + $0x74] sm:$0xf]
        %v358 = vld [vmem:[%s247 + $0x78] sm:$0xf]
        %v359 = vld [vmem:[%s247 + $0x7c] sm:$0xf]
        %v360 = vld [vmem:[#allocation3] sm:$0xf]
        %v361 = vld [vmem:[#allocation3 + $0x4] sm:$0xf]
        %v362 = vld [vmem:[#allocation3 + $0x8] sm:$0xf]
        %v363 = vld [vmem:[#allocation3 + $0xc] sm:$0xf]
        %v364 = vld [vmem:[#allocation3 + $0x10] sm:$0xf]
        %v365 = vld [vmem:[#allocation3 + $0x14] sm:$0xf]
        %v366 = vld [vmem:[#allocation3 + $0x18] sm:$0xf]
        %v367 = vld [vmem:[#allocation3 + $0x1c] sm:$0xf]
        %v368 = vld [vmem:[#allocation3 + $0x20] sm:$0xf]
        %v369 = vld [vmem:[#allocation3 + $0x24] sm:$0xf]
        %v370 = vld [vmem:[#allocation3 + $0x28] sm:$0xf]
        %v371 = vld [vmem:[#allocation3 + $0x2c] sm:$0xf]
        %v372 = vld [vmem:[#allocation3 + $0x30] sm:$0xf]
        %v373 = vld [vmem:[#allocation3 + $0x34] sm:$0xf]
        %v374 = vld [vmem:[#allocation3 + $0x38] sm:$0xf]
        %v375 = vld [vmem:[#allocation3 + $0x3c] sm:$0xf]
        %v408 = vunpack.c.l.b16 %v328
        %v409 = vunpack.c.l.b16 %v329
        %v410 = vunpack.c.l.b16 %v330
        %v411 = vunpack.c.l.b16 %v331
        %v412 = vunpack.c.l.b16 %v332
        %v413 = vunpack.c.l.b16 %v333
        %v414 = vunpack.c.l.b16 %v334
        %v415 = vunpack.c.l.b16 %v335
        %v416 = vunpack.c.l.b16 %v336
        %v417 = vunpack.c.l.b16 %v337
        %v418 = vunpack.c.l.b16 %v338
        %v419 = vunpack.c.l.b16 %v339
        %v420 = vunpack.c.l.b16 %v340
        %v421 = vunpack.c.l.b16 %v341
        %v422 = vunpack.c.l.b16 %v342
        %v423 = vunpack.c.l.b16 %v343
        %v424 = vunpack.c.l.b16 %v344
        %v425 = vunpack.c.l.b16 %v345
        %v426 = vunpack.c.l.b16 %v346
        %v427 = vunpack.c.l.b16 %v347
        %v428 = vunpack.c.l.b16 %v348
        %v429 = vunpack.c.l.b16 %v349
        %v430 = vunpack.c.l.b16 %v350
        %v431 = vunpack.c.l.b16 %v351
        %v432 = vunpack.c.l.b16 %v352
        %v433 = vunpack.c.l.b16 %v353
        %v434 = vunpack.c.l.b16 %v354
        %v435 = vunpack.c.l.b16 %v355
        %v436 = vunpack.c.l.b16 %v356
        %v437 = vunpack.c.l.b16 %v357
        %v438 = vunpack.c.l.b16 %v358
        %v439 = vunpack.c.l.b16 %v359
        %v440 = vpack.c.b16 %v409, %v408
        %v441 = vpack.c.b16 %v411, %v410
        %v442 = vpack.c.b16 %v413, %v412
        %v443 = vpack.c.b16 %v415, %v414
        %v444 = vpack.c.b16 %v417, %v416
        %v445 = vpack.c.b16 %v419, %v418
        %v446 = vpack.c.b16 %v421, %v420
        %v447 = vpack.c.b16 %v423, %v422
        %v448 = vpack.c.b16 %v425, %v424
        %v449 = vpack.c.b16 %v427, %v426
        %v450 = vpack.c.b16 %v429, %v428
        %v451 = vpack.c.b16 %v431, %v430
        %v452 = vpack.c.b16 %v433, %v432
        %v453 = vpack.c.b16 %v435, %v434
        %v454 = vpack.c.b16 %v437, %v436
        %v455 = vpack.c.b16 %v439, %v438
        %v488 = vunpack.c.l.b16 %v360
        %v489 = vunpack.c.l.b16 %v361
        %v490 = vunpack.c.l.b16 %v362
        %v491 = vunpack.c.l.b16 %v363
        %v492 = vunpack.c.l.b16 %v364
        %v493 = vunpack.c.l.b16 %v365
        %v494 = vunpack.c.l.b16 %v366
        %v495 = vunpack.c.l.b16 %v367
        %v496 = vunpack.c.l.b16 %v368
        %v497 = vunpack.c.l.b16 %v369
        %v498 = vunpack.c.l.b16 %v370
        %v499 = vunpack.c.l.b16 %v371
        %v500 = vunpack.c.l.b16 %v372
        %v501 = vunpack.c.l.b16 %v373
        %v502 = vunpack.c.l.b16 %v374
        %v503 = vunpack.c.l.b16 %v375
        %v504 = vpack.c.b16 %v489, %v488
        %v505 = vpack.c.b16 %v491, %v490
        %v506 = vpack.c.b16 %v493, %v492
        %v507 = vpack.c.b16 %v495, %v494
        %v508 = vpack.c.b16 %v497, %v496
        %v509 = vpack.c.b16 %v499, %v498
        %v510 = vpack.c.b16 %v501, %v500
        %v511 = vpack.c.b16 %v503, %v502
        %520 = vmatprep.subr.bf16.mxu0 0
        %521 = vmatpush1.bf16.msra.mxu0 %v511
        %522 = vmatprep.subr.bf16.mxu0 0
        %523 = vmatpush1.bf16.msra.mxu0 %v510
        %524 = vmatprep.subr.bf16.mxu0 0
        %525 = vmatpush1.bf16.msra.mxu0 %v509
        %526 = vmatprep.subr.bf16.mxu0 0
        %527 = vmatpush1.bf16.msra.mxu0 %v508
        %528 = vmatprep.subr.bf16.mxu0 0
        %529 = vmatpush1.bf16.msra.mxu0 %v507
        %530 = vmatprep.subr.bf16.mxu0 0
        %531 = vmatpush1.bf16.msra.mxu0 %v506
        %532 = vmatprep.subr.bf16.mxu0 0
        %533 = vmatpush1.bf16.msra.mxu0 %v505
        %534 = vmatprep.subr.bf16.mxu0 0
        %535 = vmatpush1.bf16.msra.mxu0 %v504
        %536 = vmatprep.subr.bf16.mxu0 0
        %537 = vmatpush2.bf16.msra.mxu0 0
        %538 = vmatprep.subr.bf16.mxu0 0
        %539 = vmatpush2.bf16.msra.mxu0 0
        %540 = vmatprep.subr.bf16.mxu0 0
        %541 = vmatpush2.bf16.msra.mxu0 0
        %542 = vmatprep.subr.bf16.mxu0 0
        %543 = vmatpush2.bf16.msra.mxu0 0
        %544 = vmatprep.subr.bf16.mxu0 0
        %545 = vmatpush2.bf16.msra.mxu0 0
        %546 = vmatprep.subr.bf16.mxu0 0
        %547 = vmatpush2.bf16.msra.mxu0 0
        %548 = vmatprep.subr.bf16.mxu0 0
        %549 = vmatpush2.bf16.msra.mxu0 0
        %550 = vmatprep.subr.bf16.mxu0 0
        %551 = vmatpush2.bf16.msra.mxu0 0
        %552 = vmatprep.mubr.bf16.mxu0 0
        %553 = vmatmul.mubr.bf16.gmra.mxu0 %v440
        %v554 = vpop.f32.mrf.mxu0
        %v555 = vadd.f32 0.0, %v554
        %v556 = vpop.f32.mrf.mxu0
        %v557 = vpop.f32.mrf.mxu0
        %v558 = vadd.f32 0.0, %v557
        %v559 = vpop.f32.mrf.mxu0
        %560 = vmatprep.mubr.bf16.mxu0 0
        %561 = vmatmul.mubr.bf16.gmra.mxu0 %v441
        %v562 = vpop.f32.mrf.mxu0
        %v563 = vadd.f32 0.0, %v562
        %v564 = vpop.f32.mrf.mxu0
        %v565 = vpop.f32.mrf.mxu0
        %v566 = vadd.f32 0.0, %v565
        %v567 = vpop.f32.mrf.mxu0
        %568 = vmatprep.mubr.bf16.mxu0 0
        %569 = vmatmul.mubr.bf16.gmra.mxu0 %v442
        %v570 = vpop.f32.mrf.mxu0
        %v571 = vadd.f32 0.0, %v570
        %v572 = vpop.f32.mrf.mxu0
        %v573 = vpop.f32.mrf.mxu0
        %v574 = vadd.f32 0.0, %v573
        %v575 = vpop.f32.mrf.mxu0
        %576 = vmatprep.mubr.bf16.mxu0 0
        %577 = vmatmul.mubr.bf16.gmra.mxu0 %v443
        %v578 = vpop.f32.mrf.mxu0
        %v579 = vadd.f32 0.0, %v578
        %v580 = vpop.f32.mrf.mxu0
        %v581 = vpop.f32.mrf.mxu0
        %v582 = vadd.f32 0.0, %v581
        %v583 = vpop.f32.mrf.mxu0
        %584 = vmatprep.mubr.bf16.mxu0 0
        %585 = vmatmul.mubr.bf16.gmra.mxu0 %v444
        %v586 = vpop.f32.mrf.mxu0
        %v587 = vadd.f32 0.0, %v586
        %v588 = vpop.f32.mrf.mxu0
        %v589 = vpop.f32.mrf.mxu0
        %v590 = vadd.f32 0.0, %v589
        %v591 = vpop.f32.mrf.mxu0
        %592 = vmatprep.mubr.bf16.mxu0 0
        %593 = vmatmul.mubr.bf16.gmra.mxu0 %v445
        %v594 = vpop.f32.mrf.mxu0
        %v595 = vadd.f32 0.0, %v594
        %v596 = vpop.f32.mrf.mxu0
        %v597 = vpop.f32.mrf.mxu0
        %v598 = vadd.f32 0.0, %v597
        %v599 = vpop.f32.mrf.mxu0
        %600 = vmatprep.mubr.bf16.mxu0 0
        %601 = vmatmul.mubr.bf16.gmra.mxu0 %v446
        %v602 = vpop.f32.mrf.mxu0
        %v603 = vadd.f32 0.0, %v602
        %v604 = vpop.f32.mrf.mxu0
        %v605 = vpop.f32.mrf.mxu0
        %v606 = vadd.f32 0.0, %v605
        %v607 = vpop.f32.mrf.mxu0
        %608 = vmatprep.mubr.bf16.mxu0 0
        %609 = vmatmul.mubr.bf16.gmra.mxu0 %v447
        %v610 = vpop.f32.mrf.mxu0
        %v611 = vadd.f32 0.0, %v610
        %v612 = vpop.f32.mrf.mxu0
        %v613 = vpop.f32.mrf.mxu0
        %v614 = vadd.f32 0.0, %v613
        %v615 = vpop.f32.mrf.mxu0
        %616 = vmatprep.mubr.bf16.mxu0 0
        %617 = vmatmul.mubr.bf16.gmra.mxu0 %v448
        %v618 = vpop.f32.mrf.mxu0
        %v619 = vadd.f32 0.0, %v618
        %v620 = vpop.f32.mrf.mxu0
        %v621 = vpop.f32.mrf.mxu0
        %v622 = vadd.f32 0.0, %v621
        %v623 = vpop.f32.mrf.mxu0
        %624 = vmatprep.mubr.bf16.mxu0 0
        %625 = vmatmul.mubr.bf16.gmra.mxu0 %v449
        %v626 = vpop.f32.mrf.mxu0
        %v627 = vadd.f32 0.0, %v626
        %v628 = vpop.f32.mrf.mxu0
        %v629 = vpop.f32.mrf.mxu0
        %v630 = vadd.f32 0.0, %v629
        %v631 = vpop.f32.mrf.mxu0
        %632 = vmatprep.mubr.bf16.mxu0 0
        %633 = vmatmul.mubr.bf16.gmra.mxu0 %v450
        %v634 = vpop.f32.mrf.mxu0
        %v635 = vadd.f32 0.0, %v634
        %v636 = vpop.f32.mrf.mxu0
        %v637 = vpop.f32.mrf.mxu0
        %v638 = vadd.f32 0.0, %v637
        %v639 = vpop.f32.mrf.mxu0
        %640 = vmatprep.mubr.bf16.mxu0 0
        %641 = vmatmul.mubr.bf16.gmra.mxu0 %v451
        %v642 = vpop.f32.mrf.mxu0
        %v643 = vadd.f32 0.0, %v642
        %v644 = vpop.f32.mrf.mxu0
        %v645 = vpop.f32.mrf.mxu0
        %v646 = vadd.f32 0.0, %v645
        %v647 = vpop.f32.mrf.mxu0
        %648 = vmatprep.mubr.bf16.mxu0 0
        %649 = vmatmul.mubr.bf16.gmra.mxu0 %v452
        %v650 = vpop.f32.mrf.mxu0
        %v651 = vadd.f32 0.0, %v650
        %v652 = vpop.f32.mrf.mxu0
        %v653 = vpop.f32.mrf.mxu0
        %v654 = vadd.f32 0.0, %v653
        %v655 = vpop.f32.mrf.mxu0
        %656 = vmatprep.mubr.bf16.mxu0 0
        %657 = vmatmul.mubr.bf16.gmra.mxu0 %v453
        %v658 = vpop.f32.mrf.mxu0
        %v659 = vadd.f32 0.0, %v658
        %v660 = vpop.f32.mrf.mxu0
        %v661 = vpop.f32.mrf.mxu0
        %v662 = vadd.f32 0.0, %v661
        %v663 = vpop.f32.mrf.mxu0
        %664 = vmatprep.mubr.bf16.mxu0 0
        %665 = vmatmul.mubr.bf16.gmra.mxu0 %v454
        %v666 = vpop.f32.mrf.mxu0
        %v667 = vadd.f32 0.0, %v666
        %v668 = vpop.f32.mrf.mxu0
        %v669 = vpop.f32.mrf.mxu0
        %v670 = vadd.f32 0.0, %v669
        %v671 = vpop.f32.mrf.mxu0
        %672 = vmatprep.mubr.bf16.mxu0 0
        %673 = vmatmul.mubr.bf16.gmra.mxu0 %v455
        %v674 = vpop.f32.mrf.mxu0
        %v675 = vadd.f32 0.0, %v674
        %v676 = vpop.f32.mrf.mxu0
        %v677 = vpop.f32.mrf.mxu0
        %v678 = vadd.f32 0.0, %v677
        %v679 = vpop.f32.mrf.mxu0
        %680 = vdwg.mxu0
        %v681 = vadd.f32 %v296, %v555
        %v682 = vadd.f32 %v297, %v558
        %v683 = vadd.f32 %v298, %v563
        %v684 = vadd.f32 %v299, %v566
        %v685 = vadd.f32 %v300, %v571
        %v686 = vadd.f32 %v301, %v574
        %v687 = vadd.f32 %v302, %v579
        %v688 = vadd.f32 %v303, %v582
        %v689 = vadd.f32 %v304, %v587
        %v690 = vadd.f32 %v305, %v590
        %v691 = vadd.f32 %v306, %v595
        %v692 = vadd.f32 %v307, %v598
        %v693 = vadd.f32 %v308, %v603
        %v694 = vadd.f32 %v309, %v606
        %v695 = vadd.f32 %v310, %v611
        %v696 = vadd.f32 %v311, %v614
        %v697 = vadd.f32 %v312, %v619
        %v698 = vadd.f32 %v313, %v622
        %v699 = vadd.f32 %v314, %v627
        %v700 = vadd.f32 %v315, %v630
        %v701 = vadd.f32 %v316, %v635
        %v702 = vadd.f32 %v317, %v638
        %v703 = vadd.f32 %v318, %v643
        %v704 = vadd.f32 %v319, %v646
        %v705 = vadd.f32 %v320, %v651
        %v706 = vadd.f32 %v321, %v654
        %v707 = vadd.f32 %v322, %v659
        %v708 = vadd.f32 %v323, %v662
        %v709 = vadd.f32 %v324, %v667
        %v710 = vadd.f32 %v325, %v670
        %v711 = vadd.f32 %v326, %v675
        %v712 = vadd.f32 %v327, %v678
        %713 = vst [vmem:[#allocation2] sm:$0xff] %v681
        %714 = vst [vmem:[#allocation2 + $0x8] sm:$0xff] %v682
        %715 = vst [vmem:[#allocation2 + $0x10] sm:$0xff] %v683
        %716 = vst [vmem:[#allocation2 + $0x18] sm:$0xff] %v684
        %717 = vst [vmem:[#allocation2 + $0x20] sm:$0xff] %v685
        %718 = vst [vmem:[#allocation2 + $0x28] sm:$0xff] %v686
        %719 = vst [vmem:[#allocation2 + $0x30] sm:$0xff] %v687
        %720 = vst [vmem:[#allocation2 + $0x38] sm:$0xff] %v688
        %721 = vst [vmem:[#allocation2 + $0x40] sm:$0xff] %v689
        %722 = vst [vmem:[#allocation2 + $0x48] sm:$0xff] %v690
        %723 = vst [vmem:[#allocation2 + $0x50] sm:$0xff] %v691
        %724 = vst [vmem:[#allocation2 + $0x58] sm:$0xff] %v692
        %725 = vst [vmem:[#allocation2 + $0x60] sm:$0xff] %v693
        %726 = vst [vmem:[#allocation2 + $0x68] sm:$0xff] %v694
        %727 = vst [vmem:[#allocation2 + $0x70] sm:$0xff] %v695
        %728 = vst [vmem:[#allocation2 + $0x78] sm:$0xff] %v696
        %729 = vst [vmem:[#allocation2 + $0x80] sm:$0xff] %v697
        %730 = vst [vmem:[#allocation2 + $0x88] sm:$0xff] %v698
        %731 = vst [vmem:[#allocation2 + $0x90] sm:$0xff] %v699
        %732 = vst [vmem:[#allocation2 + $0x98] sm:$0xff] %v700
        %733 = vst [vmem:[#allocation2 + $0xa0] sm:$0xff] %v701
        %734 = vst [vmem:[#allocation2 + $0xa8] sm:$0xff] %v702
        %735 = vst [vmem:[#allocation2 + $0xb0] sm:$0xff] %v703
        %736 = vst [vmem:[#allocation2 + $0xb8] sm:$0xff] %v704
        %737 = vst [vmem:[#allocation2 + $0xc0] sm:$0xff] %v705
        %738 = vst [vmem:[#allocation2 + $0xc8] sm:$0xff] %v706
        %739 = vst [vmem:[#allocation2 + $0xd0] sm:$0xff] %v707
        %740 = vst [vmem:[#allocation2 + $0xd8] sm:$0xff] %v708
        %741 = vst [vmem:[#allocation2 + $0xe0] sm:$0xff] %v709
        %742 = vst [vmem:[#allocation2 + $0xe8] sm:$0xff] %v710
        %743 = vst [vmem:[#allocation2 + $0xf0] sm:$0xff] %v711
        %744 = vst [vmem:[#allocation2 + $0xf8] sm:$0xff] %v712
        // Predicated region
        $region45: #{_lambda_.9} parent=31 // pred_check
          %p745 = pneg %p260
        $region46: #{_lambda_.9} parent=31 // pred_check_branch
          %747 = sbr.rel (%p745) target = $region48
        $region47: #{_lambda_.9} parent=31 // pred_region
          %v748 = vld [vmem:[#allocation2] sm:$0xff]
          %v749 = vld [vmem:[#allocation2 + $0x8] sm:$0xff]
          %v750 = vld [vmem:[#allocation2 + $0x10] sm:$0xff]
          %v751 = vld [vmem:[#allocation2 + $0x18] sm:$0xff]
          %v752 = vld [vmem:[#allocation2 + $0x20] sm:$0xff]
          %v753 = vld [vmem:[#allocation2 + $0x28] sm:$0xff]
          %v754 = vld [vmem:[#allocation2 + $0x30] sm:$0xff]
          %v755 = vld [vmem:[#allocation2 + $0x38] sm:$0xff]
          %v756 = vld [vmem:[#allocation2 + $0x40] sm:$0xff]
          %v757 = vld [vmem:[#allocation2 + $0x48] sm:$0xff]
          %v758 = vld [vmem:[#allocation2 + $0x50] sm:$0xff]
          %v759 = vld [vmem:[#allocation2 + $0x58] sm:$0xff]
          %v760 = vld [vmem:[#allocation2 + $0x60] sm:$0xff]
          %v761 = vld [vmem:[#allocation2 + $0x68] sm:$0xff]
          %v762 = vld [vmem:[#allocation2 + $0x70] sm:$0xff]
          %v763 = vld [vmem:[#allocation2 + $0x78] sm:$0xff]
          %v764 = vld [vmem:[#allocation2 + $0x80] sm:$0xff]
          %v765 = vld [vmem:[#allocation2 + $0x88] sm:$0xff]
          %v766 = vld [vmem:[#allocation2 + $0x90] sm:$0xff]
          %v767 = vld [vmem:[#allocation2 + $0x98] sm:$0xff]
          %v768 = vld [vmem:[#allocation2 + $0xa0] sm:$0xff]
          %v769 = vld [vmem:[#allocation2 + $0xa8] sm:$0xff]
          %v770 = vld [vmem:[#allocation2 + $0xb0] sm:$0xff]
          %v771 = vld [vmem:[#allocation2 + $0xb8] sm:$0xff]
          %v772 = vld [vmem:[#allocation2 + $0xc0] sm:$0xff]
          %v773 = vld [vmem:[#allocation2 + $0xc8] sm:$0xff]
          %v774 = vld [vmem:[#allocation2 + $0xd0] sm:$0xff]
          %v775 = vld [vmem:[#allocation2 + $0xd8] sm:$0xff]
          %v776 = vld [vmem:[#allocation2 + $0xe0] sm:$0xff]
          %v777 = vld [vmem:[#allocation2 + $0xe8] sm:$0xff]
          %v778 = vld [vmem:[#allocation2 + $0xf0] sm:$0xff]
          %v779 = vld [vmem:[#allocation2 + $0xf8] sm:$0xff]
          %v780 = vld [vmem:[#allocation5] sm:$0x1]
          %v782 = vlaneseq
          %v783 = vshrl.u32 %v782, 7
          %v784 = vsub.s32 0, %v783
          %v785 = vrot.slane %v780, %v784
          %v787 = vadd.f32 %v748, %v785
          %v788 = vadd.f32 %v749, %v785
          %v789 = vadd.f32 %v750, %v785
          %v790 = vadd.f32 %v751, %v785
          %v791 = vadd.f32 %v752, %v785
          %v792 = vadd.f32 %v753, %v785
          %v793 = vadd.f32 %v754, %v785
          %v794 = vadd.f32 %v755, %v785
          %v795 = vadd.f32 %v756, %v785
          %v796 = vadd.f32 %v757, %v785
          %v797 = vadd.f32 %v758, %v785
          %v798 = vadd.f32 %v759, %v785
          %v799 = vadd.f32 %v760, %v785
          %v800 = vadd.f32 %v761, %v785
          %v801 = vadd.f32 %v762, %v785
          %v802 = vadd.f32 %v763, %v785
          %v803 = vadd.f32 %v764, %v785
          %v804 = vadd.f32 %v765, %v785
          %v805 = vadd.f32 %v766, %v785
          %v806 = vadd.f32 %v767, %v785
          %v807 = vadd.f32 %v768, %v785
          %v808 = vadd.f32 %v769, %v785
          %v809 = vadd.f32 %v770, %v785
          %v810 = vadd.f32 %v771, %v785
          %v811 = vadd.f32 %v772, %v785
          %v812 = vadd.f32 %v773, %v785
          %v813 = vadd.f32 %v774, %v785
          %v814 = vadd.f32 %v775, %v785
          %v815 = vadd.f32 %v776, %v785
          %v816 = vadd.f32 %v777, %v785
          %v817 = vadd.f32 %v778, %v785
          %v818 = vadd.f32 %v779, %v785
          %v819 = vmax.f32 %v787, 0.0
          %v820 = vmax.f32 %v788, 0.0
          %v821 = vmax.f32 %v789, 0.0
          %v822 = vmax.f32 %v790, 0.0
          %v823 = vmax.f32 %v791, 0.0
          %v824 = vmax.f32 %v792, 0.0
          %v825 = vmax.f32 %v793, 0.0
          %v826 = vmax.f32 %v794, 0.0
          %v827 = vmax.f32 %v795, 0.0
          %v828 = vmax.f32 %v796, 0.0
          %v829 = vmax.f32 %v797, 0.0
          %v830 = vmax.f32 %v798, 0.0
          %v831 = vmax.f32 %v799, 0.0
          %v832 = vmax.f32 %v800, 0.0
          %v833 = vmax.f32 %v801, 0.0
          %v834 = vmax.f32 %v802, 0.0
          %v835 = vmax.f32 %v803, 0.0
          %v836 = vmax.f32 %v804, 0.0
          %v837 = vmax.f32 %v805, 0.0
          %v838 = vmax.f32 %v806, 0.0
          %v839 = vmax.f32 %v807, 0.0
          %v840 = vmax.f32 %v808, 0.0
          %v841 = vmax.f32 %v809, 0.0
          %v842 = vmax.f32 %v810, 0.0
          %v843 = vmax.f32 %v811, 0.0
          %v844 = vmax.f32 %v812, 0.0
          %v845 = vmax.f32 %v813, 0.0
          %v846 = vmax.f32 %v814, 0.0
          %v847 = vmax.f32 %v815, 0.0
          %v848 = vmax.f32 %v816, 0.0
          %v849 = vmax.f32 %v817, 0.0
          %v850 = vmax.f32 %v818, 0.0
          %851 = vst [vmem:[%s257] sm:$0xff] %v819
          %852 = vst [vmem:[%s257 + $0x8] sm:$0xff] %v820
          %853 = vst [vmem:[%s257 + $0x10] sm:$0xff] %v821
          %854 = vst [vmem:[%s257 + $0x18] sm:$0xff] %v822
          %855 = vst [vmem:[%s257 + $0x20] sm:$0xff] %v823
          %856 = vst [vmem:[%s257 + $0x28] sm:$0xff] %v824
          %857 = vst [vmem:[%s257 + $0x30] sm:$0xff] %v825
          %858 = vst [vmem:[%s257 + $0x38] sm:$0xff] %v826
          %859 = vst [vmem:[%s257 + $0x40] sm:$0xff] %v827
          %860 = vst [vmem:[%s257 + $0x48] sm:$0xff] %v828
          %861 = vst [vmem:[%s257 + $0x50] sm:$0xff] %v829
          %862 = vst [vmem:[%s257 + $0x58] sm:$0xff] %v830
          %863 = vst [vmem:[%s257 + $0x60] sm:$0xff] %v831
          %864 = vst [vmem:[%s257 + $0x68] sm:$0xff] %v832
          %865 = vst [vmem:[%s257 + $0x70] sm:$0xff] %v833
          %866 = vst [vmem:[%s257 + $0x78] sm:$0xff] %v834
          %867 = vst [vmem:[%s257 + $0x80] sm:$0xff] %v835
          %868 = vst [vmem:[%s257 + $0x88] sm:$0xff] %v836
          %869 = vst [vmem:[%s257 + $0x90] sm:$0xff] %v837
          %870 = vst [vmem:[%s257 + $0x98] sm:$0xff] %v838
          %871 = vst [vmem:[%s257 + $0xa0] sm:$0xff] %v839
          %872 = vst [vmem:[%s257 + $0xa8] sm:$0xff] %v840
          %873 = vst [vmem:[%s257 + $0xb0] sm:$0xff] %v841
          %874 = vst [vmem:[%s257 + $0xb8] sm:$0xff] %v842
          %875 = vst [vmem:[%s257 + $0xc0] sm:$0xff] %v843
          %876 = vst [vmem:[%s257 + $0xc8] sm:$0xff] %v844
          %877 = vst [vmem:[%s257 + $0xd0] sm:$0xff] %v845
          %878 = vst [vmem:[%s257 + $0xd8] sm:$0xff] %v846
          %879 = vst [vmem:[%s257 + $0xe0] sm:$0xff] %v847
          %880 = vst [vmem:[%s257 + $0xe8] sm:$0xff] %v848
          %881 = vst [vmem:[%s257 + $0xf0] sm:$0xff] %v849
          %882 = vst [vmem:[%s257 + $0xf8] sm:$0xff] %v850
        $region48: #{_lambda_.9} parent=31 // pred_fallthru
          _
        %s883 = smul.u32 32, %s21
        %p884 = scmp.lt.s32.totalorder %s883, 63
        %s885 = scalar_select %p884, %s883, 63
        %p886 = scmp.lt.s32.totalorder %s22, 0
        %s887 = scalar_select %p886, %s22, 0
        %s888 = sadd.s32 %s887, %s885
        %s889 = smul.addr %s888, 8
        %s890 = scalar_lea.vmem %s3, %s889
        // Predicated region
        $region49: #{_lambda_.9} parent=31 // pred_check
          %p891 = pneg %p137
        $region50: #{_lambda_.9} parent=31 // pred_check_branch
          %893 = sbr.rel (%p891) target = $region52
        $region51: #{_lambda_.9} parent=31 // pred_region
          %s894 = smul.u32 32, %s21
        $region52: #{_lambda_.9} parent=31 // pred_fallthru
          _
      $region32: #{_lambda_.9} parent=5 // pred_fallthru
        _
      %p895 = scmp.le.s32.totalorder 2, %s11
      // Predicated region
      $region53: #{_lambda_.9} parent=5 // pred_check
        %p896 = pneg %p895
      $region54: #{_lambda_.9} parent=5 // pred_check_branch
        %898 = sbr.rel (%p896) target = $region56
      $region55: #{_lambda_.9} parent=5 // pred_region
        %s899 = ssub.s32 %s11, 2
        // Predicated region
        $region57: #{_lambda_.9} parent=55 // pred_check
          %p900 = pneg %p143
        $region58: #{_lambda_.9} parent=55 // pred_check_branch
          %902 = sbr.rel (%p900) target = $region60
        $region59: #{_lambda_.9} parent=55 // pred_region
          %s903 = smul.u32 32, %s24
          %p904 = scmp.lt.s32.totalorder %s903, 63
          %s905 = scalar_select %p904, %s903, 63
          %p906 = scmp.lt.s32.totalorder %s25, 0
          %s907 = scalar_select %p906, %s25, 0
          %s908 = sadd.s32 %s907, %s905
          %s909 = smul.addr %s908, 8
          %s910 = scalar_lea.vmem %s3, %s909
        $region60: #{_lambda_.9} parent=55 // pred_fallthru
          _
      $region56: #{_lambda_.9} parent=5 // pred_fallthru
        _
    $region6: #{_lambda_.9} parent=1 // loop_footer
      %s15 = sadd.s32 1, %s11
    $region7: #{_lambda_.9} parent=1 // loop_footer_branch
      %10 = sbr.rel target = $region3
    $region8: #{_lambda_.9} parent=1 // loop_exit
      _
    %911 = vsyncpa [#allocation4], 1
    %s912 = scalar_lea.sflag [#allocation4], 1
    %913 = vsyncpa %s912, 1
    %914 = vsyncpa [#allocation6], 1

// kernel: _lambda_.10
$region0: #{_lambda_.10}
  #allocation0 [shape = 'u32[]', space=smem, size = 0x4, offset = 0x4, fixed_abs, tag = 'smem constant byte address 0x4 - core index']
  #allocation1 [shape = 'u32[144,128]{1,0:T(1,128)}', space=vmem, size = 0x12000, scoped, tag = 'internal scratch']
  #allocation2 [shape = 'f32[256,128]{1,0:T(8,128)}', space=vmem, size = 0x20000, scoped, tag = 'scratch operand']
  %s0 = inlined_call_operand.vmem [shape: f32[2,320,128], index: 0, kind: input, shape index: {}]
  %s1 = inlined_call_operand.vmem [shape: bf16[9,128,128], index: 1, kind: input, shape index: {}]
  %s2 = inlined_call_operand.vmem [shape: f32[1,128], index: 2, kind: input, shape index: {}]
  %s3 = inlined_call_operand.vmem [shape: f32[256,1], index: 3, kind: input, shape index: {}]
  %s4 = inlined_call_operand.vmem [shape: f32[2,320,128], index: 4, kind: output, shape index: {}]
  %s5 = sld [smem:[#allocation0]]
  $region49: #{_lambda_.10} parent=0
    _
  %s7 = ssub.s32 1, %s5
  %s8 = scalar_select 0, %s7, %s5
  loop: start=0, step=1, limit=4
  $region2: #{_lambda_.10} parent=0 // loop_pre_header
    _
  $region3: #{_lambda_.10} parent=0 // loop_header
    %s10 = sphi 0, %s14
    %p11 = scmp.ge.s32.totalorder %s10, 4
    %s20 = sphi 0, %s22
    %s23 = sphi 0, %s20
    %s24 = sphi 0, %s23
    %s40 = sphi 0, %s24
    %s44 = sphi 0, %s44
    %s46 = sphi 0, %s44
    %s47 = sphi 0, %s46
    %s61 = sphi 0, %s47
    %s65 = sphi 0, %s65
    %s67 = sphi 0, %s65
    %s68 = sphi 0, %s67
    %s82 = sphi 0, %s68
    %s86 = sphi 0, %s86
    %s88 = sphi 0, %s86
    %s89 = sphi 0, %s88
    %s103 = sphi 0, %s89
    %s109 = sphi 0, %s111
    %s112 = sphi 0, %s109
    %s113 = sphi 0, %s112
    %s129 = sphi 0, %s113
  $region4: #{_lambda_.10} parent=0 // loop_header_branch
    %13 = sbr.rel (%p11) target = $region8
  $region5: #{_lambda_.10} parent=0 // loop_body
    %s15 = ssub.s32 %s10, 1
    %s16 = ssub.s32 %s10, 2
    %s17 = sadd.s32 %s10, 1
    %s18 = ssub.s32 %s10, %s17
    %p19 = scmp.eq.s32.totalorder %s18, 0
    %s21 = sadd.s32 %s20, 1
    %s22 = scalar_select %p19, %s20, %s21
    %p25 = pneg %p19
    %p26 = scmp.eq.s32.totalorder %s10, 1
    %p27 = por %p25, %p26
    %p28 = scmp.ne.s32.totalorder %s20, %s23
    %p29 = scmp.eq.s32.totalorder %s10, 0
    %p30 = por %p28, %p29
    %p31 = scmp.ne.s32.totalorder %s20, %s23
    %p32 = scmp.eq.s32.totalorder %s15, 1
    %p33 = por %p31, %p32
    %p34 = scmp.ne.s32.totalorder %s23, %s24
    %p35 = scmp.eq.s32.totalorder %s15, 0
    %p36 = por %p34, %p35
    %p37 = scmp.ne.s32.totalorder %s23, %s24
    %p38 = scmp.eq.s32.totalorder %s16, 1
    %p39 = por %p37, %p38
    %p41 = scmp.ne.s32.totalorder %s24, %s40
    %p42 = scmp.eq.s32.totalorder %s16, 0
    %p43 = por %p41, %p42
    %s45 = sadd.s32 %s44, 1
    %p48 = scmp.eq.s32.totalorder %s10, 1
    %p49 = scmp.ne.s32.totalorder %s44, %s46
    %p50 = scmp.eq.s32.totalorder %s10, 0
    %p51 = por %p49, %p50
    %p52 = scmp.ne.s32.totalorder %s44, %s46
    %p53 = scmp.eq.s32.totalorder %s15, 1
    %p54 = por %p52, %p53
    %p55 = scmp.ne.s32.totalorder %s46, %s47
    %p56 = scmp.eq.s32.totalorder %s15, 0
    %p57 = por %p55, %p56
    %p58 = scmp.ne.s32.totalorder %s46, %s47
    %p59 = scmp.eq.s32.totalorder %s16, 1
    %p60 = por %p58, %p59
    %p62 = scmp.ne.s32.totalorder %s47, %s61
    %p63 = scmp.eq.s32.totalorder %s16, 0
    %p64 = por %p62, %p63
    %s66 = sadd.s32 %s65, 1
    %p69 = scmp.eq.s32.totalorder %s10, 1
    %p70 = scmp.ne.s32.totalorder %s65, %s67
    %p71 = scmp.eq.s32.totalorder %s10, 0
    %p72 = por %p70, %p71
    %p73 = scmp.ne.s32.totalorder %s65, %s67
    %p74 = scmp.eq.s32.totalorder %s15, 1
    %p75 = por %p73, %p74
    %p76 = scmp.ne.s32.totalorder %s67, %s68
    %p77 = scmp.eq.s32.totalorder %s15, 0
    %p78 = por %p76, %p77
    %p79 = scmp.ne.s32.totalorder %s67, %s68
    %p80 = scmp.eq.s32.totalorder %s16, 1
    %p81 = por %p79, %p80
    %p83 = scmp.ne.s32.totalorder %s68, %s82
    %p84 = scmp.eq.s32.totalorder %s16, 0
    %p85 = por %p83, %p84
    %s87 = sadd.s32 %s86, 1
    %p90 = scmp.eq.s32.totalorder %s10, 1
    %p91 = scmp.ne.s32.totalorder %s86, %s88
    %p92 = scmp.eq.s32.totalorder %s10, 0
    %p93 = por %p91, %p92
    %p94 = scmp.ne.s32.totalorder %s86, %s88
    %p95 = scmp.eq.s32.totalorder %s15, 1
    %p96 = por %p94, %p95
    %p97 = scmp.ne.s32.totalorder %s88, %s89
    %p98 = scmp.eq.s32.totalorder %s15, 0
    %p99 = por %p97, %p98
    %p100 = scmp.ne.s32.totalorder %s88, %s89
    %p101 = scmp.eq.s32.totalorder %s16, 1
    %p102 = por %p100, %p101
    %p104 = scmp.ne.s32.totalorder %s89, %s103
    %p105 = scmp.eq.s32.totalorder %s16, 0
    %p106 = por %p104, %p105
    %s107 = ssub.s32 %s10, %s17
    %p108 = scmp.eq.s32.totalorder %s107, 0
    %s110 = sadd.s32 %s109, 1
    %s111 = scalar_select %p108, %s109, %s110
    %p114 = pneg %p108
    %p115 = scmp.eq.s32.totalorder %s10, 1
    %p116 = por %p114, %p115
    %p117 = scmp.ne.s32.totalorder %s109, %s112
    %p118 = scmp.eq.s32.totalorder %s10, 0
    %p119 = por %p117, %p118
    %p120 = scmp.ne.s32.totalorder %s109, %s112
    %p121 = scmp.eq.s32.totalorder %s15, 1
    %p122 = por %p120, %p121
    %p123 = scmp.ne.s32.totalorder %s112, %s113
    %p124 = scmp.eq.s32.totalorder %s15, 0
    %p125 = por %p123, %p124
    %p126 = scmp.ne.s32.totalorder %s112, %s113
    %p127 = scmp.eq.s32.totalorder %s16, 1
    %p128 = por %p126, %p127
    %p130 = scmp.ne.s32.totalorder %s113, %s129
    %p131 = scmp.eq.s32.totalorder %s16, 0
    %p132 = por %p130, %p131
    %p133 = scmp.le.s32.totalorder 1, %s10
    %p134 = scmp.lt.s32.totalorder %s10, 3
    %p135 = pnand %p133, %p134
    %p136 = pneg %p135
    // Predicated region
    $region9: #{_lambda_.10} parent=5 // pred_check
      _
    $region10: #{_lambda_.10} parent=5 // pred_check_branch
      %138 = sbr.rel (%p135) target = $region12
    $region11: #{_lambda_.10} parent=5 // pred_region
      %s139 = ssub.s32 %s10, 1
      // Predicated region
      $region13: #{_lambda_.10} parent=11 // pred_check
        %p140 = pneg %p57
      $region14: #{_lambda_.10} parent=11 // pred_check_branch
        %142 = sbr.rel (%p140) target = $region16
      $region15: #{_lambda_.10} parent=11 // pred_region
        _
      $region16: #{_lambda_.10} parent=11 // pred_fallthru
        _
      // Predicated region
      $region17: #{_lambda_.10} parent=11 // pred_check
        %p143 = pneg %p78
      $region18: #{_lambda_.10} parent=11 // pred_check_branch
        %145 = sbr.rel (%p143) target = $region20
      $region19: #{_lambda_.10} parent=11 // pred_region
        _
      $region20: #{_lambda_.10} parent=11 // pred_fallthru
        _
      // Predicated region
      $region21: #{_lambda_.10} parent=11 // pred_check
        %p146 = pneg %p99
      $region22: #{_lambda_.10} parent=11 // pred_check_branch
        %148 = sbr.rel (%p146) target = $region24
      $region23: #{_lambda_.10} parent=11 // pred_region
        _
      $region24: #{_lambda_.10} parent=11 // pred_fallthru
        _
    $region12: #{_lambda_.10} parent=5 // pred_fallthru
      _
    %p149 = scmp.lt.s32.totalorder %s10, 2
    // Predicated region
    $region25: #{_lambda_.10} parent=5 // pred_check
      %p150 = pneg %p149
    $region26: #{_lambda_.10} parent=5 // pred_check_branch
      %152 = sbr.rel (%p150) target = $region28
    $region27: #{_lambda_.10} parent=5 // pred_region
      // Predicated region
      $region29: #{_lambda_.10} parent=27 // pred_check
        %p153 = pneg %p30
      $region30: #{_lambda_.10} parent=27 // pred_check_branch
        %155 = sbr.rel (%p153) target = $region32
      $region31: #{_lambda_.10} parent=27 // pred_region
        %p156 = scmp.lt.s32.totalorder %s10, 1
        %s157 = scalar_select %p156, %s10, 1
        %s158 = smul.addr %s157, 40
        %s159 = smul.addr %s158, 8
        %s160 = scalar_lea.vmem %s0, %s159
      $region32: #{_lambda_.10} parent=27 // pred_fallthru
        _
    $region28: #{_lambda_.10} parent=5 // pred_fallthru
      _
    %p161 = scmp.le.s32.totalorder 1, %s10
    %p162 = scmp.lt.s32.totalorder %s10, 3
    %p163 = pnand %p161, %p162
    %p164 = pneg %p163
    // Predicated region
    $region33: #{_lambda_.10} parent=5 // pred_check
      _
    $region34: #{_lambda_.10} parent=5 // pred_check_branch
      %166 = sbr.rel (%p163) target = $region36
    $region35: #{_lambda_.10} parent=5 // pred_region
      %s167 = ssub.s32 %s10, 1
      %p168 = scmp.lt.s32.totalorder %s15, 1
      %s169 = scalar_select %p168, %s15, 1
      %s170 = smul.addr %s169, 40
      %s171 = smul.addr %s170, 8
      %s172 = scalar_lea.vmem %s0, %s171
      %p173 = pneg %p36
      %p174 = pneg %p33
      %p175 = pneg %p57
      %p176 = pneg %p54
      %p177 = pneg %p78
      %p178 = pneg %p75
      %p179 = pneg %p99
      %p180 = pneg %p96
      %p181 = pneg %p125
      %p182 = pneg %p122
      %p183 = scmp.lt.s32.totalorder %s15, 1
      %s184 = scalar_select %p183, %s15, 1
      %s185 = smul.addr %s184, 40
      %s186 = smul.addr %s185, 8
      %s187 = scalar_lea.vmem %s4, %s186
      %p188 = scmp.lt.s32.totalorder %s15, 1
      %s189 = scalar_select %p188, %s15, 1
      %s190 = smul.addr %s189, 40
      %s191 = smul.addr %s190, 8
      %s192 = scalar_lea.vmem %s0, %s191
      %p193 = scmp.lt.s32.totalorder %s15, 1
      %s194 = scalar_select %p193, %s15, 1
      %s195 = smul.addr %s194, 40
      %s196 = smul.addr %s195, 8
      %s197 = scalar_lea.vmem %s4, %s196
      %v199 = vld [vmem:[%s192 + $0xf] sm:$0xff]
      %v200 = vld [vmem:[%s192 + $0x17] sm:$0xff]
      %v201 = vld [vmem:[%s192 + $0x1f] sm:$0xff]
      %v202 = vld [vmem:[%s192 + $0x27] sm:$0xff]
      %v203 = vld [vmem:[%s192 + $0x2f] sm:$0xff]
      %v204 = vld [vmem:[%s192 + $0x37] sm:$0xff]
      %v205 = vld [vmem:[%s192 + $0x3f] sm:$0xff]
      %v206 = vld [vmem:[%s192 + $0x47] sm:$0xff]
      %v207 = vld [vmem:[%s192 + $0x4f] sm:$0xff]
      %v208 = vld [vmem:[%s192 + $0x57] sm:$0xff]
      %v209 = vld [vmem:[%s192 + $0x5f] sm:$0xff]
      %v210 = vld [vmem:[%s192 + $0x67] sm:$0xff]
      %v211 = vld [vmem:[%s192 + $0x6f] sm:$0xff]
      %v212 = vld [vmem:[%s192 + $0x77] sm:$0xff]
      %v213 = vld [vmem:[%s192 + $0x7f] sm:$0xff]
      %v214 = vld [vmem:[%s192 + $0x87] sm:$0xff]
      %v215 = vld [vmem:[%s192 + $0x8f] sm:$0xff]
      %v216 = vld [vmem:[%s192 + $0x97] sm:$0xff]
      %v217 = vld [vmem:[%s192 + $0x9f] sm:$0xff]
      %v218 = vld [vmem:[%s192 + $0xa7] sm:$0xff]
      %v219 = vld [vmem:[%s192 + $0xaf] sm:$0xff]
      %v220 = vld [vmem:[%s192 + $0xb7] sm:$0xff]
      %v221 = vld [vmem:[%s192 + $0xbf] sm:$0xff]
      %v222 = vld [vmem:[%s192 + $0xc7] sm:$0xff]
      %v223 = vld [vmem:[%s192 + $0xcf] sm:$0xff]
      %v224 = vld [vmem:[%s192 + $0xd7] sm:$0xff]
      %v225 = vld [vmem:[%s192 + $0xdf] sm:$0xff]
      %v226 = vld [vmem:[%s192 + $0xe7] sm:$0xff]
      %v227 = vld [vmem:[%s192 + $0xef] sm:$0xff]
      %v228 = vld [vmem:[%s192 + $0xf7] sm:$0xff]
      %v229 = vld [vmem:[%s192 + $0xff] sm:$0xff]
      %v230 = vld [vmem:[%s192 + $0x107] sm:$0xff]
      %v231 = vpack.c.bf16 %v200, %v199
      %v232 = vpack.c.bf16 %v202, %v201
      %v233 = vpack.c.bf16 %v204, %v203
      %v234 = vpack.c.bf16 %v206, %v205
      %v235 = vpack.c.bf16 %v208, %v207
      %v236 = vpack.c.bf16 %v210, %v209
      %v237 = vpack.c.bf16 %v212, %v211
      %v238 = vpack.c.bf16 %v214, %v213
      %v239 = vpack.c.bf16 %v216, %v215
      %v240 = vpack.c.bf16 %v218, %v217
      %v241 = vpack.c.bf16 %v220, %v219
      %v242 = vpack.c.bf16 %v222, %v221
      %v243 = vpack.c.bf16 %v224, %v223
      %v244 = vpack.c.bf16 %v226, %v225
      %v245 = vpack.c.bf16 %v228, %v227
      %v246 = vpack.c.bf16 %v230, %v229
      %v247 = vld [vmem:[%s1] sm:$0xf]
      %v248 = vld [vmem:[%s1 + $0x4] sm:$0xf]
      %v249 = vld [vmem:[%s1 + $0x8] sm:$0xf]
      %v250 = vld [vmem:[%s1 + $0xc] sm:$0xf]
      %v251 = vld [vmem:[%s1 + $0x10] sm:$0xf]
      %v252 = vld [vmem:[%s1 + $0x14] sm:$0xf]
      %v253 = vld [vmem:[%s1 + $0x18] sm:$0xf]
      %v254 = vld [vmem:[%s1 + $0x1c] sm:$0xf]
      %v255 = vld [vmem:[%s1 + $0x20] sm:$0xf]
      %v256 = vld [vmem:[%s1 + $0x24] sm:$0xf]
      %v257 = vld [vmem:[%s1 + $0x28] sm:$0xf]
      %v258 = vld [vmem:[%s1 + $0x2c] sm:$0xf]
      %v259 = vld [vmem:[%s1 + $0x30] sm:$0xf]
      %v260 = vld [vmem:[%s1 + $0x34] sm:$0xf]
      %v261 = vld [vmem:[%s1 + $0x38] sm:$0xf]
      %v262 = vld [vmem:[%s1 + $0x3c] sm:$0xf]
      %v279 = vunpack.c.l.b16 %v247
      %v280 = vunpack.c.l.b16 %v248
      %v281 = vunpack.c.l.b16 %v249
      %v282 = vunpack.c.l.b16 %v250
      %v283 = vunpack.c.l.b16 %v251
      %v284 = vunpack.c.l.b16 %v252
      %v285 = vunpack.c.l.b16 %v253
      %v286 = vunpack.c.l.b16 %v254
      %v287 = vunpack.c.l.b16 %v255
      %v288 = vunpack.c.l.b16 %v256
      %v289 = vunpack.c.l.b16 %v257
      %v290 = vunpack.c.l.b16 %v258
      %v291 = vunpack.c.l.b16 %v259
      %v292 = vunpack.c.l.b16 %v260
      %v293 = vunpack.c.l.b16 %v261
      %v294 = vunpack.c.l.b16 %v262
      %v295 = vpack.c.b16 %v280, %v279
      %v296 = vpack.c.b16 %v282, %v281
      %v297 = vpack.c.b16 %v284, %v283
      %v298 = vpack.c.b16 %v286, %v285
      %v299 = vpack.c.b16 %v288, %v287
      %v300 = vpack.c.b16 %v290, %v289
      %v301 = vpack.c.b16 %v292, %v291
      %v302 = vpack.c.b16 %v294, %v293
      %311 = vmatprep.subr.bf16.mxu0 0
      %312 = vmatpush1.bf16.msra.mxu0 %v302
      %313 = vmatprep.subr.bf16.mxu0 0
      %314 = vmatpush1.bf16.msra.mxu0 %v301
      %315 = vmatprep.subr.bf16.mxu0 0
      %316 = vmatpush1.bf16.msra.mxu0 %v300
      %317 = vmatprep.subr.bf16.mxu0 0
      %318 = vmatpush1.bf16.msra.mxu0 %v299
      %319 = vmatprep.subr.bf16.mxu0 0
      %320 = vmatpush1.bf16.msra.mxu0 %v298
      %321 = vmatprep.subr.bf16.mxu0 0
      %322 = vmatpush1.bf16.msra.mxu0 %v297
      %323 = vmatprep.subr.bf16.mxu0 0
      %324 = vmatpush1.bf16.msra.mxu0 %v296
      %325 = vmatprep.subr.bf16.mxu0 0
      %326 = vmatpush1.bf16.msra.mxu0 %v295
      %327 = vmatprep.subr.bf16.mxu0 0
      %328 = vmatpush2.bf16.msra.mxu0 0
      %329 = vmatprep.subr.bf16.mxu0 0
      %330 = vmatpush2.bf16.msra.mxu0 0
      %331 = vmatprep.subr.bf16.mxu0 0
      %332 = vmatpush2.bf16.msra.mxu0 0
      %333 = vmatprep.subr.bf16.mxu0 0
      %334 = vmatpush2.bf16.msra.mxu0 0
      %335 = vmatprep.subr.bf16.mxu0 0
      %336 = vmatpush2.bf16.msra.mxu0 0
      %337 = vmatprep.subr.bf16.mxu0 0
      %338 = vmatpush2.bf16.msra.mxu0 0
      %339 = vmatprep.subr.bf16.mxu0 0
      %340 = vmatpush2.bf16.msra.mxu0 0
      %341 = vmatprep.subr.bf16.mxu0 0
      %342 = vmatpush2.bf16.msra.mxu0 0
      %343 = vmatprep.mubr.bf16.mxu0 0
      %344 = vmatmul.mubr.bf16.gmra.mxu0 %v231
      %v345 = vpop.f32.mrf.mxu0
      %v346 = vadd.f32 0.0, %v345
      %v347 = vpop.f32.mrf.mxu0
      %v348 = vpop.f32.mrf.mxu0
      %v349 = vadd.f32 0.0, %v348
      %v350 = vpop.f32.mrf.mxu0
      %351 = vmatprep.mubr.bf16.mxu0 0
      %352 = vmatmul.mubr.bf16.gmra.mxu0 %v232
      %v353 = vpop.f32.mrf.mxu0
      %v354 = vadd.f32 0.0, %v353
      %v355 = vpop.f32.mrf.mxu0
      %v356 = vpop.f32.mrf.mxu0
      %v357 = vadd.f32 0.0, %v356
      %v358 = vpop.f32.mrf.mxu0
      %359 = vmatprep.mubr.bf16.mxu0 0
      %360 = vmatmul.mubr.bf16.gmra.mxu0 %v233
      %v361 = vpop.f32.mrf.mxu0
      %v362 = vadd.f32 0.0, %v361
      %v363 = vpop.f32.mrf.mxu0
      %v364 = vpop.f32.mrf.mxu0
      %v365 = vadd.f32 0.0, %v364
      %v366 = vpop.f32.mrf.mxu0
      %367 = vmatprep.mubr.bf16.mxu0 0
      %368 = vmatmul.mubr.bf16.gmra.mxu0 %v234
      %v369 = vpop.f32.mrf.mxu0
      %v370 = vadd.f32 0.0, %v369
      %v371 = vpop.f32.mrf.mxu0
      %v372 = vpop.f32.mrf.mxu0
      %v373 = vadd.f32 0.0, %v372
      %v374 = vpop.f32.mrf.mxu0
      %375 = vmatprep.mubr.bf16.mxu0 0
      %376 = vmatmul.mubr.bf16.gmra.mxu0 %v235
      %v377 = vpop.f32.mrf.mxu0
      %v378 = vadd.f32 0.0, %v377
      %v379 = vpop.f32.mrf.mxu0
      %v380 = vpop.f32.mrf.mxu0
      %v381 = vadd.f32 0.0, %v380
      %v382 = vpop.f32.mrf.mxu0
      %383 = vmatprep.mubr.bf16.mxu0 0
      %384 = vmatmul.mubr.bf16.gmra.mxu0 %v236
      %v385 = vpop.f32.mrf.mxu0
      %v386 = vadd.f32 0.0, %v385
      %v387 = vpop.f32.mrf.mxu0
      %v388 = vpop.f32.mrf.mxu0
      %v389 = vadd.f32 0.0, %v388
      %v390 = vpop.f32.mrf.mxu0
      %391 = vmatprep.mubr.bf16.mxu0 0
      %392 = vmatmul.mubr.bf16.gmra.mxu0 %v237
      %v393 = vpop.f32.mrf.mxu0
      %v394 = vadd.f32 0.0, %v393
      %v395 = vpop.f32.mrf.mxu0
      %v396 = vpop.f32.mrf.mxu0
      %v397 = vadd.f32 0.0, %v396
      %v398 = vpop.f32.mrf.mxu0
      %399 = vmatprep.mubr.bf16.mxu0 0
      %400 = vmatmul.mubr.bf16.gmra.mxu0 %v238
      %v401 = vpop.f32.mrf.mxu0
      %v402 = vadd.f32 0.0, %v401
      %v403 = vpop.f32.mrf.mxu0
      %v404 = vpop.f32.mrf.mxu0
      %v405 = vadd.f32 0.0, %v404
      %v406 = vpop.f32.mrf.mxu0
      %407 = vmatprep.mubr.bf16.mxu0 0
      %408 = vmatmul.mubr.bf16.gmra.mxu0 %v239
      %v409 = vpop.f32.mrf.mxu0
      %v410 = vadd.f32 0.0, %v409
      %v411 = vpop.f32.mrf.mxu0
      %v412 = vpop.f32.mrf.mxu0
      %v413 = vadd.f32 0.0, %v412
      %v414 = vpop.f32.mrf.mxu0
      %415 = vmatprep.mubr.bf16.mxu0 0
      %416 = vmatmul.mubr.bf16.gmra.mxu0 %v240
      %v417 = vpop.f32.mrf.mxu0
      %v418 = vadd.f32 0.0, %v417
      %v419 = vpop.f32.mrf.mxu0
      %v420 = vpop.f32.mrf.mxu0
      %v421 = vadd.f32 0.0, %v420
      %v422 = vpop.f32.mrf.mxu0
      %423 = vmatprep.mubr.bf16.mxu0 0
      %424 = vmatmul.mubr.bf16.gmra.mxu0 %v241
      %v425 = vpop.f32.mrf.mxu0
      %v426 = vadd.f32 0.0, %v425
      %v427 = vpop.f32.mrf.mxu0
      %v428 = vpop.f32.mrf.mxu0
      %v429 = vadd.f32 0.0, %v428
      %v430 = vpop.f32.mrf.mxu0
      %431 = vmatprep.mubr.bf16.mxu0 0
      %432 = vmatmul.mubr.bf16.gmra.mxu0 %v242
      %v433 = vpop.f32.mrf.mxu0
      %v434 = vadd.f32 0.0, %v433
      %v435 = vpop.f32.mrf.mxu0
      %v436 = vpop.f32.mrf.mxu0
      %v437 = vadd.f32 0.0, %v436
      %v438 = vpop.f32.mrf.mxu0
      %439 = vmatprep.mubr.bf16.mxu0 0
      %440 = vmatmul.mubr.bf16.gmra.mxu0 %v243
      %v441 = vpop.f32.mrf.mxu0
      %v442 = vadd.f32 0.0, %v441
      %v443 = vpop.f32.mrf.mxu0
      %v444 = vpop.f32.mrf.mxu0
      %v445 = vadd.f32 0.0, %v444
      %v446 = vpop.f32.mrf.mxu0
      %447 = vmatprep.mubr.bf16.mxu0 0
      %448 = vmatmul.mubr.bf16.gmra.mxu0 %v244
      %v449 = vpop.f32.mrf.mxu0
      %v450 = vadd.f32 0.0, %v449
      %v451 = vpop.f32.mrf.mxu0
      %v452 = vpop.f32.mrf.mxu0
      %v453 = vadd.f32 0.0, %v452
      %v454 = vpop.f32.mrf.mxu0
      %455 = vmatprep.mubr.bf16.mxu0 0
      %456 = vmatmul.mubr.bf16.gmra.mxu0 %v245
      %v457 = vpop.f32.mrf.mxu0
      %v458 = vadd.f32 0.0, %v457
      %v459 = vpop.f32.mrf.mxu0
      %v460 = vpop.f32.mrf.mxu0
      %v461 = vadd.f32 0.0, %v460
      %v462 = vpop.f32.mrf.mxu0
      %463 = vmatprep.mubr.bf16.mxu0 0
      %464 = vmatmul.mubr.bf16.gmra.mxu0 %v246
      %v465 = vpop.f32.mrf.mxu0
      %v466 = vadd.f32 0.0, %v465
      %v467 = vpop.f32.mrf.mxu0
      %v468 = vpop.f32.mrf.mxu0
      %v469 = vadd.f32 0.0, %v468
      %v470 = vpop.f32.mrf.mxu0
      %471 = vdwg.mxu0
      %472 = vst [vmem:[#allocation2] sm:$0xff] %v346
      %473 = vst [vmem:[#allocation2 + $0x8] sm:$0xff] %v349
      %474 = vst [vmem:[#allocation2 + $0x10] sm:$0xff] %v354
      %475 = vst [vmem:[#allocation2 + $0x18] sm:$0xff] %v357
      %476 = vst [vmem:[#allocation2 + $0x20] sm:$0xff] %v362
      %477 = vst [vmem:[#allocation2 + $0x28] sm:$0xff] %v365
      %478 = vst [vmem:[#allocation2 + $0x30] sm:$0xff] %v370
      %479 = vst [vmem:[#allocation2 + $0x38] sm:$0xff] %v373
      %480 = vst [vmem:[#allocation2 + $0x40] sm:$0xff] %v378
      %481 = vst [vmem:[#allocation2 + $0x48] sm:$0xff] %v381
      %482 = vst [vmem:[#allocation2 + $0x50] sm:$0xff] %v386
      %483 = vst [vmem:[#allocation2 + $0x58] sm:$0xff] %v389
      %484 = vst [vmem:[#allocation2 + $0x60] sm:$0xff] %v394
      %485 = vst [vmem:[#allocation2 + $0x68] sm:$0xff] %v397
      %486 = vst [vmem:[#allocation2 + $0x70] sm:$0xff] %v402
      %487 = vst [vmem:[#allocation2 + $0x78] sm:$0xff] %v405
      %488 = vst [vmem:[#allocation2 + $0x80] sm:$0xff] %v410
      %489 = vst [vmem:[#allocation2 + $0x88] sm:$0xff] %v413
      %490 = vst [vmem:[#allocation2 + $0x90] sm:$0xff] %v418
      %491 = vst [vmem:[#allocation2 + $0x98] sm:$0xff] %v421
      %492 = vst [vmem:[#allocation2 + $0xa0] sm:$0xff] %v426
      %493 = vst [vmem:[#allocation2 + $0xa8] sm:$0xff] %v429
      %494 = vst [vmem:[#allocation2 + $0xb0] sm:$0xff] %v434
      %495 = vst [vmem:[#allocation2 + $0xb8] sm:$0xff] %v437
      %496 = vst [vmem:[#allocation2 + $0xc0] sm:$0xff] %v442
      %497 = vst [vmem:[#allocation2 + $0xc8] sm:$0xff] %v445
      %498 = vst [vmem:[#allocation2 + $0xd0] sm:$0xff] %v450
      %499 = vst [vmem:[#allocation2 + $0xd8] sm:$0xff] %v453
      %500 = vst [vmem:[#allocation2 + $0xe0] sm:$0xff] %v458
      %501 = vst [vmem:[#allocation2 + $0xe8] sm:$0xff] %v461
      %502 = vst [vmem:[#allocation2 + $0xf0] sm:$0xff] %v466
      %503 = vst [vmem:[#allocation2 + $0xf8] sm:$0xff] %v469
      %v504 = vld [vmem:[%s192 + $0x10] sm:$0xff]
      %v505 = vld [vmem:[%s192 + $0x18] sm:$0xff]
      %v506 = vld [vmem:[%s192 + $0x20] sm:$0xff]
      %v507 = vld [vmem:[%s192 + $0x28] sm:$0xff]
      %v508 = vld [vmem:[%s192 + $0x30] sm:$0xff]
      %v509 = vld [vmem:[%s192 + $0x38] sm:$0xff]
      %v510 = vld [vmem:[%s192 + $0x40] sm:$0xff]
      %v511 = vld [vmem:[%s192 + $0x48] sm:$0xff]
      %v512 = vld [vmem:[%s192 + $0x50] sm:$0xff]
      %v513 = vld [vmem:[%s192 + $0x58] sm:$0xff]
      %v514 = vld [vmem:[%s192 + $0x60] sm:$0xff]
      %v515 = vld [vmem:[%s192 + $0x68] sm:$0xff]
      %v516 = vld [vmem:[%s192 + $0x70] sm:$0xff]
      %v517 = vld [vmem:[%s192 + $0x78] sm:$0xff]
      %v518 = vld [vmem:[%s192 + $0x80] sm:$0xff]
      %v519 = vld [vmem:[%s192 + $0x88] sm:$0xff]
      %v520 = vld [vmem:[%s192 + $0x90] sm:$0xff]
      %v521 = vld [vmem:[%s192 + $0x98] sm:$0xff]
      %v522 = vld [vmem:[%s192 + $0xa0] sm:$0xff]
      %v523 = vld [vmem:[%s192 + $0xa8] sm:$0xff]
      %v524 = vld [vmem:[%s192 + $0xb0] sm:$0xff]
      %v525 = vld [vmem:[%s192 + $0xb8] sm:$0xff]
      %v526 = vld [vmem:[%s192 + $0xc0] sm:$0xff]
      %v527 = vld [vmem:[%s192 + $0xc8] sm:$0xff]
      %v528 = vld [vmem:[%s192 + $0xd0] sm:$0xff]
      %v529 = vld [vmem:[%s192 + $0xd8] sm:$0xff]
      %v530 = vld [vmem:[%s192 + $0xe0] sm:$0xff]
      %v531 = vld [vmem:[%s192 + $0xe8] sm:$0xff]
      %v532 = vld [vmem:[%s192 + $0xf0] sm:$0xff]
      %v533 = vld [vmem:[%s192 + $0xf8] sm:$0xff]
      %v534 = vld [vmem:[%s192 + $0x100] sm:$0xff]
      %v535 = vld [vmem:[%s192 + $0x108] sm:$0xff]
      %v536 = vpack.c.bf16 %v505, %v504
      %v537 = vpack.c.bf16 %v507, %v506
      %v538 = vpack.c.bf16 %v509, %v508
      %v539 = vpack.c.bf16 %v511, %v510
      %v540 = vpack.c.bf16 %v513, %v512
      %v541 = vpack.c.bf16 %v515, %v514
      %v542 = vpack.c.bf16 %v517, %v516
      %v543 = vpack.c.bf16 %v519, %v518
      %v544 = vpack.c.bf16 %v521, %v520
      %v545 = vpack.c.bf16 %v523, %v522
      %v546 = vpack.c.bf16 %v525, %v524
      %v547 = vpack.c.bf16 %v527, %v526
      %v548 = vpack.c.bf16 %v529, %v528
      %v549 = vpack.c.bf16 %v531, %v530
      %v550 = vpack.c.bf16 %v533, %v532
      %v551 = vpack.c.bf16 %v535, %v534
      %s552 = scalar_lea.vmem %s1, 64
      %v553 = vld [vmem:[%s552] sm:$0xf]
      %v554 = vld [vmem:[%s552 + $0x4] sm:$0xf]
      %v555 = vld [vmem:[%s552 + $0x8] sm:$0xf]
      %v556 = vld [vmem:[%s552 + $0xc] sm:$0xf]
      %v557 = vld [vmem:[%s552 + $0x10] sm:$0xf]
      %v558 = vld [vmem:[%s552 + $0x14] sm:$0xf]
      %v559 = vld [vmem:[%s552 + $0x18] sm:$0xf]
      %v560 = vld [vmem:[%s552 + $0x1c] sm:$0xf]
      %v561 = vld [vmem:[%s552 + $0x20] sm:$0xf]
      %v562 = vld [vmem:[%s552 + $0x24] sm:$0xf]
      %v563 = vld [vmem:[%s552 + $0x28] sm:$0xf]
      %v564 = vld [vmem:[%s552 + $0x2c] sm:$0xf]
      %v565 = vld [vmem:[%s552 + $0x30] sm:$0xf]
      %v566 = vld [vmem:[%s552 + $0x34] sm:$0xf]
      %v567 = vld [vmem:[%s552 + $0x38] sm:$0xf]
      %v568 = vld [vmem:[%s552 + $0x3c] sm:$0xf]
      %v585 = vunpack.c.l.b16 %v553
      %v586 = vunpack.c.l.b16 %v554
      %v587 = vunpack.c.l.b16 %v555
      %v588 = vunpack.c.l.b16 %v556
      %v589 = vunpack.c.l.b16 %v557
      %v590 = vunpack.c.l.b16 %v558
      %v591 = vunpack.c.l.b16 %v559
      %v592 = vunpack.c.l.b16 %v560
      %v593 = vunpack.c.l.b16 %v561
      %v594 = vunpack.c.l.b16 %v562
      %v595 = vunpack.c.l.b16 %v563
      %v596 = vunpack.c.l.b16 %v564
      %v597 = vunpack.c.l.b16 %v565
      %v598 = vunpack.c.l.b16 %v566
      %v599 = vunpack.c.l.b16 %v567
      %v600 = vunpack.c.l.b16 %v568
      %v601 = vpack.c.b16 %v586, %v585
      %v602 = vpack.c.b16 %v588, %v587
      %v603 = vpack.c.b16 %v590, %v589
      %v604 = vpack.c.b16 %v592, %v591
      %v605 = vpack.c.b16 %v594, %v593
      %v606 = vpack.c.b16 %v596, %v595
      %v607 = vpack.c.b16 %v598, %v597
      %v608 = vpack.c.b16 %v600, %v599
      %617 = vmatprep.subr.bf16.mxu0 0
      %618 = vmatpush1.bf16.msra.mxu0 %v608
      %619 = vmatprep.subr.bf16.mxu0 0
      %620 = vmatpush1.bf16.msra.mxu0 %v607
      %621 = vmatprep.subr.bf16.mxu0 0
      %622 = vmatpush1.bf16.msra.mxu0 %v606
      %623 = vmatprep.subr.bf16.mxu0 0
      %624 = vmatpush1.bf16.msra.mxu0 %v605
      %625 = vmatprep.subr.bf16.mxu0 0
      %626 = vmatpush1.bf16.msra.mxu0 %v604
      %627 = vmatprep.subr.bf16.mxu0 0
      %628 = vmatpush1.bf16.msra.mxu0 %v603
      %629 = vmatprep.subr.bf16.mxu0 0
      %630 = vmatpush1.bf16.msra.mxu0 %v602
      %631 = vmatprep.subr.bf16.mxu0 0
      %632 = vmatpush1.bf16.msra.mxu0 %v601
      %633 = vmatprep.subr.bf16.mxu0 0
      %634 = vmatpush2.bf16.msra.mxu0 0
      %635 = vmatprep.subr.bf16.mxu0 0
      %636 = vmatpush2.bf16.msra.mxu0 0
      %637 = vmatprep.subr.bf16.mxu0 0
      %638 = vmatpush2.bf16.msra.mxu0 0
      %639 = vmatprep.subr.bf16.mxu0 0
      %640 = vmatpush2.bf16.msra.mxu0 0
      %641 = vmatprep.subr.bf16.mxu0 0
      %642 = vmatpush2.bf16.msra.mxu0 0
      %643 = vmatprep.subr.bf16.mxu0 0
      %644 = vmatpush2.bf16.msra.mxu0 0
      %645 = vmatprep.subr.bf16.mxu0 0
      %646 = vmatpush2.bf16.msra.mxu0 0
      %647 = vmatprep.subr.bf16.mxu0 0
      %648 = vmatpush2.bf16.msra.mxu0 0
      %649 = vmatprep.mubr.bf16.mxu0 0
      %650 = vmatmul.mubr.bf16.gmra.mxu0 %v536
      %v651 = vpop.f32.mrf.mxu0
      %v652 = vadd.f32 0.0, %v651
      %v653 = vpop.f32.mrf.mxu0
      %v654 = vpop.f32.mrf.mxu0
      %v655 = vadd.f32 0.0, %v654
      %v656 = vpop.f32.mrf.mxu0
      %657 = vmatprep.mubr.bf16.mxu0 0
      %658 = vmatmul.mubr.bf16.gmra.mxu0 %v537
      %v659 = vpop.f32.mrf.mxu0
      %v660 = vadd.f32 0.0, %v659
      %v661 = vpop.f32.mrf.mxu0
      %v662 = vpop.f32.mrf.mxu0
      %v663 = vadd.f32 0.0, %v662
      %v664 = vpop.f32.mrf.mxu0
      %665 = vmatprep.mubr.bf16.mxu0 0
      %666 = vmatmul.mubr.bf16.gmra.mxu0 %v538
      %v667 = vpop.f32.mrf.mxu0
      %v668 = vadd.f32 0.0, %v667
      %v669 = vpop.f32.mrf.mxu0
      %v670 = vpop.f32.mrf.mxu0
      %v671 = vadd.f32 0.0, %v670
      %v672 = vpop.f32.mrf.mxu0
      %673 = vmatprep.mubr.bf16.mxu0 0
      %674 = vmatmul.mubr.bf16.gmra.mxu0 %v539
      %v675 = vpop.f32.mrf.mxu0
      %v676 = vadd.f32 0.0, %v675
      %v677 = vpop.f32.mrf.mxu0
      %v678 = vpop.f32.mrf.mxu0
      %v679 = vadd.f32 0.0, %v678
      %v680 = vpop.f32.mrf.mxu0
      %681 = vmatprep.mubr.bf16.mxu0 0
      %682 = vmatmul.mubr.bf16.gmra.mxu0 %v540
      %v683 = vpop.f32.mrf.mxu0
      %v684 = vadd.f32 0.0, %v683
      %v685 = vpop.f32.mrf.mxu0
      %v686 = vpop.f32.mrf.mxu0
      %v687 = vadd.f32 0.0, %v686
      %v688 = vpop.f32.mrf.mxu0
      %689 = vmatprep.mubr.bf16.mxu0 0
      %690 = vmatmul.mubr.bf16.gmra.mxu0 %v541
      %v691 = vpop.f32.mrf.mxu0
      %v692 = vadd.f32 0.0, %v691
      %v693 = vpop.f32.mrf.mxu0
      %v694 = vpop.f32.mrf.mxu0
      %v695 = vadd.f32 0.0, %v694
      %v696 = vpop.f32.mrf.mxu0
      %697 = vmatprep.mubr.bf16.mxu0 0
      %698 = vmatmul.mubr.bf16.gmra.mxu0 %v542
      %v699 = vpop.f32.mrf.mxu0
      %v700 = vadd.f32 0.0, %v699
      %v701 = vpop.f32.mrf.mxu0
      %v702 = vpop.f32.mrf.mxu0
      %v703 = vadd.f32 0.0, %v702
      %v704 = vpop.f32.mrf.mxu0
      %705 = vmatprep.mubr.bf16.mxu0 0
      %706 = vmatmul.mubr.bf16.gmra.mxu0 %v543
      %v707 = vpop.f32.mrf.mxu0
      %v708 = vadd.f32 0.0, %v707
      %v709 = vpop.f32.mrf.mxu0
      %v710 = vpop.f32.mrf.mxu0
      %v711 = vadd.f32 0.0, %v710
      %v712 = vpop.f32.mrf.mxu0
      %713 = vmatprep.mubr.bf16.mxu0 0
      %714 = vmatmul.mubr.bf16.gmra.mxu0 %v544
      %v715 = vpop.f32.mrf.mxu0
      %v716 = vadd.f32 0.0, %v715
      %v717 = vpop.f32.mrf.mxu0
      %v718 = vpop.f32.mrf.mxu0
      %v719 = vadd.f32 0.0, %v718
      %v720 = vpop.f32.mrf.mxu0
      %721 = vmatprep.mubr.bf16.mxu0 0
      %722 = vmatmul.mubr.bf16.gmra.mxu0 %v545
      %v723 = vpop.f32.mrf.mxu0
      %v724 = vadd.f32 0.0, %v723
      %v725 = vpop.f32.mrf.mxu0
      %v726 = vpop.f32.mrf.mxu0
      %v727 = vadd.f32 0.0, %v726
      %v728 = vpop.f32.mrf.mxu0
      %729 = vmatprep.mubr.bf16.mxu0 0
      %730 = vmatmul.mubr.bf16.gmra.mxu0 %v546
      %v731 = vpop.f32.mrf.mxu0
      %v732 = vadd.f32 0.0, %v731
      %v733 = vpop.f32.mrf.mxu0
      %v734 = vpop.f32.mrf.mxu0
      %v735 = vadd.f32 0.0, %v734
      %v736 = vpop.f32.mrf.mxu0
      %737 = vmatprep.mubr.bf16.mxu0 0
      %738 = vmatmul.mubr.bf16.gmra.mxu0 %v547
      %v739 = vpop.f32.mrf.mxu0
      %v740 = vadd.f32 0.0, %v739
      %v741 = vpop.f32.mrf.mxu0
      %v742 = vpop.f32.mrf.mxu0
      %v743 = vadd.f32 0.0, %v742
      %v744 = vpop.f32.mrf.mxu0
      %745 = vmatprep.mubr.bf16.mxu0 0
      %746 = vmatmul.mubr.bf16.gmra.mxu0 %v548
      %v747 = vpop.f32.mrf.mxu0
      %v748 = vadd.f32 0.0, %v747
      %v749 = vpop.f32.mrf.mxu0
      %v750 = vpop.f32.mrf.mxu0
      %v751 = vadd.f32 0.0, %v750
      %v752 = vpop.f32.mrf.mxu0
      %753 = vmatprep.mubr.bf16.mxu0 0
      %754 = vmatmul.mubr.bf16.gmra.mxu0 %v549
      %v755 = vpop.f32.mrf.mxu0
      %v756 = vadd.f32 0.0, %v755
      %v757 = vpop.f32.mrf.mxu0
      %v758 = vpop.f32.mrf.mxu0
      %v759 = vadd.f32 0.0, %v758
      %v760 = vpop.f32.mrf.mxu0
      %761 = vmatprep.mubr.bf16.mxu0 0
      %762 = vmatmul.mubr.bf16.gmra.mxu0 %v550
      %v763 = vpop.f32.mrf.mxu0
      %v764 = vadd.f32 0.0, %v763
      %v765 = vpop.f32.mrf.mxu0
      %v766 = vpop.f32.mrf.mxu0
      %v767 = vadd.f32 0.0, %v766
      %v768 = vpop.f32.mrf.mxu0
      %769 = vmatprep.mubr.bf16.mxu0 0
      %770 = vmatmul.mubr.bf16.gmra.mxu0 %v551
      %v771 = vpop.f32.mrf.mxu0
      %v772 = vadd.f32 0.0, %v771
      %v773 = vpop.f32.mrf.mxu0
      %v774 = vpop.f32.mrf.mxu0
      %v775 = vadd.f32 0.0, %v774
      %v776 = vpop.f32.mrf.mxu0
      %777 = vdwg.mxu0
      %v778 = vld [vmem:[#allocation2] sm:$0xff]
      %v779 = vld [vmem:[#allocation2 + $0x8] sm:$0xff]
      %v780 = vld [vmem:[#allocation2 + $0x10] sm:$0xff]
      %v781 = vld [vmem:[#allocation2 + $0x18] sm:$0xff]
      %v782 = vld [vmem:[#allocation2 + $0x20] sm:$0xff]
      %v783 = vld [vmem:[#allocation2 + $0x28] sm:$0xff]
      %v784 = vld [vmem:[#allocation2 + $0x30] sm:$0xff]
      %v785 = vld [vmem:[#allocation2 + $0x38] sm:$0xff]
      %v786 = vld [vmem:[#allocation2 + $0x40] sm:$0xff]
      %v787 = vld [vmem:[#allocation2 + $0x48] sm:$0xff]
      %v788 = vld [vmem:[#allocation2 + $0x50] sm:$0xff]
      %v789 = vld [vmem:[#allocation2 + $0x58] sm:$0xff]
      %v790 = vld [vmem:[#allocation2 + $0x60] sm:$0xff]
      %v791 = vld [vmem:[#allocation2 + $0x68] sm:$0xff]
      %v792 = vld [vmem:[#allocation2 + $0x70] sm:$0xff]
      %v793 = vld [vmem:[#allocation2 + $0x78] sm:$0xff]
      %v794 = vld [vmem:[#allocation2 + $0x80] sm:$0xff]
      %v795 = vld [vmem:[#allocation2 + $0x88] sm:$0xff]
      %v796 = vld [vmem:[#allocation2 + $0x90] sm:$0xff]
      %v797 = vld [vmem:[#allocation2 + $0x98] sm:$0xff]
      %v798 = vld [vmem:[#allocation2 + $0xa0] sm:$0xff]
      %v799 = vld [vmem:[#allocation2 + $0xa8] sm:$0xff]
      %v800 = vld [vmem:[#allocation2 + $0xb0] sm:$0xff]
      %v801 = vld [vmem:[#allocation2 + $0xb8] sm:$0xff]
      %v802 = vld [vmem:[#allocation2 + $0xc0] sm:$0xff]
      %v803 = vld [vmem:[#allocation2 + $0xc8] sm:$0xff]
      %v804 = vld [vmem:[#allocation2 + $0xd0] sm:$0xff]
      %v805 = vld [vmem:[#allocation2 + $0xd8] sm:$0xff]
      %v806 = vld [vmem:[#allocation2 + $0xe0] sm:$0xff]
      %v807 = vld [vmem:[#allocation2 + $0xe8] sm:$0xff]
      %v808 = vld [vmem:[#allocation2 + $0xf0] sm:$0xff]
      %v809 = vld [vmem:[#allocation2 + $0xf8] sm:$0xff]
      %v810 = vadd.f32 %v778, %v652
      %v811 = vadd.f32 %v779, %v655
      %v812 = vadd.f32 %v780, %v660
      %v813 = vadd.f32 %v781, %v663
      %v814 = vadd.f32 %v782, %v668
      %v815 = vadd.f32 %v783, %v671
      %v816 = vadd.f32 %v784, %v676
      %v817 = vadd.f32 %v785, %v679
      %v818 = vadd.f32 %v786, %v684
      %v819 = vadd.f32 %v787, %v687
      %v820 = vadd.f32 %v788, %v692
      %v821 = vadd.f32 %v789, %v695
      %v822 = vadd.f32 %v790, %v700
      %v823 = vadd.f32 %v791, %v703
      %v824 = vadd.f32 %v792, %v708
      %v825 = vadd.f32 %v793, %v711
      %v826 = vadd.f32 %v794, %v716
      %v827 = vadd.f32 %v795, %v719
      %v828 = vadd.f32 %v796, %v724
      %v829 = vadd.f32 %v797, %v727
      %v830 = vadd.f32 %v798, %v732
      %v831 = vadd.f32 %v799, %v735
      %v832 = vadd.f32 %v800, %v740
      %v833 = vadd.f32 %v801, %v743
      %v834 = vadd.f32 %v802, %v748
      %v835 = vadd.f32 %v803, %v751
      %v836 = vadd.f32 %v804, %v756
      %v837 = vadd.f32 %v805, %v759
      %v838 = vadd.f32 %v806, %v764
      %v839 = vadd.f32 %v807, %v767
      %v840 = vadd.f32 %v808, %v772
      %v841 = vadd.f32 %v809, %v775
      %842 = vst [vmem:[#allocation2] sm:$0xff] %v810
      %843 = vst [vmem:[#allocation2 + $0x8] sm:$0xff] %v811
      %844 = vst [vmem:[#allocation2 + $0x10] sm:$0xff] %v812
      %845 = vst [vmem:[#allocation2 + $0x18] sm:$0xff] %v813
      %846 = vst [vmem:[#allocation2 + $0x20] sm:$0xff] %v814
      %847 = vst [vmem:[#allocation2 + $0x28] sm:$0xff] %v815
      %848 = vst [vmem:[#allocation2 + $0x30] sm:$0xff] %v816
      %849 = vst [vmem:[#allocation2 + $0x38] sm:$0xff] %v817
      %850 = vst [vmem:[#allocation2 + $0x40] sm:$0xff] %v818
      %851 = vst [vmem:[#allocation2 + $0x48] sm:$0xff] %v819
      %852 = vst [vmem:[#allocation2 + $0x50] sm:$0xff] %v820
      %853 = vst [vmem:[#allocation2 + $0x58] sm:$0xff] %v821
      %854 = vst [vmem:[#allocation2 + $0x60] sm:$0xff] %v822
      %855 = vst [vmem:[#allocation2 + $0x68] sm:$0xff] %v823
      %856 = vst [vmem:[#allocation2 + $0x70] sm:$0xff] %v824
      %857 = vst [vmem:[#allocation2 + $0x78] sm:$0xff] %v825
      %858 = vst [vmem:[#allocation2 + $0x80] sm:$0xff] %v826
      %859 = vst [vmem:[#allocation2 + $0x88] sm:$0xff] %v827
      %860 = vst [vmem:[#allocation2 + $0x90] sm:$0xff] %v828
      %861 = vst [vmem:[#allocation2 + $0x98] sm:$0xff] %v829
      %862 = vst [vmem:[#allocation2 + $0xa0] sm:$0xff] %v830
      %863 = vst [vmem:[#allocation2 + $0xa8] sm:$0xff] %v831
      %864 = vst [vmem:[#allocation2 + $0xb0] sm:$0xff] %v832
      %865 = vst [vmem:[#allocation2 + $0xb8] sm:$0xff] %v833
      %866 = vst [vmem:[#allocation2 + $0xc0] sm:$0xff] %v834
      %867 = vst [vmem:[#allocation2 + $0xc8] sm:$0xff] %v835
      %868 = vst [vmem:[#allocation2 + $0xd0] sm:$0xff] %v836
      %869 = vst [vmem:[#allocation2 + $0xd8] sm:$0xff] %v837
      %870 = vst [vmem:[#allocation2 + $0xe0] sm:$0xff] %v838
      %871 = vst [vmem:[#allocation2 + $0xe8] sm:$0xff] %v839
      %872 = vst [vmem:[#allocation2 + $0xf0] sm:$0xff] %v840
      %873 = vst [vmem:[#allocation2 + $0xf8] sm:$0xff] %v841
      %v874 = vld [vmem:[%s192 + $0x11] sm:$0xff]
      %v875 = vld [vmem:[%s192 + $0x19] sm:$0xff]
      %v876 = vld [vmem:[%s192 + $0x21] sm:$0xff]
      %v877 = vld [vmem:[%s192 + $0x29] sm:$0xff]
      %v878 = vld [vmem:[%s192 + $0x31] sm:$0xff]
      %v879 = vld [vmem:[%s192 + $0x39] sm:$0xff]
      %v880 = vld [vmem:[%s192 + $0x41] sm:$0xff]
      %v881 = vld [vmem:[%s192 + $0x49] sm:$0xff]
      %v882 = vld [vmem:[%s192 + $0x51] sm:$0xff]
      %v883 = vld [vmem:[%s192 + $0x59] sm:$0xff]
      %v884 = vld [vmem:[%s192 + $0x61] sm:$0xff]
      %v885 = vld [vmem:[%s192 + $0x69] sm:$0xff]
      %v886 = vld [vmem:[%s192 + $0x71] sm:$0xff]
      %v887 = vld [vmem:[%s192 + $0x79] sm:$0xff]
      %v888 = vld [vmem:[%s192 + $0x81] sm:$0xff]
      %v889 = vld [vmem:[%s192 + $0x89] sm:$0xff]
      %v890 = vld [vmem:[%s192 + $0x91] sm:$0xff]
      %v891 = vld [vmem:[%s192 + $0x99] sm:$0xff]
      %v892 = vld [vmem:[%s192 + $0xa1] sm:$0xff]
      %v893 = vld [vmem:[%s192 + $0xa9] sm:$0xff]
      %v894 = vld [vmem:[%s192 + $0xb1] sm:$0xff]
      %v895 = vld [vmem:[%s192 + $0xb9] sm:$0xff]
      %v896 = vld [vmem:[%s192 + $0xc1] sm:$0xff]
      %v897 = vld [vmem:[%s192 + $0xc9] sm:$0xff]
      %v898 = vld [vmem:[%s192 + $0xd1] sm:$0xff]
      %v899 = vld [vmem:[%s192 + $0xd9] sm:$0xff]
      %v900 = vld [vmem:[%s192 + $0xe1] sm:$0xff]
      %v901 = vld [vmem:[%s192 + $0xe9] sm:$0xff]
      %v902 = vld [vmem:[%s192 + $0xf1] sm:$0xff]
      %v903 = vld [vmem:[%s192 + $0xf9] sm:$0xff]
      %v904 = vld [vmem:[%s192 + $0x101] sm:$0xff]
      %v905 = vld [vmem:[%s192 + $0x109] sm:$0xff]
      %v906 = vpack.c.bf16 %v875, %v874
      %v907 = vpack.c.bf16 %v877, %v876
      %v908 = vpack.c.bf16 %v879, %v878
      %v909 = vpack.c.bf16 %v881, %v880
      %v910 = vpack.c.bf16 %v883, %v882
      %v911 = vpack.c.bf16 %v885, %v884
      %v912 = vpack.c.bf16 %v887, %v886
      %v913 = vpack.c.bf16 %v889, %v888
      %v914 = vpack.c.bf16 %v891, %v890
      %v915 = vpack.c.bf16 %v893, %v892
      %v916 = vpack.c.bf16 %v895, %v894
      %v917 = vpack.c.bf16 %v897, %v896
      %v918 = vpack.c.bf16 %v899, %v898
      %v919 = vpack.c.bf16 %v901, %v900
      %v920 = vpack.c.bf16 %v903, %v902
      %v921 = vpack.c.bf16 %v905, %v904
      %s922 = scalar_lea.vmem %s1, 128
      %v923 = vld [vmem:[%s922] sm:$0xf]
      %v924 = vld [vmem:[%s922 + $0x4] sm:$0xf]
      %v925 = vld [vmem:[%s922 + $0x8] sm:$0xf]
      %v926 = vld [vmem:[%s922 + $0xc] sm:$0xf]
      %v927 = vld [vmem:[%s922 + $0x10] sm:$0xf]
      %v928 = vld [vmem:[%s922 + $0x14] sm:$0xf]
      %v929 = vld [vmem:[%s922 + $0x18] sm:$0xf]
      %v930 = vld [vmem:[%s922 + $0x1c] sm:$0xf]
      %v931 = vld [vmem:[%s922 + $0x20] sm:$0xf]
      %v932 = vld [vmem:[%s922 + $0x24] sm:$0xf]
      %v933 = vld [vmem:[%s922 + $0x28] sm:$0xf]
      %v934 = vld [vmem:[%s922 + $0x2c] sm:$0xf]
      %v935 = vld [vmem:[%s922 + $0x30] sm:$0xf]
      %v936 = vld [vmem:[%s922 + $0x34] sm:$0xf]
      %v937 = vld [vmem:[%s922 + $0x38] sm:$0xf]
      %v938 = vld [vmem:[%s922 + $0x3c] sm:$0xf]
      %v955 = vunpack.c.l.b16 %v923
      %v956 = vunpack.c.l.b16 %v924
      %v957 = vunpack.c.l.b16 %v925
      %v958 = vunpack.c.l.b16 %v926
      %v959 = vunpack.c.l.b16 %v927
      %v960 = vunpack.c.l.b16 %v928
      %v961 = vunpack.c.l.b16 %v929
      %v962 = vunpack.c.l.b16 %v930
      %v963 = vunpack.c.l.b16 %v931
      %v964 = vunpack.c.l.b16 %v932
      %v965 = vunpack.c.l.b16 %v933
      %v966 = vunpack.c.l.b16 %v934
      %v967 = vunpack.c.l.b16 %v935
      %v968 = vunpack.c.l.b16 %v936
      %v969 = vunpack.c.l.b16 %v937
      %v970 = vunpack.c.l.b16 %v938
      %v971 = vpack.c.b16 %v956, %v955
      %v972 = vpack.c.b16 %v958, %v957
      %v973 = vpack.c.b16 %v960, %v959
      %v974 = vpack.c.b16 %v962, %v961
      %v975 = vpack.c.b16 %v964, %v963
      %v976 = vpack.c.b16 %v966, %v965
      %v977 = vpack.c.b16 %v968, %v967
      %v978 = vpack.c.b16 %v970, %v969
      %987 = vmatprep.subr.bf16.mxu0 0
      %988 = vmatpush1.bf16.msra.mxu0 %v978
      %989 = vmatprep.subr.bf16.mxu0 0
      %990 = vmatpush1.bf16.msra.mxu0 %v977
      %991 = vmatprep.subr.bf16.mxu0 0
      %992 = vmatpush1.bf16.msra.mxu0 %v976
      %993 = vmatprep.subr.bf16.mxu0 0
      %994 = vmatpush1.bf16.msra.mxu0 %v975
      %995 = vmatprep.subr.bf16.mxu0 0
      %996 = vmatpush1.bf16.msra.mxu0 %v974
      %997 = vmatprep.subr.bf16.mxu0 0
      %998 = vmatpush1.bf16.msra.mxu0 %v973
      %999 = vmatprep.subr.bf16.mxu0 0
      %1000 = vmatpush1.bf16.msra.mxu0 %v972
      %1001 = vmatprep.subr.bf16.mxu0 0
      %1002 = vmatpush1.bf16.msra.mxu0 %v971
      %1003 = vmatprep.subr.bf16.mxu0 0
      %1004 = vmatpush2.bf16.msra.mxu0 0
      %1005 = vmatprep.subr.bf16.mxu0 0
      %1006 = vmatpush2.bf16.msra.mxu0 0
      %1007 = vmatprep.subr.bf16.mxu0 0
      %1008 = vmatpush2.bf16.msra.mxu0 0
      %1009 = vmatprep.subr.bf16.mxu0 0
      %1010 = vmatpush2.bf16.msra.mxu0 0
      %1011 = vmatprep.subr.bf16.mxu0 0
      %1012 = vmatpush2.bf16.msra.mxu0 0
      %1013 = vmatprep.subr.bf16.mxu0 0
      %1014 = vmatpush2.bf16.msra.mxu0 0
      %1015 = vmatprep.subr.bf16.mxu0 0
      %1016 = vmatpush2.bf16.msra.mxu0 0
      %1017 = vmatprep.subr.bf16.mxu0 0
      %1018 = vmatpush2.bf16.msra.mxu0 0
      %1019 = vmatprep.mubr.bf16.mxu0 0
      %1020 = vmatmul.mubr.bf16.gmra.mxu0 %v906
      %v1021 = vpop.f32.mrf.mxu0
      %v1022 = vadd.f32 0.0, %v1021
      %v1023 = vpop.f32.mrf.mxu0
      %v1024 = vpop.f32.mrf.mxu0
      %v1025 = vadd.f32 0.0, %v1024
      %v1026 = vpop.f32.mrf.mxu0
      %1027 = vmatprep.mubr.bf16.mxu0 0
      %1028 = vmatmul.mubr.bf16.gmra.mxu0 %v907
      %v1029 = vpop.f32.mrf.mxu0
      %v1030 = vadd.f32 0.0, %v1029
      %v1031 = vpop.f32.mrf.mxu0
      %v1032 = vpop.f32.mrf.mxu0
      %v1033 = vadd.f32 0.0, %v1032
      %v1034 = vpop.f32.mrf.mxu0
      %1035 = vmatprep.mubr.bf16.mxu0 0
      %1036 = vmatmul.mubr.bf16.gmra.mxu0 %v908
      %v1037 = vpop.f32.mrf.mxu0
      %v1038 = vadd.f32 0.0, %v1037
      %v1039 = vpop.f32.mrf.mxu0
      %v1040 = vpop.f32.mrf.mxu0
      %v1041 = vadd.f32 0.0, %v1040
      %v1042 = vpop.f32.mrf.mxu0
      %1043 = vmatprep.mubr.bf16.mxu0 0
      %1044 = vmatmul.mubr.bf16.gmra.mxu0 %v909
      %v1045 = vpop.f32.mrf.mxu0
      %v1046 = vadd.f32 0.0, %v1045
      %v1047 = vpop.f32.mrf.mxu0
      %v1048 = vpop.f32.mrf.mxu0
      %v1049 = vadd.f32 0.0, %v1048
      %v1050 = vpop.f32.mrf.mxu0
      %1051 = vmatprep.mubr.bf16.mxu0 0
      %1052 = vmatmul.mubr.bf16.gmra.mxu0 %v910
      %v1053 = vpop.f32.mrf.mxu0
      %v1054 = vadd.f32 0.0, %v1053
      %v1055 = vpop.f32.mrf.mxu0
      %v1056 = vpop.f32.mrf.mxu0
      %v1057 = vadd.f32 0.0, %v1056
      %v1058 = vpop.f32.mrf.mxu0
      %1059 = vmatprep.mubr.bf16.mxu0 0
      %1060 = vmatmul.mubr.bf16.gmra.mxu0 %v911
      %v1061 = vpop.f32.mrf.mxu0
      %v1062 = vadd.f32 0.0, %v1061
      %v1063 = vpop.f32.mrf.mxu0
      %v1064 = vpop.f32.mrf.mxu0
      %v1065 = vadd.f32 0.0, %v1064
      %v1066 = vpop.f32.mrf.mxu0
      %1067 = vmatprep.mubr.bf16.mxu0 0
      %1068 = vmatmul.mubr.bf16.gmra.mxu0 %v912
      %v1069 = vpop.f32.mrf.mxu0
      %v1070 = vadd.f32 0.0, %v1069
      %v1071 = vpop.f32.mrf.mxu0
      %v1072 = vpop.f32.mrf.mxu0
      %v1073 = vadd.f32 0.0, %v1072
      %v1074 = vpop.f32.mrf.mxu0
      %1075 = vmatprep.mubr.bf16.mxu0 0
      %1076 = vmatmul.mubr.bf16.gmra.mxu0 %v913
      %v1077 = vpop.f32.mrf.mxu0
      %v1078 = vadd.f32 0.0, %v1077
      %v1079 = vpop.f32.mrf.mxu0
      %v1080 = vpop.f32.mrf.mxu0
      %v1081 = vadd.f32 0.0, %v1080
      %v1082 = vpop.f32.mrf.mxu0
      %1083 = vmatprep.mubr.bf16.mxu0 0
      %1084 = vmatmul.mubr.bf16.gmra.mxu0 %v914
      %v1085 = vpop.f32.mrf.mxu0
      %v1086 = vadd.f32 0.0, %v1085
      %v1087 = vpop.f32.mrf.mxu0
      %v1088 = vpop.f32.mrf.mxu0
      %v1089 = vadd.f32 0.0, %v1088
      %v1090 = vpop.f32.mrf.mxu0
      %1091 = vmatprep.mubr.bf16.mxu0 0
      %1092 = vmatmul.mubr.bf16.gmra.mxu0 %v915
      %v1093 = vpop.f32.mrf.mxu0
      %v1094 = vadd.f32 0.0, %v1093
      %v1095 = vpop.f32.mrf.mxu0
      %v1096 = vpop.f32.mrf.mxu0
      %v1097 = vadd.f32 0.0, %v1096
      %v1098 = vpop.f32.mrf.mxu0
      %1099 = vmatprep.mubr.bf16.mxu0 0
      %1100 = vmatmul.mubr.bf16.gmra.mxu0 %v916
      %v1101 = vpop.f32.mrf.mxu0
      %v1102 = vadd.f32 0.0, %v1101
      %v1103 = vpop.f32.mrf.mxu0
      %v1104 = vpop.f32.mrf.mxu0
      %v1105 = vadd.f32 0.0, %v1104
      %v1106 = vpop.f32.mrf.mxu0
      %1107 = vmatprep.mubr.bf16.mxu0 0
      %1108 = vmatmul.mubr.bf16.gmra.mxu0 %v917
      %v1109 = vpop.f32.mrf.mxu0
      %v1110 = vadd.f32 0.0, %v1109
      %v1111 = vpop.f32.mrf.mxu0
      %v1112 = vpop.f32.mrf.mxu0
      %v1113 = vadd.f32 0.0, %v1112
      %v1114 = vpop.f32.mrf.mxu0
      %1115 = vmatprep.mubr.bf16.mxu0 0
      %1116 = vmatmul.mubr.bf16.gmra.mxu0 %v918
      %v1117 = vpop.f32.mrf.mxu0
      %v1118 = vadd.f32 0.0, %v1117
      %v1119 = vpop.f32.mrf.mxu0
      %v1120 = vpop.f32.mrf.mxu0
      %v1121 = vadd.f32 0.0, %v1120
      %v1122 = vpop.f32.mrf.mxu0
      %1123 = vmatprep.mubr.bf16.mxu0 0
      %1124 = vmatmul.mubr.bf16.gmra.mxu0 %v919
      %v1125 = vpop.f32.mrf.mxu0
      %v1126 = vadd.f32 0.0, %v1125
      %v1127 = vpop.f32.mrf.mxu0
      %v1128 = vpop.f32.mrf.mxu0
      %v1129 = vadd.f32 0.0, %v1128
      %v1130 = vpop.f32.mrf.mxu0
      %1131 = vmatprep.mubr.bf16.mxu0 0
      %1132 = vmatmul.mubr.bf16.gmra.mxu0 %v920
      %v1133 = vpop.f32.mrf.mxu0
      %v1134 = vadd.f32 0.0, %v1133
      %v1135 = vpop.f32.mrf.mxu0
      %v1136 = vpop.f32.mrf.mxu0
      %v1137 = vadd.f32 0.0, %v1136
      %v1138 = vpop.f32.mrf.mxu0
      %1139 = vmatprep.mubr.bf16.mxu0 0
      %1140 = vmatmul.mubr.bf16.gmra.mxu0 %v921
      %v1141 = vpop.f32.mrf.mxu0
      %v1142 = vadd.f32 0.0, %v1141
      %v1143 = vpop.f32.mrf.mxu0
      %v1144 = vpop.f32.mrf.mxu0
      %v1145 = vadd.f32 0.0, %v1144
      %v1146 = vpop.f32.mrf.mxu0
      %1147 = vdwg.mxu0
      %v1148 = vld [vmem:[#allocation2] sm:$0xff]
      %v1149 = vld [vmem:[#allocation2 + $0x8] sm:$0xff]
      %v1150 = vld [vmem:[#allocation2 + $0x10] sm:$0xff]
      %v1151 = vld [vmem:[#allocation2 + $0x18] sm:$0xff]
      %v1152 = vld [vmem:[#allocation2 + $0x20] sm:$0xff]
      %v1153 = vld [vmem:[#allocation2 + $0x28] sm:$0xff]
      %v1154 = vld [vmem:[#allocation2 + $0x30] sm:$0xff]
      %v1155 = vld [vmem:[#allocation2 + $0x38] sm:$0xff]
      %v1156 = vld [vmem:[#allocation2 + $0x40] sm:$0xff]
      %v1157 = vld [vmem:[#allocation2 + $0x48] sm:$0xff]
      %v1158 = vld [vmem:[#allocation2 + $0x50] sm:$0xff]
      %v1159 = vld [vmem:[#allocation2 + $0x58] sm:$0xff]
      %v1160 = vld [vmem:[#allocation2 + $0x60] sm:$0xff]
      %v1161 = vld [vmem:[#allocation2 + $0x68] sm:$0xff]
      %v1162 = vld [vmem:[#allocation2 + $0x70] sm:$0xff]
      %v1163 = vld [vmem:[#allocation2 + $0x78] sm:$0xff]
      %v1164 = vld [vmem:[#allocation2 + $0x80] sm:$0xff]
      %v1165 = vld [vmem:[#allocation2 + $0x88] sm:$0xff]
      %v1166 = vld [vmem:[#allocation2 + $0x90] sm:$0xff]
      %v1167 = vld [vmem:[#allocation2 + $0x98] sm:$0xff]
      %v1168 = vld [vmem:[#allocation2 + $0xa0] sm:$0xff]
      %v1169 = vld [vmem:[#allocation2 + $0xa8] sm:$0xff]
      %v1170 = vld [vmem:[#allocation2 + $0xb0] sm:$0xff]
      %v1171 = vld [vmem:[#allocation2 + $0xb8] sm:$0xff]
      %v1172 = vld [vmem:[#allocation2 + $0xc0] sm:$0xff]
      %v1173 = vld [vmem:[#allocation2 + $0xc8] sm:$0xff]
      %v1174 = vld [vmem:[#allocation2 + $0xd0] sm:$0xff]
      %v1175 = vld [vmem:[#allocation2 + $0xd8] sm:$0xff]
      %v1176 = vld [vmem:[#allocation2 + $0xe0] sm:$0xff]
      %v1177 = vld [vmem:[#allocation2 + $0xe8] sm:$0xff]
      %v1178 = vld [vmem:[#allocation2 + $0xf0] sm:$0xff]
      %v1179 = vld [vmem:[#allocation2 + $0xf8] sm:$0xff]
      %v1180 = vadd.f32 %v1148, %v1022
      %v1181 = vadd.f32 %v1149, %v1025
      %v1182 = vadd.f32 %v1150, %v1030
      %v1183 = vadd.f32 %v1151, %v1033
      %v1184 = vadd.f32 %v1152, %v1038
      %v1185 = vadd.f32 %v1153, %v1041
      %v1186 = vadd.f32 %v1154, %v1046
      %v1187 = vadd.f32 %v1155, %v1049
      %v1188 = vadd.f32 %v1156, %v1054
      %v1189 = vadd.f32 %v1157, %v1057
      %v1190 = vadd.f32 %v1158, %v1062
      %v1191 = vadd.f32 %v1159, %v1065
      %v1192 = vadd.f32 %v1160, %v1070
      %v1193 = vadd.f32 %v1161, %v1073
      %v1194 = vadd.f32 %v1162, %v1078
      %v1195 = vadd.f32 %v1163, %v1081
      %v1196 = vadd.f32 %v1164, %v1086
      %v1197 = vadd.f32 %v1165, %v1089
      %v1198 = vadd.f32 %v1166, %v1094
      %v1199 = vadd.f32 %v1167, %v1097
      %v1200 = vadd.f32 %v1168, %v1102
      %v1201 = vadd.f32 %v1169, %v1105
      %v1202 = vadd.f32 %v1170, %v1110
      %v1203 = vadd.f32 %v1171, %v1113
      %v1204 = vadd.f32 %v1172, %v1118
      %v1205 = vadd.f32 %v1173, %v1121
      %v1206 = vadd.f32 %v1174, %v1126
      %v1207 = vadd.f32 %v1175, %v1129
      %v1208 = vadd.f32 %v1176, %v1134
      %v1209 = vadd.f32 %v1177, %v1137
      %v1210 = vadd.f32 %v1178, %v1142
      %v1211 = vadd.f32 %v1179, %v1145
      %1212 = vst [vmem:[#allocation2] sm:$0xff] %v1180
      %1213 = vst [vmem:[#allocation2 + $0x8] sm:$0xff] %v1181
      %1214 = vst [vmem:[#allocation2 + $0x10] sm:$0xff] %v1182
      %1215 = vst [vmem:[#allocation2 + $0x18] sm:$0xff] %v1183
      %1216 = vst [vmem:[#allocation2 + $0x20] sm:$0xff] %v1184
      %1217 = vst [vmem:[#allocation2 + $0x28] sm:$0xff] %v1185
      %1218 = vst [vmem:[#allocation2 + $0x30] sm:$0xff] %v1186
      %1219 = vst [vmem:[#allocation2 + $0x38] sm:$0xff] %v1187
      %1220 = vst [vmem:[#allocation2 + $0x40] sm:$0xff] %v1188
      %1221 = vst [vmem:[#allocation2 + $0x48] sm:$0xff] %v1189
      %1222 = vst [vmem:[#allocation2 + $0x50] sm:$0xff] %v1190
      %1223 = vst [vmem:[#allocation2 + $0x58] sm:$0xff] %v1191
      %1224 = vst [vmem:[#allocation2 + $0x60] sm:$0xff] %v1192
      %1225 = vst [vmem:[#allocation2 + $0x68] sm:$0xff] %v1193
      %1226 = vst [vmem:[#allocation2 + $0x70] sm:$0xff] %v1194
      %1227 = vst [vmem:[#allocation2 + $0x78] sm:$0xff] %v1195
      %1228 = vst [vmem:[#allocation2 + $0x80] sm:$0xff] %v1196
      %1229 = vst [vmem:[#allocation2 + $0x88] sm:$0xff] %v1197
      %1230 = vst [vmem:[#allocation2 + $0x90] sm:$0xff] %v1198
      %1231 = vst [vmem:[#allocation2 + $0x98] sm:$0xff] %v1199
      %1232 = vst [vmem:[#allocation2 + $0xa0] sm:$0xff] %v1200
      %1233 = vst [vmem:[#allocation2 + $0xa8] sm:$0xff] %v1201
      %1234 = vst [vmem:[#allocation2 + $0xb0] sm:$0xff] %v1202
      %1235 = vst [vmem:[#allocation2 + $0xb8] sm:$0xff] %v1203
      %1236 = vst [vmem:[#allocation2 + $0xc0] sm:$0xff] %v1204
      %1237 = vst [vmem:[#allocation2 + $0xc8] sm:$0xff] %v1205
      %1238 = vst [vmem:[#allocation2 + $0xd0] sm:$0xff] %v1206
      %1239 = vst [vmem:[#allocation2 + $0xd8] sm:$0xff] %v1207
      %1240 = vst [vmem:[#allocation2 + $0xe0] sm:$0xff] %v1208
      %1241 = vst [vmem:[#allocation2 + $0xe8] sm:$0xff] %v1209
      %1242 = vst [vmem:[#allocation2 + $0xf0] sm:$0xff] %v1210
      %1243 = vst [vmem:[#allocation2 + $0xf8] sm:$0xff] %v1211
      %v1244 = vld [vmem:[%s192 + $0x1f] sm:$0xff]
      %v1245 = vld [vmem:[%s192 + $0x27] sm:$0xff]
      %v1246 = vld [vmem:[%s192 + $0x2f] sm:$0xff]
      %v1247 = vld [vmem:[%s192 + $0x37] sm:$0xff]
      %v1248 = vld [vmem:[%s192 + $0x3f] sm:$0xff]
      %v1249 = vld [vmem:[%s192 + $0x47] sm:$0xff]
      %v1250 = vld [vmem:[%s192 + $0x4f] sm:$0xff]
      %v1251 = vld [vmem:[%s192 + $0x57] sm:$0xff]
      %v1252 = vld [vmem:[%s192 + $0x5f] sm:$0xff]
      %v1253 = vld [vmem:[%s192 + $0x67] sm:$0xff]
      %v1254 = vld [vmem:[%s192 + $0x6f] sm:$0xff]
      %v1255 = vld [vmem:[%s192 + $0x77] sm:$0xff]
      %v1256 = vld [vmem:[%s192 + $0x7f] sm:$0xff]
      %v1257 = vld [vmem:[%s192 + $0x87] sm:$0xff]
      %v1258 = vld [vmem:[%s192 + $0x8f] sm:$0xff]
      %v1259 = vld [vmem:[%s192 + $0x97] sm:$0xff]
      %v1260 = vld [vmem:[%s192 + $0x9f] sm:$0xff]
      %v1261 = vld [vmem:[%s192 + $0xa7] sm:$0xff]
      %v1262 = vld [vmem:[%s192 + $0xaf] sm:$0xff]
      %v1263 = vld [vmem:[%s192 + $0xb7] sm:$0xff]
      %v1264 = vld [vmem:[%s192 + $0xbf] sm:$0xff]
      %v1265 = vld [vmem:[%s192 + $0xc7] sm:$0xff]
      %v1266 = vld [vmem:[%s192 + $0xcf] sm:$0xff]
      %v1267 = vld [vmem:[%s192 + $0xd7] sm:$0xff]
      %v1268 = vld [vmem:[%s192 + $0xdf] sm:$0xff]
      %v1269 = vld [vmem:[%s192 + $0xe7] sm:$0xff]
      %v1270 = vld [vmem:[%s192 + $0xef] sm:$0xff]
      %v1271 = vld [vmem:[%s192 + $0xf7] sm:$0xff]
      %v1272 = vld [vmem:[%s192 + $0xff] sm:$0xff]
      %v1273 = vld [vmem:[%s192 + $0x107] sm:$0xff]
      %v1274 = vld [vmem:[%s192 + $0x10f] sm:$0xff]
      %v1275 = vld [vmem:[%s192 + $0x117] sm:$0xff]
      %v1276 = vpack.c.bf16 %v1245, %v1244
      %v1277 = vpack.c.bf16 %v1247, %v1246
      %v1278 = vpack.c.bf16 %v1249, %v1248
      %v1279 = vpack.c.bf16 %v1251, %v1250
      %v1280 = vpack.c.bf16 %v1253, %v1252
      %v1281 = vpack.c.bf16 %v1255, %v1254
      %v1282 = vpack.c.bf16 %v1257, %v1256
      %v1283 = vpack.c.bf16 %v1259, %v1258
      %v1284 = vpack.c.bf16 %v1261, %v1260
      %v1285 = vpack.c.bf16 %v1263, %v1262
      %v1286 = vpack.c.bf16 %v1265, %v1264
      %v1287 = vpack.c.bf16 %v1267, %v1266
      %v1288 = vpack.c.bf16 %v1269, %v1268
      %v1289 = vpack.c.bf16 %v1271, %v1270
      %v1290 = vpack.c.bf16 %v1273, %v1272
      %v1291 = vpack.c.bf16 %v1275, %v1274
      %s1292 = scalar_lea.vmem %s1, 192
      %v1293 = vld [vmem:[%s1292] sm:$0xf]
      %v1294 = vld [vmem:[%s1292 + $0x4] sm:$0xf]
      %v1295 = vld [vmem:[%s1292 + $0x8] sm:$0xf]
      %v1296 = vld [vmem:[%s1292 + $0xc] sm:$0xf]
      %v1297 = vld [vmem:[%s1292 + $0x10] sm:$0xf]
      %v1298 = vld [vmem:[%s1292 + $0x14] sm:$0xf]
      %v1299 = vld [vmem:[%s1292 + $0x18] sm:$0xf]
      %v1300 = vld [vmem:[%s1292 + $0x1c] sm:$0xf]
      %v1301 = vld [vmem:[%s1292 + $0x20] sm:$0xf]
      %v1302 = vld [vmem:[%s1292 + $0x24] sm:$0xf]
      %v1303 = vld [vmem:[%s1292 + $0x28] sm:$0xf]
      %v1304 = vld [vmem:[%s1292 + $0x2c] sm:$0xf]
      %v1305 = vld [vmem:[%s1292 + $0x30] sm:$0xf]
      %v1306 = vld [vmem:[%s1292 + $0x34] sm:$0xf]
      %v1307 = vld [vmem:[%s1292 + $0x38] sm:$0xf]
      %v1308 = vld [vmem:[%s1292 + $0x3c] sm:$0xf]
      %v1325 = vunpack.c.l.b16 %v1293
      %v1326 = vunpack.c.l.b16 %v1294
      %v1327 = vunpack.c.l.b16 %v1295
      %v1328 = vunpack.c.l.b16 %v1296
      %v1329 = vunpack.c.l.b16 %v1297
      %v1330 = vunpack.c.l.b16 %v1298
      %v1331 = vunpack.c.l.b16 %v1299
      %v1332 = vunpack.c.l.b16 %v1300
      %v1333 = vunpack.c.l.b16 %v1301
      %v1334 = vunpack.c.l.b16 %v1302
      %v1335 = vunpack.c.l.b16 %v1303
      %v1336 = vunpack.c.l.b16 %v1304
      %v1337 = vunpack.c.l.b16 %v1305
      %v1338 = vunpack.c.l.b16 %v1306
      %v1339 = vunpack.c.l.b16 %v1307
      %v1340 = vunpack.c.l.b16 %v1308
      %v1341 = vpack.c.b16 %v1326, %v1325
      %v1342 = vpack.c.b16 %v1328, %v1327
      %v1343 = vpack.c.b16 %v1330, %v1329
      %v1344 = vpack.c.b16 %v1332, %v1331
      %v1345 = vpack.c.b16 %v1334, %v1333
      %v1346 = vpack.c.b16 %v1336, %v1335
      %v1347 = vpack.c.b16 %v1338, %v1337
      %v1348 = vpack.c.b16 %v1340, %v1339
      %1357 = vmatprep.subr.bf16.mxu0 0
      %1358 = vmatpush1.bf16.msra.mxu0 %v1348
      %1359 = vmatprep.subr.bf16.mxu0 0
      %1360 = vmatpush1.bf16.msra.mxu0 %v1347
      %1361 = vmatprep.subr.bf16.mxu0 0
      %1362 = vmatpush1.bf16.msra.mxu0 %v1346
      %1363 = vmatprep.subr.bf16.mxu0 0
      %1364 = vmatpush1.bf16.msra.mxu0 %v1345
      %1365 = vmatprep.subr.bf16.mxu0 0
      %1366 = vmatpush1.bf16.msra.mxu0 %v1344
      %1367 = vmatprep.subr.bf16.mxu0 0
      %1368 = vmatpush1.bf16.msra.mxu0 %v1343
      %1369 = vmatprep.subr.bf16.mxu0 0
      %1370 = vmatpush1.bf16.msra.mxu0 %v1342
      %1371 = vmatprep.subr.bf16.mxu0 0
      %1372 = vmatpush1.bf16.msra.mxu0 %v1341
      %1373 = vmatprep.subr.bf16.mxu0 0
      %1374 = vmatpush2.bf16.msra.mxu0 0
      %1375 = vmatprep.subr.bf16.mxu0 0
      %1376 = vmatpush2.bf16.msra.mxu0 0
      %1377 = vmatprep.subr.bf16.mxu0 0
      %1378 = vmatpush2.bf16.msra.mxu0 0
      %1379 = vmatprep.subr.bf16.mxu0 0
      %1380 = vmatpush2.bf16.msra.mxu0 0
      %1381 = vmatprep.subr.bf16.mxu0 0
      %1382 = vmatpush2.bf16.msra.mxu0 0
      %1383 = vmatprep.subr.bf16.mxu0 0
      %1384 = vmatpush2.bf16.msra.mxu0 0
      %1385 = vmatprep.subr.bf16.mxu0 0
      %1386 = vmatpush2.bf16.msra.mxu0 0
      %1387 = vmatprep.subr.bf16.mxu0 0
      %1388 = vmatpush2.bf16.msra.mxu0 0
      %1389 = vmatprep.mubr.bf16.mxu0 0
      %1390 = vmatmul.mubr.bf16.gmra.mxu0 %v1276
      %v1391 = vpop.f32.mrf.mxu0
      %v1392 = vadd.f32 0.0, %v1391
      %v1393 = vpop.f32.mrf.mxu0
      %v1394 = vpop.f32.mrf.mxu0
      %v1395 = vadd.f32 0.0, %v1394
      %v1396 = vpop.f32.mrf.mxu0
      %1397 = vmatprep.mubr.bf16.mxu0 0
      %1398 = vmatmul.mubr.bf16.gmra.mxu0 %v1277
      %v1399 = vpop.f32.mrf.mxu0
      %v1400 = vadd.f32 0.0, %v1399
      %v1401 = vpop.f32.mrf.mxu0
      %v1402 = vpop.f32.mrf.mxu0
      %v1403 = vadd.f32 0.0, %v1402
      %v1404 = vpop.f32.mrf.mxu0
      %1405 = vmatprep.mubr.bf16.mxu0 0
      %1406 = vmatmul.mubr.bf16.gmra.mxu0 %v1278
      %v1407 = vpop.f32.mrf.mxu0
      %v1408 = vadd.f32 0.0, %v1407
      %v1409 = vpop.f32.mrf.mxu0
      %v1410 = vpop.f32.mrf.mxu0
      %v1411 = vadd.f32 0.0, %v1410
      %v1412 = vpop.f32.mrf.mxu0
      %1413 = vmatprep.mubr.bf16.mxu0 0
      %1414 = vmatmul.mubr.bf16.gmra.mxu0 %v1279
      %v1415 = vpop.f32.mrf.mxu0
      %v1416 = vadd.f32 0.0, %v1415
      %v1417 = vpop.f32.mrf.mxu0
      %v1418 = vpop.f32.mrf.mxu0
      %v1419 = vadd.f32 0.0, %v1418
      %v1420 = vpop.f32.mrf.mxu0
      %1421 = vmatprep.mubr.bf16.mxu0 0
      %1422 = vmatmul.mubr.bf16.gmra.mxu0 %v1280
      %v1423 = vpop.f32.mrf.mxu0
      %v1424 = vadd.f32 0.0, %v1423
      %v1425 = vpop.f32.mrf.mxu0
      %v1426 = vpop.f32.mrf.mxu0
      %v1427 = vadd.f32 0.0, %v1426
      %v1428 = vpop.f32.mrf.mxu0
      %1429 = vmatprep.mubr.bf16.mxu0 0
      %1430 = vmatmul.mubr.bf16.gmra.mxu0 %v1281
      %v1431 = vpop.f32.mrf.mxu0
      %v1432 = vadd.f32 0.0, %v1431
      %v1433 = vpop.f32.mrf.mxu0
      %v1434 = vpop.f32.mrf.mxu0
      %v1435 = vadd.f32 0.0, %v1434
      %v1436 = vpop.f32.mrf.mxu0
      %1437 = vmatprep.mubr.bf16.mxu0 0
      %1438 = vmatmul.mubr.bf16.gmra.mxu0 %v1282
      %v1439 = vpop.f32.mrf.mxu0
      %v1440 = vadd.f32 0.0, %v1439
      %v1441 = vpop.f32.mrf.mxu0
      %v1442 = vpop.f32.mrf.mxu0
      %v1443 = vadd.f32 0.0, %v1442
      %v1444 = vpop.f32.mrf.mxu0
      %1445 = vmatprep.mubr.bf16.mxu0 0
      %1446 = vmatmul.mubr.bf16.gmra.mxu0 %v1283
      %v1447 = vpop.f32.mrf.mxu0
      %v1448 = vadd.f32 0.0, %v1447
      %v1449 = vpop.f32.mrf.mxu0
      %v1450 = vpop.f32.mrf.mxu0
      %v1451 = vadd.f32 0.0, %v1450
      %v1452 = vpop.f32.mrf.mxu0
      %1453 = vmatprep.mubr.bf16.mxu0 0
      %1454 = vmatmul.mubr.bf16.gmra.mxu0 %v1284
      %v1455 = vpop.f32.mrf.mxu0
      %v1456 = vadd.f32 0.0, %v1455
      %v1457 = vpop.f32.mrf.mxu0
      %v1458 = vpop.f32.mrf.mxu0
      %v1459 = vadd.f32 0.0, %v1458
      %v1460 = vpop.f32.mrf.mxu0
      %1461 = vmatprep.mubr.bf16.mxu0 0
      %1462 = vmatmul.mubr.bf16.gmra.mxu0 %v1285
      %v1463 = vpop.f32.mrf.mxu0
      %v1464 = vadd.f32 0.0, %v1463
      %v1465 = vpop.f32.mrf.mxu0
      %v1466 = vpop.f32.mrf.mxu0
      %v1467 = vadd.f32 0.0, %v1466
      %v1468 = vpop.f32.mrf.mxu0
      %1469 = vmatprep.mubr.bf16.mxu0 0
      %1470 = vmatmul.mubr.bf16.gmra.mxu0 %v1286
      %v1471 = vpop.f32.mrf.mxu0
      %v1472 = vadd.f32 0.0, %v1471
      %v1473 = vpop.f32.mrf.mxu0
      %v1474 = vpop.f32.mrf.mxu0
      %v1475 = vadd.f32 0.0, %v1474
      %v1476 = vpop.f32.mrf.mxu0
      %1477 = vmatprep.mubr.bf16.mxu0 0
      %1478 = vmatmul.mubr.bf16.gmra.mxu0 %v1287
      %v1479 = vpop.f32.mrf.mxu0
      %v1480 = vadd.f32 0.0, %v1479
      %v1481 = vpop.f32.mrf.mxu0
      %v1482 = vpop.f32.mrf.mxu0
      %v1483 = vadd.f32 0.0, %v1482
      %v1484 = vpop.f32.mrf.mxu0
      %1485 = vmatprep.mubr.bf16.mxu0 0
      %1486 = vmatmul.mubr.bf16.gmra.mxu0 %v1288
      %v1487 = vpop.f32.mrf.mxu0
      %v1488 = vadd.f32 0.0, %v1487
      %v1489 = vpop.f32.mrf.mxu0
      %v1490 = vpop.f32.mrf.mxu0
      %v1491 = vadd.f32 0.0, %v1490
      %v1492 = vpop.f32.mrf.mxu0
      %1493 = vmatprep.mubr.bf16.mxu0 0
      %1494 = vmatmul.mubr.bf16.gmra.mxu0 %v1289
      %v1495 = vpop.f32.mrf.mxu0
      %v1496 = vadd.f32 0.0, %v1495
      %v1497 = vpop.f32.mrf.mxu0
      %v1498 = vpop.f32.mrf.mxu0
      %v1499 = vadd.f32 0.0, %v1498
      %v1500 = vpop.f32.mrf.mxu0
      %1501 = vmatprep.mubr.bf16.mxu0 0
      %1502 = vmatmul.mubr.bf16.gmra.mxu0 %v1290
      %v1503 = vpop.f32.mrf.mxu0
      %v1504 = vadd.f32 0.0, %v1503
      %v1505 = vpop.f32.mrf.mxu0
      %v1506 = vpop.f32.mrf.mxu0
      %v1507 = vadd.f32 0.0, %v1506
      %v1508 = vpop.f32.mrf.mxu0
      %1509 = vmatprep.mubr.bf16.mxu0 0
      %1510 = vmatmul.mubr.bf16.gmra.mxu0 %v1291
      %v1511 = vpop.f32.mrf.mxu0
      %v1512 = vadd.f32 0.0, %v1511
      %v1513 = vpop.f32.mrf.mxu0
      %v1514 = vpop.f32.mrf.mxu0
      %v1515 = vadd.f32 0.0, %v1514
      %v1516 = vpop.f32.mrf.mxu0
      %1517 = vdwg.mxu0
      %v1518 = vld [vmem:[#allocation2] sm:$0xff]
      %v1519 = vld [vmem:[#allocation2 + $0x8] sm:$0xff]
      %v1520 = vld [vmem:[#allocation2 + $0x10] sm:$0xff]
      %v1521 = vld [vmem:[#allocation2 + $0x18] sm:$0xff]
      %v1522 = vld [vmem:[#allocation2 + $0x20] sm:$0xff]
      %v1523 = vld [vmem:[#allocation2 + $0x28] sm:$0xff]
      %v1524 = vld [vmem:[#allocation2 + $0x30] sm:$0xff]
      %v1525 = vld [vmem:[#allocation2 + $0x38] sm:$0xff]
      %v1526 = vld [vmem:[#allocation2 + $0x40] sm:$0xff]
      %v1527 = vld [vmem:[#allocation2 + $0x48] sm:$0xff]
      %v1528 = vld [vmem:[#allocation2 + $0x50] sm:$0xff]
      %v1529 = vld [vmem:[#allocation2 + $0x58] sm:$0xff]
      %v1530 = vld [vmem:[#allocation2 + $0x60] sm:$0xff]
      %v1531 = vld [vmem:[#allocation2 + $0x68] sm:$0xff]
      %v1532 = vld [vmem:[#allocation2 + $0x70] sm:$0xff]
      %v1533 = vld [vmem:[#allocation2 + $0x78] sm:$0xff]
      %v1534 = vld [vmem:[#allocation2 + $0x80] sm:$0xff]
      %v1535 = vld [vmem:[#allocation2 + $0x88] sm:$0xff]
      %v1536 = vld [vmem:[#allocation2 + $0x90] sm:$0xff]
      %v1537 = vld [vmem:[#allocation2 + $0x98] sm:$0xff]
      %v1538 = vld [vmem:[#allocation2 + $0xa0] sm:$0xff]
      %v1539 = vld [vmem:[#allocation2 + $0xa8] sm:$0xff]
      %v1540 = vld [vmem:[#allocation2 + $0xb0] sm:$0xff]
      %v1541 = vld [vmem:[#allocation2 + $0xb8] sm:$0xff]
      %v1542 = vld [vmem:[#allocation2 + $0xc0] sm:$0xff]
      %v1543 = vld [vmem:[#allocation2 + $0xc8] sm:$0xff]
      %v1544 = vld [vmem:[#allocation2 + $0xd0] sm:$0xff]
      %v1545 = vld [vmem:[#allocation2 + $0xd8] sm:$0xff]
      %v1546 = vld [vmem:[#allocation2 + $0xe0] sm:$0xff]
      %v1547 = vld [vmem:[#allocation2 + $0xe8] sm:$0xff]
      %v1548 = vld [vmem:[#allocation2 + $0xf0] sm:$0xff]
      %v1549 = vld [vmem:[#allocation2 + $0xf8] sm:$0xff]
      %v1550 = vadd.f32 %v1518, %v1392
      %v1551 = vadd.f32 %v1519, %v1395
      %v1552 = vadd.f32 %v1520, %v1400
      %v1553 = vadd.f32 %v1521, %v1403
      %v1554 = vadd.f32 %v1522, %v1408
      %v1555 = vadd.f32 %v1523, %v1411
      %v1556 = vadd.f32 %v1524, %v1416
      %v1557 = vadd.f32 %v1525, %v1419
      %v1558 = vadd.f32 %v1526, %v1424
      %v1559 = vadd.f32 %v1527, %v1427
      %v1560 = vadd.f32 %v1528, %v1432
      %v1561 = vadd.f32 %v1529, %v1435
      %v1562 = vadd.f32 %v1530, %v1440
      %v1563 = vadd.f32 %v1531, %v1443
      %v1564 = vadd.f32 %v1532, %v1448
      %v1565 = vadd.f32 %v1533, %v1451
      %v1566 = vadd.f32 %v1534, %v1456
      %v1567 = vadd.f32 %v1535, %v1459
      %v1568 = vadd.f32 %v1536, %v1464
      %v1569 = vadd.f32 %v1537, %v1467
      %v1570 = vadd.f32 %v1538, %v1472
      %v1571 = vadd.f32 %v1539, %v1475
      %v1572 = vadd.f32 %v1540, %v1480
      %v1573 = vadd.f32 %v1541, %v1483
      %v1574 = vadd.f32 %v1542, %v1488
      %v1575 = vadd.f32 %v1543, %v1491
      %v1576 = vadd.f32 %v1544, %v1496
      %v1577 = vadd.f32 %v1545, %v1499
      %v1578 = vadd.f32 %v1546, %v1504
      %v1579 = vadd.f32 %v1547, %v1507
      %v1580 = vadd.f32 %v1548, %v1512
      %v1581 = vadd.f32 %v1549, %v1515
      %1582 = vst [vmem:[#allocation2] sm:$0xff] %v1550
      %1583 = vst [vmem:[#allocation2 + $0x8] sm:$0xff] %v1551
      %1584 = vst [vmem:[#allocation2 + $0x10] sm:$0xff] %v1552
      %1585 = vst [vmem:[#allocation2 + $0x18] sm:$0xff] %v1553
      %1586 = vst [vmem:[#allocation2 + $0x20] sm:$0xff] %v1554
      %1587 = vst [vmem:[#allocation2 + $0x28] sm:$0xff] %v1555
      %1588 = vst [vmem:[#allocation2 + $0x30] sm:$0xff] %v1556
      %1589 = vst [vmem:[#allocation2 + $0x38] sm:$0xff] %v1557
      %1590 = vst [vmem:[#allocation2 + $0x40] sm:$0xff] %v1558
      %1591 = vst [vmem:[#allocation2 + $0x48] sm:$0xff] %v1559
      %1592 = vst [vmem:[#allocation2 + $0x50] sm:$0xff] %v1560
      %1593 = vst [vmem:[#allocation2 + $0x58] sm:$0xff] %v1561
      %1594 = vst [vmem:[#allocation2 + $0x60] sm:$0xff] %v1562
      %1595 = vst [vmem:[#allocation2 + $0x68] sm:$0xff] %v1563
      %1596 = vst [vmem:[#allocation2 + $0x70] sm:$0xff] %v1564
      %1597 = vst [vmem:[#allocation2 + $0x78] sm:$0xff] %v1565
      %1598 = vst [vmem:[#allocation2 + $0x80] sm:$0xff] %v1566
      %1599 = vst [vmem:[#allocation2 + $0x88] sm:$0xff] %v1567
      %1600 = vst [vmem:[#allocation2 + $0x90] sm:$0xff] %v1568
      %1601 = vst [vmem:[#allocation2 + $0x98] sm:$0xff] %v1569
      %1602 = vst [vmem:[#allocation2 + $0xa0] sm:$0xff] %v1570
      %1603 = vst [vmem:[#allocation2 + $0xa8] sm:$0xff] %v1571
      %1604 = vst [vmem:[#allocation2 + $0xb0] sm:$0xff] %v1572
      %1605 = vst [vmem:[#allocation2 + $0xb8] sm:$0xff] %v1573
      %1606 = vst [vmem:[#allocation2 + $0xc0] sm:$0xff] %v1574
      %1607 = vst [vmem:[#allocation2 + $0xc8] sm:$0xff] %v1575
      %1608 = vst [vmem:[#allocation2 + $0xd0] sm:$0xff] %v1576
      %1609 = vst [vmem:[#allocation2 + $0xd8] sm:$0xff] %v1577
      %1610 = vst [vmem:[#allocation2 + $0xe0] sm:$0xff] %v1578
      %1611 = vst [vmem:[#allocation2 + $0xe8] sm:$0xff] %v1579
      %1612 = vst [vmem:[#allocation2 + $0xf0] sm:$0xff] %v1580
      %1613 = vst [vmem:[#allocation2 + $0xf8] sm:$0xff] %v1581
      %v1614 = vld [vmem:[%s192 + $0x20] sm:$0xff]
      %v1615 = vld [vmem:[%s192 + $0x28] sm:$0xff]
      %v1616 = vld [vmem:[%s192 + $0x30] sm:$0xff]
      %v1617 = vld [vmem:[%s192 + $0x38] sm:$0xff]
      %v1618 = vld [vmem:[%s192 + $0x40] sm:$0xff]
      %v1619 = vld [vmem:[%s192 + $0x48] sm:$0xff]
      %v1620 = vld [vmem:[%s192 + $0x50] sm:$0xff]
      %v1621 = vld [vmem:[%s192 + $0x58] sm:$0xff]
      %v1622 = vld [vmem:[%s192 + $0x60] sm:$0xff]
      %v1623 = vld [vmem:[%s192 + $0x68] sm:$0xff]
      %v1624 = vld [vmem:[%s192 + $0x70] sm:$0xff]
      %v1625 = vld [vmem:[%s192 + $0x78] sm:$0xff]
      %v1626 = vld [vmem:[%s192 + $0x80] sm:$0xff]
      %v1627 = vld [vmem:[%s192 + $0x88] sm:$0xff]
      %v1628 = vld [vmem:[%s192 + $0x90] sm:$0xff]
      %v1629 = vld [vmem:[%s192 + $0x98] sm:$0xff]
      %v1630 = vld [vmem:[%s192 + $0xa0] sm:$0xff]
      %v1631 = vld [vmem:[%s192 + $0xa8] sm:$0xff]
      %v1632 = vld [vmem:[%s192 + $0xb0] sm:$0xff]
      %v1633 = vld [vmem:[%s192 + $0xb8] sm:$0xff]
      %v1634 = vld [vmem:[%s192 + $0xc0] sm:$0xff]
      %v1635 = vld [vmem:[%s192 + $0xc8] sm:$0xff]
      %v1636 = vld [vmem:[%s192 + $0xd0] sm:$0xff]
      %v1637 = vld [vmem:[%s192 + $0xd8] sm:$0xff]
      %v1638 = vld [vmem:[%s192 + $0xe0] sm:$0xff]
      %v1639 = vld [vmem:[%s192 + $0xe8] sm:$0xff]
      %v1640 = vld [vmem:[%s192 + $0xf0] sm:$0xff]
      %v1641 = vld [vmem:[%s192 + $0xf8] sm:$0xff]
      %v1642 = vld [vmem:[%s192 + $0x100] sm:$0xff]
      %v1643 = vld [vmem:[%s192 + $0x108] sm:$0xff]
      %v1644 = vld [vmem:[%s192 + $0x110] sm:$0xff]
      %v1645 = vld [vmem:[%s192 + $0x118] sm:$0xff]
      %v1646 = vpack.c.bf16 %v1615, %v1614
      %v1647 = vpack.c.bf16 %v1617, %v1616
      %v1648 = vpack.c.bf16 %v1619, %v1618
      %v1649 = vpack.c.bf16 %v1621, %v1620
      %v1650 = vpack.c.bf16 %v1623, %v1622
      %v1651 = vpack.c.bf16 %v1625, %v1624
      %v1652 = vpack.c.bf16 %v1627, %v1626
      %v1653 = vpack.c.bf16 %v1629, %v1628
      %v1654 = vpack.c.bf16 %v1631, %v1630
      %v1655 = vpack.c.bf16 %v1633, %v1632
      %v1656 = vpack.c.bf16 %v1635, %v1634
      %v1657 = vpack.c.bf16 %v1637, %v1636
      %v1658 = vpack.c.bf16 %v1639, %v1638
      %v1659 = vpack.c.bf16 %v1641, %v1640
      %v1660 = vpack.c.bf16 %v1643, %v1642
      %v1661 = vpack.c.bf16 %v1645, %v1644
      %s1662 = scalar_lea.vmem %s1, 256
      %v1663 = vld [vmem:[%s1662] sm:$0xf]
      %v1664 = vld [vmem:[%s1662 + $0x4] sm:$0xf]
      %v1665 = vld [vmem:[%s1662 + $0x8] sm:$0xf]
      %v1666 = vld [vmem:[%s1662 + $0xc] sm:$0xf]
      %v1667 = vld [vmem:[%s1662 + $0x10] sm:$0xf]
      %v1668 = vld [vmem:[%s1662 + $0x14] sm:$0xf]
      %v1669 = vld [vmem:[%s1662 + $0x18] sm:$0xf]
      %v1670 = vld [vmem:[%s1662 + $0x1c] sm:$0xf]
      %v1671 = vld [vmem:[%s1662 + $0x20] sm:$0xf]
      %v1672 = vld [vmem:[%s1662 + $0x24] sm:$0xf]
      %v1673 = vld [vmem:[%s1662 + $0x28] sm:$0xf]
      %v1674 = vld [vmem:[%s1662 + $0x2c] sm:$0xf]
      %v1675 = vld [vmem:[%s1662 + $0x30] sm:$0xf]
      %v1676 = vld [vmem:[%s1662 + $0x34] sm:$0xf]
      %v1677 = vld [vmem:[%s1662 + $0x38] sm:$0xf]
      %v1678 = vld [vmem:[%s1662 + $0x3c] sm:$0xf]
      %v1695 = vunpack.c.l.b16 %v1663
      %v1696 = vunpack.c.l.b16 %v1664
      %v1697 = vunpack.c.l.b16 %v1665
      %v1698 = vunpack.c.l.b16 %v1666
      %v1699 = vunpack.c.l.b16 %v1667
      %v1700 = vunpack.c.l.b16 %v1668
      %v1701 = vunpack.c.l.b16 %v1669
      %v1702 = vunpack.c.l.b16 %v1670
      %v1703 = vunpack.c.l.b16 %v1671
      %v1704 = vunpack.c.l.b16 %v1672
      %v1705 = vunpack.c.l.b16 %v1673
      %v1706 = vunpack.c.l.b16 %v1674
      %v1707 = vunpack.c.l.b16 %v1675
      %v1708 = vunpack.c.l.b16 %v1676
      %v1709 = vunpack.c.l.b16 %v1677
      %v1710 = vunpack.c.l.b16 %v1678
      %v1711 = vpack.c.b16 %v1696, %v1695
      %v1712 = vpack.c.b16 %v1698, %v1697
      %v1713 = vpack.c.b16 %v1700, %v1699
      %v1714 = vpack.c.b16 %v1702, %v1701
      %v1715 = vpack.c.b16 %v1704, %v1703
      %v1716 = vpack.c.b16 %v1706, %v1705
      %v1717 = vpack.c.b16 %v1708, %v1707
      %v1718 = vpack.c.b16 %v1710, %v1709
      %1727 = vmatprep.subr.bf16.mxu0 0
      %1728 = vmatpush1.bf16.msra.mxu0 %v1718
      %1729 = vmatprep.subr.bf16.mxu0 0
      %1730 = vmatpush1.bf16.msra.mxu0 %v1717
      %1731 = vmatprep.subr.bf16.mxu0 0
      %1732 = vmatpush1.bf16.msra.mxu0 %v1716
      %1733 = vmatprep.subr.bf16.mxu0 0
      %1734 = vmatpush1.bf16.msra.mxu0 %v1715
      %1735 = vmatprep.subr.bf16.mxu0 0
      %1736 = vmatpush1.bf16.msra.mxu0 %v1714
      %1737 = vmatprep.subr.bf16.mxu0 0
      %1738 = vmatpush1.bf16.msra.mxu0 %v1713
      %1739 = vmatprep.subr.bf16.mxu0 0
      %1740 = vmatpush1.bf16.msra.mxu0 %v1712
      %1741 = vmatprep.subr.bf16.mxu0 0
      %1742 = vmatpush1.bf16.msra.mxu0 %v1711
      %1743 = vmatprep.subr.bf16.mxu0 0
      %1744 = vmatpush2.bf16.msra.mxu0 0
      %1745 = vmatprep.subr.bf16.mxu0 0
      %1746 = vmatpush2.bf16.msra.mxu0 0
      %1747 = vmatprep.subr.bf16.mxu0 0
      %1748 = vmatpush2.bf16.msra.mxu0 0
      %1749 = vmatprep.subr.bf16.mxu0 0
      %1750 = vmatpush2.bf16.msra.mxu0 0
      %1751 = vmatprep.subr.bf16.mxu0 0
      %1752 = vmatpush2.bf16.msra.mxu0 0
      %1753 = vmatprep.subr.bf16.mxu0 0
      %1754 = vmatpush2.bf16.msra.mxu0 0
      %1755 = vmatprep.subr.bf16.mxu0 0
      %1756 = vmatpush2.bf16.msra.mxu0 0
      %1757 = vmatprep.subr.bf16.mxu0 0
      %1758 = vmatpush2.bf16.msra.mxu0 0
      %1759 = vmatprep.mubr.bf16.mxu0 0
      %1760 = vmatmul.mubr.bf16.gmra.mxu0 %v1646
      %v1761 = vpop.f32.mrf.mxu0
      %v1762 = vadd.f32 0.0, %v1761
      %v1763 = vpop.f32.mrf.mxu0
      %v1764 = vpop.f32.mrf.mxu0
      %v1765 = vadd.f32 0.0, %v1764
      %v1766 = vpop.f32.mrf.mxu0
      %1767 = vmatprep.mubr.bf16.mxu0 0
      %1768 = vmatmul.mubr.bf16.gmra.mxu0 %v1647
      %v1769 = vpop.f32.mrf.mxu0
      %v1770 = vadd.f32 0.0, %v1769
      %v1771 = vpop.f32.mrf.mxu0
      %v1772 = vpop.f32.mrf.mxu0
      %v1773 = vadd.f32 0.0, %v1772
      %v1774 = vpop.f32.mrf.mxu0
      %1775 = vmatprep.mubr.bf16.mxu0 0
      %1776 = vmatmul.mubr.bf16.gmra.mxu0 %v1648
      %v1777 = vpop.f32.mrf.mxu0
      %v1778 = vadd.f32 0.0, %v1777
      %v1779 = vpop.f32.mrf.mxu0
      %v1780 = vpop.f32.mrf.mxu0
      %v1781 = vadd.f32 0.0, %v1780
      %v1782 = vpop.f32.mrf.mxu0
      %1783 = vmatprep.mubr.bf16.mxu0 0
      %1784 = vmatmul.mubr.bf16.gmra.mxu0 %v1649
      %v1785 = vpop.f32.mrf.mxu0
      %v1786 = vadd.f32 0.0, %v1785
      %v1787 = vpop.f32.mrf.mxu0
      %v1788 = vpop.f32.mrf.mxu0
      %v1789 = vadd.f32 0.0, %v1788
      %v1790 = vpop.f32.mrf.mxu0
      %1791 = vmatprep.mubr.bf16.mxu0 0
      %1792 = vmatmul.mubr.bf16.gmra.mxu0 %v1650
      %v1793 = vpop.f32.mrf.mxu0
      %v1794 = vadd.f32 0.0, %v1793
      %v1795 = vpop.f32.mrf.mxu0
      %v1796 = vpop.f32.mrf.mxu0
      %v1797 = vadd.f32 0.0, %v1796
      %v1798 = vpop.f32.mrf.mxu0
      %1799 = vmatprep.mubr.bf16.mxu0 0
      %1800 = vmatmul.mubr.bf16.gmra.mxu0 %v1651
      %v1801 = vpop.f32.mrf.mxu0
      %v1802 = vadd.f32 0.0, %v1801
      %v1803 = vpop.f32.mrf.mxu0
      %v1804 = vpop.f32.mrf.mxu0
      %v1805 = vadd.f32 0.0, %v1804
      %v1806 = vpop.f32.mrf.mxu0
      %1807 = vmatprep.mubr.bf16.mxu0 0
      %1808 = vmatmul.mubr.bf16.gmra.mxu0 %v1652
      %v1809 = vpop.f32.mrf.mxu0
      %v1810 = vadd.f32 0.0, %v1809
      %v1811 = vpop.f32.mrf.mxu0
      %v1812 = vpop.f32.mrf.mxu0
      %v1813 = vadd.f32 0.0, %v1812
      %v1814 = vpop.f32.mrf.mxu0
      %1815 = vmatprep.mubr.bf16.mxu0 0
      %1816 = vmatmul.mubr.bf16.gmra.mxu0 %v1653
      %v1817 = vpop.f32.mrf.mxu0
      %v1818 = vadd.f32 0.0, %v1817
      %v1819 = vpop.f32.mrf.mxu0
      %v1820 = vpop.f32.mrf.mxu0
      %v1821 = vadd.f32 0.0, %v1820
      %v1822 = vpop.f32.mrf.mxu0
      %1823 = vmatprep.mubr.bf16.mxu0 0
      %1824 = vmatmul.mubr.bf16.gmra.mxu0 %v1654
      %v1825 = vpop.f32.mrf.mxu0
      %v1826 = vadd.f32 0.0, %v1825
      %v1827 = vpop.f32.mrf.mxu0
      %v1828 = vpop.f32.mrf.mxu0
      %v1829 = vadd.f32 0.0, %v1828
      %v1830 = vpop.f32.mrf.mxu0
      %1831 = vmatprep.mubr.bf16.mxu0 0
      %1832 = vmatmul.mubr.bf16.gmra.mxu0 %v1655
      %v1833 = vpop.f32.mrf.mxu0
      %v1834 = vadd.f32 0.0, %v1833
      %v1835 = vpop.f32.mrf.mxu0
      %v1836 = vpop.f32.mrf.mxu0
      %v1837 = vadd.f32 0.0, %v1836
      %v1838 = vpop.f32.mrf.mxu0
      %1839 = vmatprep.mubr.bf16.mxu0 0
      %1840 = vmatmul.mubr.bf16.gmra.mxu0 %v1656
      %v1841 = vpop.f32.mrf.mxu0
      %v1842 = vadd.f32 0.0, %v1841
      %v1843 = vpop.f32.mrf.mxu0
      %v1844 = vpop.f32.mrf.mxu0
      %v1845 = vadd.f32 0.0, %v1844
      %v1846 = vpop.f32.mrf.mxu0
      %1847 = vmatprep.mubr.bf16.mxu0 0
      %1848 = vmatmul.mubr.bf16.gmra.mxu0 %v1657
      %v1849 = vpop.f32.mrf.mxu0
      %v1850 = vadd.f32 0.0, %v1849
      %v1851 = vpop.f32.mrf.mxu0
      %v1852 = vpop.f32.mrf.mxu0
      %v1853 = vadd.f32 0.0, %v1852
      %v1854 = vpop.f32.mrf.mxu0
      %1855 = vmatprep.mubr.bf16.mxu0 0
      %1856 = vmatmul.mubr.bf16.gmra.mxu0 %v1658
      %v1857 = vpop.f32.mrf.mxu0
      %v1858 = vadd.f32 0.0, %v1857
      %v1859 = vpop.f32.mrf.mxu0
      %v1860 = vpop.f32.mrf.mxu0
      %v1861 = vadd.f32 0.0, %v1860
      %v1862 = vpop.f32.mrf.mxu0
      %1863 = vmatprep.mubr.bf16.mxu0 0
      %1864 = vmatmul.mubr.bf16.gmra.mxu0 %v1659
      %v1865 = vpop.f32.mrf.mxu0
      %v1866 = vadd.f32 0.0, %v1865
      %v1867 = vpop.f32.mrf.mxu0
      %v1868 = vpop.f32.mrf.mxu0
      %v1869 = vadd.f32 0.0, %v1868
      %v1870 = vpop.f32.mrf.mxu0
      %1871 = vmatprep.mubr.bf16.mxu0 0
      %1872 = vmatmul.mubr.bf16.gmra.mxu0 %v1660
      %v1873 = vpop.f32.mrf.mxu0
      %v1874 = vadd.f32 0.0, %v1873
      %v1875 = vpop.f32.mrf.mxu0
      %v1876 = vpop.f32.mrf.mxu0
      %v1877 = vadd.f32 0.0, %v1876
      %v1878 = vpop.f32.mrf.mxu0
      %1879 = vmatprep.mubr.bf16.mxu0 0
      %1880 = vmatmul.mubr.bf16.gmra.mxu0 %v1661
      %v1881 = vpop.f32.mrf.mxu0
      %v1882 = vadd.f32 0.0, %v1881
      %v1883 = vpop.f32.mrf.mxu0
      %v1884 = vpop.f32.mrf.mxu0
      %v1885 = vadd.f32 0.0, %v1884
      %v1886 = vpop.f32.mrf.mxu0
      %1887 = vdwg.mxu0
      %v1888 = vld [vmem:[#allocation2] sm:$0xff]
      %v1889 = vld [vmem:[#allocation2 + $0x8] sm:$0xff]
      %v1890 = vld [vmem:[#allocation2 + $0x10] sm:$0xff]
      %v1891 = vld [vmem:[#allocation2 + $0x18] sm:$0xff]
      %v1892 = vld [vmem:[#allocation2 + $0x20] sm:$0xff]
      %v1893 = vld [vmem:[#allocation2 + $0x28] sm:$0xff]
      %v1894 = vld [vmem:[#allocation2 + $0x30] sm:$0xff]
      %v1895 = vld [vmem:[#allocation2 + $0x38] sm:$0xff]
      %v1896 = vld [vmem:[#allocation2 + $0x40] sm:$0xff]
      %v1897 = vld [vmem:[#allocation2 + $0x48] sm:$0xff]
      %v1898 = vld [vmem:[#allocation2 + $0x50] sm:$0xff]
      %v1899 = vld [vmem:[#allocation2 + $0x58] sm:$0xff]
      %v1900 = vld [vmem:[#allocation2 + $0x60] sm:$0xff]
      %v1901 = vld [vmem:[#allocation2 + $0x68] sm:$0xff]
      %v1902 = vld [vmem:[#allocation2 + $0x70] sm:$0xff]
      %v1903 = vld [vmem:[#allocation2 + $0x78] sm:$0xff]
      %v1904 = vld [vmem:[#allocation2 + $0x80] sm:$0xff]
      %v1905 = vld [vmem:[#allocation2 + $0x88] sm:$0xff]
      %v1906 = vld [vmem:[#allocation2 + $0x90] sm:$0xff]
      %v1907 = vld [vmem:[#allocation2 + $0x98] sm:$0xff]
      %v1908 = vld [vmem:[#allocation2 + $0xa0] sm:$0xff]
      %v1909 = vld [vmem:[#allocation2 + $0xa8] sm:$0xff]
      %v1910 = vld [vmem:[#allocation2 + $0xb0] sm:$0xff]
      %v1911 = vld [vmem:[#allocation2 + $0xb8] sm:$0xff]
      %v1912 = vld [vmem:[#allocation2 + $0xc0] sm:$0xff]
      %v1913 = vld [vmem:[#allocation2 + $0xc8] sm:$0xff]
      %v1914 = vld [vmem:[#allocation2 + $0xd0] sm:$0xff]
      %v1915 = vld [vmem:[#allocation2 + $0xd8] sm:$0xff]
      %v1916 = vld [vmem:[#allocation2 + $0xe0] sm:$0xff]
      %v1917 = vld [vmem:[#allocation2 + $0xe8] sm:$0xff]
      %v1918 = vld [vmem:[#allocation2 + $0xf0] sm:$0xff]
      %v1919 = vld [vmem:[#allocation2 + $0xf8] sm:$0xff]
      %v1920 = vadd.f32 %v1888, %v1762
      %v1921 = vadd.f32 %v1889, %v1765
      %v1922 = vadd.f32 %v1890, %v1770
      %v1923 = vadd.f32 %v1891, %v1773
      %v1924 = vadd.f32 %v1892, %v1778
      %v1925 = vadd.f32 %v1893, %v1781
      %v1926 = vadd.f32 %v1894, %v1786
      %v1927 = vadd.f32 %v1895, %v1789
      %v1928 = vadd.f32 %v1896, %v1794
      %v1929 = vadd.f32 %v1897, %v1797
      %v1930 = vadd.f32 %v1898, %v1802
      %v1931 = vadd.f32 %v1899, %v1805
      %v1932 = vadd.f32 %v1900, %v1810
      %v1933 = vadd.f32 %v1901, %v1813
      %v1934 = vadd.f32 %v1902, %v1818
      %v1935 = vadd.f32 %v1903, %v1821
      %v1936 = vadd.f32 %v1904, %v1826
      %v1937 = vadd.f32 %v1905, %v1829
      %v1938 = vadd.f32 %v1906, %v1834
      %v1939 = vadd.f32 %v1907, %v1837
      %v1940 = vadd.f32 %v1908, %v1842
      %v1941 = vadd.f32 %v1909, %v1845
      %v1942 = vadd.f32 %v1910, %v1850
      %v1943 = vadd.f32 %v1911, %v1853
      %v1944 = vadd.f32 %v1912, %v1858
      %v1945 = vadd.f32 %v1913, %v1861
      %v1946 = vadd.f32 %v1914, %v1866
      %v1947 = vadd.f32 %v1915, %v1869
      %v1948 = vadd.f32 %v1916, %v1874
      %v1949 = vadd.f32 %v1917, %v1877
      %v1950 = vadd.f32 %v1918, %v1882
      %v1951 = vadd.f32 %v1919, %v1885
      %1952 = vst [vmem:[#allocation2] sm:$0xff] %v1920
      %1953 = vst [vmem:[#allocation2 + $0x8] sm:$0xff] %v1921
      %1954 = vst [vmem:[#allocation2 + $0x10] sm:$0xff] %v1922
      %1955 = vst [vmem:[#allocation2 + $0x18] sm:$0xff] %v1923
      %1956 = vst [vmem:[#allocation2 + $0x20] sm:$0xff] %v1924
      %1957 = vst [vmem:[#allocation2 + $0x28] sm:$0xff] %v1925
      %1958 = vst [vmem:[#allocation2 + $0x30] sm:$0xff] %v1926
      %1959 = vst [vmem:[#allocation2 + $0x38] sm:$0xff] %v1927
      %1960 = vst [vmem:[#allocation2 + $0x40] sm:$0xff] %v1928
      %1961 = vst [vmem:[#allocation2 + $0x48] sm:$0xff] %v1929
      %1962 = vst [vmem:[#allocation2 + $0x50] sm:$0xff] %v1930
      %1963 = vst [vmem:[#allocation2 + $0x58] sm:$0xff] %v1931
      %1964 = vst [vmem:[#allocation2 + $0x60] sm:$0xff] %v1932
      %1965 = vst [vmem:[#allocation2 + $0x68] sm:$0xff] %v1933
      %1966 = vst [vmem:[#allocation2 + $0x70] sm:$0xff] %v1934
      %1967 = vst [vmem:[#allocation2 + $0x78] sm:$0xff] %v1935
      %1968 = vst [vmem:[#allocation2 + $0x80] sm:$0xff] %v1936
      %1969 = vst [vmem:[#allocation2 + $0x88] sm:$0xff] %v1937
      %1970 = vst [vmem:[#allocation2 + $0x90] sm:$0xff] %v1938
      %1971 = vst [vmem:[#allocation2 + $0x98] sm:$0xff] %v1939
      %1972 = vst [vmem:[#allocation2 + $0xa0] sm:$0xff] %v1940
      %1973 = vst [vmem:[#allocation2 + $0xa8] sm:$0xff] %v1941
      %1974 = vst [vmem:[#allocation2 + $0xb0] sm:$0xff] %v1942
      %1975 = vst [vmem:[#allocation2 + $0xb8] sm:$0xff] %v1943
      %1976 = vst [vmem:[#allocation2 + $0xc0] sm:$0xff] %v1944
      %1977 = vst [vmem:[#allocation2 + $0xc8] sm:$0xff] %v1945
      %1978 = vst [vmem:[#allocation2 + $0xd0] sm:$0xff] %v1946
      %1979 = vst [vmem:[#allocation2 + $0xd8] sm:$0xff] %v1947
      %1980 = vst [vmem:[#allocation2 + $0xe0] sm:$0xff] %v1948
      %1981 = vst [vmem:[#allocation2 + $0xe8] sm:$0xff] %v1949
      %1982 = vst [vmem:[#allocation2 + $0xf0] sm:$0xff] %v1950
      %1983 = vst [vmem:[#allocation2 + $0xf8] sm:$0xff] %v1951
      %v1984 = vld [vmem:[%s192 + $0x21] sm:$0xff]
      %v1985 = vld [vmem:[%s192 + $0x29] sm:$0xff]
      %v1986 = vld [vmem:[%s192 + $0x31] sm:$0xff]
      %v1987 = vld [vmem:[%s192 + $0x39] sm:$0xff]
      %v1988 = vld [vmem:[%s192 + $0x41] sm:$0xff]
      %v1989 = vld [vmem:[%s192 + $0x49] sm:$0xff]
      %v1990 = vld [vmem:[%s192 + $0x51] sm:$0xff]
      %v1991 = vld [vmem:[%s192 + $0x59] sm:$0xff]
      %v1992 = vld [vmem:[%s192 + $0x61] sm:$0xff]
      %v1993 = vld [vmem:[%s192 + $0x69] sm:$0xff]
      %v1994 = vld [vmem:[%s192 + $0x71] sm:$0xff]
      %v1995 = vld [vmem:[%s192 + $0x79] sm:$0xff]
      %v1996 = vld [vmem:[%s192 + $0x81] sm:$0xff]
      %v1997 = vld [vmem:[%s192 + $0x89] sm:$0xff]
      %v1998 = vld [vmem:[%s192 + $0x91] sm:$0xff]
      %v1999 = vld [vmem:[%s192 + $0x99] sm:$0xff]
      %v2000 = vld [vmem:[%s192 + $0xa1] sm:$0xff]
      %v2001 = vld [vmem:[%s192 + $0xa9] sm:$0xff]
      %v2002 = vld [vmem:[%s192 + $0xb1] sm:$0xff]
      %v2003 = vld [vmem:[%s192 + $0xb9] sm:$0xff]
      %v2004 = vld [vmem:[%s192 + $0xc1] sm:$0xff]
      %v2005 = vld [vmem:[%s192 + $0xc9] sm:$0xff]
      %v2006 = vld [vmem:[%s192 + $0xd1] sm:$0xff]
      %v2007 = vld [vmem:[%s192 + $0xd9] sm:$0xff]
      %v2008 = vld [vmem:[%s192 + $0xe1] sm:$0xff]
      %v2009 = vld [vmem:[%s192 + $0xe9] sm:$0xff]
      %v2010 = vld [vmem:[%s192 + $0xf1] sm:$0xff]
      %v2011 = vld [vmem:[%s192 + $0xf9] sm:$0xff]
      %v2012 = vld [vmem:[%s192 + $0x101] sm:$0xff]
      %v2013 = vld [vmem:[%s192 + $0x109] sm:$0xff]
      %v2014 = vld [vmem:[%s192 + $0x111] sm:$0xff]
      %v2015 = vld [vmem:[%s192 + $0x119] sm:$0xff]
      %v2016 = vpack.c.bf16 %v1985, %v1984
      %v2017 = vpack.c.bf16 %v1987, %v1986
      %v2018 = vpack.c.bf16 %v1989, %v1988
      %v2019 = vpack.c.bf16 %v1991, %v1990
      %v2020 = vpack.c.bf16 %v1993, %v1992
      %v2021 = vpack.c.bf16 %v1995, %v1994
      %v2022 = vpack.c.bf16 %v1997, %v1996
      %v2023 = vpack.c.bf16 %v1999, %v1998
      %v2024 = vpack.c.bf16 %v2001, %v2000
      %v2025 = vpack.c.bf16 %v2003, %v2002
      %v2026 = vpack.c.bf16 %v2005, %v2004
      %v2027 = vpack.c.bf16 %v2007, %v2006
      %v2028 = vpack.c.bf16 %v2009, %v2008
      %v2029 = vpack.c.bf16 %v2011, %v2010
      %v2030 = vpack.c.bf16 %v2013, %v2012
      %v2031 = vpack.c.bf16 %v2015, %v2014
      %s2032 = scalar_lea.vmem %s1, 320
      %v2033 = vld [vmem:[%s2032] sm:$0xf]
      %v2034 = vld [vmem:[%s2032 + $0x4] sm:$0xf]
      %v2035 = vld [vmem:[%s2032 + $0x8] sm:$0xf]
      %v2036 = vld [vmem:[%s2032 + $0xc] sm:$0xf]
      %v2037 = vld [vmem:[%s2032 + $0x10] sm:$0xf]
      %v2038 = vld [vmem:[%s2032 + $0x14] sm:$0xf]
      %v2039 = vld [vmem:[%s2032 + $0x18] sm:$0xf]
      %v2040 = vld [vmem:[%s2032 + $0x1c] sm:$0xf]
      %v2041 = vld [vmem:[%s2032 + $0x20] sm:$0xf]
      %v2042 = vld [vmem:[%s2032 + $0x24] sm:$0xf]
      %v2043 = vld [vmem:[%s2032 + $0x28] sm:$0xf]
      %v2044 = vld [vmem:[%s2032 + $0x2c] sm:$0xf]
      %v2045 = vld [vmem:[%s2032 + $0x30] sm:$0xf]
      %v2046 = vld [vmem:[%s2032 + $0x34] sm:$0xf]
      %v2047 = vld [vmem:[%s2032 + $0x38] sm:$0xf]
      %v2048 = vld [vmem:[%s2032 + $0x3c] sm:$0xf]
      %v2065 = vunpack.c.l.b16 %v2033
      %v2066 = vunpack.c.l.b16 %v2034
      %v2067 = vunpack.c.l.b16 %v2035
      %v2068 = vunpack.c.l.b16 %v2036
      %v2069 = vunpack.c.l.b16 %v2037
      %v2070 = vunpack.c.l.b16 %v2038
      %v2071 = vunpack.c.l.b16 %v2039
      %v2072 = vunpack.c.l.b16 %v2040
      %v2073 = vunpack.c.l.b16 %v2041
      %v2074 = vunpack.c.l.b16 %v2042
      %v2075 = vunpack.c.l.b16 %v2043
      %v2076 = vunpack.c.l.b16 %v2044
      %v2077 = vunpack.c.l.b16 %v2045
      %v2078 = vunpack.c.l.b16 %v2046
      %v2079 = vunpack.c.l.b16 %v2047
      %v2080 = vunpack.c.l.b16 %v2048
      %v2081 = vpack.c.b16 %v2066, %v2065
      %v2082 = vpack.c.b16 %v2068, %v2067
      %v2083 = vpack.c.b16 %v2070, %v2069
      %v2084 = vpack.c.b16 %v2072, %v2071
      %v2085 = vpack.c.b16 %v2074, %v2073
      %v2086 = vpack.c.b16 %v2076, %v2075
      %v2087 = vpack.c.b16 %v2078, %v2077
      %v2088 = vpack.c.b16 %v2080, %v2079
      %2097 = vmatprep.subr.bf16.mxu0 0
      %2098 = vmatpush1.bf16.msra.mxu0 %v2088
      %2099 = vmatprep.subr.bf16.mxu0 0
      %2100 = vmatpush1.bf16.msra.mxu0 %v2087
      %2101 = vmatprep.subr.bf16.mxu0 0
      %2102 = vmatpush1.bf16.msra.mxu0 %v2086
      %2103 = vmatprep.subr.bf16.mxu0 0
      %2104 = vmatpush1.bf16.msra.mxu0 %v2085
      %2105 = vmatprep.subr.bf16.mxu0 0
      %2106 = vmatpush1.bf16.msra.mxu0 %v2084
      %2107 = vmatprep.subr.bf16.mxu0 0
      %2108 = vmatpush1.bf16.msra.mxu0 %v2083
      %2109 = vmatprep.subr.bf16.mxu0 0
      %2110 = vmatpush1.bf16.msra.mxu0 %v2082
      %2111 = vmatprep.subr.bf16.mxu0 0
      %2112 = vmatpush1.bf16.msra.mxu0 %v2081
      %2113 = vmatprep.subr.bf16.mxu0 0
      %2114 = vmatpush2.bf16.msra.mxu0 0
      %2115 = vmatprep.subr.bf16.mxu0 0
      %2116 = vmatpush2.bf16.msra.mxu0 0
      %2117 = vmatprep.subr.bf16.mxu0 0
      %2118 = vmatpush2.bf16.msra.mxu0 0
      %2119 = vmatprep.subr.bf16.mxu0 0
      %2120 = vmatpush2.bf16.msra.mxu0 0
      %2121 = vmatprep.subr.bf16.mxu0 0
      %2122 = vmatpush2.bf16.msra.mxu0 0
      %2123 = vmatprep.subr.bf16.mxu0 0
      %2124 = vmatpush2.bf16.msra.mxu0 0
      %2125 = vmatprep.subr.bf16.mxu0 0
      %2126 = vmatpush2.bf16.msra.mxu0 0
      %2127 = vmatprep.subr.bf16.mxu0 0
      %2128 = vmatpush2.bf16.msra.mxu0 0
      %2129 = vmatprep.mubr.bf16.mxu0 0
      %2130 = vmatmul.mubr.bf16.gmra.mxu0 %v2016
      %v2131 = vpop.f32.mrf.mxu0
      %v2132 = vadd.f32 0.0, %v2131
      %v2133 = vpop.f32.mrf.mxu0
      %v2134 = vpop.f32.mrf.mxu0
      %v2135 = vadd.f32 0.0, %v2134
      %v2136 = vpop.f32.mrf.mxu0
      %2137 = vmatprep.mubr.bf16.mxu0 0
      %2138 = vmatmul.mubr.bf16.gmra.mxu0 %v2017
      %v2139 = vpop.f32.mrf.mxu0
      %v2140 = vadd.f32 0.0, %v2139
      %v2141 = vpop.f32.mrf.mxu0
      %v2142 = vpop.f32.mrf.mxu0
      %v2143 = vadd.f32 0.0, %v2142
      %v2144 = vpop.f32.mrf.mxu0
      %2145 = vmatprep.mubr.bf16.mxu0 0
      %2146 = vmatmul.mubr.bf16.gmra.mxu0 %v2018
      %v2147 = vpop.f32.mrf.mxu0
      %v2148 = vadd.f32 0.0, %v2147
      %v2149 = vpop.f32.mrf.mxu0
      %v2150 = vpop.f32.mrf.mxu0
      %v2151 = vadd.f32 0.0, %v2150
      %v2152 = vpop.f32.mrf.mxu0
      %2153 = vmatprep.mubr.bf16.mxu0 0
      %2154 = vmatmul.mubr.bf16.gmra.mxu0 %v2019
      %v2155 = vpop.f32.mrf.mxu0
      %v2156 = vadd.f32 0.0, %v2155
      %v2157 = vpop.f32.mrf.mxu0
      %v2158 = vpop.f32.mrf.mxu0
      %v2159 = vadd.f32 0.0, %v2158
      %v2160 = vpop.f32.mrf.mxu0
      %2161 = vmatprep.mubr.bf16.mxu0 0
      %2162 = vmatmul.mubr.bf16.gmra.mxu0 %v2020
      %v2163 = vpop.f32.mrf.mxu0
      %v2164 = vadd.f32 0.0, %v2163
      %v2165 = vpop.f32.mrf.mxu0
      %v2166 = vpop.f32.mrf.mxu0
      %v2167 = vadd.f32 0.0, %v2166
      %v2168 = vpop.f32.mrf.mxu0
      %2169 = vmatprep.mubr.bf16.mxu0 0
      %2170 = vmatmul.mubr.bf16.gmra.mxu0 %v2021
      %v2171 = vpop.f32.mrf.mxu0
      %v2172 = vadd.f32 0.0, %v2171
      %v2173 = vpop.f32.mrf.mxu0
      %v2174 = vpop.f32.mrf.mxu0
      %v2175 = vadd.f32 0.0, %v2174
      %v2176 = vpop.f32.mrf.mxu0
      %2177 = vmatprep.mubr.bf16.mxu0 0
      %2178 = vmatmul.mubr.bf16.gmra.mxu0 %v2022
      %v2179 = vpop.f32.mrf.mxu0
      %v2180 = vadd.f32 0.0, %v2179
      %v2181 = vpop.f32.mrf.mxu0
      %v2182 = vpop.f32.mrf.mxu0
      %v2183 = vadd.f32 0.0, %v2182
      %v2184 = vpop.f32.mrf.mxu0
      %2185 = vmatprep.mubr.bf16.mxu0 0
      %2186 = vmatmul.mubr.bf16.gmra.mxu0 %v2023
      %v2187 = vpop.f32.mrf.mxu0
      %v2188 = vadd.f32 0.0, %v2187
      %v2189 = vpop.f32.mrf.mxu0
      %v2190 = vpop.f32.mrf.mxu0
      %v2191 = vadd.f32 0.0, %v2190
      %v2192 = vpop.f32.mrf.mxu0
      %2193 = vmatprep.mubr.bf16.mxu0 0
      %2194 = vmatmul.mubr.bf16.gmra.mxu0 %v2024
      %v2195 = vpop.f32.mrf.mxu0
      %v2196 = vadd.f32 0.0, %v2195
      %v2197 = vpop.f32.mrf.mxu0
      %v2198 = vpop.f32.mrf.mxu0
      %v2199 = vadd.f32 0.0, %v2198
      %v2200 = vpop.f32.mrf.mxu0
      %2201 = vmatprep.mubr.bf16.mxu0 0
      %2202 = vmatmul.mubr.bf16.gmra.mxu0 %v2025
      %v2203 = vpop.f32.mrf.mxu0
      %v2204 = vadd.f32 0.0, %v2203
      %v2205 = vpop.f32.mrf.mxu0
      %v2206 = vpop.f32.mrf.mxu0
      %v2207 = vadd.f32 0.0, %v2206
      %v2208 = vpop.f32.mrf.mxu0
      %2209 = vmatprep.mubr.bf16.mxu0 0
      %2210 = vmatmul.mubr.bf16.gmra.mxu0 %v2026
      %v2211 = vpop.f32.mrf.mxu0
      %v2212 = vadd.f32 0.0, %v2211
      %v2213 = vpop.f32.mrf.mxu0
      %v2214 = vpop.f32.mrf.mxu0
      %v2215 = vadd.f32 0.0, %v2214
      %v2216 = vpop.f32.mrf.mxu0
      %2217 = vmatprep.mubr.bf16.mxu0 0
      %2218 = vmatmul.mubr.bf16.gmra.mxu0 %v2027
      %v2219 = vpop.f32.mrf.mxu0
      %v2220 = vadd.f32 0.0, %v2219
      %v2221 = vpop.f32.mrf.mxu0
      %v2222 = vpop.f32.mrf.mxu0
      %v2223 = vadd.f32 0.0, %v2222
      %v2224 = vpop.f32.mrf.mxu0
      %2225 = vmatprep.mubr.bf16.mxu0 0
      %2226 = vmatmul.mubr.bf16.gmra.mxu0 %v2028
      %v2227 = vpop.f32.mrf.mxu0
      %v2228 = vadd.f32 0.0, %v2227
      %v2229 = vpop.f32.mrf.mxu0
      %v2230 = vpop.f32.mrf.mxu0
      %v2231 = vadd.f32 0.0, %v2230
      %v2232 = vpop.f32.mrf.mxu0
      %2233 = vmatprep.mubr.bf16.mxu0 0
      %2234 = vmatmul.mubr.bf16.gmra.mxu0 %v2029
      %v2235 = vpop.f32.mrf.mxu0
      %v2236 = vadd.f32 0.0, %v2235
      %v2237 = vpop.f32.mrf.mxu0
      %v2238 = vpop.f32.mrf.mxu0
      %v2239 = vadd.f32 0.0, %v2238
      %v2240 = vpop.f32.mrf.mxu0
      %2241 = vmatprep.mubr.bf16.mxu0 0
      %2242 = vmatmul.mubr.bf16.gmra.mxu0 %v2030
      %v2243 = vpop.f32.mrf.mxu0
      %v2244 = vadd.f32 0.0, %v2243
      %v2245 = vpop.f32.mrf.mxu0
      %v2246 = vpop.f32.mrf.mxu0
      %v2247 = vadd.f32 0.0, %v2246
      %v2248 = vpop.f32.mrf.mxu0
      %2249 = vmatprep.mubr.bf16.mxu0 0
      %2250 = vmatmul.mubr.bf16.gmra.mxu0 %v2031
      %v2251 = vpop.f32.mrf.mxu0
      %v2252 = vadd.f32 0.0, %v2251
      %v2253 = vpop.f32.mrf.mxu0
      %v2254 = vpop.f32.mrf.mxu0
      %v2255 = vadd.f32 0.0, %v2254
      %v2256 = vpop.f32.mrf.mxu0
      %2257 = vdwg.mxu0
      %v2258 = vld [vmem:[#allocation2] sm:$0xff]
      %v2259 = vld [vmem:[#allocation2 + $0x8] sm:$0xff]
      %v2260 = vld [vmem:[#allocation2 + $0x10] sm:$0xff]
      %v2261 = vld [vmem:[#allocation2 + $0x18] sm:$0xff]
      %v2262 = vld [vmem:[#allocation2 + $0x20] sm:$0xff]
      %v2263 = vld [vmem:[#allocation2 + $0x28] sm:$0xff]
      %v2264 = vld [vmem:[#allocation2 + $0x30] sm:$0xff]
      %v2265 = vld [vmem:[#allocation2 + $0x38] sm:$0xff]
      %v2266 = vld [vmem:[#allocation2 + $0x40] sm:$0xff]
      %v2267 = vld [vmem:[#allocation2 + $0x48] sm:$0xff]
      %v2268 = vld [vmem:[#allocation2 + $0x50] sm:$0xff]
      %v2269 = vld [vmem:[#allocation2 + $0x58] sm:$0xff]
      %v2270 = vld [vmem:[#allocation2 + $0x60] sm:$0xff]
      %v2271 = vld [vmem:[#allocation2 + $0x68] sm:$0xff]
      %v2272 = vld [vmem:[#allocation2 + $0x70] sm:$0xff]
      %v2273 = vld [vmem:[#allocation2 + $0x78] sm:$0xff]
      %v2274 = vld [vmem:[#allocation2 + $0x80] sm:$0xff]
      %v2275 = vld [vmem:[#allocation2 + $0x88] sm:$0xff]
      %v2276 = vld [vmem:[#allocation2 + $0x90] sm:$0xff]
      %v2277 = vld [vmem:[#allocation2 + $0x98] sm:$0xff]
      %v2278 = vld [vmem:[#allocation2 + $0xa0] sm:$0xff]
      %v2279 = vld [vmem:[#allocation2 + $0xa8] sm:$0xff]
      %v2280 = vld [vmem:[#allocation2 + $0xb0] sm:$0xff]
      %v2281 = vld [vmem:[#allocation2 + $0xb8] sm:$0xff]
      %v2282 = vld [vmem:[#allocation2 + $0xc0] sm:$0xff]
      %v2283 = vld [vmem:[#allocation2 + $0xc8] sm:$0xff]
      %v2284 = vld [vmem:[#allocation2 + $0xd0] sm:$0xff]
      %v2285 = vld [vmem:[#allocation2 + $0xd8] sm:$0xff]
      %v2286 = vld [vmem:[#allocation2 + $0xe0] sm:$0xff]
      %v2287 = vld [vmem:[#allocation2 + $0xe8] sm:$0xff]
      %v2288 = vld [vmem:[#allocation2 + $0xf0] sm:$0xff]
      %v2289 = vld [vmem:[#allocation2 + $0xf8] sm:$0xff]
      %v2290 = vadd.f32 %v2258, %v2132
      %v2291 = vadd.f32 %v2259, %v2135
      %v2292 = vadd.f32 %v2260, %v2140
      %v2293 = vadd.f32 %v2261, %v2143
      %v2294 = vadd.f32 %v2262, %v2148
      %v2295 = vadd.f32 %v2263, %v2151
      %v2296 = vadd.f32 %v2264, %v2156
      %v2297 = vadd.f32 %v2265, %v2159
      %v2298 = vadd.f32 %v2266, %v2164
      %v2299 = vadd.f32 %v2267, %v2167
      %v2300 = vadd.f32 %v2268, %v2172
      %v2301 = vadd.f32 %v2269, %v2175
      %v2302 = vadd.f32 %v2270, %v2180
      %v2303 = vadd.f32 %v2271, %v2183
      %v2304 = vadd.f32 %v2272, %v2188
      %v2305 = vadd.f32 %v2273, %v2191
      %v2306 = vadd.f32 %v2274, %v2196
      %v2307 = vadd.f32 %v2275, %v2199
      %v2308 = vadd.f32 %v2276, %v2204
      %v2309 = vadd.f32 %v2277, %v2207
      %v2310 = vadd.f32 %v2278, %v2212
      %v2311 = vadd.f32 %v2279, %v2215
      %v2312 = vadd.f32 %v2280, %v2220
      %v2313 = vadd.f32 %v2281, %v2223
      %v2314 = vadd.f32 %v2282, %v2228
      %v2315 = vadd.f32 %v2283, %v2231
      %v2316 = vadd.f32 %v2284, %v2236
      %v2317 = vadd.f32 %v2285, %v2239
      %v2318 = vadd.f32 %v2286, %v2244
      %v2319 = vadd.f32 %v2287, %v2247
      %v2320 = vadd.f32 %v2288, %v2252
      %v2321 = vadd.f32 %v2289, %v2255
      %2322 = vst [vmem:[#allocation2] sm:$0xff] %v2290
      %2323 = vst [vmem:[#allocation2 + $0x8] sm:$0xff] %v2291
      %2324 = vst [vmem:[#allocation2 + $0x10] sm:$0xff] %v2292
      %2325 = vst [vmem:[#allocation2 + $0x18] sm:$0xff] %v2293
      %2326 = vst [vmem:[#allocation2 + $0x20] sm:$0xff] %v2294
      %2327 = vst [vmem:[#allocation2 + $0x28] sm:$0xff] %v2295
      %2328 = vst [vmem:[#allocation2 + $0x30] sm:$0xff] %v2296
      %2329 = vst [vmem:[#allocation2 + $0x38] sm:$0xff] %v2297
      %2330 = vst [vmem:[#allocation2 + $0x40] sm:$0xff] %v2298
      %2331 = vst [vmem:[#allocation2 + $0x48] sm:$0xff] %v2299
      %2332 = vst [vmem:[#allocation2 + $0x50] sm:$0xff] %v2300
      %2333 = vst [vmem:[#allocation2 + $0x58] sm:$0xff] %v2301
      %2334 = vst [vmem:[#allocation2 + $0x60] sm:$0xff] %v2302
      %2335 = vst [vmem:[#allocation2 + $0x68] sm:$0xff] %v2303
      %2336 = vst [vmem:[#allocation2 + $0x70] sm:$0xff] %v2304
      %2337 = vst [vmem:[#allocation2 + $0x78] sm:$0xff] %v2305
      %2338 = vst [vmem:[#allocation2 + $0x80] sm:$0xff] %v2306
      %2339 = vst [vmem:[#allocation2 + $0x88] sm:$0xff] %v2307
      %2340 = vst [vmem:[#allocation2 + $0x90] sm:$0xff] %v2308
      %2341 = vst [vmem:[#allocation2 + $0x98] sm:$0xff] %v2309
      %2342 = vst [vmem:[#allocation2 + $0xa0] sm:$0xff] %v2310
      %2343 = vst [vmem:[#allocation2 + $0xa8] sm:$0xff] %v2311
      %2344 = vst [vmem:[#allocation2 + $0xb0] sm:$0xff] %v2312
      %2345 = vst [vmem:[#allocation2 + $0xb8] sm:$0xff] %v2313
      %2346 = vst [vmem:[#allocation2 + $0xc0] sm:$0xff] %v2314
      %2347 = vst [vmem:[#allocation2 + $0xc8] sm:$0xff] %v2315
      %2348 = vst [vmem:[#allocation2 + $0xd0] sm:$0xff] %v2316
      %2349 = vst [vmem:[#allocation2 + $0xd8] sm:$0xff] %v2317
      %2350 = vst [vmem:[#allocation2 + $0xe0] sm:$0xff] %v2318
      %2351 = vst [vmem:[#allocation2 + $0xe8] sm:$0xff] %v2319
      %2352 = vst [vmem:[#allocation2 + $0xf0] sm:$0xff] %v2320
      %2353 = vst [vmem:[#allocation2 + $0xf8] sm:$0xff] %v2321
      %v2354 = vld [vmem:[%s192 + $0x2f] sm:$0xff]
      %v2355 = vld [vmem:[%s192 + $0x37] sm:$0xff]
      %v2356 = vld [vmem:[%s192 + $0x3f] sm:$0xff]
      %v2357 = vld [vmem:[%s192 + $0x47] sm:$0xff]
      %v2358 = vld [vmem:[%s192 + $0x4f] sm:$0xff]
      %v2359 = vld [vmem:[%s192 + $0x57] sm:$0xff]
      %v2360 = vld [vmem:[%s192 + $0x5f] sm:$0xff]
      %v2361 = vld [vmem:[%s192 + $0x67] sm:$0xff]
      %v2362 = vld [vmem:[%s192 + $0x6f] sm:$0xff]
      %v2363 = vld [vmem:[%s192 + $0x77] sm:$0xff]
      %v2364 = vld [vmem:[%s192 + $0x7f] sm:$0xff]
      %v2365 = vld [vmem:[%s192 + $0x87] sm:$0xff]
      %v2366 = vld [vmem:[%s192 + $0x8f] sm:$0xff]
      %v2367 = vld [vmem:[%s192 + $0x97] sm:$0xff]
      %v2368 = vld [vmem:[%s192 + $0x9f] sm:$0xff]
      %v2369 = vld [vmem:[%s192 + $0xa7] sm:$0xff]
      %v2370 = vld [vmem:[%s192 + $0xaf] sm:$0xff]
      %v2371 = vld [vmem:[%s192 + $0xb7] sm:$0xff]
      %v2372 = vld [vmem:[%s192 + $0xbf] sm:$0xff]
      %v2373 = vld [vmem:[%s192 + $0xc7] sm:$0xff]
      %v2374 = vld [vmem:[%s192 + $0xcf] sm:$0xff]
      %v2375 = vld [vmem:[%s192 + $0xd7] sm:$0xff]
      %v2376 = vld [vmem:[%s192 + $0xdf] sm:$0xff]
      %v2377 = vld [vmem:[%s192 + $0xe7] sm:$0xff]
      %v2378 = vld [vmem:[%s192 + $0xef] sm:$0xff]
      %v2379 = vld [vmem:[%s192 + $0xf7] sm:$0xff]
      %v2380 = vld [vmem:[%s192 + $0xff] sm:$0xff]
      %v2381 = vld [vmem:[%s192 + $0x107] sm:$0xff]
      %v2382 = vld [vmem:[%s192 + $0x10f] sm:$0xff]
      %v2383 = vld [vmem:[%s192 + $0x117] sm:$0xff]
      %v2384 = vld [vmem:[%s192 + $0x11f] sm:$0xff]
      %v2385 = vld [vmem:[%s192 + $0x127] sm:$0xff]
      %v2386 = vpack.c.bf16 %v2355, %v2354
      %v2387 = vpack.c.bf16 %v2357, %v2356
      %v2388 = vpack.c.bf16 %v2359, %v2358
      %v2389 = vpack.c.bf16 %v2361, %v2360
      %v2390 = vpack.c.bf16 %v2363, %v2362
      %v2391 = vpack.c.bf16 %v2365, %v2364
      %v2392 = vpack.c.bf16 %v2367, %v2366
      %v2393 = vpack.c.bf16 %v2369, %v2368
      %v2394 = vpack.c.bf16 %v2371, %v2370
      %v2395 = vpack.c.bf16 %v2373, %v2372
      %v2396 = vpack.c.bf16 %v2375, %v2374
      %v2397 = vpack.c.bf16 %v2377, %v2376
      %v2398 = vpack.c.bf16 %v2379, %v2378
      %v2399 = vpack.c.bf16 %v2381, %v2380
      %v2400 = vpack.c.bf16 %v2383, %v2382
      %v2401 = vpack.c.bf16 %v2385, %v2384
      %s2402 = scalar_lea.vmem %s1, 384
      %v2403 = vld [vmem:[%s2402] sm:$0xf]
      %v2404 = vld [vmem:[%s2402 + $0x4] sm:$0xf]
      %v2405 = vld [vmem:[%s2402 + $0x8] sm:$0xf]
      %v2406 = vld [vmem:[%s2402 + $0xc] sm:$0xf]
      %v2407 = vld [vmem:[%s2402 + $0x10] sm:$0xf]
      %v2408 = vld [vmem:[%s2402 + $0x14] sm:$0xf]
      %v2409 = vld [vmem:[%s2402 + $0x18] sm:$0xf]
      %v2410 = vld [vmem:[%s2402 + $0x1c] sm:$0xf]
      %v2411 = vld [vmem:[%s2402 + $0x20] sm:$0xf]
      %v2412 = vld [vmem:[%s2402 + $0x24] sm:$0xf]
      %v2413 = vld [vmem:[%s2402 + $0x28] sm:$0xf]
      %v2414 = vld [vmem:[%s2402 + $0x2c] sm:$0xf]
      %v2415 = vld [vmem:[%s2402 + $0x30] sm:$0xf]
      %v2416 = vld [vmem:[%s2402 + $0x34] sm:$0xf]
      %v2417 = vld [vmem:[%s2402 + $0x38] sm:$0xf]
      %v2418 = vld [vmem:[%s2402 + $0x3c] sm:$0xf]
      %v2435 = vunpack.c.l.b16 %v2403
      %v2436 = vunpack.c.l.b16 %v2404
      %v2437 = vunpack.c.l.b16 %v2405
      %v2438 = vunpack.c.l.b16 %v2406
      %v2439 = vunpack.c.l.b16 %v2407
      %v2440 = vunpack.c.l.b16 %v2408
      %v2441 = vunpack.c.l.b16 %v2409
      %v2442 = vunpack.c.l.b16 %v2410
      %v2443 = vunpack.c.l.b16 %v2411
      %v2444 = vunpack.c.l.b16 %v2412
      %v2445 = vunpack.c.l.b16 %v2413
      %v2446 = vunpack.c.l.b16 %v2414
      %v2447 = vunpack.c.l.b16 %v2415
      %v2448 = vunpack.c.l.b16 %v2416
      %v2449 = vunpack.c.l.b16 %v2417
      %v2450 = vunpack.c.l.b16 %v2418
      %v2451 = vpack.c.b16 %v2436, %v2435
      %v2452 = vpack.c.b16 %v2438, %v2437
      %v2453 = vpack.c.b16 %v2440, %v2439
      %v2454 = vpack.c.b16 %v2442, %v2441
      %v2455 = vpack.c.b16 %v2444, %v2443
      %v2456 = vpack.c.b16 %v2446, %v2445
      %v2457 = vpack.c.b16 %v2448, %v2447
      %v2458 = vpack.c.b16 %v2450, %v2449
      %2467 = vmatprep.subr.bf16.mxu0 0
      %2468 = vmatpush1.bf16.msra.mxu0 %v2458
      %2469 = vmatprep.subr.bf16.mxu0 0
      %2470 = vmatpush1.bf16.msra.mxu0 %v2457
      %2471 = vmatprep.subr.bf16.mxu0 0
      %2472 = vmatpush1.bf16.msra.mxu0 %v2456
      %2473 = vmatprep.subr.bf16.mxu0 0
      %2474 = vmatpush1.bf16.msra.mxu0 %v2455
      %2475 = vmatprep.subr.bf16.mxu0 0
      %2476 = vmatpush1.bf16.msra.mxu0 %v2454
      %2477 = vmatprep.subr.bf16.mxu0 0
      %2478 = vmatpush1.bf16.msra.mxu0 %v2453
      %2479 = vmatprep.subr.bf16.mxu0 0
      %2480 = vmatpush1.bf16.msra.mxu0 %v2452
      %2481 = vmatprep.subr.bf16.mxu0 0
      %2482 = vmatpush1.bf16.msra.mxu0 %v2451
      %2483 = vmatprep.subr.bf16.mxu0 0
      %2484 = vmatpush2.bf16.msra.mxu0 0
      %2485 = vmatprep.subr.bf16.mxu0 0
      %2486 = vmatpush2.bf16.msra.mxu0 0
      %2487 = vmatprep.subr.bf16.mxu0 0
      %2488 = vmatpush2.bf16.msra.mxu0 0
      %2489 = vmatprep.subr.bf16.mxu0 0
      %2490 = vmatpush2.bf16.msra.mxu0 0
      %2491 = vmatprep.subr.bf16.mxu0 0
      %2492 = vmatpush2.bf16.msra.mxu0 0
      %2493 = vmatprep.subr.bf16.mxu0 0
      %2494 = vmatpush2.bf16.msra.mxu0 0
      %2495 = vmatprep.subr.bf16.mxu0 0
      %2496 = vmatpush2.bf16.msra.mxu0 0
      %2497 = vmatprep.subr.bf16.mxu0 0
      %2498 = vmatpush2.bf16.msra.mxu0 0
      %2499 = vmatprep.mubr.bf16.mxu0 0
      %2500 = vmatmul.mubr.bf16.gmra.mxu0 %v2386
      %v2501 = vpop.f32.mrf.mxu0
      %v2502 = vadd.f32 0.0, %v2501
      %v2503 = vpop.f32.mrf.mxu0
      %v2504 = vpop.f32.mrf.mxu0
      %v2505 = vadd.f32 0.0, %v2504
      %v2506 = vpop.f32.mrf.mxu0
      %2507 = vmatprep.mubr.bf16.mxu0 0
      %2508 = vmatmul.mubr.bf16.gmra.mxu0 %v2387
      %v2509 = vpop.f32.mrf.mxu0
      %v2510 = vadd.f32 0.0, %v2509
      %v2511 = vpop.f32.mrf.mxu0
      %v2512 = vpop.f32.mrf.mxu0
      %v2513 = vadd.f32 0.0, %v2512
      %v2514 = vpop.f32.mrf.mxu0
      %2515 = vmatprep.mubr.bf16.mxu0 0
      %2516 = vmatmul.mubr.bf16.gmra.mxu0 %v2388
      %v2517 = vpop.f32.mrf.mxu0
      %v2518 = vadd.f32 0.0, %v2517
      %v2519 = vpop.f32.mrf.mxu0
      %v2520 = vpop.f32.mrf.mxu0
      %v2521 = vadd.f32 0.0, %v2520
      %v2522 = vpop.f32.mrf.mxu0
      %2523 = vmatprep.mubr.bf16.mxu0 0
      %2524 = vmatmul.mubr.bf16.gmra.mxu0 %v2389
      %v2525 = vpop.f32.mrf.mxu0
      %v2526 = vadd.f32 0.0, %v2525
      %v2527 = vpop.f32.mrf.mxu0
      %v2528 = vpop.f32.mrf.mxu0
      %v2529 = vadd.f32 0.0, %v2528
      %v2530 = vpop.f32.mrf.mxu0
      %2531 = vmatprep.mubr.bf16.mxu0 0
      %2532 = vmatmul.mubr.bf16.gmra.mxu0 %v2390
      %v2533 = vpop.f32.mrf.mxu0
      %v2534 = vadd.f32 0.0, %v2533
      %v2535 = vpop.f32.mrf.mxu0
      %v2536 = vpop.f32.mrf.mxu0
      %v2537 = vadd.f32 0.0, %v2536
      %v2538 = vpop.f32.mrf.mxu0
      %2539 = vmatprep.mubr.bf16.mxu0 0
      %2540 = vmatmul.mubr.bf16.gmra.mxu0 %v2391
      %v2541 = vpop.f32.mrf.mxu0
      %v2542 = vadd.f32 0.0, %v2541
      %v2543 = vpop.f32.mrf.mxu0
      %v2544 = vpop.f32.mrf.mxu0
      %v2545 = vadd.f32 0.0, %v2544
      %v2546 = vpop.f32.mrf.mxu0
      %2547 = vmatprep.mubr.bf16.mxu0 0
      %2548 = vmatmul.mubr.bf16.gmra.mxu0 %v2392
      %v2549 = vpop.f32.mrf.mxu0
      %v2550 = vadd.f32 0.0, %v2549
      %v2551 = vpop.f32.mrf.mxu0
      %v2552 = vpop.f32.mrf.mxu0
      %v2553 = vadd.f32 0.0, %v2552
      %v2554 = vpop.f32.mrf.mxu0
      %2555 = vmatprep.mubr.bf16.mxu0 0
      %2556 = vmatmul.mubr.bf16.gmra.mxu0 %v2393
      %v2557 = vpop.f32.mrf.mxu0
      %v2558 = vadd.f32 0.0, %v2557
      %v2559 = vpop.f32.mrf.mxu0
      %v2560 = vpop.f32.mrf.mxu0
      %v2561 = vadd.f32 0.0, %v2560
      %v2562 = vpop.f32.mrf.mxu0
      %2563 = vmatprep.mubr.bf16.mxu0 0
      %2564 = vmatmul.mubr.bf16.gmra.mxu0 %v2394
      %v2565 = vpop.f32.mrf.mxu0
      %v2566 = vadd.f32 0.0, %v2565
      %v2567 = vpop.f32.mrf.mxu0
      %v2568 = vpop.f32.mrf.mxu0
      %v2569 = vadd.f32 0.0, %v2568
      %v2570 = vpop.f32.mrf.mxu0
      %2571 = vmatprep.mubr.bf16.mxu0 0
      %2572 = vmatmul.mubr.bf16.gmra.mxu0 %v2395
      %v2573 = vpop.f32.mrf.mxu0
      %v2574 = vadd.f32 0.0, %v2573
      %v2575 = vpop.f32.mrf.mxu0
      %v2576 = vpop.f32.mrf.mxu0
      %v2577 = vadd.f32 0.0, %v2576
      %v2578 = vpop.f32.mrf.mxu0
      %2579 = vmatprep.mubr.bf16.mxu0 0
      %2580 = vmatmul.mubr.bf16.gmra.mxu0 %v2396
      %v2581 = vpop.f32.mrf.mxu0
      %v2582 = vadd.f32 0.0, %v2581
      %v2583 = vpop.f32.mrf.mxu0
      %v2584 = vpop.f32.mrf.mxu0
      %v2585 = vadd.f32 0.0, %v2584
      %v2586 = vpop.f32.mrf.mxu0
      %2587 = vmatprep.mubr.bf16.mxu0 0
      %2588 = vmatmul.mubr.bf16.gmra.mxu0 %v2397
      %v2589 = vpop.f32.mrf.mxu0
      %v2590 = vadd.f32 0.0, %v2589
      %v2591 = vpop.f32.mrf.mxu0
      %v2592 = vpop.f32.mrf.mxu0
      %v2593 = vadd.f32 0.0, %v2592
      %v2594 = vpop.f32.mrf.mxu0
      %2595 = vmatprep.mubr.bf16.mxu0 0
      %2596 = vmatmul.mubr.bf16.gmra.mxu0 %v2398
      %v2597 = vpop.f32.mrf.mxu0
      %v2598 = vadd.f32 0.0, %v2597
      %v2599 = vpop.f32.mrf.mxu0
      %v2600 = vpop.f32.mrf.mxu0
      %v2601 = vadd.f32 0.0, %v2600
      %v2602 = vpop.f32.mrf.mxu0
      %2603 = vmatprep.mubr.bf16.mxu0 0
      %2604 = vmatmul.mubr.bf16.gmra.mxu0 %v2399
      %v2605 = vpop.f32.mrf.mxu0
      %v2606 = vadd.f32 0.0, %v2605
      %v2607 = vpop.f32.mrf.mxu0
      %v2608 = vpop.f32.mrf.mxu0
      %v2609 = vadd.f32 0.0, %v2608
      %v2610 = vpop.f32.mrf.mxu0
      %2611 = vmatprep.mubr.bf16.mxu0 0
      %2612 = vmatmul.mubr.bf16.gmra.mxu0 %v2400
      %v2613 = vpop.f32.mrf.mxu0
      %v2614 = vadd.f32 0.0, %v2613
      %v2615 = vpop.f32.mrf.mxu0
      %v2616 = vpop.f32.mrf.mxu0
      %v2617 = vadd.f32 0.0, %v2616
      %v2618 = vpop.f32.mrf.mxu0
      %2619 = vmatprep.mubr.bf16.mxu0 0
      %2620 = vmatmul.mubr.bf16.gmra.mxu0 %v2401
      %v2621 = vpop.f32.mrf.mxu0
      %v2622 = vadd.f32 0.0, %v2621
      %v2623 = vpop.f32.mrf.mxu0
      %v2624 = vpop.f32.mrf.mxu0
      %v2625 = vadd.f32 0.0, %v2624
      %v2626 = vpop.f32.mrf.mxu0
      %2627 = vdwg.mxu0
      %v2628 = vld [vmem:[#allocation2] sm:$0xff]
      %v2629 = vld [vmem:[#allocation2 + $0x8] sm:$0xff]
      %v2630 = vld [vmem:[#allocation2 + $0x10] sm:$0xff]
      %v2631 = vld [vmem:[#allocation2 + $0x18] sm:$0xff]
      %v2632 = vld [vmem:[#allocation2 + $0x20] sm:$0xff]
      %v2633 = vld [vmem:[#allocation2 + $0x28] sm:$0xff]
      %v2634 = vld [vmem:[#allocation2 + $0x30] sm:$0xff]
      %v2635 = vld [vmem:[#allocation2 + $0x38] sm:$0xff]
      %v2636 = vld [vmem:[#allocation2 + $0x40] sm:$0xff]
      %v2637 = vld [vmem:[#allocation2 + $0x48] sm:$0xff]
      %v2638 = vld [vmem:[#allocation2 + $0x50] sm:$0xff]
      %v2639 = vld [vmem:[#allocation2 + $0x58] sm:$0xff]
      %v2640 = vld [vmem:[#allocation2 + $0x60] sm:$0xff]
      %v2641 = vld [vmem:[#allocation2 + $0x68] sm:$0xff]
      %v2642 = vld [vmem:[#allocation2 + $0x70] sm:$0xff]
      %v2643 = vld [vmem:[#allocation2 + $0x78] sm:$0xff]
      %v2644 = vld [vmem:[#allocation2 + $0x80] sm:$0xff]
      %v2645 = vld [vmem:[#allocation2 + $0x88] sm:$0xff]
      %v2646 = vld [vmem:[#allocation2 + $0x90] sm:$0xff]
      %v2647 = vld [vmem:[#allocation2 + $0x98] sm:$0xff]
      %v2648 = vld [vmem:[#allocation2 + $0xa0] sm:$0xff]
      %v2649 = vld [vmem:[#allocation2 + $0xa8] sm:$0xff]
      %v2650 = vld [vmem:[#allocation2 + $0xb0] sm:$0xff]
      %v2651 = vld [vmem:[#allocation2 + $0xb8] sm:$0xff]
      %v2652 = vld [vmem:[#allocation2 + $0xc0] sm:$0xff]
      %v2653 = vld [vmem:[#allocation2 + $0xc8] sm:$0xff]
      %v2654 = vld [vmem:[#allocation2 + $0xd0] sm:$0xff]
      %v2655 = vld [vmem:[#allocation2 + $0xd8] sm:$0xff]
      %v2656 = vld [vmem:[#allocation2 + $0xe0] sm:$0xff]
      %v2657 = vld [vmem:[#allocation2 + $0xe8] sm:$0xff]
      %v2658 = vld [vmem:[#allocation2 + $0xf0] sm:$0xff]
      %v2659 = vld [vmem:[#allocation2 + $0xf8] sm:$0xff]
      %v2660 = vadd.f32 %v2628, %v2502
      %v2661 = vadd.f32 %v2629, %v2505
      %v2662 = vadd.f32 %v2630, %v2510
      %v2663 = vadd.f32 %v2631, %v2513
      %v2664 = vadd.f32 %v2632, %v2518
      %v2665 = vadd.f32 %v2633, %v2521
      %v2666 = vadd.f32 %v2634, %v2526
      %v2667 = vadd.f32 %v2635, %v2529
      %v2668 = vadd.f32 %v2636, %v2534
      %v2669 = vadd.f32 %v2637, %v2537
      %v2670 = vadd.f32 %v2638, %v2542
      %v2671 = vadd.f32 %v2639, %v2545
      %v2672 = vadd.f32 %v2640, %v2550
      %v2673 = vadd.f32 %v2641, %v2553
      %v2674 = vadd.f32 %v2642, %v2558
      %v2675 = vadd.f32 %v2643, %v2561
      %v2676 = vadd.f32 %v2644, %v2566
      %v2677 = vadd.f32 %v2645, %v2569
      %v2678 = vadd.f32 %v2646, %v2574
      %v2679 = vadd.f32 %v2647, %v2577
      %v2680 = vadd.f32 %v2648, %v2582
      %v2681 = vadd.f32 %v2649, %v2585
      %v2682 = vadd.f32 %v2650, %v2590
      %v2683 = vadd.f32 %v2651, %v2593
      %v2684 = vadd.f32 %v2652, %v2598
      %v2685 = vadd.f32 %v2653, %v2601
      %v2686 = vadd.f32 %v2654, %v2606
      %v2687 = vadd.f32 %v2655, %v2609
      %v2688 = vadd.f32 %v2656, %v2614
      %v2689 = vadd.f32 %v2657, %v2617
      %v2690 = vadd.f32 %v2658, %v2622
      %v2691 = vadd.f32 %v2659, %v2625
      %2692 = vst [vmem:[#allocation2] sm:$0xff] %v2660
      %2693 = vst [vmem:[#allocation2 + $0x8] sm:$0xff] %v2661
      %2694 = vst [vmem:[#allocation2 + $0x10] sm:$0xff] %v2662
      %2695 = vst [vmem:[#allocation2 + $0x18] sm:$0xff] %v2663
      %2696 = vst [vmem:[#allocation2 + $0x20] sm:$0xff] %v2664
      %2697 = vst [vmem:[#allocation2 + $0x28] sm:$0xff] %v2665
      %2698 = vst [vmem:[#allocation2 + $0x30] sm:$0xff] %v2666
      %2699 = vst [vmem:[#allocation2 + $0x38] sm:$0xff] %v2667
      %2700 = vst [vmem:[#allocation2 + $0x40] sm:$0xff] %v2668
      %2701 = vst [vmem:[#allocation2 + $0x48] sm:$0xff] %v2669
      %2702 = vst [vmem:[#allocation2 + $0x50] sm:$0xff] %v2670
      %2703 = vst [vmem:[#allocation2 + $0x58] sm:$0xff] %v2671
      %2704 = vst [vmem:[#allocation2 + $0x60] sm:$0xff] %v2672
      %2705 = vst [vmem:[#allocation2 + $0x68] sm:$0xff] %v2673
      %2706 = vst [vmem:[#allocation2 + $0x70] sm:$0xff] %v2674
      %2707 = vst [vmem:[#allocation2 + $0x78] sm:$0xff] %v2675
      %2708 = vst [vmem:[#allocation2 + $0x80] sm:$0xff] %v2676
      %2709 = vst [vmem:[#allocation2 + $0x88] sm:$0xff] %v2677
      %2710 = vst [vmem:[#allocation2 + $0x90] sm:$0xff] %v2678
      %2711 = vst [vmem:[#allocation2 + $0x98] sm:$0xff] %v2679
      %2712 = vst [vmem:[#allocation2 + $0xa0] sm:$0xff] %v2680
      %2713 = vst [vmem:[#allocation2 + $0xa8] sm:$0xff] %v2681
      %2714 = vst [vmem:[#allocation2 + $0xb0] sm:$0xff] %v2682
      %2715 = vst [vmem:[#allocation2 + $0xb8] sm:$0xff] %v2683
      %2716 = vst [vmem:[#allocation2 + $0xc0] sm:$0xff] %v2684
      %2717 = vst [vmem:[#allocation2 + $0xc8] sm:$0xff] %v2685
      %2718 = vst [vmem:[#allocation2 + $0xd0] sm:$0xff] %v2686
      %2719 = vst [vmem:[#allocation2 + $0xd8] sm:$0xff] %v2687
      %2720 = vst [vmem:[#allocation2 + $0xe0] sm:$0xff] %v2688
      %2721 = vst [vmem:[#allocation2 + $0xe8] sm:$0xff] %v2689
      %2722 = vst [vmem:[#allocation2 + $0xf0] sm:$0xff] %v2690
      %2723 = vst [vmem:[#allocation2 + $0xf8] sm:$0xff] %v2691
      %v2724 = vld [vmem:[%s192 + $0x30] sm:$0xff]
      %v2725 = vld [vmem:[%s192 + $0x38] sm:$0xff]
      %v2726 = vld [vmem:[%s192 + $0x40] sm:$0xff]
      %v2727 = vld [vmem:[%s192 + $0x48] sm:$0xff]
      %v2728 = vld [vmem:[%s192 + $0x50] sm:$0xff]
      %v2729 = vld [vmem:[%s192 + $0x58] sm:$0xff]
      %v2730 = vld [vmem:[%s192 + $0x60] sm:$0xff]
      %v2731 = vld [vmem:[%s192 + $0x68] sm:$0xff]
      %v2732 = vld [vmem:[%s192 + $0x70] sm:$0xff]
      %v2733 = vld [vmem:[%s192 + $0x78] sm:$0xff]
      %v2734 = vld [vmem:[%s192 + $0x80] sm:$0xff]
      %v2735 = vld [vmem:[%s192 + $0x88] sm:$0xff]
      %v2736 = vld [vmem:[%s192 + $0x90] sm:$0xff]
      %v2737 = vld [vmem:[%s192 + $0x98] sm:$0xff]
      %v2738 = vld [vmem:[%s192 + $0xa0] sm:$0xff]
      %v2739 = vld [vmem:[%s192 + $0xa8] sm:$0xff]
      %v2740 = vld [vmem:[%s192 + $0xb0] sm:$0xff]
      %v2741 = vld [vmem:[%s192 + $0xb8] sm:$0xff]
      %v2742 = vld [vmem:[%s192 + $0xc0] sm:$0xff]
      %v2743 = vld [vmem:[%s192 + $0xc8] sm:$0xff]
      %v2744 = vld [vmem:[%s192 + $0xd0] sm:$0xff]
      %v2745 = vld [vmem:[%s192 + $0xd8] sm:$0xff]
      %v2746 = vld [vmem:[%s192 + $0xe0] sm:$0xff]
      %v2747 = vld [vmem:[%s192 + $0xe8] sm:$0xff]
      %v2748 = vld [vmem:[%s192 + $0xf0] sm:$0xff]
      %v2749 = vld [vmem:[%s192 + $0xf8] sm:$0xff]
      %v2750 = vld [vmem:[%s192 + $0x100] sm:$0xff]
      %v2751 = vld [vmem:[%s192 + $0x108] sm:$0xff]
      %v2752 = vld [vmem:[%s192 + $0x110] sm:$0xff]
      %v2753 = vld [vmem:[%s192 + $0x118] sm:$0xff]
      %v2754 = vld [vmem:[%s192 + $0x120] sm:$0xff]
      %v2755 = vld [vmem:[%s192 + $0x128] sm:$0xff]
      %v2756 = vpack.c.bf16 %v2725, %v2724
      %v2757 = vpack.c.bf16 %v2727, %v2726
      %v2758 = vpack.c.bf16 %v2729, %v2728
      %v2759 = vpack.c.bf16 %v2731, %v2730
      %v2760 = vpack.c.bf16 %v2733, %v2732
      %v2761 = vpack.c.bf16 %v2735, %v2734
      %v2762 = vpack.c.bf16 %v2737, %v2736
      %v2763 = vpack.c.bf16 %v2739, %v2738
      %v2764 = vpack.c.bf16 %v2741, %v2740
      %v2765 = vpack.c.bf16 %v2743, %v2742
      %v2766 = vpack.c.bf16 %v2745, %v2744
      %v2767 = vpack.c.bf16 %v2747, %v2746
      %v2768 = vpack.c.bf16 %v2749, %v2748
      %v2769 = vpack.c.bf16 %v2751, %v2750
      %v2770 = vpack.c.bf16 %v2753, %v2752
      %v2771 = vpack.c.bf16 %v2755, %v2754
      %s2772 = scalar_lea.vmem %s1, 448
      %v2773 = vld [vmem:[%s2772] sm:$0xf]
      %v2774 = vld [vmem:[%s2772 + $0x4] sm:$0xf]
      %v2775 = vld [vmem:[%s2772 + $0x8] sm:$0xf]
      %v2776 = vld [vmem:[%s2772 + $0xc] sm:$0xf]
      %v2777 = vld [vmem:[%s2772 + $0x10] sm:$0xf]
      %v2778 = vld [vmem:[%s2772 + $0x14] sm:$0xf]
      %v2779 = vld [vmem:[%s2772 + $0x18] sm:$0xf]
      %v2780 = vld [vmem:[%s2772 + $0x1c] sm:$0xf]
      %v2781 = vld [vmem:[%s2772 + $0x20] sm:$0xf]
      %v2782 = vld [vmem:[%s2772 + $0x24] sm:$0xf]
      %v2783 = vld [vmem:[%s2772 + $0x28] sm:$0xf]
      %v2784 = vld [vmem:[%s2772 + $0x2c] sm:$0xf]
      %v2785 = vld [vmem:[%s2772 + $0x30] sm:$0xf]
      %v2786 = vld [vmem:[%s2772 + $0x34] sm:$0xf]
      %v2787 = vld [vmem:[%s2772 + $0x38] sm:$0xf]
      %v2788 = vld [vmem:[%s2772 + $0x3c] sm:$0xf]
      %v2805 = vunpack.c.l.b16 %v2773
      %v2806 = vunpack.c.l.b16 %v2774
      %v2807 = vunpack.c.l.b16 %v2775
      %v2808 = vunpack.c.l.b16 %v2776
      %v2809 = vunpack.c.l.b16 %v2777
      %v2810 = vunpack.c.l.b16 %v2778
      %v2811 = vunpack.c.l.b16 %v2779
      %v2812 = vunpack.c.l.b16 %v2780
      %v2813 = vunpack.c.l.b16 %v2781
      %v2814 = vunpack.c.l.b16 %v2782
      %v2815 = vunpack.c.l.b16 %v2783
      %v2816 = vunpack.c.l.b16 %v2784
      %v2817 = vunpack.c.l.b16 %v2785
      %v2818 = vunpack.c.l.b16 %v2786
      %v2819 = vunpack.c.l.b16 %v2787
      %v2820 = vunpack.c.l.b16 %v2788
      %v2821 = vpack.c.b16 %v2806, %v2805
      %v2822 = vpack.c.b16 %v2808, %v2807
      %v2823 = vpack.c.b16 %v2810, %v2809
      %v2824 = vpack.c.b16 %v2812, %v2811
      %v2825 = vpack.c.b16 %v2814, %v2813
      %v2826 = vpack.c.b16 %v2816, %v2815
      %v2827 = vpack.c.b16 %v2818, %v2817
      %v2828 = vpack.c.b16 %v2820, %v2819
      %2837 = vmatprep.subr.bf16.mxu0 0
      %2838 = vmatpush1.bf16.msra.mxu0 %v2828
      %2839 = vmatprep.subr.bf16.mxu0 0
      %2840 = vmatpush1.bf16.msra.mxu0 %v2827
      %2841 = vmatprep.subr.bf16.mxu0 0
      %2842 = vmatpush1.bf16.msra.mxu0 %v2826
      %2843 = vmatprep.subr.bf16.mxu0 0
      %2844 = vmatpush1.bf16.msra.mxu0 %v2825
      %2845 = vmatprep.subr.bf16.mxu0 0
      %2846 = vmatpush1.bf16.msra.mxu0 %v2824
      %2847 = vmatprep.subr.bf16.mxu0 0
      %2848 = vmatpush1.bf16.msra.mxu0 %v2823
      %2849 = vmatprep.subr.bf16.mxu0 0
      %2850 = vmatpush1.bf16.msra.mxu0 %v2822
      %2851 = vmatprep.subr.bf16.mxu0 0
      %2852 = vmatpush1.bf16.msra.mxu0 %v2821
      %2853 = vmatprep.subr.bf16.mxu0 0
      %2854 = vmatpush2.bf16.msra.mxu0 0
      %2855 = vmatprep.subr.bf16.mxu0 0
      %2856 = vmatpush2.bf16.msra.mxu0 0
      %2857 = vmatprep.subr.bf16.mxu0 0
      %2858 = vmatpush2.bf16.msra.mxu0 0
      %2859 = vmatprep.subr.bf16.mxu0 0
      %2860 = vmatpush2.bf16.msra.mxu0 0
      %2861 = vmatprep.subr.bf16.mxu0 0
      %2862 = vmatpush2.bf16.msra.mxu0 0
      %2863 = vmatprep.subr.bf16.mxu0 0
      %2864 = vmatpush2.bf16.msra.mxu0 0
      %2865 = vmatprep.subr.bf16.mxu0 0
      %2866 = vmatpush2.bf16.msra.mxu0 0
      %2867 = vmatprep.subr.bf16.mxu0 0
      %2868 = vmatpush2.bf16.msra.mxu0 0
      %2869 = vmatprep.mubr.bf16.mxu0 0
      %2870 = vmatmul.mubr.bf16.gmra.mxu0 %v2756
      %v2871 = vpop.f32.mrf.mxu0
      %v2872 = vadd.f32 0.0, %v2871
      %v2873 = vpop.f32.mrf.mxu0
      %v2874 = vpop.f32.mrf.mxu0
      %v2875 = vadd.f32 0.0, %v2874
      %v2876 = vpop.f32.mrf.mxu0
      %2877 = vmatprep.mubr.bf16.mxu0 0
      %2878 = vmatmul.mubr.bf16.gmra.mxu0 %v2757
      %v2879 = vpop.f32.mrf.mxu0
      %v2880 = vadd.f32 0.0, %v2879
      %v2881 = vpop.f32.mrf.mxu0
      %v2882 = vpop.f32.mrf.mxu0
      %v2883 = vadd.f32 0.0, %v2882
      %v2884 = vpop.f32.mrf.mxu0
      %2885 = vmatprep.mubr.bf16.mxu0 0
      %2886 = vmatmul.mubr.bf16.gmra.mxu0 %v2758
      %v2887 = vpop.f32.mrf.mxu0
      %v2888 = vadd.f32 0.0, %v2887
      %v2889 = vpop.f32.mrf.mxu0
      %v2890 = vpop.f32.mrf.mxu0
      %v2891 = vadd.f32 0.0, %v2890
      %v2892 = vpop.f32.mrf.mxu0
      %2893 = vmatprep.mubr.bf16.mxu0 0
      %2894 = vmatmul.mubr.bf16.gmra.mxu0 %v2759
      %v2895 = vpop.f32.mrf.mxu0
      %v2896 = vadd.f32 0.0, %v2895
      %v2897 = vpop.f32.mrf.mxu0
      %v2898 = vpop.f32.mrf.mxu0
      %v2899 = vadd.f32 0.0, %v2898
      %v2900 = vpop.f32.mrf.mxu0
      %2901 = vmatprep.mubr.bf16.mxu0 0
      %2902 = vmatmul.mubr.bf16.gmra.mxu0 %v2760
      %v2903 = vpop.f32.mrf.mxu0
      %v2904 = vadd.f32 0.0, %v2903
      %v2905 = vpop.f32.mrf.mxu0
      %v2906 = vpop.f32.mrf.mxu0
      %v2907 = vadd.f32 0.0, %v2906
      %v2908 = vpop.f32.mrf.mxu0
      %2909 = vmatprep.mubr.bf16.mxu0 0
      %2910 = vmatmul.mubr.bf16.gmra.mxu0 %v2761
      %v2911 = vpop.f32.mrf.mxu0
      %v2912 = vadd.f32 0.0, %v2911
      %v2913 = vpop.f32.mrf.mxu0
      %v2914 = vpop.f32.mrf.mxu0
      %v2915 = vadd.f32 0.0, %v2914
      %v2916 = vpop.f32.mrf.mxu0
      %2917 = vmatprep.mubr.bf16.mxu0 0
      %2918 = vmatmul.mubr.bf16.gmra.mxu0 %v2762
      %v2919 = vpop.f32.mrf.mxu0
      %v2920 = vadd.f32 0.0, %v2919
      %v2921 = vpop.f32.mrf.mxu0
      %v2922 = vpop.f32.mrf.mxu0
      %v2923 = vadd.f32 0.0, %v2922
      %v2924 = vpop.f32.mrf.mxu0
      %2925 = vmatprep.mubr.bf16.mxu0 0
      %2926 = vmatmul.mubr.bf16.gmra.mxu0 %v2763
      %v2927 = vpop.f32.mrf.mxu0
      %v2928 = vadd.f32 0.0, %v2927
      %v2929 = vpop.f32.mrf.mxu0
      %v2930 = vpop.f32.mrf.mxu0
      %v2931 = vadd.f32 0.0, %v2930
      %v2932 = vpop.f32.mrf.mxu0
      %2933 = vmatprep.mubr.bf16.mxu0 0
      %2934 = vmatmul.mubr.bf16.gmra.mxu0 %v2764
      %v2935 = vpop.f32.mrf.mxu0
      %v2936 = vadd.f32 0.0, %v2935
      %v2937 = vpop.f32.mrf.mxu0
      %v2938 = vpop.f32.mrf.mxu0
      %v2939 = vadd.f32 0.0, %v2938
      %v2940 = vpop.f32.mrf.mxu0
      %2941 = vmatprep.mubr.bf16.mxu0 0
      %2942 = vmatmul.mubr.bf16.gmra.mxu0 %v2765
      %v2943 = vpop.f32.mrf.mxu0
      %v2944 = vadd.f32 0.0, %v2943
      %v2945 = vpop.f32.mrf.mxu0
      %v2946 = vpop.f32.mrf.mxu0
      %v2947 = vadd.f32 0.0, %v2946
      %v2948 = vpop.f32.mrf.mxu0
      %2949 = vmatprep.mubr.bf16.mxu0 0
      %2950 = vmatmul.mubr.bf16.gmra.mxu0 %v2766
      %v2951 = vpop.f32.mrf.mxu0
      %v2952 = vadd.f32 0.0, %v2951
      %v2953 = vpop.f32.mrf.mxu0
      %v2954 = vpop.f32.mrf.mxu0
      %v2955 = vadd.f32 0.0, %v2954
      %v2956 = vpop.f32.mrf.mxu0
      %2957 = vmatprep.mubr.bf16.mxu0 0
      %2958 = vmatmul.mubr.bf16.gmra.mxu0 %v2767
      %v2959 = vpop.f32.mrf.mxu0
      %v2960 = vadd.f32 0.0, %v2959
      %v2961 = vpop.f32.mrf.mxu0
      %v2962 = vpop.f32.mrf.mxu0
      %v2963 = vadd.f32 0.0, %v2962
      %v2964 = vpop.f32.mrf.mxu0
      %2965 = vmatprep.mubr.bf16.mxu0 0
      %2966 = vmatmul.mubr.bf16.gmra.mxu0 %v2768
      %v2967 = vpop.f32.mrf.mxu0
      %v2968 = vadd.f32 0.0, %v2967
      %v2969 = vpop.f32.mrf.mxu0
      %v2970 = vpop.f32.mrf.mxu0
      %v2971 = vadd.f32 0.0, %v2970
      %v2972 = vpop.f32.mrf.mxu0
      %2973 = vmatprep.mubr.bf16.mxu0 0
      %2974 = vmatmul.mubr.bf16.gmra.mxu0 %v2769
      %v2975 = vpop.f32.mrf.mxu0
      %v2976 = vadd.f32 0.0, %v2975
      %v2977 = vpop.f32.mrf.mxu0
      %v2978 = vpop.f32.mrf.mxu0
      %v2979 = vadd.f32 0.0, %v2978
      %v2980 = vpop.f32.mrf.mxu0
      %2981 = vmatprep.mubr.bf16.mxu0 0
      %2982 = vmatmul.mubr.bf16.gmra.mxu0 %v2770
      %v2983 = vpop.f32.mrf.mxu0
      %v2984 = vadd.f32 0.0, %v2983
      %v2985 = vpop.f32.mrf.mxu0
      %v2986 = vpop.f32.mrf.mxu0
      %v2987 = vadd.f32 0.0, %v2986
      %v2988 = vpop.f32.mrf.mxu0
      %2989 = vmatprep.mubr.bf16.mxu0 0
      %2990 = vmatmul.mubr.bf16.gmra.mxu0 %v2771
      %v2991 = vpop.f32.mrf.mxu0
      %v2992 = vadd.f32 0.0, %v2991
      %v2993 = vpop.f32.mrf.mxu0
      %v2994 = vpop.f32.mrf.mxu0
      %v2995 = vadd.f32 0.0, %v2994
      %v2996 = vpop.f32.mrf.mxu0
      %2997 = vdwg.mxu0
      %v2998 = vld [vmem:[#allocation2] sm:$0xff]
      %v2999 = vld [vmem:[#allocation2 + $0x8] sm:$0xff]
      %v3000 = vld [vmem:[#allocation2 + $0x10] sm:$0xff]
      %v3001 = vld [vmem:[#allocation2 + $0x18] sm:$0xff]
      %v3002 = vld [vmem:[#allocation2 + $0x20] sm:$0xff]
      %v3003 = vld [vmem:[#allocation2 + $0x28] sm:$0xff]
      %v3004 = vld [vmem:[#allocation2 + $0x30] sm:$0xff]
      %v3005 = vld [vmem:[#allocation2 + $0x38] sm:$0xff]
      %v3006 = vld [vmem:[#allocation2 + $0x40] sm:$0xff]
      %v3007 = vld [vmem:[#allocation2 + $0x48] sm:$0xff]
      %v3008 = vld [vmem:[#allocation2 + $0x50] sm:$0xff]
      %v3009 = vld [vmem:[#allocation2 + $0x58] sm:$0xff]
      %v3010 = vld [vmem:[#allocation2 + $0x60] sm:$0xff]
      %v3011 = vld [vmem:[#allocation2 + $0x68] sm:$0xff]
      %v3012 = vld [vmem:[#allocation2 + $0x70] sm:$0xff]
      %v3013 = vld [vmem:[#allocation2 + $0x78] sm:$0xff]
      %v3014 = vld [vmem:[#allocation2 + $0x80] sm:$0xff]
      %v3015 = vld [vmem:[#allocation2 + $0x88] sm:$0xff]
      %v3016 = vld [vmem:[#allocation2 + $0x90] sm:$0xff]
      %v3017 = vld [vmem:[#allocation2 + $0x98] sm:$0xff]
      %v3018 = vld [vmem:[#allocation2 + $0xa0] sm:$0xff]
      %v3019 = vld [vmem:[#allocation2 + $0xa8] sm:$0xff]
      %v3020 = vld [vmem:[#allocation2 + $0xb0] sm:$0xff]
      %v3021 = vld [vmem:[#allocation2 + $0xb8] sm:$0xff]
      %v3022 = vld [vmem:[#allocation2 + $0xc0] sm:$0xff]
      %v3023 = vld [vmem:[#allocation2 + $0xc8] sm:$0xff]
      %v3024 = vld [vmem:[#allocation2 + $0xd0] sm:$0xff]
      %v3025 = vld [vmem:[#allocation2 + $0xd8] sm:$0xff]
      %v3026 = vld [vmem:[#allocation2 + $0xe0] sm:$0xff]
      %v3027 = vld [vmem:[#allocation2 + $0xe8] sm:$0xff]
      %v3028 = vld [vmem:[#allocation2 + $0xf0] sm:$0xff]
      %v3029 = vld [vmem:[#allocation2 + $0xf8] sm:$0xff]
      %v3030 = vadd.f32 %v2998, %v2872
      %v3031 = vadd.f32 %v2999, %v2875
      %v3032 = vadd.f32 %v3000, %v2880
      %v3033 = vadd.f32 %v3001, %v2883
      %v3034 = vadd.f32 %v3002, %v2888
      %v3035 = vadd.f32 %v3003, %v2891
      %v3036 = vadd.f32 %v3004, %v2896
      %v3037 = vadd.f32 %v3005, %v2899
      %v3038 = vadd.f32 %v3006, %v2904
      %v3039 = vadd.f32 %v3007, %v2907
      %v3040 = vadd.f32 %v3008, %v2912
      %v3041 = vadd.f32 %v3009, %v2915
      %v3042 = vadd.f32 %v3010, %v2920
      %v3043 = vadd.f32 %v3011, %v2923
      %v3044 = vadd.f32 %v3012, %v2928
      %v3045 = vadd.f32 %v3013, %v2931
      %v3046 = vadd.f32 %v3014, %v2936
      %v3047 = vadd.f32 %v3015, %v2939
      %v3048 = vadd.f32 %v3016, %v2944
      %v3049 = vadd.f32 %v3017, %v2947
      %v3050 = vadd.f32 %v3018, %v2952
      %v3051 = vadd.f32 %v3019, %v2955
      %v3052 = vadd.f32 %v3020, %v2960
      %v3053 = vadd.f32 %v3021, %v2963
      %v3054 = vadd.f32 %v3022, %v2968
      %v3055 = vadd.f32 %v3023, %v2971
      %v3056 = vadd.f32 %v3024, %v2976
      %v3057 = vadd.f32 %v3025, %v2979
      %v3058 = vadd.f32 %v3026, %v2984
      %v3059 = vadd.f32 %v3027, %v2987
      %v3060 = vadd.f32 %v3028, %v2992
      %v3061 = vadd.f32 %v3029, %v2995
      %3062 = vst [vmem:[#allocation2] sm:$0xff] %v3030
      %3063 = vst [vmem:[#allocation2 + $0x8] sm:$0xff] %v3031
      %3064 = vst [vmem:[#allocation2 + $0x10] sm:$0xff] %v3032
      %3065 = vst [vmem:[#allocation2 + $0x18] sm:$0xff] %v3033
      %3066 = vst [vmem:[#allocation2 + $0x20] sm:$0xff] %v3034
      %3067 = vst [vmem:[#allocation2 + $0x28] sm:$0xff] %v3035
      %3068 = vst [vmem:[#allocation2 + $0x30] sm:$0xff] %v3036
      %3069 = vst [vmem:[#allocation2 + $0x38] sm:$0xff] %v3037
      %3070 = vst [vmem:[#allocation2 + $0x40] sm:$0xff] %v3038
      %3071 = vst [vmem:[#allocation2 + $0x48] sm:$0xff] %v3039
      %3072 = vst [vmem:[#allocation2 + $0x50] sm:$0xff] %v3040
      %3073 = vst [vmem:[#allocation2 + $0x58] sm:$0xff] %v3041
      %3074 = vst [vmem:[#allocation2 + $0x60] sm:$0xff] %v3042
      %3075 = vst [vmem:[#allocation2 + $0x68] sm:$0xff] %v3043
      %3076 = vst [vmem:[#allocation2 + $0x70] sm:$0xff] %v3044
      %3077 = vst [vmem:[#allocation2 + $0x78] sm:$0xff] %v3045
      %3078 = vst [vmem:[#allocation2 + $0x80] sm:$0xff] %v3046
      %3079 = vst [vmem:[#allocation2 + $0x88] sm:$0xff] %v3047
      %3080 = vst [vmem:[#allocation2 + $0x90] sm:$0xff] %v3048
      %3081 = vst [vmem:[#allocation2 + $0x98] sm:$0xff] %v3049
      %3082 = vst [vmem:[#allocation2 + $0xa0] sm:$0xff] %v3050
      %3083 = vst [vmem:[#allocation2 + $0xa8] sm:$0xff] %v3051
      %3084 = vst [vmem:[#allocation2 + $0xb0] sm:$0xff] %v3052
      %3085 = vst [vmem:[#allocation2 + $0xb8] sm:$0xff] %v3053
      %3086 = vst [vmem:[#allocation2 + $0xc0] sm:$0xff] %v3054
      %3087 = vst [vmem:[#allocation2 + $0xc8] sm:$0xff] %v3055
      %3088 = vst [vmem:[#allocation2 + $0xd0] sm:$0xff] %v3056
      %3089 = vst [vmem:[#allocation2 + $0xd8] sm:$0xff] %v3057
      %3090 = vst [vmem:[#allocation2 + $0xe0] sm:$0xff] %v3058
      %3091 = vst [vmem:[#allocation2 + $0xe8] sm:$0xff] %v3059
      %3092 = vst [vmem:[#allocation2 + $0xf0] sm:$0xff] %v3060
      %3093 = vst [vmem:[#allocation2 + $0xf8] sm:$0xff] %v3061
      %v3094 = vld [vmem:[%s192 + $0x31] sm:$0xff]
      %v3095 = vld [vmem:[%s192 + $0x39] sm:$0xff]
      %v3096 = vld [vmem:[%s192 + $0x41] sm:$0xff]
      %v3097 = vld [vmem:[%s192 + $0x49] sm:$0xff]
      %v3098 = vld [vmem:[%s192 + $0x51] sm:$0xff]
      %v3099 = vld [vmem:[%s192 + $0x59] sm:$0xff]
      %v3100 = vld [vmem:[%s192 + $0x61] sm:$0xff]
      %v3101 = vld [vmem:[%s192 + $0x69] sm:$0xff]
      %v3102 = vld [vmem:[%s192 + $0x71] sm:$0xff]
      %v3103 = vld [vmem:[%s192 + $0x79] sm:$0xff]
      %v3104 = vld [vmem:[%s192 + $0x81] sm:$0xff]
      %v3105 = vld [vmem:[%s192 + $0x89] sm:$0xff]
      %v3106 = vld [vmem:[%s192 + $0x91] sm:$0xff]
      %v3107 = vld [vmem:[%s192 + $0x99] sm:$0xff]
      %v3108 = vld [vmem:[%s192 + $0xa1] sm:$0xff]
      %v3109 = vld [vmem:[%s192 + $0xa9] sm:$0xff]
      %v3110 = vld [vmem:[%s192 + $0xb1] sm:$0xff]
      %v3111 = vld [vmem:[%s192 + $0xb9] sm:$0xff]
      %v3112 = vld [vmem:[%s192 + $0xc1] sm:$0xff]
      %v3113 = vld [vmem:[%s192 + $0xc9] sm:$0xff]
      %v3114 = vld [vmem:[%s192 + $0xd1] sm:$0xff]
      %v3115 = vld [vmem:[%s192 + $0xd9] sm:$0xff]
      %v3116 = vld [vmem:[%s192 + $0xe1] sm:$0xff]
      %v3117 = vld [vmem:[%s192 + $0xe9] sm:$0xff]
      %v3118 = vld [vmem:[%s192 + $0xf1] sm:$0xff]
      %v3119 = vld [vmem:[%s192 + $0xf9] sm:$0xff]
      %v3120 = vld [vmem:[%s192 + $0x101] sm:$0xff]
      %v3121 = vld [vmem:[%s192 + $0x109] sm:$0xff]
      %v3122 = vld [vmem:[%s192 + $0x111] sm:$0xff]
      %v3123 = vld [vmem:[%s192 + $0x119] sm:$0xff]
      %v3124 = vld [vmem:[%s192 + $0x121] sm:$0xff]
      %v3125 = vld [vmem:[%s192 + $0x129] sm:$0xff]
      %v3126 = vpack.c.bf16 %v3095, %v3094
      %v3127 = vpack.c.bf16 %v3097, %v3096
      %v3128 = vpack.c.bf16 %v3099, %v3098
      %v3129 = vpack.c.bf16 %v3101, %v3100
      %v3130 = vpack.c.bf16 %v3103, %v3102
      %v3131 = vpack.c.bf16 %v3105, %v3104
      %v3132 = vpack.c.bf16 %v3107, %v3106
      %v3133 = vpack.c.bf16 %v3109, %v3108
      %v3134 = vpack.c.bf16 %v3111, %v3110
      %v3135 = vpack.c.bf16 %v3113, %v3112
      %v3136 = vpack.c.bf16 %v3115, %v3114
      %v3137 = vpack.c.bf16 %v3117, %v3116
      %v3138 = vpack.c.bf16 %v3119, %v3118
      %v3139 = vpack.c.bf16 %v3121, %v3120
      %v3140 = vpack.c.bf16 %v3123, %v3122
      %v3141 = vpack.c.bf16 %v3125, %v3124
      %s3142 = scalar_lea.vmem %s1, 512
      %v3143 = vld [vmem:[%s3142] sm:$0xf]
      %v3144 = vld [vmem:[%s3142 + $0x4] sm:$0xf]
      %v3145 = vld [vmem:[%s3142 + $0x8] sm:$0xf]
      %v3146 = vld [vmem:[%s3142 + $0xc] sm:$0xf]
      %v3147 = vld [vmem:[%s3142 + $0x10] sm:$0xf]
      %v3148 = vld [vmem:[%s3142 + $0x14] sm:$0xf]
      %v3149 = vld [vmem:[%s3142 + $0x18] sm:$0xf]
      %v3150 = vld [vmem:[%s3142 + $0x1c] sm:$0xf]
      %v3151 = vld [vmem:[%s3142 + $0x20] sm:$0xf]
      %v3152 = vld [vmem:[%s3142 + $0x24] sm:$0xf]
      %v3153 = vld [vmem:[%s3142 + $0x28] sm:$0xf]
      %v3154 = vld [vmem:[%s3142 + $0x2c] sm:$0xf]
      %v3155 = vld [vmem:[%s3142 + $0x30] sm:$0xf]
      %v3156 = vld [vmem:[%s3142 + $0x34] sm:$0xf]
      %v3157 = vld [vmem:[%s3142 + $0x38] sm:$0xf]
      %v3158 = vld [vmem:[%s3142 + $0x3c] sm:$0xf]
      %v3175 = vunpack.c.l.b16 %v3143
      %v3176 = vunpack.c.l.b16 %v3144
      %v3177 = vunpack.c.l.b16 %v3145
      %v3178 = vunpack.c.l.b16 %v3146
      %v3179 = vunpack.c.l.b16 %v3147
      %v3180 = vunpack.c.l.b16 %v3148
      %v3181 = vunpack.c.l.b16 %v3149
      %v3182 = vunpack.c.l.b16 %v3150
      %v3183 = vunpack.c.l.b16 %v3151
      %v3184 = vunpack.c.l.b16 %v3152
      %v3185 = vunpack.c.l.b16 %v3153
      %v3186 = vunpack.c.l.b16 %v3154
      %v3187 = vunpack.c.l.b16 %v3155
      %v3188 = vunpack.c.l.b16 %v3156
      %v3189 = vunpack.c.l.b16 %v3157
      %v3190 = vunpack.c.l.b16 %v3158
      %v3191 = vpack.c.b16 %v3176, %v3175
      %v3192 = vpack.c.b16 %v3178, %v3177
      %v3193 = vpack.c.b16 %v3180, %v3179
      %v3194 = vpack.c.b16 %v3182, %v3181
      %v3195 = vpack.c.b16 %v3184, %v3183
      %v3196 = vpack.c.b16 %v3186, %v3185
      %v3197 = vpack.c.b16 %v3188, %v3187
      %v3198 = vpack.c.b16 %v3190, %v3189
      %3207 = vmatprep.subr.bf16.mxu0 0
      %3208 = vmatpush1.bf16.msra.mxu0 %v3198
      %3209 = vmatprep.subr.bf16.mxu0 0
      %3210 = vmatpush1.bf16.msra.mxu0 %v3197
      %3211 = vmatprep.subr.bf16.mxu0 0
      %3212 = vmatpush1.bf16.msra.mxu0 %v3196
      %3213 = vmatprep.subr.bf16.mxu0 0
      %3214 = vmatpush1.bf16.msra.mxu0 %v3195
      %3215 = vmatprep.subr.bf16.mxu0 0
      %3216 = vmatpush1.bf16.msra.mxu0 %v3194
      %3217 = vmatprep.subr.bf16.mxu0 0
      %3218 = vmatpush1.bf16.msra.mxu0 %v3193
      %3219 = vmatprep.subr.bf16.mxu0 0
      %3220 = vmatpush1.bf16.msra.mxu0 %v3192
      %3221 = vmatprep.subr.bf16.mxu0 0
      %3222 = vmatpush1.bf16.msra.mxu0 %v3191
      %3223 = vmatprep.subr.bf16.mxu0 0
      %3224 = vmatpush2.bf16.msra.mxu0 0
      %3225 = vmatprep.subr.bf16.mxu0 0
      %3226 = vmatpush2.bf16.msra.mxu0 0
      %3227 = vmatprep.subr.bf16.mxu0 0
      %3228 = vmatpush2.bf16.msra.mxu0 0
      %3229 = vmatprep.subr.bf16.mxu0 0
      %3230 = vmatpush2.bf16.msra.mxu0 0
      %3231 = vmatprep.subr.bf16.mxu0 0
      %3232 = vmatpush2.bf16.msra.mxu0 0
      %3233 = vmatprep.subr.bf16.mxu0 0
      %3234 = vmatpush2.bf16.msra.mxu0 0
      %3235 = vmatprep.subr.bf16.mxu0 0
      %3236 = vmatpush2.bf16.msra.mxu0 0
      %3237 = vmatprep.subr.bf16.mxu0 0
      %3238 = vmatpush2.bf16.msra.mxu0 0
      %3239 = vmatprep.mubr.bf16.mxu0 0
      %3240 = vmatmul.mubr.bf16.gmra.mxu0 %v3126
      %v3241 = vpop.f32.mrf.mxu0
      %v3242 = vadd.f32 0.0, %v3241
      %v3243 = vpop.f32.mrf.mxu0
      %v3244 = vpop.f32.mrf.mxu0
      %v3245 = vadd.f32 0.0, %v3244
      %v3246 = vpop.f32.mrf.mxu0
      %3247 = vmatprep.mubr.bf16.mxu0 0
      %3248 = vmatmul.mubr.bf16.gmra.mxu0 %v3127
      %v3249 = vpop.f32.mrf.mxu0
      %v3250 = vadd.f32 0.0, %v3249
      %v3251 = vpop.f32.mrf.mxu0
      %v3252 = vpop.f32.mrf.mxu0
      %v3253 = vadd.f32 0.0, %v3252
      %v3254 = vpop.f32.mrf.mxu0
      %3255 = vmatprep.mubr.bf16.mxu0 0
      %3256 = vmatmul.mubr.bf16.gmra.mxu0 %v3128
      %v3257 = vpop.f32.mrf.mxu0
      %v3258 = vadd.f32 0.0, %v3257
      %v3259 = vpop.f32.mrf.mxu0
      %v3260 = vpop.f32.mrf.mxu0
      %v3261 = vadd.f32 0.0, %v3260
      %v3262 = vpop.f32.mrf.mxu0
      %3263 = vmatprep.mubr.bf16.mxu0 0
      %3264 = vmatmul.mubr.bf16.gmra.mxu0 %v3129
      %v3265 = vpop.f32.mrf.mxu0
      %v3266 = vadd.f32 0.0, %v3265
      %v3267 = vpop.f32.mrf.mxu0
      %v3268 = vpop.f32.mrf.mxu0
      %v3269 = vadd.f32 0.0, %v3268
      %v3270 = vpop.f32.mrf.mxu0
      %3271 = vmatprep.mubr.bf16.mxu0 0
      %3272 = vmatmul.mubr.bf16.gmra.mxu0 %v3130
      %v3273 = vpop.f32.mrf.mxu0
      %v3274 = vadd.f32 0.0, %v3273
      %v3275 = vpop.f32.mrf.mxu0
      %v3276 = vpop.f32.mrf.mxu0
      %v3277 = vadd.f32 0.0, %v3276
      %v3278 = vpop.f32.mrf.mxu0
      %3279 = vmatprep.mubr.bf16.mxu0 0
      %3280 = vmatmul.mubr.bf16.gmra.mxu0 %v3131
      %v3281 = vpop.f32.mrf.mxu0
      %v3282 = vadd.f32 0.0, %v3281
      %v3283 = vpop.f32.mrf.mxu0
      %v3284 = vpop.f32.mrf.mxu0
      %v3285 = vadd.f32 0.0, %v3284
      %v3286 = vpop.f32.mrf.mxu0
      %3287 = vmatprep.mubr.bf16.mxu0 0
      %3288 = vmatmul.mubr.bf16.gmra.mxu0 %v3132
      %v3289 = vpop.f32.mrf.mxu0
      %v3290 = vadd.f32 0.0, %v3289
      %v3291 = vpop.f32.mrf.mxu0
      %v3292 = vpop.f32.mrf.mxu0
      %v3293 = vadd.f32 0.0, %v3292
      %v3294 = vpop.f32.mrf.mxu0
      %3295 = vmatprep.mubr.bf16.mxu0 0
      %3296 = vmatmul.mubr.bf16.gmra.mxu0 %v3133
      %v3297 = vpop.f32.mrf.mxu0
      %v3298 = vadd.f32 0.0, %v3297
      %v3299 = vpop.f32.mrf.mxu0
      %v3300 = vpop.f32.mrf.mxu0
      %v3301 = vadd.f32 0.0, %v3300
      %v3302 = vpop.f32.mrf.mxu0
      %3303 = vmatprep.mubr.bf16.mxu0 0
      %3304 = vmatmul.mubr.bf16.gmra.mxu0 %v3134
      %v3305 = vpop.f32.mrf.mxu0
      %v3306 = vadd.f32 0.0, %v3305
      %v3307 = vpop.f32.mrf.mxu0
      %v3308 = vpop.f32.mrf.mxu0
      %v3309 = vadd.f32 0.0, %v3308
      %v3310 = vpop.f32.mrf.mxu0
      %3311 = vmatprep.mubr.bf16.mxu0 0
      %3312 = vmatmul.mubr.bf16.gmra.mxu0 %v3135
      %v3313 = vpop.f32.mrf.mxu0
      %v3314 = vadd.f32 0.0, %v3313
      %v3315 = vpop.f32.mrf.mxu0
      %v3316 = vpop.f32.mrf.mxu0
      %v3317 = vadd.f32 0.0, %v3316
      %v3318 = vpop.f32.mrf.mxu0
      %3319 = vmatprep.mubr.bf16.mxu0 0
      %3320 = vmatmul.mubr.bf16.gmra.mxu0 %v3136
      %v3321 = vpop.f32.mrf.mxu0
      %v3322 = vadd.f32 0.0, %v3321
      %v3323 = vpop.f32.mrf.mxu0
      %v3324 = vpop.f32.mrf.mxu0
      %v3325 = vadd.f32 0.0, %v3324
      %v3326 = vpop.f32.mrf.mxu0
      %3327 = vmatprep.mubr.bf16.mxu0 0
      %3328 = vmatmul.mubr.bf16.gmra.mxu0 %v3137
      %v3329 = vpop.f32.mrf.mxu0
      %v3330 = vadd.f32 0.0, %v3329
      %v3331 = vpop.f32.mrf.mxu0
      %v3332 = vpop.f32.mrf.mxu0
      %v3333 = vadd.f32 0.0, %v3332
      %v3334 = vpop.f32.mrf.mxu0
      %3335 = vmatprep.mubr.bf16.mxu0 0
      %3336 = vmatmul.mubr.bf16.gmra.mxu0 %v3138
      %v3337 = vpop.f32.mrf.mxu0
      %v3338 = vadd.f32 0.0, %v3337
      %v3339 = vpop.f32.mrf.mxu0
      %v3340 = vpop.f32.mrf.mxu0
      %v3341 = vadd.f32 0.0, %v3340
      %v3342 = vpop.f32.mrf.mxu0
      %3343 = vmatprep.mubr.bf16.mxu0 0
      %3344 = vmatmul.mubr.bf16.gmra.mxu0 %v3139
      %v3345 = vpop.f32.mrf.mxu0
      %v3346 = vadd.f32 0.0, %v3345
      %v3347 = vpop.f32.mrf.mxu0
      %v3348 = vpop.f32.mrf.mxu0
      %v3349 = vadd.f32 0.0, %v3348
      %v3350 = vpop.f32.mrf.mxu0
      %3351 = vmatprep.mubr.bf16.mxu0 0
      %3352 = vmatmul.mubr.bf16.gmra.mxu0 %v3140
      %v3353 = vpop.f32.mrf.mxu0
      %v3354 = vadd.f32 0.0, %v3353
      %v3355 = vpop.f32.mrf.mxu0
      %v3356 = vpop.f32.mrf.mxu0
      %v3357 = vadd.f32 0.0, %v3356
      %v3358 = vpop.f32.mrf.mxu0
      %3359 = vmatprep.mubr.bf16.mxu0 0
      %3360 = vmatmul.mubr.bf16.gmra.mxu0 %v3141
      %v3361 = vpop.f32.mrf.mxu0
      %v3362 = vadd.f32 0.0, %v3361
      %v3363 = vpop.f32.mrf.mxu0
      %v3364 = vpop.f32.mrf.mxu0
      %v3365 = vadd.f32 0.0, %v3364
      %v3366 = vpop.f32.mrf.mxu0
      %3367 = vdwg.mxu0
      %v3368 = vld [vmem:[#allocation2] sm:$0xff]
      %v3369 = vld [vmem:[#allocation2 + $0x8] sm:$0xff]
      %v3370 = vld [vmem:[#allocation2 + $0x10] sm:$0xff]
      %v3371 = vld [vmem:[#allocation2 + $0x18] sm:$0xff]
      %v3372 = vld [vmem:[#allocation2 + $0x20] sm:$0xff]
      %v3373 = vld [vmem:[#allocation2 + $0x28] sm:$0xff]
      %v3374 = vld [vmem:[#allocation2 + $0x30] sm:$0xff]
      %v3375 = vld [vmem:[#allocation2 + $0x38] sm:$0xff]
      %v3376 = vld [vmem:[#allocation2 + $0x40] sm:$0xff]
      %v3377 = vld [vmem:[#allocation2 + $0x48] sm:$0xff]
      %v3378 = vld [vmem:[#allocation2 + $0x50] sm:$0xff]
      %v3379 = vld [vmem:[#allocation2 + $0x58] sm:$0xff]
      %v3380 = vld [vmem:[#allocation2 + $0x60] sm:$0xff]
      %v3381 = vld [vmem:[#allocation2 + $0x68] sm:$0xff]
      %v3382 = vld [vmem:[#allocation2 + $0x70] sm:$0xff]
      %v3383 = vld [vmem:[#allocation2 + $0x78] sm:$0xff]
      %v3384 = vld [vmem:[#allocation2 + $0x80] sm:$0xff]
      %v3385 = vld [vmem:[#allocation2 + $0x88] sm:$0xff]
      %v3386 = vld [vmem:[#allocation2 + $0x90] sm:$0xff]
      %v3387 = vld [vmem:[#allocation2 + $0x98] sm:$0xff]
      %v3388 = vld [vmem:[#allocation2 + $0xa0] sm:$0xff]
      %v3389 = vld [vmem:[#allocation2 + $0xa8] sm:$0xff]
      %v3390 = vld [vmem:[#allocation2 + $0xb0] sm:$0xff]
      %v3391 = vld [vmem:[#allocation2 + $0xb8] sm:$0xff]
      %v3392 = vld [vmem:[#allocation2 + $0xc0] sm:$0xff]
      %v3393 = vld [vmem:[#allocation2 + $0xc8] sm:$0xff]
      %v3394 = vld [vmem:[#allocation2 + $0xd0] sm:$0xff]
      %v3395 = vld [vmem:[#allocation2 + $0xd8] sm:$0xff]
      %v3396 = vld [vmem:[#allocation2 + $0xe0] sm:$0xff]
      %v3397 = vld [vmem:[#allocation2 + $0xe8] sm:$0xff]
      %v3398 = vld [vmem:[#allocation2 + $0xf0] sm:$0xff]
      %v3399 = vld [vmem:[#allocation2 + $0xf8] sm:$0xff]
      %v3400 = vadd.f32 %v3368, %v3242
      %v3401 = vadd.f32 %v3369, %v3245
      %v3402 = vadd.f32 %v3370, %v3250
      %v3403 = vadd.f32 %v3371, %v3253
      %v3404 = vadd.f32 %v3372, %v3258
      %v3405 = vadd.f32 %v3373, %v3261
      %v3406 = vadd.f32 %v3374, %v3266
      %v3407 = vadd.f32 %v3375, %v3269
      %v3408 = vadd.f32 %v3376, %v3274
      %v3409 = vadd.f32 %v3377, %v3277
      %v3410 = vadd.f32 %v3378, %v3282
      %v3411 = vadd.f32 %v3379, %v3285
      %v3412 = vadd.f32 %v3380, %v3290
      %v3413 = vadd.f32 %v3381, %v3293
      %v3414 = vadd.f32 %v3382, %v3298
      %v3415 = vadd.f32 %v3383, %v3301
      %v3416 = vadd.f32 %v3384, %v3306
      %v3417 = vadd.f32 %v3385, %v3309
      %v3418 = vadd.f32 %v3386, %v3314
      %v3419 = vadd.f32 %v3387, %v3317
      %v3420 = vadd.f32 %v3388, %v3322
      %v3421 = vadd.f32 %v3389, %v3325
      %v3422 = vadd.f32 %v3390, %v3330
      %v3423 = vadd.f32 %v3391, %v3333
      %v3424 = vadd.f32 %v3392, %v3338
      %v3425 = vadd.f32 %v3393, %v3341
      %v3426 = vadd.f32 %v3394, %v3346
      %v3427 = vadd.f32 %v3395, %v3349
      %v3428 = vadd.f32 %v3396, %v3354
      %v3429 = vadd.f32 %v3397, %v3357
      %v3430 = vadd.f32 %v3398, %v3362
      %v3431 = vadd.f32 %v3399, %v3365
      %3432 = vst [vmem:[#allocation2] sm:$0xff] %v3400
      %3433 = vst [vmem:[#allocation2 + $0x8] sm:$0xff] %v3401
      %3434 = vst [vmem:[#allocation2 + $0x10] sm:$0xff] %v3402
      %3435 = vst [vmem:[#allocation2 + $0x18] sm:$0xff] %v3403
      %3436 = vst [vmem:[#allocation2 + $0x20] sm:$0xff] %v3404
      %3437 = vst [vmem:[#allocation2 + $0x28] sm:$0xff] %v3405
      %3438 = vst [vmem:[#allocation2 + $0x30] sm:$0xff] %v3406
      %3439 = vst [vmem:[#allocation2 + $0x38] sm:$0xff] %v3407
      %3440 = vst [vmem:[#allocation2 + $0x40] sm:$0xff] %v3408
      %3441 = vst [vmem:[#allocation2 + $0x48] sm:$0xff] %v3409
      %3442 = vst [vmem:[#allocation2 + $0x50] sm:$0xff] %v3410
      %3443 = vst [vmem:[#allocation2 + $0x58] sm:$0xff] %v3411
      %3444 = vst [vmem:[#allocation2 + $0x60] sm:$0xff] %v3412
      %3445 = vst [vmem:[#allocation2 + $0x68] sm:$0xff] %v3413
      %3446 = vst [vmem:[#allocation2 + $0x70] sm:$0xff] %v3414
      %3447 = vst [vmem:[#allocation2 + $0x78] sm:$0xff] %v3415
      %3448 = vst [vmem:[#allocation2 + $0x80] sm:$0xff] %v3416
      %3449 = vst [vmem:[#allocation2 + $0x88] sm:$0xff] %v3417
      %3450 = vst [vmem:[#allocation2 + $0x90] sm:$0xff] %v3418
      %3451 = vst [vmem:[#allocation2 + $0x98] sm:$0xff] %v3419
      %3452 = vst [vmem:[#allocation2 + $0xa0] sm:$0xff] %v3420
      %3453 = vst [vmem:[#allocation2 + $0xa8] sm:$0xff] %v3421
      %3454 = vst [vmem:[#allocation2 + $0xb0] sm:$0xff] %v3422
      %3455 = vst [vmem:[#allocation2 + $0xb8] sm:$0xff] %v3423
      %3456 = vst [vmem:[#allocation2 + $0xc0] sm:$0xff] %v3424
      %3457 = vst [vmem:[#allocation2 + $0xc8] sm:$0xff] %v3425
      %3458 = vst [vmem:[#allocation2 + $0xd0] sm:$0xff] %v3426
      %3459 = vst [vmem:[#allocation2 + $0xd8] sm:$0xff] %v3427
      %3460 = vst [vmem:[#allocation2 + $0xe0] sm:$0xff] %v3428
      %3461 = vst [vmem:[#allocation2 + $0xe8] sm:$0xff] %v3429
      %3462 = vst [vmem:[#allocation2 + $0xf0] sm:$0xff] %v3430
      %3463 = vst [vmem:[#allocation2 + $0xf8] sm:$0xff] %v3431
      %v3464 = vld [vmem:[#allocation2] sm:$0xff]
      %v3465 = vld [vmem:[#allocation2 + $0x8] sm:$0xff]
      %v3466 = vld [vmem:[#allocation2 + $0x10] sm:$0xff]
      %v3467 = vld [vmem:[#allocation2 + $0x18] sm:$0xff]
      %v3468 = vld [vmem:[#allocation2 + $0x20] sm:$0xff]
      %v3469 = vld [vmem:[#allocation2 + $0x28] sm:$0xff]
      %v3470 = vld [vmem:[#allocation2 + $0x30] sm:$0xff]
      %v3471 = vld [vmem:[#allocation2 + $0x38] sm:$0xff]
      %v3472 = vld [vmem:[#allocation2 + $0x40] sm:$0xff]
      %v3473 = vld [vmem:[#allocation2 + $0x48] sm:$0xff]
      %v3474 = vld [vmem:[#allocation2 + $0x50] sm:$0xff]
      %v3475 = vld [vmem:[#allocation2 + $0x58] sm:$0xff]
      %v3476 = vld [vmem:[#allocation2 + $0x60] sm:$0xff]
      %v3477 = vld [vmem:[#allocation2 + $0x68] sm:$0xff]
      %v3478 = vld [vmem:[#allocation2 + $0x70] sm:$0xff]
      %v3479 = vld [vmem:[#allocation2 + $0x78] sm:$0xff]
      %v3480 = vld [vmem:[#allocation2 + $0x80] sm:$0xff]
      %v3481 = vld [vmem:[#allocation2 + $0x88] sm:$0xff]
      %v3482 = vld [vmem:[#allocation2 + $0x90] sm:$0xff]
      %v3483 = vld [vmem:[#allocation2 + $0x98] sm:$0xff]
      %v3484 = vld [vmem:[#allocation2 + $0xa0] sm:$0xff]
      %v3485 = vld [vmem:[#allocation2 + $0xa8] sm:$0xff]
      %v3486 = vld [vmem:[#allocation2 + $0xb0] sm:$0xff]
      %v3487 = vld [vmem:[#allocation2 + $0xb8] sm:$0xff]
      %v3488 = vld [vmem:[#allocation2 + $0xc0] sm:$0xff]
      %v3489 = vld [vmem:[#allocation2 + $0xc8] sm:$0xff]
      %v3490 = vld [vmem:[#allocation2 + $0xd0] sm:$0xff]
      %v3491 = vld [vmem:[#allocation2 + $0xd8] sm:$0xff]
      %v3492 = vld [vmem:[#allocation2 + $0xe0] sm:$0xff]
      %v3493 = vld [vmem:[#allocation2 + $0xe8] sm:$0xff]
      %v3494 = vld [vmem:[#allocation2 + $0xf0] sm:$0xff]
      %v3495 = vld [vmem:[#allocation2 + $0xf8] sm:$0xff]
      %v3496 = vld [vmem:[%s2] sm:$0x1]
      %v3498 = vlaneseq
      %v3499 = vshrl.u32 %v3498, 7
      %v3500 = vsub.s32 0, %v3499
      %v3501 = vrot.slane %v3496, %v3500
      %v3503 = vadd.f32 %v3464, %v3501
      %v3504 = vadd.f32 %v3465, %v3501
      %v3505 = vadd.f32 %v3466, %v3501
      %v3506 = vadd.f32 %v3467, %v3501
      %v3507 = vadd.f32 %v3468, %v3501
      %v3508 = vadd.f32 %v3469, %v3501
      %v3509 = vadd.f32 %v3470, %v3501
      %v3510 = vadd.f32 %v3471, %v3501
      %v3511 = vadd.f32 %v3472, %v3501
      %v3512 = vadd.f32 %v3473, %v3501
      %v3513 = vadd.f32 %v3474, %v3501
      %v3514 = vadd.f32 %v3475, %v3501
      %v3515 = vadd.f32 %v3476, %v3501
      %v3516 = vadd.f32 %v3477, %v3501
      %v3517 = vadd.f32 %v3478, %v3501
      %v3518 = vadd.f32 %v3479, %v3501
      %v3519 = vadd.f32 %v3480, %v3501
      %v3520 = vadd.f32 %v3481, %v3501
      %v3521 = vadd.f32 %v3482, %v3501
      %v3522 = vadd.f32 %v3483, %v3501
      %v3523 = vadd.f32 %v3484, %v3501
      %v3524 = vadd.f32 %v3485, %v3501
      %v3525 = vadd.f32 %v3486, %v3501
      %v3526 = vadd.f32 %v3487, %v3501
      %v3527 = vadd.f32 %v3488, %v3501
      %v3528 = vadd.f32 %v3489, %v3501
      %v3529 = vadd.f32 %v3490, %v3501
      %v3530 = vadd.f32 %v3491, %v3501
      %v3531 = vadd.f32 %v3492, %v3501
      %v3532 = vadd.f32 %v3493, %v3501
      %v3533 = vadd.f32 %v3494, %v3501
      %v3534 = vadd.f32 %v3495, %v3501
      %v3535 = vmax.f32 %v3503, 0.0
      %v3536 = vmax.f32 %v3504, 0.0
      %v3537 = vmax.f32 %v3505, 0.0
      %v3538 = vmax.f32 %v3506, 0.0
      %v3539 = vmax.f32 %v3507, 0.0
      %v3540 = vmax.f32 %v3508, 0.0
      %v3541 = vmax.f32 %v3509, 0.0
      %v3542 = vmax.f32 %v3510, 0.0
      %v3543 = vmax.f32 %v3511, 0.0
      %v3544 = vmax.f32 %v3512, 0.0
      %v3545 = vmax.f32 %v3513, 0.0
      %v3546 = vmax.f32 %v3514, 0.0
      %v3547 = vmax.f32 %v3515, 0.0
      %v3548 = vmax.f32 %v3516, 0.0
      %v3549 = vmax.f32 %v3517, 0.0
      %v3550 = vmax.f32 %v3518, 0.0
      %v3551 = vmax.f32 %v3519, 0.0
      %v3552 = vmax.f32 %v3520, 0.0
      %v3553 = vmax.f32 %v3521, 0.0
      %v3554 = vmax.f32 %v3522, 0.0
      %v3555 = vmax.f32 %v3523, 0.0
      %v3556 = vmax.f32 %v3524, 0.0
      %v3557 = vmax.f32 %v3525, 0.0
      %v3558 = vmax.f32 %v3526, 0.0
      %v3559 = vmax.f32 %v3527, 0.0
      %v3560 = vmax.f32 %v3528, 0.0
      %v3561 = vmax.f32 %v3529, 0.0
      %v3562 = vmax.f32 %v3530, 0.0
      %v3563 = vmax.f32 %v3531, 0.0
      %v3564 = vmax.f32 %v3532, 0.0
      %v3565 = vmax.f32 %v3533, 0.0
      %v3566 = vmax.f32 %v3534, 0.0
      %v3567 = vld [vmem:[%s3] sm:$0xff]
      %v3568 = vld [vmem:[%s3 + $0x8] sm:$0xff]
      %v3569 = vld [vmem:[%s3 + $0x10] sm:$0xff]
      %v3570 = vld [vmem:[%s3 + $0x18] sm:$0xff]
      %v3571 = vld [vmem:[%s3 + $0x20] sm:$0xff]
      %v3572 = vld [vmem:[%s3 + $0x28] sm:$0xff]
      %v3573 = vld [vmem:[%s3 + $0x30] sm:$0xff]
      %v3574 = vld [vmem:[%s3 + $0x38] sm:$0xff]
      %v3575 = vld [vmem:[%s3 + $0x40] sm:$0xff]
      %v3576 = vld [vmem:[%s3 + $0x48] sm:$0xff]
      %v3577 = vld [vmem:[%s3 + $0x50] sm:$0xff]
      %v3578 = vld [vmem:[%s3 + $0x58] sm:$0xff]
      %v3579 = vld [vmem:[%s3 + $0x60] sm:$0xff]
      %v3580 = vld [vmem:[%s3 + $0x68] sm:$0xff]
      %v3581 = vld [vmem:[%s3 + $0x70] sm:$0xff]
      %v3582 = vld [vmem:[%s3 + $0x78] sm:$0xff]
      %v3583 = vld [vmem:[%s3 + $0x80] sm:$0xff]
      %v3584 = vld [vmem:[%s3 + $0x88] sm:$0xff]
      %v3585 = vld [vmem:[%s3 + $0x90] sm:$0xff]
      %v3586 = vld [vmem:[%s3 + $0x98] sm:$0xff]
      %v3587 = vld [vmem:[%s3 + $0xa0] sm:$0xff]
      %v3588 = vld [vmem:[%s3 + $0xa8] sm:$0xff]
      %v3589 = vld [vmem:[%s3 + $0xb0] sm:$0xff]
      %v3590 = vld [vmem:[%s3 + $0xb8] sm:$0xff]
      %v3591 = vld [vmem:[%s3 + $0xc0] sm:$0xff]
      %v3592 = vld [vmem:[%s3 + $0xc8] sm:$0xff]
      %v3593 = vld [vmem:[%s3 + $0xd0] sm:$0xff]
      %v3594 = vld [vmem:[%s3 + $0xd8] sm:$0xff]
      %v3595 = vld [vmem:[%s3 + $0xe0] sm:$0xff]
      %v3596 = vld [vmem:[%s3 + $0xe8] sm:$0xff]
      %v3597 = vld [vmem:[%s3 + $0xf0] sm:$0xff]
      %v3598 = vld [vmem:[%s3 + $0xf8] sm:$0xff]
      %3600 = vset.pattern.permute.xlu0 0
      %3601 = vperm.xlu0 %3600, %v3567
      %v3602 = vpop.permute.xlu0 %3601
      %3605 = vset.pattern.permute.xlu0 0
      %3606 = vperm.xlu0 %3605, %v3568
      %v3607 = vpop.permute.xlu0 %3606
      %3610 = vset.pattern.permute.xlu0 0
      %3611 = vperm.xlu0 %3610, %v3569
      %v3612 = vpop.permute.xlu0 %3611
      %3615 = vset.pattern.permute.xlu0 0
      %3616 = vperm.xlu0 %3615, %v3570
      %v3617 = vpop.permute.xlu0 %3616
      %3620 = vset.pattern.permute.xlu0 0
      %3621 = vperm.xlu0 %3620, %v3571
      %v3622 = vpop.permute.xlu0 %3621
      %3625 = vset.pattern.permute.xlu0 0
      %3626 = vperm.xlu0 %3625, %v3572
      %v3627 = vpop.permute.xlu0 %3626
      %3630 = vset.pattern.permute.xlu0 0
      %3631 = vperm.xlu0 %3630, %v3573
      %v3632 = vpop.permute.xlu0 %3631
      %3635 = vset.pattern.permute.xlu0 0
      %3636 = vperm.xlu0 %3635, %v3574
      %v3637 = vpop.permute.xlu0 %3636
      %3640 = vset.pattern.permute.xlu0 0
      %3641 = vperm.xlu0 %3640, %v3575
      %v3642 = vpop.permute.xlu0 %3641
      %3645 = vset.pattern.permute.xlu0 0
      %3646 = vperm.xlu0 %3645, %v3576
      %v3647 = vpop.permute.xlu0 %3646
      %3650 = vset.pattern.permute.xlu0 0
      %3651 = vperm.xlu0 %3650, %v3577
      %v3652 = vpop.permute.xlu0 %3651
      %3655 = vset.pattern.permute.xlu0 0
      %3656 = vperm.xlu0 %3655, %v3578
      %v3657 = vpop.permute.xlu0 %3656
      %3660 = vset.pattern.permute.xlu0 0
      %3661 = vperm.xlu0 %3660, %v3579
      %v3662 = vpop.permute.xlu0 %3661
      %3665 = vset.pattern.permute.xlu0 0
      %3666 = vperm.xlu0 %3665, %v3580
      %v3667 = vpop.permute.xlu0 %3666
      %3670 = vset.pattern.permute.xlu0 0
      %3671 = vperm.xlu0 %3670, %v3581
      %v3672 = vpop.permute.xlu0 %3671
      %3675 = vset.pattern.permute.xlu0 0
      %3676 = vperm.xlu0 %3675, %v3582
      %v3677 = vpop.permute.xlu0 %3676
      %3680 = vset.pattern.permute.xlu0 0
      %3681 = vperm.xlu0 %3680, %v3583
      %v3682 = vpop.permute.xlu0 %3681
      %3685 = vset.pattern.permute.xlu0 0
      %3686 = vperm.xlu0 %3685, %v3584
      %v3687 = vpop.permute.xlu0 %3686
      %3690 = vset.pattern.permute.xlu0 0
      %3691 = vperm.xlu0 %3690, %v3585
      %v3692 = vpop.permute.xlu0 %3691
      %3695 = vset.pattern.permute.xlu0 0
      %3696 = vperm.xlu0 %3695, %v3586
      %v3697 = vpop.permute.xlu0 %3696
      %3700 = vset.pattern.permute.xlu0 0
      %3701 = vperm.xlu0 %3700, %v3587
      %v3702 = vpop.permute.xlu0 %3701
      %3705 = vset.pattern.permute.xlu0 0
      %3706 = vperm.xlu0 %3705, %v3588
      %v3707 = vpop.permute.xlu0 %3706
      %3710 = vset.pattern.permute.xlu0 0
      %3711 = vperm.xlu0 %3710, %v3589
      %v3712 = vpop.permute.xlu0 %3711
      %3715 = vset.pattern.permute.xlu0 0
      %3716 = vperm.xlu0 %3715, %v3590
      %v3717 = vpop.permute.xlu0 %3716
      %3720 = vset.pattern.permute.xlu0 0
      %3721 = vperm.xlu0 %3720, %v3591
      %v3722 = vpop.permute.xlu0 %3721
      %3725 = vset.pattern.permute.xlu0 0
      %3726 = vperm.xlu0 %3725, %v3592
      %v3727 = vpop.permute.xlu0 %3726
      %3730 = vset.pattern.permute.xlu0 0
      %3731 = vperm.xlu0 %3730, %v3593
      %v3732 = vpop.permute.xlu0 %3731
      %3735 = vset.pattern.permute.xlu0 0
      %3736 = vperm.xlu0 %3735, %v3594
      %v3737 = vpop.permute.xlu0 %3736
      %3740 = vset.pattern.permute.xlu0 0
      %3741 = vperm.xlu0 %3740, %v3595
      %v3742 = vpop.permute.xlu0 %3741
      %3745 = vset.pattern.permute.xlu0 0
      %3746 = vperm.xlu0 %3745, %v3596
      %v3747 = vpop.permute.xlu0 %3746
      %3750 = vset.pattern.permute.xlu0 0
      %3751 = vperm.xlu0 %3750, %v3597
      %v3752 = vpop.permute.xlu0 %3751
      %3755 = vset.pattern.permute.xlu0 0
      %3756 = vperm.xlu0 %3755, %v3598
      %v3757 = vpop.permute.xlu0 %3756
      %v3759 = vmul.f32 %v3535, %v3602
      %v3760 = vmul.f32 %v3536, %v3607
      %v3761 = vmul.f32 %v3537, %v3612
      %v3762 = vmul.f32 %v3538, %v3617
      %v3763 = vmul.f32 %v3539, %v3622
      %v3764 = vmul.f32 %v3540, %v3627
      %v3765 = vmul.f32 %v3541, %v3632
      %v3766 = vmul.f32 %v3542, %v3637
      %v3767 = vmul.f32 %v3543, %v3642
      %v3768 = vmul.f32 %v3544, %v3647
      %v3769 = vmul.f32 %v3545, %v3652
      %v3770 = vmul.f32 %v3546, %v3657
      %v3771 = vmul.f32 %v3547, %v3662
      %v3772 = vmul.f32 %v3548, %v3667
      %v3773 = vmul.f32 %v3549, %v3672
      %v3774 = vmul.f32 %v3550, %v3677
      %v3775 = vmul.f32 %v3551, %v3682
      %v3776 = vmul.f32 %v3552, %v3687
      %v3777 = vmul.f32 %v3553, %v3692
      %v3778 = vmul.f32 %v3554, %v3697
      %v3779 = vmul.f32 %v3555, %v3702
      %v3780 = vmul.f32 %v3556, %v3707
      %v3781 = vmul.f32 %v3557, %v3712
      %v3782 = vmul.f32 %v3558, %v3717
      %v3783 = vmul.f32 %v3559, %v3722
      %v3784 = vmul.f32 %v3560, %v3727
      %v3785 = vmul.f32 %v3561, %v3732
      %v3786 = vmul.f32 %v3562, %v3737
      %v3787 = vmul.f32 %v3563, %v3742
      %v3788 = vmul.f32 %v3564, %v3747
      %v3789 = vmul.f32 %v3565, %v3752
      %v3790 = vmul.f32 %v3566, %v3757
      %3791 = vst [vmem:[%s197 + $0x20] sm:$0xff] %v3759
      %3792 = vst [vmem:[%s197 + $0x28] sm:$0xff] %v3760
      %3793 = vst [vmem:[%s197 + $0x30] sm:$0xff] %v3761
      %3794 = vst [vmem:[%s197 + $0x38] sm:$0xff] %v3762
      %3795 = vst [vmem:[%s197 + $0x40] sm:$0xff] %v3763
      %3796 = vst [vmem:[%s197 + $0x48] sm:$0xff] %v3764
      %3797 = vst [vmem:[%s197 + $0x50] sm:$0xff] %v3765
      %3798 = vst [vmem:[%s197 + $0x58] sm:$0xff] %v3766
      %3799 = vst [vmem:[%s197 + $0x60] sm:$0xff] %v3767
      %3800 = vst [vmem:[%s197 + $0x68] sm:$0xff] %v3768
      %3801 = vst [vmem:[%s197 + $0x70] sm:$0xff] %v3769
      %3802 = vst [vmem:[%s197 + $0x78] sm:$0xff] %v3770
      %3803 = vst [vmem:[%s197 + $0x80] sm:$0xff] %v3771
      %3804 = vst [vmem:[%s197 + $0x88] sm:$0xff] %v3772
      %3805 = vst [vmem:[%s197 + $0x90] sm:$0xff] %v3773
      %3806 = vst [vmem:[%s197 + $0x98] sm:$0xff] %v3774
      %3807 = vst [vmem:[%s197 + $0xa0] sm:$0xff] %v3775
      %3808 = vst [vmem:[%s197 + $0xa8] sm:$0xff] %v3776
      %3809 = vst [vmem:[%s197 + $0xb0] sm:$0xff] %v3777
      %3810 = vst [vmem:[%s197 + $0xb8] sm:$0xff] %v3778
      %3811 = vst [vmem:[%s197 + $0xc0] sm:$0xff] %v3779
      %3812 = vst [vmem:[%s197 + $0xc8] sm:$0xff] %v3780
      %3813 = vst [vmem:[%s197 + $0xd0] sm:$0xff] %v3781
      %3814 = vst [vmem:[%s197 + $0xd8] sm:$0xff] %v3782
      %3815 = vst [vmem:[%s197 + $0xe0] sm:$0xff] %v3783
      %3816 = vst [vmem:[%s197 + $0xe8] sm:$0xff] %v3784
      %3817 = vst [vmem:[%s197 + $0xf0] sm:$0xff] %v3785
      %3818 = vst [vmem:[%s197 + $0xf8] sm:$0xff] %v3786
      %3819 = vst [vmem:[%s197 + $0x100] sm:$0xff] %v3787
      %3820 = vst [vmem:[%s197 + $0x108] sm:$0xff] %v3788
      %3821 = vst [vmem:[%s197 + $0x110] sm:$0xff] %v3789
      %3822 = vst [vmem:[%s197 + $0x118] sm:$0xff] %v3790
      %3823 = vst [vmem:[%s197] sm:$0xff] 0.0
      %3824 = vst [vmem:[%s197 + $0x8] sm:$0xff] 0.0
      %3825 = vst [vmem:[%s197 + $0x10] sm:$0xff] 0.0
      %3826 = vst [vmem:[%s197 + $0x18] sm:$0xff] 0.0
      %3827 = vst [vmem:[%s197 + $0x120] sm:$0xff] 0.0
      %3828 = vst [vmem:[%s197 + $0x128] sm:$0xff] 0.0
      %3829 = vst [vmem:[%s197 + $0x130] sm:$0xff] 0.0
      %3830 = vst [vmem:[%s197 + $0x138] sm:$0xff] 0.0
      %p3831 = scmp.lt.s32.totalorder %s15, 1
      %s3832 = scalar_select %p3831, %s15, 1
      %s3833 = smul.addr %s3832, 40
      %s3834 = smul.addr %s3833, 8
      %s3835 = scalar_lea.vmem %s4, %s3834
      // Predicated region
      $region37: #{_lambda_.10} parent=35 // pred_check
        %p3836 = pneg %p122
      $region38: #{_lambda_.10} parent=35 // pred_check_branch
        %3838 = sbr.rel (%p3836) target = $region40
      $region39: #{_lambda_.10} parent=35 // pred_region
        _
      $region40: #{_lambda_.10} parent=35 // pred_fallthru
        _
    $region36: #{_lambda_.10} parent=5 // pred_fallthru
      _
    %p3839 = scmp.le.s32.totalorder 2, %s10
    // Predicated region
    $region41: #{_lambda_.10} parent=5 // pred_check
      %p3840 = pneg %p3839
    $region42: #{_lambda_.10} parent=5 // pred_check_branch
      %3842 = sbr.rel (%p3840) target = $region44
    $region43: #{_lambda_.10} parent=5 // pred_region
      %s3843 = ssub.s32 %s10, 2
      // Predicated region
      $region45: #{_lambda_.10} parent=43 // pred_check
        %p3844 = pneg %p128
      $region46: #{_lambda_.10} parent=43 // pred_check_branch
        %3846 = sbr.rel (%p3844) target = $region48
      $region47: #{_lambda_.10} parent=43 // pred_region
        %p3847 = scmp.lt.s32.totalorder %s16, 1
        %s3848 = scalar_select %p3847, %s16, 1
        %s3849 = smul.addr %s3848, 40
        %s3850 = smul.addr %s3849, 8
        %s3851 = scalar_lea.vmem %s4, %s3850
      $region48: #{_lambda_.10} parent=43 // pred_fallthru
        _
    $region44: #{_lambda_.10} parent=5 // pred_fallthru
      _
  $region6: #{_lambda_.10} parent=0 // loop_footer
    %s14 = sadd.s32 1, %s10
  $region7: #{_lambda_.10} parent=0 // loop_footer_branch
    %9 = sbr.rel target = $region3
  $region8: #{_lambda_.10} parent=0 // loop_exit
    _

// kernel: _lambda_.12
$region0: #{_lambda_.12}
  #allocation0 [shape = 'u32[]', space=smem, size = 0x4, offset = 0x4, fixed_abs, tag = 'smem constant byte address 0x4 - core index']
  #allocation1 [shape = 'u32[144,128]{1,0:T(1,128)}', space=vmem, size = 0x12000, scoped, tag = 'internal scratch']
  #allocation2 [shape = 'f32[112,128]{1,0:T(8,128)}', space=vmem, size = 0xe000, scoped, tag = 'scratch operand']
  %s0 = inlined_call_operand.vmem [shape: bf16[112,1536], index: 0, kind: input, shape index: {}]
  %s1 = inlined_call_operand.vmem [shape: bf16[1536,128], index: 1, kind: input, shape index: {}]
  %s2 = inlined_call_operand.vmem [shape: f32[1,128], index: 2, kind: input, shape index: {}]
  %s3 = inlined_call_operand.vmem [shape: f32[112,128], index: 3, kind: output, shape index: {}]
  %s4 = sld [smem:[#allocation0]]
  $region76: #{_lambda_.12} parent=0
    _
  %s6 = ssub.s32 1, %s4
  %s7 = scalar_select 0, %s6, %s4
  $region1: #{_lambda_.12} parent=0
    #allocation3 [shape = 'u8[229376]{0}', space=vmem, size = 0x38000, scoped, tag = 'input window, operand 0']
    loop: start=0, step=1, limit=5
    $region2: #{_lambda_.12} parent=1 // loop_pre_header
      _
    $region3: #{_lambda_.12} parent=1 // loop_header
      %s9 = sphi 0, %s13
      %p10 = scmp.ge.s32.totalorder %s9, 5
      %s16 = sphi 0, %s35
      %s17 = sphi 0, %s31
      %s18 = sphi 0, %s27
      %s19 = sphi 0, %s16
      %s20 = sphi 0, %s17
      %s21 = sphi 0, %s18
      %s22 = sphi 0, %s19
      %s23 = sphi 0, %s20
      %s24 = sphi 0, %s21
      %s40 = sphi 0, %s42
      %s43 = sphi 0, %s40
      %s44 = sphi 0, %s43
      %s60 = sphi 0, %s44
      %s68 = sphi 0, %s70
      %s71 = sphi 0, %s68
      %s72 = sphi 0, %s71
      %s88 = sphi 0, %s72
      %s94 = sphi 0, %s96
      %s97 = sphi 0, %s94
      %s98 = sphi 0, %s97
      %s114 = sphi 0, %s98
      %s122 = sphi 0, %s124
      %s125 = sphi 0, %s122
      %s126 = sphi 0, %s125
      %s142 = sphi 0, %s126
    $region4: #{_lambda_.12} parent=1 // loop_header_branch
      %12 = sbr.rel (%p10) target = $region8
    $region5: #{_lambda_.12} parent=1 // loop_body
      %s14 = ssub.s32 %s9, 1
      %s15 = ssub.s32 %s9, 2
      %s25 = sadd.s32 1, %s18
      %p26 = scmp.ge.s32.totalorder %s25, 3
      %s27 = scalar_select %p26, 0, %s25
      %s28 = sadd.s32 1, %s17
      %s29 = scalar_select %p26, %s28, %s17
      %p30 = scmp.ge.s32.totalorder %s29, 1
      %s31 = scalar_select %p30, 0, %s29
      %s32 = sadd.s32 1, %s16
      %s33 = scalar_select %p30, %s32, %s16
      %p34 = scmp.ge.s32.totalorder %s33, 1
      %s35 = scalar_select %p34, 0, %s33
      %s36 = ssub.s32 %s16, %s35
      %s37 = ssub.s32 %s18, %s27
      %s38 = sor.u32 %s36, %s37
      %p39 = scmp.eq.s32.totalorder %s38, 0
      %s41 = sadd.s32 %s40, 1
      %s42 = scalar_select %p39, %s40, %s41
      %p45 = pneg %p39
      %p46 = scmp.eq.s32.totalorder %s9, 2
      %p47 = por %p45, %p46
      %p48 = scmp.ne.s32.totalorder %s40, %s43
      %p49 = scmp.eq.s32.totalorder %s9, 0
      %p50 = por %p48, %p49
      %p51 = scmp.ne.s32.totalorder %s40, %s43
      %p52 = scmp.eq.s32.totalorder %s14, 2
      %p53 = por %p51, %p52
      %p54 = scmp.ne.s32.totalorder %s43, %s44
      %p55 = scmp.eq.s32.totalorder %s14, 0
      %p56 = por %p54, %p55
      %p57 = scmp.ne.s32.totalorder %s43, %s44
      %p58 = scmp.eq.s32.totalorder %s15, 2
      %p59 = por %p57, %p58
      %p61 = scmp.ne.s32.totalorder %s44, %s60
      %p62 = scmp.eq.s32.totalorder %s15, 0
      %p63 = por %p61, %p62
      %s64 = ssub.s32 %s18, %s27
      %s65 = ssub.s32 %s17, %s31
      %s66 = sor.u32 %s64, %s65
      %p67 = scmp.eq.s32.totalorder %s66, 0
      %s69 = sadd.s32 %s68, 1
      %s70 = scalar_select %p67, %s68, %s69
      %p73 = pneg %p67
      %p74 = scmp.eq.s32.totalorder %s9, 2
      %p75 = por %p73, %p74
      %p76 = scmp.ne.s32.totalorder %s68, %s71
      %p77 = scmp.eq.s32.totalorder %s9, 0
      %p78 = por %p76, %p77
      %p79 = scmp.ne.s32.totalorder %s68, %s71
      %p80 = scmp.eq.s32.totalorder %s14, 2
      %p81 = por %p79, %p80
      %p82 = scmp.ne.s32.totalorder %s71, %s72
      %p83 = scmp.eq.s32.totalorder %s14, 0
      %p84 = por %p82, %p83
      %p85 = scmp.ne.s32.totalorder %s71, %s72
      %p86 = scmp.eq.s32.totalorder %s15, 2
      %p87 = por %p85, %p86
      %p89 = scmp.ne.s32.totalorder %s72, %s88
      %p90 = scmp.eq.s32.totalorder %s15, 0
      %p91 = por %p89, %p90
      %s92 = ssub.s32 %s17, %s31
      %p93 = scmp.eq.s32.totalorder %s92, 0
      %s95 = sadd.s32 %s94, 1
      %s96 = scalar_select %p93, %s94, %s95
      %p99 = pneg %p93
      %p100 = scmp.eq.s32.totalorder %s9, 2
      %p101 = por %p99, %p100
      %p102 = scmp.ne.s32.totalorder %s94, %s97
      %p103 = scmp.eq.s32.totalorder %s9, 0
      %p104 = por %p102, %p103
      %p105 = scmp.ne.s32.totalorder %s94, %s97
      %p106 = scmp.eq.s32.totalorder %s14, 2
      %p107 = por %p105, %p106
      %p108 = scmp.ne.s32.totalorder %s97, %s98
      %p109 = scmp.eq.s32.totalorder %s14, 0
      %p110 = por %p108, %p109
      %p111 = scmp.ne.s32.totalorder %s97, %s98
      %p112 = scmp.eq.s32.totalorder %s15, 2
      %p113 = por %p111, %p112
      %p115 = scmp.ne.s32.totalorder %s98, %s114
      %p116 = scmp.eq.s32.totalorder %s15, 0
      %p117 = por %p115, %p116
      %s118 = ssub.s32 %s16, %s35
      %s119 = ssub.s32 %s17, %s31
      %s120 = sor.u32 %s118, %s119
      %p121 = scmp.eq.s32.totalorder %s120, 0
      %s123 = sadd.s32 %s122, 1
      %s124 = scalar_select %p121, %s122, %s123
      %p127 = pneg %p121
      %p128 = scmp.eq.s32.totalorder %s9, 2
      %p129 = por %p127, %p128
      %p130 = scmp.ne.s32.totalorder %s122, %s125
      %p131 = scmp.eq.s32.totalorder %s9, 0
      %p132 = por %p130, %p131
      %p133 = scmp.ne.s32.totalorder %s122, %s125
      %p134 = scmp.eq.s32.totalorder %s14, 2
      %p135 = por %p133, %p134
      %p136 = scmp.ne.s32.totalorder %s125, %s126
      %p137 = scmp.eq.s32.totalorder %s14, 0
      %p138 = por %p136, %p137
      %p139 = scmp.ne.s32.totalorder %s125, %s126
      %p140 = scmp.eq.s32.totalorder %s15, 2
      %p141 = por %p139, %p140
      %p143 = scmp.ne.s32.totalorder %s126, %s142
      %p144 = scmp.eq.s32.totalorder %s15, 0
      %p145 = por %p143, %p144
      %p146 = scmp.le.s32.totalorder 1, %s9
      %p147 = scmp.lt.s32.totalorder %s9, 4
      %p148 = pnand %p146, %p147
      %p149 = pneg %p148
      // Predicated region
      $region9: #{_lambda_.12} parent=5 // pred_check
        _
      $region10: #{_lambda_.12} parent=5 // pred_check_branch
        %151 = sbr.rel (%p148) target = $region12
      $region11: #{_lambda_.12} parent=5 // pred_region
        %s152 = ssub.s32 %s9, 1
        // Predicated region
        $region13: #{_lambda_.12} parent=11 // pred_check
          %p153 = pneg %p110
        $region14: #{_lambda_.12} parent=11 // pred_check_branch
          %155 = sbr.rel (%p153) target = $region16
        $region15: #{_lambda_.12} parent=11 // pred_region
          %p156 = scmp.lt.s32.totalorder %s20, 0
          %s157 = scalar_select %p156, %s20, 0
          %s158 = scalar_lea.vmem %s2, %s157
        $region16: #{_lambda_.12} parent=11 // pred_fallthru
          _
      $region12: #{_lambda_.12} parent=5 // pred_fallthru
        _
      %p159 = scmp.lt.s32.totalorder %s9, 3
      // Predicated region
      $region17: #{_lambda_.12} parent=5 // pred_check
        %p160 = pneg %p159
      $region18: #{_lambda_.12} parent=5 // pred_check_branch
        %162 = sbr.rel (%p160) target = $region20
      $region19: #{_lambda_.12} parent=5 // pred_region
        // Predicated region
        $region21: #{_lambda_.12} parent=19 // pred_check
          %p163 = pneg %p50
        $region22: #{_lambda_.12} parent=19 // pred_check_branch
          %165 = sbr.rel (%p163) target = $region24
        $region23: #{_lambda_.12} parent=19 // pred_region
          %s166 = sand.u32 %s40, 1
          %s167 = sand.u32 %s40, 1
          %s168 = smul.addr %s167, 224
          %s169 = scalar_lea.vmem [#allocation3], %s168
          %s170 = smul.u32 14, %s16
          %s171 = smul.u32 4, %s18
          %s172 = smul.addr %s170, 12
          %s173 = sadd.s32 %s171, %s172
          %s174 = smul.addr %s173, 4
          %s175 = scalar_lea.vmem %s0, %s174
          // Predicated region
          $region25: #{_lambda_.12} parent=23 // pred_check
            _
          $region26: #{_lambda_.12} parent=23 // pred_check_branch
            %177 = sbr.rel (0) target = $region28
          $region27: #{_lambda_.12} parent=23 // pred_region
            // Predicated region
            $region29: #{_lambda_.12} parent=27 // pred_check
              _
            $region30: #{_lambda_.12} parent=27 // pred_check_branch
              %179 = sbr.rel (0) target = $region32
            $region31: #{_lambda_.12} parent=27 // pred_region
              loop: start=0, step=1, limit=1
              $region33: #{_lambda_.12} parent=31 // loop_pre_header
                _
              $region34: #{_lambda_.12} parent=31 // loop_header
                %s181 = sphi 0, %s185
                %p182 = scmp.ge.s32.totalorder %s181, 1
                %s186 = sphi %s175, %s175
                %s187 = sphi %s169, %s169
              $region35: #{_lambda_.12} parent=31 // loop_header_branch
                %184 = sbr.rel (%p182) target = $region39
              $region36: #{_lambda_.12} parent=31 // loop_body
                %v188 = vld [vmem:[%s186] sm:$0xff]
                %189 = vst [vmem:[%s187] sm:$0xff] %v188
                %v190 = vld [vmem:[%s186 + $0x8] sm:$0xff]
                %191 = vst [vmem:[%s187 + $0x8] sm:$0xff] %v190
                %v192 = vld [vmem:[%s186 + $0x30] sm:$0xff]
                %193 = vst [vmem:[%s187 + $0x10] sm:$0xff] %v192
                %v194 = vld [vmem:[%s186 + $0x38] sm:$0xff]
                %195 = vst [vmem:[%s187 + $0x18] sm:$0xff] %v194
                %v196 = vld [vmem:[%s186 + $0x60] sm:$0xff]
                %197 = vst [vmem:[%s187 + $0x20] sm:$0xff] %v196
                %v198 = vld [vmem:[%s186 + $0x68] sm:$0xff]
                %199 = vst [vmem:[%s187 + $0x28] sm:$0xff] %v198
                %v200 = vld [vmem:[%s186 + $0x90] sm:$0xff]
                %201 = vst [vmem:[%s187 + $0x30] sm:$0xff] %v200
                %v202 = vld [vmem:[%s186 + $0x98] sm:$0xff]
                %203 = vst [vmem:[%s187 + $0x38] sm:$0xff] %v202
                %v204 = vld [vmem:[%s186 + $0xc0] sm:$0xff]
                %205 = vst [vmem:[%s187 + $0x40] sm:$0xff] %v204
                %v206 = vld [vmem:[%s186 + $0xc8] sm:$0xff]
                %207 = vst [vmem:[%s187 + $0x48] sm:$0xff] %v206
                %v208 = vld [vmem:[%s186 + $0xf0] sm:$0xff]
                %209 = vst [vmem:[%s187 + $0x50] sm:$0xff] %v208
                %v210 = vld [vmem:[%s186 + $0xf8] sm:$0xff]
                %211 = vst [vmem:[%s187 + $0x58] sm:$0xff] %v210
                %v212 = vld [vmem:[%s186 + $0x120] sm:$0xff]
                %213 = vst [vmem:[%s187 + $0x60] sm:$0xff] %v212
                %v214 = vld [vmem:[%s186 + $0x128] sm:$0xff]
                %215 = vst [vmem:[%s187 + $0x68] sm:$0xff] %v214
                %v216 = vld [vmem:[%s186 + $0x150] sm:$0xff]
                %217 = vst [vmem:[%s187 + $0x70] sm:$0xff] %v216
                %v218 = vld [vmem:[%s186 + $0x158] sm:$0xff]
                %219 = vst [vmem:[%s187 + $0x78] sm:$0xff] %v218
                %v220 = vld [vmem:[%s186 + $0x180] sm:$0xff]
                %221 = vst [vmem:[%s187 + $0x80] sm:$0xff] %v220
                %v222 = vld [vmem:[%s186 + $0x188] sm:$0xff]
                %223 = vst [vmem:[%s187 + $0x88] sm:$0xff] %v222
                %v224 = vld [vmem:[%s186 + $0x1b0] sm:$0xff]
                %225 = vst [vmem:[%s187 + $0x90] sm:$0xff] %v224
                %v226 = vld [vmem:[%s186 + $0x1b8] sm:$0xff]
                %227 = vst [vmem:[%s187 + $0x98] sm:$0xff] %v226
                %v228 = vld [vmem:[%s186 + $0x1e0] sm:$0xff]
                %229 = vst [vmem:[%s187 + $0xa0] sm:$0xff] %v228
                %v230 = vld [vmem:[%s186 + $0x1e8] sm:$0xff]
                %231 = vst [vmem:[%s187 + $0xa8] sm:$0xff] %v230
                %v232 = vld [vmem:[%s186 + $0x210] sm:$0xff]
                %233 = vst [vmem:[%s187 + $0xb0] sm:$0xff] %v232
                %v234 = vld [vmem:[%s186 + $0x218] sm:$0xff]
                %235 = vst [vmem:[%s187 + $0xb8] sm:$0xff] %v234
                %v236 = vld [vmem:[%s186 + $0x240] sm:$0xff]
                %237 = vst [vmem:[%s187 + $0xc0] sm:$0xff] %v236
                %v238 = vld [vmem:[%s186 + $0x248] sm:$0xff]
                %239 = vst [vmem:[%s187 + $0xc8] sm:$0xff] %v238
                %v240 = vld [vmem:[%s186 + $0x270] sm:$0xff]
                %241 = vst [vmem:[%s187 + $0xd0] sm:$0xff] %v240
                %v242 = vld [vmem:[%s186 + $0x278] sm:$0xff]
                %243 = vst [vmem:[%s187 + $0xd8] sm:$0xff] %v242
              $region37: #{_lambda_.12} parent=31 // loop_footer
                %s185 = sadd.s32 1, %s181
              $region38: #{_lambda_.12} parent=31 // loop_footer_branch
                %180 = sbr.rel target = $region34
              $region39: #{_lambda_.12} parent=31 // loop_exit
                _
            $region32: #{_lambda_.12} parent=27 // pred_fallthru
              _
            // Predicated region
            $region40: #{_lambda_.12} parent=27 // pred_check
              _
            $region41: #{_lambda_.12} parent=27 // pred_check_branch
              %245 = sbr.rel target = $region43
            $region42: #{_lambda_.12} parent=27 // pred_region
              _
            $region43: #{_lambda_.12} parent=27 // pred_fallthru
              _
          $region28: #{_lambda_.12} parent=23 // pred_fallthru
            _
          %246 = vnop
        $region24: #{_lambda_.12} parent=19 // pred_fallthru
          _
        // Predicated region
        $region44: #{_lambda_.12} parent=19 // pred_check
          %p247 = pneg %p78
        $region45: #{_lambda_.12} parent=19 // pred_check_branch
          %249 = sbr.rel (%p247) target = $region47
        $region46: #{_lambda_.12} parent=19 // pred_region
          %s250 = smul.u32 64, %s18
          %p251 = scmp.lt.s32.totalorder %s250, 191
          %s252 = scalar_select %p251, %s250, 191
          %p253 = scmp.lt.s32.totalorder %s17, 0
          %s254 = scalar_select %p253, %s17, 0
          %s255 = sadd.s32 %s254, %s252
          %s256 = smul.addr %s255, 4
          %s257 = scalar_lea.vmem %s1, %s256
          %s258 = smul.u32 64, %s18
        $region47: #{_lambda_.12} parent=19 // pred_fallthru
          _
      $region20: #{_lambda_.12} parent=5 // pred_fallthru
        _
      %p259 = scmp.le.s32.totalorder 1, %s9
      %p260 = scmp.lt.s32.totalorder %s9, 4
      %p261 = pnand %p259, %p260
      %p262 = pneg %p261
      // Predicated region
      $region48: #{_lambda_.12} parent=5 // pred_check
        _
      $region49: #{_lambda_.12} parent=5 // pred_check_branch
        %264 = sbr.rel (%p261) target = $region51
      $region50: #{_lambda_.12} parent=5 // pred_region
        %s265 = ssub.s32 %s9, 1
        %s266 = sand.u32 %s43, 1
        %s267 = sand.u32 %s43, 1
        %s268 = smul.addr %s267, 224
        %s269 = scalar_lea.vmem [#allocation3], %s268
        // Predicated region
        $region52: #{_lambda_.12} parent=50 // pred_check
          %p270 = pneg %p56
        $region53: #{_lambda_.12} parent=50 // pred_check_branch
          %272 = sbr.rel (%p270) target = $region55
        $region54: #{_lambda_.12} parent=50 // pred_region
          _
        $region55: #{_lambda_.12} parent=50 // pred_fallthru
          _
        %s273 = sand.u32 %s43, 1
        %s274 = sand.u32 %s43, 1
        %s275 = smul.addr %s274, 224
        %s276 = scalar_lea.vmem [#allocation3], %s275
        %p277 = pneg %p56
        %p278 = pneg %p53
        %s279 = smul.u32 64, %s21
        %p280 = scmp.lt.s32.totalorder %s279, 191
        %s281 = scalar_select %p280, %s279, 191
        %p282 = scmp.lt.s32.totalorder %s20, 0
        %s283 = scalar_select %p282, %s20, 0
        %s284 = sadd.s32 %s283, %s281
        %s285 = smul.addr %s284, 4
        %s286 = scalar_lea.vmem %s1, %s285
        %p287 = pneg %p84
        %p288 = pneg %p81
        %p289 = scmp.lt.s32.totalorder %s20, 0
        %s290 = scalar_select %p289, %s20, 0
        %s291 = scalar_lea.vmem %s2, %s290
        %p292 = pneg %p110
        %p293 = pneg %p107
        %p294 = pneg %p138
        %p295 = pneg %p135
        %s296 = smul.u32 14, %s19
        %p297 = scmp.lt.s32.totalorder %s296, 13
        %s298 = scalar_select %p297, %s296, 13
        %p299 = scmp.lt.s32.totalorder %s20, 0
        %s300 = scalar_select %p299, %s20, 0
        %s301 = sadd.s32 %s300, %s298
        %s302 = smul.addr %s301, 8
        %s303 = scalar_lea.vmem %s3, %s302
        %s304 = smul.u32 14, %s19
        %s305 = smul.u32 4, %s21
        %s306 = smul.u32 64, %s21
        %p307 = scmp.lt.s32.totalorder %s306, 191
        %s308 = scalar_select %p307, %s306, 191
        %p309 = scmp.lt.s32.totalorder %s20, 0
        %s310 = scalar_select %p309, %s20, 0
        %s311 = sadd.s32 %s310, %s308
        %s312 = smul.addr %s311, 4
        %s313 = scalar_lea.vmem %s1, %s312
        %s314 = smul.u32 64, %s21
        %p315 = scmp.lt.s32.totalorder %s20, 0
        %s316 = scalar_select %p315, %s20, 0
        %s317 = scalar_lea.vmem %s2, %s316
        %s318 = smul.u32 14, %s19
        %p319 = scmp.lt.s32.totalorder %s318, 13
        %s320 = scalar_select %p319, %s318, 13
        %p321 = scmp.lt.s32.totalorder %s20, 0
        %s322 = scalar_select %p321, %s20, 0
        %s323 = sadd.s32 %s322, %s320
        %s324 = smul.addr %s323, 8
        %s325 = scalar_lea.vmem %s3, %s324
        %s326 = smul.u32 14, %s19
        %p328 = scmp.eq.s32.totalorder %s21, 0
        // Predicated region
        $region56: #{_lambda_.12} parent=50 // pred_check
          %p329 = pneg %p328
        $region57: #{_lambda_.12} parent=50 // pred_check_branch
          %331 = sbr.rel (%p329) target = $region59
        $region58: #{_lambda_.12} parent=50 // pred_region
          %332 = vst [vmem:[#allocation2] sm:$0xff] 0.0
          %333 = vst [vmem:[#allocation2 + $0x8] sm:$0xff] 0.0
          %334 = vst [vmem:[#allocation2 + $0x10] sm:$0xff] 0.0
          %335 = vst [vmem:[#allocation2 + $0x18] sm:$0xff] 0.0
          %336 = vst [vmem:[#allocation2 + $0x20] sm:$0xff] 0.0
          %337 = vst [vmem:[#allocation2 + $0x28] sm:$0xff] 0.0
          %338 = vst [vmem:[#allocation2 + $0x30] sm:$0xff] 0.0
          %339 = vst [vmem:[#allocation2 + $0x38] sm:$0xff] 0.0
          %340 = vst [vmem:[#allocation2 + $0x40] sm:$0xff] 0.0
          %341 = vst [vmem:[#allocation2 + $0x48] sm:$0xff] 0.0
          %342 = vst [vmem:[#allocation2 + $0x50] sm:$0xff] 0.0
          %343 = vst [vmem:[#allocation2 + $0x58] sm:$0xff] 0.0
          %344 = vst [vmem:[#allocation2 + $0x60] sm:$0xff] 0.0
          %345 = vst [vmem:[#allocation2 + $0x68] sm:$0xff] 0.0
        $region59: #{_lambda_.12} parent=50 // pred_fallthru
          _
        %v346 = vld [vmem:[#allocation2] sm:$0xff]
        %v347 = vld [vmem:[#allocation2 + $0x8] sm:$0xff]
        %v348 = vld [vmem:[#allocation2 + $0x10] sm:$0xff]
        %v349 = vld [vmem:[#allocation2 + $0x18] sm:$0xff]
        %v350 = vld [vmem:[#allocation2 + $0x20] sm:$0xff]
        %v351 = vld [vmem:[#allocation2 + $0x28] sm:$0xff]
        %v352 = vld [vmem:[#allocation2 + $0x30] sm:$0xff]
        %v353 = vld [vmem:[#allocation2 + $0x38] sm:$0xff]
        %v354 = vld [vmem:[#allocation2 + $0x40] sm:$0xff]
        %v355 = vld [vmem:[#allocation2 + $0x48] sm:$0xff]
        %v356 = vld [vmem:[#allocation2 + $0x50] sm:$0xff]
        %v357 = vld [vmem:[#allocation2 + $0x58] sm:$0xff]
        %v358 = vld [vmem:[#allocation2 + $0x60] sm:$0xff]
        %v359 = vld [vmem:[#allocation2 + $0x68] sm:$0xff]
        %v360 = vld [vmem:[%s269] sm:$0xff]
        %v361 = vld [vmem:[%s269 + $0x8] sm:$0xff]
        %v362 = vld [vmem:[%s269 + $0x10] sm:$0xff]
        %v363 = vld [vmem:[%s269 + $0x18] sm:$0xff]
        %v364 = vld [vmem:[%s269 + $0x20] sm:$0xff]
        %v365 = vld [vmem:[%s269 + $0x28] sm:$0xff]
        %v366 = vld [vmem:[%s269 + $0x30] sm:$0xff]
        %v367 = vld [vmem:[%s269 + $0x38] sm:$0xff]
        %v368 = vld [vmem:[%s269 + $0x40] sm:$0xff]
        %v369 = vld [vmem:[%s269 + $0x48] sm:$0xff]
        %v370 = vld [vmem:[%s269 + $0x50] sm:$0xff]
        %v371 = vld [vmem:[%s269 + $0x58] sm:$0xff]
        %v372 = vld [vmem:[%s269 + $0x60] sm:$0xff]
        %v373 = vld [vmem:[%s269 + $0x68] sm:$0xff]
        %v374 = vld [vmem:[%s269 + $0x70] sm:$0xff]
        %v375 = vld [vmem:[%s269 + $0x78] sm:$0xff]
        %v376 = vld [vmem:[%s269 + $0x80] sm:$0xff]
        %v377 = vld [vmem:[%s269 + $0x88] sm:$0xff]
        %v378 = vld [vmem:[%s269 + $0x90] sm:$0xff]
        %v379 = vld [vmem:[%s269 + $0x98] sm:$0xff]
        %v380 = vld [vmem:[%s269 + $0xa0] sm:$0xff]
        %v381 = vld [vmem:[%s269 + $0xa8] sm:$0xff]
        %v382 = vld [vmem:[%s269 + $0xb0] sm:$0xff]
        %v383 = vld [vmem:[%s269 + $0xb8] sm:$0xff]
        %v384 = vld [vmem:[%s269 + $0xc0] sm:$0xff]
        %v385 = vld [vmem:[%s269 + $0xc8] sm:$0xff]
        %v386 = vld [vmem:[%s269 + $0xd0] sm:$0xff]
        %v387 = vld [vmem:[%s269 + $0xd8] sm:$0xff]
        %v388 = vld [vmem:[%s313] sm:$0xf]
        %v389 = vld [vmem:[%s313 + $0x4] sm:$0xf]
        %v390 = vld [vmem:[%s313 + $0x8] sm:$0xf]
        %v391 = vld [vmem:[%s313 + $0xc] sm:$0xf]
        %v392 = vld [vmem:[%s313 + $0x10] sm:$0xf]
        %v393 = vld [vmem:[%s313 + $0x14] sm:$0xf]
        %v394 = vld [vmem:[%s313 + $0x18] sm:$0xf]
        %v395 = vld [vmem:[%s313 + $0x1c] sm:$0xf]
        %v396 = vld [vmem:[%s313 + $0x20] sm:$0xf]
        %v397 = vld [vmem:[%s313 + $0x24] sm:$0xf]
        %v398 = vld [vmem:[%s313 + $0x28] sm:$0xf]
        %v399 = vld [vmem:[%s313 + $0x2c] sm:$0xf]
        %v400 = vld [vmem:[%s313 + $0x30] sm:$0xf]
        %v401 = vld [vmem:[%s313 + $0x34] sm:$0xf]
        %v402 = vld [vmem:[%s313 + $0x38] sm:$0xf]
        %v403 = vld [vmem:[%s313 + $0x3c] sm:$0xf]
        %v404 = vld [vmem:[%s313 + $0x40] sm:$0xf]
        %v405 = vld [vmem:[%s313 + $0x44] sm:$0xf]
        %v406 = vld [vmem:[%s313 + $0x48] sm:$0xf]
        %v407 = vld [vmem:[%s313 + $0x4c] sm:$0xf]
        %v408 = vld [vmem:[%s313 + $0x50] sm:$0xf]
        %v409 = vld [vmem:[%s313 + $0x54] sm:$0xf]
        %v410 = vld [vmem:[%s313 + $0x58] sm:$0xf]
        %v411 = vld [vmem:[%s313 + $0x5c] sm:$0xf]
        %v412 = vld [vmem:[%s313 + $0x60] sm:$0xf]
        %v413 = vld [vmem:[%s313 + $0x64] sm:$0xf]
        %v414 = vld [vmem:[%s313 + $0x68] sm:$0xf]
        %v415 = vld [vmem:[%s313 + $0x6c] sm:$0xf]
        %v416 = vld [vmem:[%s313 + $0x70] sm:$0xf]
        %v417 = vld [vmem:[%s313 + $0x74] sm:$0xf]
        %v418 = vld [vmem:[%s313 + $0x78] sm:$0xf]
        %v419 = vld [vmem:[%s313 + $0x7c] sm:$0xf]
        %v420 = vld [vmem:[%s313 + $0x80] sm:$0xf]
        %v421 = vld [vmem:[%s313 + $0x84] sm:$0xf]
        %v422 = vld [vmem:[%s313 + $0x88] sm:$0xf]
        %v423 = vld [vmem:[%s313 + $0x8c] sm:$0xf]
        %v424 = vld [vmem:[%s313 + $0x90] sm:$0xf]
        %v425 = vld [vmem:[%s313 + $0x94] sm:$0xf]
        %v426 = vld [vmem:[%s313 + $0x98] sm:$0xf]
        %v427 = vld [vmem:[%s313 + $0x9c] sm:$0xf]
        %v428 = vld [vmem:[%s313 + $0xa0] sm:$0xf]
        %v429 = vld [vmem:[%s313 + $0xa4] sm:$0xf]
        %v430 = vld [vmem:[%s313 + $0xa8] sm:$0xf]
        %v431 = vld [vmem:[%s313 + $0xac] sm:$0xf]
        %v432 = vld [vmem:[%s313 + $0xb0] sm:$0xf]
        %v433 = vld [vmem:[%s313 + $0xb4] sm:$0xf]
        %v434 = vld [vmem:[%s313 + $0xb8] sm:$0xf]
        %v435 = vld [vmem:[%s313 + $0xbc] sm:$0xf]
        %v436 = vld [vmem:[%s313 + $0xc0] sm:$0xf]
        %v437 = vld [vmem:[%s313 + $0xc4] sm:$0xf]
        %v438 = vld [vmem:[%s313 + $0xc8] sm:$0xf]
        %v439 = vld [vmem:[%s313 + $0xcc] sm:$0xf]
        %v440 = vld [vmem:[%s313 + $0xd0] sm:$0xf]
        %v441 = vld [vmem:[%s313 + $0xd4] sm:$0xf]
        %v442 = vld [vmem:[%s313 + $0xd8] sm:$0xf]
        %v443 = vld [vmem:[%s313 + $0xdc] sm:$0xf]
        %v444 = vld [vmem:[%s313 + $0xe0] sm:$0xf]
        %v445 = vld [vmem:[%s313 + $0xe4] sm:$0xf]
        %v446 = vld [vmem:[%s313 + $0xe8] sm:$0xf]
        %v447 = vld [vmem:[%s313 + $0xec] sm:$0xf]
        %v448 = vld [vmem:[%s313 + $0xf0] sm:$0xf]
        %v449 = vld [vmem:[%s313 + $0xf4] sm:$0xf]
        %v450 = vld [vmem:[%s313 + $0xf8] sm:$0xf]
        %v451 = vld [vmem:[%s313 + $0xfc] sm:$0xf]
        %v480 = vunpack.c.l.b16 %v360
        %v481 = vunpack.c.h.b16 %v360
        %v482 = vunpack.c.l.b16 %v361
        %v483 = vunpack.c.h.b16 %v361
        %v484 = vunpack.c.l.b16 %v362
        %v485 = vunpack.c.h.b16 %v362
        %v486 = vunpack.c.l.b16 %v363
        %v487 = vunpack.c.h.b16 %v363
        %v488 = vunpack.c.l.b16 %v364
        %v489 = vunpack.c.h.b16 %v364
        %v490 = vunpack.c.l.b16 %v365
        %v491 = vunpack.c.h.b16 %v365
        %v492 = vunpack.c.l.b16 %v366
        %v493 = vunpack.c.h.b16 %v366
        %v494 = vunpack.c.l.b16 %v367
        %v495 = vunpack.c.h.b16 %v367
        %v496 = vunpack.c.l.b16 %v368
        %v497 = vunpack.c.h.b16 %v368
        %v498 = vunpack.c.l.b16 %v369
        %v499 = vunpack.c.h.b16 %v369
        %v500 = vunpack.c.l.b16 %v370
        %v501 = vunpack.c.h.b16 %v370
        %v502 = vunpack.c.l.b16 %v371
        %v503 = vunpack.c.h.b16 %v371
        %v504 = vunpack.c.l.b16 %v372
        %v505 = vunpack.c.h.b16 %v372
        %v506 = vunpack.c.l.b16 %v373
        %v507 = vunpack.c.h.b16 %v373
        %v508 = vunpack.c.l.b16 %v374
        %v509 = vunpack.c.h.b16 %v374
        %v510 = vunpack.c.l.b16 %v375
        %v511 = vunpack.c.h.b16 %v375
        %v512 = vunpack.c.l.b16 %v376
        %v513 = vunpack.c.h.b16 %v376
        %v514 = vunpack.c.l.b16 %v377
        %v515 = vunpack.c.h.b16 %v377
        %v516 = vunpack.c.l.b16 %v378
        %v517 = vunpack.c.h.b16 %v378
        %v518 = vunpack.c.l.b16 %v379
        %v519 = vunpack.c.h.b16 %v379
        %v520 = vunpack.c.l.b16 %v380
        %v521 = vunpack.c.h.b16 %v380
        %v522 = vunpack.c.l.b16 %v381
        %v523 = vunpack.c.h.b16 %v381
        %v524 = vunpack.c.l.b16 %v382
        %v525 = vunpack.c.h.b16 %v382
        %v526 = vunpack.c.l.b16 %v383
        %v527 = vunpack.c.h.b16 %v383
        %v528 = vunpack.c.l.b16 %v384
        %v529 = vunpack.c.h.b16 %v384
        %v530 = vunpack.c.l.b16 %v385
        %v531 = vunpack.c.h.b16 %v385
        %v532 = vunpack.c.l.b16 %v386
        %v533 = vunpack.c.h.b16 %v386
        %v534 = vunpack.c.l.b16 %v387
        %v535 = vunpack.c.h.b16 %v387
        %v536 = vpack.c.b16 %v484, %v480
        %v537 = vpack.c.b16 %v485, %v481
        %v538 = vpack.c.b16 %v486, %v482
        %v539 = vpack.c.b16 %v487, %v483
        %v540 = vpack.c.b16 %v492, %v488
        %v541 = vpack.c.b16 %v493, %v489
        %v542 = vpack.c.b16 %v494, %v490
        %v543 = vpack.c.b16 %v495, %v491
        %v544 = vpack.c.b16 %v500, %v496
        %v545 = vpack.c.b16 %v501, %v497
        %v546 = vpack.c.b16 %v502, %v498
        %v547 = vpack.c.b16 %v503, %v499
        %v548 = vpack.c.b16 %v508, %v504
        %v549 = vpack.c.b16 %v509, %v505
        %v550 = vpack.c.b16 %v510, %v506
        %v551 = vpack.c.b16 %v511, %v507
        %v552 = vpack.c.b16 %v516, %v512
        %v553 = vpack.c.b16 %v517, %v513
        %v554 = vpack.c.b16 %v518, %v514
        %v555 = vpack.c.b16 %v519, %v515
        %v556 = vpack.c.b16 %v524, %v520
        %v557 = vpack.c.b16 %v525, %v521
        %v558 = vpack.c.b16 %v526, %v522
        %v559 = vpack.c.b16 %v527, %v523
        %v560 = vpack.c.b16 %v532, %v528
        %v561 = vpack.c.b16 %v533, %v529
        %v562 = vpack.c.b16 %v534, %v530
        %v563 = vpack.c.b16 %v535, %v531
        %v656 = vunpack.c.l.b16 %v388
        %v657 = vunpack.c.l.b16 %v389
        %v658 = vunpack.c.l.b16 %v390
        %v659 = vunpack.c.l.b16 %v391
        %v660 = vunpack.c.l.b16 %v392
        %v661 = vunpack.c.l.b16 %v393
        %v662 = vunpack.c.l.b16 %v394
        %v663 = vunpack.c.l.b16 %v395
        %v664 = vunpack.c.l.b16 %v396
        %v665 = vunpack.c.l.b16 %v397
        %v666 = vunpack.c.l.b16 %v398
        %v667 = vunpack.c.l.b16 %v399
        %v668 = vunpack.c.l.b16 %v400
        %v669 = vunpack.c.l.b16 %v401
        %v670 = vunpack.c.l.b16 %v402
        %v671 = vunpack.c.l.b16 %v403
        %v672 = vunpack.c.l.b16 %v404
        %v673 = vunpack.c.l.b16 %v405
        %v674 = vunpack.c.l.b16 %v406
        %v675 = vunpack.c.l.b16 %v407
        %v676 = vunpack.c.l.b16 %v408
        %v677 = vunpack.c.l.b16 %v409
        %v678 = vunpack.c.l.b16 %v410
        %v679 = vunpack.c.l.b16 %v411
        %v680 = vunpack.c.l.b16 %v412
        %v681 = vunpack.c.l.b16 %v413
        %v682 = vunpack.c.l.b16 %v414
        %v683 = vunpack.c.l.b16 %v415
        %v684 = vunpack.c.l.b16 %v416
        %v685 = vunpack.c.l.b16 %v417
        %v686 = vunpack.c.l.b16 %v418
        %v687 = vunpack.c.l.b16 %v419
        %v688 = vunpack.c.l.b16 %v420
        %v689 = vunpack.c.l.b16 %v421
        %v690 = vunpack.c.l.b16 %v422
        %v691 = vunpack.c.l.b16 %v423
        %v692 = vunpack.c.l.b16 %v424
        %v693 = vunpack.c.l.b16 %v425
        %v694 = vunpack.c.l.b16 %v426
        %v695 = vunpack.c.l.b16 %v427
        %v696 = vunpack.c.l.b16 %v428
        %v697 = vunpack.c.l.b16 %v429
        %v698 = vunpack.c.l.b16 %v430
        %v699 = vunpack.c.l.b16 %v431
        %v700 = vunpack.c.l.b16 %v432
        %v701 = vunpack.c.l.b16 %v433
        %v702 = vunpack.c.l.b16 %v434
        %v703 = vunpack.c.l.b16 %v435
        %v704 = vunpack.c.l.b16 %v436
        %v705 = vunpack.c.l.b16 %v437
        %v706 = vunpack.c.l.b16 %v438
        %v707 = vunpack.c.l.b16 %v439
        %v708 = vunpack.c.l.b16 %v440
        %v709 = vunpack.c.l.b16 %v441
        %v710 = vunpack.c.l.b16 %v442
        %v711 = vunpack.c.l.b16 %v443
        %v712 = vunpack.c.l.b16 %v444
        %v713 = vunpack.c.l.b16 %v445
        %v714 = vunpack.c.l.b16 %v446
        %v715 = vunpack.c.l.b16 %v447
        %v716 = vunpack.c.l.b16 %v448
        %v717 = vunpack.c.l.b16 %v449
        %v718 = vunpack.c.l.b16 %v450
        %v719 = vunpack.c.l.b16 %v451
        %v720 = vpack.c.b16 %v657, %v656
        %v721 = vpack.c.b16 %v659, %v658
        %v722 = vpack.c.b16 %v661, %v660
        %v723 = vpack.c.b16 %v663, %v662
        %v724 = vpack.c.b16 %v665, %v664
        %v725 = vpack.c.b16 %v667, %v666
        %v726 = vpack.c.b16 %v669, %v668
        %v727 = vpack.c.b16 %v671, %v670
        %v728 = vpack.c.b16 %v673, %v672
        %v729 = vpack.c.b16 %v675, %v674
        %v730 = vpack.c.b16 %v677, %v676
        %v731 = vpack.c.b16 %v679, %v678
        %v732 = vpack.c.b16 %v681, %v680
        %v733 = vpack.c.b16 %v683, %v682
        %v734 = vpack.c.b16 %v685, %v684
        %v735 = vpack.c.b16 %v687, %v686
        %v736 = vpack.c.b16 %v689, %v688
        %v737 = vpack.c.b16 %v691, %v690
        %v738 = vpack.c.b16 %v693, %v692
        %v739 = vpack.c.b16 %v695, %v694
        %v740 = vpack.c.b16 %v697, %v696
        %v741 = vpack.c.b16 %v699, %v698
        %v742 = vpack.c.b16 %v701, %v700
        %v743 = vpack.c.b16 %v703, %v702
        %v744 = vpack.c.b16 %v705, %v704
        %v745 = vpack.c.b16 %v707, %v706
        %v746 = vpack.c.b16 %v709, %v708
        %v747 = vpack.c.b16 %v711, %v710
        %v748 = vpack.c.b16 %v713, %v712
        %v749 = vpack.c.b16 %v715, %v714
        %v750 = vpack.c.b16 %v717, %v716
        %v751 = vpack.c.b16 %v719, %v718
        %784 = vmatprep.subr.bf16.mxu0 0
        %785 = vmatpush1.bf16.msra.mxu0 %v727
        %786 = vmatprep.subr.bf16.mxu0 0
        %787 = vmatpush1.bf16.msra.mxu0 %v726
        %788 = vmatprep.subr.bf16.mxu0 0
        %789 = vmatpush1.bf16.msra.mxu0 %v725
        %790 = vmatprep.subr.bf16.mxu0 0
        %791 = vmatpush1.bf16.msra.mxu0 %v724
        %792 = vmatprep.subr.bf16.mxu0 0
        %793 = vmatpush1.bf16.msra.mxu0 %v723
        %794 = vmatprep.subr.bf16.mxu0 0
        %795 = vmatpush1.bf16.msra.mxu0 %v722
        %796 = vmatprep.subr.bf16.mxu0 0
        %797 = vmatpush1.bf16.msra.mxu0 %v721
        %798 = vmatprep.subr.bf16.mxu0 0
        %799 = vmatpush1.bf16.msra.mxu0 %v720
        %800 = vmatprep.subr.bf16.mxu0 0
        %801 = vmatpush2.bf16.msra.mxu0 %v735
        %802 = vmatprep.subr.bf16.mxu0 0
        %803 = vmatpush2.bf16.msra.mxu0 %v734
        %804 = vmatprep.subr.bf16.mxu0 0
        %805 = vmatpush2.bf16.msra.mxu0 %v733
        %806 = vmatprep.subr.bf16.mxu0 0
        %807 = vmatpush2.bf16.msra.mxu0 %v732
        %808 = vmatprep.subr.bf16.mxu0 0
        %809 = vmatpush2.bf16.msra.mxu0 %v731
        %810 = vmatprep.subr.bf16.mxu0 0
        %811 = vmatpush2.bf16.msra.mxu0 %v730
        %812 = vmatprep.subr.bf16.mxu0 0
        %813 = vmatpush2.bf16.msra.mxu0 %v729
        %814 = vmatprep.subr.bf16.mxu0 0
        %815 = vmatpush2.bf16.msra.mxu0 %v728
        %816 = vmatprep.mubr.bf16.mxu0 %v537
        %817 = vmatmul.mubr.bf16.gmra.mxu0 %v536
        %v818 = vpop.f32.mrf.mxu0
        %v819 = vadd.f32 0.0, %v818
        %v820 = vpop.f32.mrf.mxu0
        %v821 = vpop.f32.mrf.mxu0
        %v822 = vadd.f32 0.0, %v821
        %v823 = vpop.f32.mrf.mxu0
        %824 = vmatprep.mubr.bf16.mxu0 %v541
        %825 = vmatmul.mubr.bf16.gmra.mxu0 %v540
        %v826 = vpop.f32.mrf.mxu0
        %v827 = vadd.f32 0.0, %v826
        %v828 = vpop.f32.mrf.mxu0
        %v829 = vpop.f32.mrf.mxu0
        %v830 = vadd.f32 0.0, %v829
        %v831 = vpop.f32.mrf.mxu0
        %832 = vmatprep.mubr.bf16.mxu0 %v545
        %833 = vmatmul.mubr.bf16.gmra.mxu0 %v544
        %v834 = vpop.f32.mrf.mxu0
        %v835 = vadd.f32 0.0, %v834
        %v836 = vpop.f32.mrf.mxu0
        %v837 = vpop.f32.mrf.mxu0
        %v838 = vadd.f32 0.0, %v837
        %v839 = vpop.f32.mrf.mxu0
        %840 = vmatprep.mubr.bf16.mxu0 %v549
        %841 = vmatmul.mubr.bf16.gmra.mxu0 %v548
        %v842 = vpop.f32.mrf.mxu0
        %v843 = vadd.f32 0.0, %v842
        %v844 = vpop.f32.mrf.mxu0
        %v845 = vpop.f32.mrf.mxu0
        %v846 = vadd.f32 0.0, %v845
        %v847 = vpop.f32.mrf.mxu0
        %848 = vmatprep.mubr.bf16.mxu0 %v553
        %849 = vmatmul.mubr.bf16.gmra.mxu0 %v552
        %v850 = vpop.f32.mrf.mxu0
        %v851 = vadd.f32 0.0, %v850
        %v852 = vpop.f32.mrf.mxu0
        %v853 = vpop.f32.mrf.mxu0
        %v854 = vadd.f32 0.0, %v853
        %v855 = vpop.f32.mrf.mxu0
        %856 = vmatprep.mubr.bf16.mxu0 %v557
        %857 = vmatmul.mubr.bf16.gmra.mxu0 %v556
        %v858 = vpop.f32.mrf.mxu0
        %v859 = vadd.f32 0.0, %v858
        %v860 = vpop.f32.mrf.mxu0
        %v861 = vpop.f32.mrf.mxu0
        %v862 = vadd.f32 0.0, %v861
        %v863 = vpop.f32.mrf.mxu0
        %864 = vmatprep.mubr.bf16.mxu0 %v561
        %865 = vmatmul.mubr.bf16.gmra.mxu0 %v560
        %v866 = vpop.f32.mrf.mxu0
        %v867 = vadd.f32 0.0, %v866
        %v868 = vpop.f32.mrf.mxu0
        %v869 = vpop.f32.mrf.mxu0
        %v870 = vadd.f32 0.0, %v869
        %v871 = vpop.f32.mrf.mxu0
        %872 = vdwg.mxu0
        %873 = vmatprep.subr.bf16.mxu0 0
        %874 = vmatpush1.bf16.msra.mxu0 %v743
        %875 = vmatprep.subr.bf16.mxu0 0
        %876 = vmatpush1.bf16.msra.mxu0 %v742
        %877 = vmatprep.subr.bf16.mxu0 0
        %878 = vmatpush1.bf16.msra.mxu0 %v741
        %879 = vmatprep.subr.bf16.mxu0 0
        %880 = vmatpush1.bf16.msra.mxu0 %v740
        %881 = vmatprep.subr.bf16.mxu0 0
        %882 = vmatpush1.bf16.msra.mxu0 %v739
        %883 = vmatprep.subr.bf16.mxu0 0
        %884 = vmatpush1.bf16.msra.mxu0 %v738
        %885 = vmatprep.subr.bf16.mxu0 0
        %886 = vmatpush1.bf16.msra.mxu0 %v737
        %887 = vmatprep.subr.bf16.mxu0 0
        %888 = vmatpush1.bf16.msra.mxu0 %v736
        %889 = vmatprep.subr.bf16.mxu0 0
        %890 = vmatpush2.bf16.msra.mxu0 %v751
        %891 = vmatprep.subr.bf16.mxu0 0
        %892 = vmatpush2.bf16.msra.mxu0 %v750
        %893 = vmatprep.subr.bf16.mxu0 0
        %894 = vmatpush2.bf16.msra.mxu0 %v749
        %895 = vmatprep.subr.bf16.mxu0 0
        %896 = vmatpush2.bf16.msra.mxu0 %v748
        %897 = vmatprep.subr.bf16.mxu0 0
        %898 = vmatpush2.bf16.msra.mxu0 %v747
        %899 = vmatprep.subr.bf16.mxu0 0
        %900 = vmatpush2.bf16.msra.mxu0 %v746
        %901 = vmatprep.subr.bf16.mxu0 0
        %902 = vmatpush2.bf16.msra.mxu0 %v745
        %903 = vmatprep.subr.bf16.mxu0 0
        %904 = vmatpush2.bf16.msra.mxu0 %v744
        %905 = vmatprep.mubr.bf16.mxu0 %v539
        %906 = vmatmul.mubr.bf16.gmra.mxu0 %v538
        %v907 = vpop.f32.mrf.mxu0
        %v908 = vadd.f32 %v819, %v907
        %v909 = vpop.f32.mrf.mxu0
        %v910 = vpop.f32.mrf.mxu0
        %v911 = vadd.f32 %v822, %v910
        %v912 = vpop.f32.mrf.mxu0
        %913 = vmatprep.mubr.bf16.mxu0 %v543
        %914 = vmatmul.mubr.bf16.gmra.mxu0 %v542
        %v915 = vpop.f32.mrf.mxu0
        %v916 = vadd.f32 %v827, %v915
        %v917 = vpop.f32.mrf.mxu0
        %v918 = vpop.f32.mrf.mxu0
        %v919 = vadd.f32 %v830, %v918
        %v920 = vpop.f32.mrf.mxu0
        %921 = vmatprep.mubr.bf16.mxu0 %v547
        %922 = vmatmul.mubr.bf16.gmra.mxu0 %v546
        %v923 = vpop.f32.mrf.mxu0
        %v924 = vadd.f32 %v835, %v923
        %v925 = vpop.f32.mrf.mxu0
        %v926 = vpop.f32.mrf.mxu0
        %v927 = vadd.f32 %v838, %v926
        %v928 = vpop.f32.mrf.mxu0
        %929 = vmatprep.mubr.bf16.mxu0 %v551
        %930 = vmatmul.mubr.bf16.gmra.mxu0 %v550
        %v931 = vpop.f32.mrf.mxu0
        %v932 = vadd.f32 %v843, %v931
        %v933 = vpop.f32.mrf.mxu0
        %v934 = vpop.f32.mrf.mxu0
        %v935 = vadd.f32 %v846, %v934
        %v936 = vpop.f32.mrf.mxu0
        %937 = vmatprep.mubr.bf16.mxu0 %v555
        %938 = vmatmul.mubr.bf16.gmra.mxu0 %v554
        %v939 = vpop.f32.mrf.mxu0
        %v940 = vadd.f32 %v851, %v939
        %v941 = vpop.f32.mrf.mxu0
        %v942 = vpop.f32.mrf.mxu0
        %v943 = vadd.f32 %v854, %v942
        %v944 = vpop.f32.mrf.mxu0
        %945 = vmatprep.mubr.bf16.mxu0 %v559
        %946 = vmatmul.mubr.bf16.gmra.mxu0 %v558
        %v947 = vpop.f32.mrf.mxu0
        %v948 = vadd.f32 %v859, %v947
        %v949 = vpop.f32.mrf.mxu0
        %v950 = vpop.f32.mrf.mxu0
        %v951 = vadd.f32 %v862, %v950
        %v952 = vpop.f32.mrf.mxu0
        %953 = vmatprep.mubr.bf16.mxu0 %v563
        %954 = vmatmul.mubr.bf16.gmra.mxu0 %v562
        %v955 = vpop.f32.mrf.mxu0
        %v956 = vadd.f32 %v867, %v955
        %v957 = vpop.f32.mrf.mxu0
        %v958 = vpop.f32.mrf.mxu0
        %v959 = vadd.f32 %v870, %v958
        %v960 = vpop.f32.mrf.mxu0
        %961 = vdwg.mxu0
        %v962 = vadd.f32 %v346, %v908
        %v963 = vadd.f32 %v347, %v911
        %v964 = vadd.f32 %v348, %v916
        %v965 = vadd.f32 %v349, %v919
        %v966 = vadd.f32 %v350, %v924
        %v967 = vadd.f32 %v351, %v927
        %v968 = vadd.f32 %v352, %v932
        %v969 = vadd.f32 %v353, %v935
        %v970 = vadd.f32 %v354, %v940
        %v971 = vadd.f32 %v355, %v943
        %v972 = vadd.f32 %v356, %v948
        %v973 = vadd.f32 %v357, %v951
        %v974 = vadd.f32 %v358, %v956
        %v975 = vadd.f32 %v359, %v959
        %976 = vst [vmem:[#allocation2] sm:$0xff] %v962
        %977 = vst [vmem:[#allocation2 + $0x8] sm:$0xff] %v963
        %978 = vst [vmem:[#allocation2 + $0x10] sm:$0xff] %v964
        %979 = vst [vmem:[#allocation2 + $0x18] sm:$0xff] %v965
        %980 = vst [vmem:[#allocation2 + $0x20] sm:$0xff] %v966
        %981 = vst [vmem:[#allocation2 + $0x28] sm:$0xff] %v967
        %982 = vst [vmem:[#allocation2 + $0x30] sm:$0xff] %v968
        %983 = vst [vmem:[#allocation2 + $0x38] sm:$0xff] %v969
        %984 = vst [vmem:[#allocation2 + $0x40] sm:$0xff] %v970
        %985 = vst [vmem:[#allocation2 + $0x48] sm:$0xff] %v971
        %986 = vst [vmem:[#allocation2 + $0x50] sm:$0xff] %v972
        %987 = vst [vmem:[#allocation2 + $0x58] sm:$0xff] %v973
        %988 = vst [vmem:[#allocation2 + $0x60] sm:$0xff] %v974
        %989 = vst [vmem:[#allocation2 + $0x68] sm:$0xff] %v975
        %p990 = scmp.eq.s32.totalorder %s21, 2
        // Predicated region
        $region60: #{_lambda_.12} parent=50 // pred_check
          %p991 = pneg %p990
        $region61: #{_lambda_.12} parent=50 // pred_check_branch
          %993 = sbr.rel (%p991) target = $region63
        $region62: #{_lambda_.12} parent=50 // pred_region
          %v994 = vld [vmem:[#allocation2] sm:$0xff]
          %v995 = vld [vmem:[#allocation2 + $0x8] sm:$0xff]
          %v996 = vld [vmem:[#allocation2 + $0x10] sm:$0xff]
          %v997 = vld [vmem:[#allocation2 + $0x18] sm:$0xff]
          %v998 = vld [vmem:[#allocation2 + $0x20] sm:$0xff]
          %v999 = vld [vmem:[#allocation2 + $0x28] sm:$0xff]
          %v1000 = vld [vmem:[#allocation2 + $0x30] sm:$0xff]
          %v1001 = vld [vmem:[#allocation2 + $0x38] sm:$0xff]
          %v1002 = vld [vmem:[#allocation2 + $0x40] sm:$0xff]
          %v1003 = vld [vmem:[#allocation2 + $0x48] sm:$0xff]
          %v1004 = vld [vmem:[#allocation2 + $0x50] sm:$0xff]
          %v1005 = vld [vmem:[#allocation2 + $0x58] sm:$0xff]
          %v1006 = vld [vmem:[#allocation2 + $0x60] sm:$0xff]
          %v1007 = vld [vmem:[#allocation2 + $0x68] sm:$0xff]
          %v1008 = vld [vmem:[%s317] sm:$0x1]
          %v1010 = vlaneseq
          %v1011 = vshrl.u32 %v1010, 7
          %v1012 = vsub.s32 0, %v1011
          %v1013 = vrot.slane %v1008, %v1012
          %v1015 = vadd.f32 %v994, %v1013
          %v1016 = vadd.f32 %v995, %v1013
          %v1017 = vadd.f32 %v996, %v1013
          %v1018 = vadd.f32 %v997, %v1013
          %v1019 = vadd.f32 %v998, %v1013
          %v1020 = vadd.f32 %v999, %v1013
          %v1021 = vadd.f32 %v1000, %v1013
          %v1022 = vadd.f32 %v1001, %v1013
          %v1023 = vadd.f32 %v1002, %v1013
          %v1024 = vadd.f32 %v1003, %v1013
          %v1025 = vadd.f32 %v1004, %v1013
          %v1026 = vadd.f32 %v1005, %v1013
          %v1027 = vadd.f32 %v1006, %v1013
          %v1028 = vadd.f32 %v1007, %v1013
          %v1029 = vmax.f32 %v1015, 0.0
          %v1030 = vmax.f32 %v1016, 0.0
          %v1031 = vmax.f32 %v1017, 0.0
          %v1032 = vmax.f32 %v1018, 0.0
          %v1033 = vmax.f32 %v1019, 0.0
          %v1034 = vmax.f32 %v1020, 0.0
          %v1035 = vmax.f32 %v1021, 0.0
          %v1036 = vmax.f32 %v1022, 0.0
          %v1037 = vmax.f32 %v1023, 0.0
          %v1038 = vmax.f32 %v1024, 0.0
          %v1039 = vmax.f32 %v1025, 0.0
          %v1040 = vmax.f32 %v1026, 0.0
          %v1041 = vmax.f32 %v1027, 0.0
          %v1042 = vmax.f32 %v1028, 0.0
          %1043 = vst [vmem:[%s325] sm:$0xff] %v1029
          %1044 = vst [vmem:[%s325 + $0x8] sm:$0xff] %v1030
          %1045 = vst [vmem:[%s325 + $0x10] sm:$0xff] %v1031
          %1046 = vst [vmem:[%s325 + $0x18] sm:$0xff] %v1032
          %1047 = vst [vmem:[%s325 + $0x20] sm:$0xff] %v1033
          %1048 = vst [vmem:[%s325 + $0x28] sm:$0xff] %v1034
          %1049 = vst [vmem:[%s325 + $0x30] sm:$0xff] %v1035
          %1050 = vst [vmem:[%s325 + $0x38] sm:$0xff] %v1036
          %1051 = vst [vmem:[%s325 + $0x40] sm:$0xff] %v1037
          %1052 = vst [vmem:[%s325 + $0x48] sm:$0xff] %v1038
          %1053 = vst [vmem:[%s325 + $0x50] sm:$0xff] %v1039
          %1054 = vst [vmem:[%s325 + $0x58] sm:$0xff] %v1040
          %1055 = vst [vmem:[%s325 + $0x60] sm:$0xff] %v1041
          %1056 = vst [vmem:[%s325 + $0x68] sm:$0xff] %v1042
        $region63: #{_lambda_.12} parent=50 // pred_fallthru
          _
        %s1057 = smul.u32 14, %s19
        %p1058 = scmp.lt.s32.totalorder %s1057, 13
        %s1059 = scalar_select %p1058, %s1057, 13
        %p1060 = scmp.lt.s32.totalorder %s20, 0
        %s1061 = scalar_select %p1060, %s20, 0
        %s1062 = sadd.s32 %s1061, %s1059
        %s1063 = smul.addr %s1062, 8
        %s1064 = scalar_lea.vmem %s3, %s1063
        // Predicated region
        $region64: #{_lambda_.12} parent=50 // pred_check
          %p1065 = pneg %p135
        $region65: #{_lambda_.12} parent=50 // pred_check_branch
          %1067 = sbr.rel (%p1065) target = $region67
        $region66: #{_lambda_.12} parent=50 // pred_region
          %s1068 = smul.u32 14, %s19
        $region67: #{_lambda_.12} parent=50 // pred_fallthru
          _
        // Predicated region
        $region68: #{_lambda_.12} parent=50 // pred_check
          %p1069 = pneg %p135
        $region69: #{_lambda_.12} parent=50 // pred_check_branch
          %1071 = sbr.rel (%p1069) target = $region71
        $region70: #{_lambda_.12} parent=50 // pred_region
          %s1072 = smul.u32 14, %s19
          %p1073 = scmp.lt.s32.totalorder %s1072, 13
          %s1074 = scalar_select %p1073, %s1072, 13
          %p1075 = scmp.lt.s32.totalorder %s20, 0
          %s1076 = scalar_select %p1075, %s20, 0
          %s1077 = sadd.s32 %s1076, %s1074
          %s1078 = smul.addr %s1077, 8
          %s1079 = scalar_lea.vmem %s3, %s1078
        $region71: #{_lambda_.12} parent=50 // pred_fallthru
          _
      $region51: #{_lambda_.12} parent=5 // pred_fallthru
        _
      %p1080 = scmp.le.s32.totalorder 2, %s9
      // Predicated region
      $region72: #{_lambda_.12} parent=5 // pred_check
        %p1081 = pneg %p1080
      $region73: #{_lambda_.12} parent=5 // pred_check_branch
        %1083 = sbr.rel (%p1081) target = $region75
      $region74: #{_lambda_.12} parent=5 // pred_region
        %s1084 = ssub.s32 %s9, 2
      $region75: #{_lambda_.12} parent=5 // pred_fallthru
        _
    $region6: #{_lambda_.12} parent=1 // loop_footer
      %s13 = sadd.s32 1, %s9
    $region7: #{_lambda_.12} parent=1 // loop_footer_branch
      %8 = sbr.rel target = $region3
    $region8: #{_lambda_.12} parent=1 // loop_exit
      _

// kernel: _lambda_.17
$region0: #{_lambda_.17}
  #allocation0 [shape = 'u32[]', space=smem, size = 0x4, offset = 0x4, fixed_abs, tag = 'smem constant byte address 0x4 - core index']
  #allocation1 [shape = 'u32[144,128]{1,0:T(1,128)}', space=vmem, size = 0x12000, scoped, tag = 'internal scratch']
  #allocation2 [shape = 'f32[16,128]{1,0:T(8,128)}', space=vmem, size = 0x2000, scoped, tag = 'scratch operand']
  %s0 = inlined_call_operand.vmem [shape: bf16[16,6656], index: 0, kind: input, shape index: {}]
  %s1 = inlined_call_operand.vmem [shape: bf16[6656,128], index: 1, kind: input, shape index: {}]
  %s2 = inlined_call_operand.vmem [shape: f32[1,128], index: 2, kind: input, shape index: {}]
  %s3 = inlined_call_operand.vmem [shape: f32[16,128], index: 3, kind: output, shape index: {}]
  %s4 = sld [smem:[#allocation0]]
  $region76: #{_lambda_.17} parent=0
    _
  %s6 = ssub.s32 1, %s4
  %s7 = scalar_select 0, %s6, %s4
  $region1: #{_lambda_.17} parent=0
    #allocation3 [shape = 'u8[32768]{0}', space=vmem, size = 0x8000, scoped, tag = 'input window, operand 0']
    loop: start=0, step=1, limit=15
    $region2: #{_lambda_.17} parent=1 // loop_pre_header
      _
    $region3: #{_lambda_.17} parent=1 // loop_header
      %s9 = sphi 0, %s13
      %p10 = scmp.ge.s32.totalorder %s9, 15
      %s16 = sphi 0, %s35
      %s17 = sphi 0, %s31
      %s18 = sphi 0, %s27
      %s19 = sphi 0, %s16
      %s20 = sphi 0, %s17
      %s21 = sphi 0, %s18
      %s22 = sphi 0, %s19
      %s23 = sphi 0, %s20
      %s24 = sphi 0, %s21
      %s40 = sphi 0, %s42
      %s43 = sphi 0, %s40
      %s44 = sphi 0, %s43
      %s60 = sphi 0, %s44
      %s68 = sphi 0, %s70
      %s71 = sphi 0, %s68
      %s72 = sphi 0, %s71
      %s88 = sphi 0, %s72
      %s94 = sphi 0, %s96
      %s97 = sphi 0, %s94
      %s98 = sphi 0, %s97
      %s114 = sphi 0, %s98
      %s122 = sphi 0, %s124
      %s125 = sphi 0, %s122
      %s126 = sphi 0, %s125
      %s142 = sphi 0, %s126
    $region4: #{_lambda_.17} parent=1 // loop_header_branch
      %12 = sbr.rel (%p10) target = $region8
    $region5: #{_lambda_.17} parent=1 // loop_body
      %s14 = ssub.s32 %s9, 1
      %s15 = ssub.s32 %s9, 2
      %s25 = sadd.s32 1, %s18
      %p26 = scmp.ge.s32.totalorder %s25, 13
      %s27 = scalar_select %p26, 0, %s25
      %s28 = sadd.s32 1, %s17
      %s29 = scalar_select %p26, %s28, %s17
      %p30 = scmp.ge.s32.totalorder %s29, 1
      %s31 = scalar_select %p30, 0, %s29
      %s32 = sadd.s32 1, %s16
      %s33 = scalar_select %p30, %s32, %s16
      %p34 = scmp.ge.s32.totalorder %s33, 1
      %s35 = scalar_select %p34, 0, %s33
      %s36 = ssub.s32 %s16, %s35
      %s37 = ssub.s32 %s18, %s27
      %s38 = sor.u32 %s36, %s37
      %p39 = scmp.eq.s32.totalorder %s38, 0
      %s41 = sadd.s32 %s40, 1
      %s42 = scalar_select %p39, %s40, %s41
      %p45 = pneg %p39
      %p46 = scmp.eq.s32.totalorder %s9, 12
      %p47 = por %p45, %p46
      %p48 = scmp.ne.s32.totalorder %s40, %s43
      %p49 = scmp.eq.s32.totalorder %s9, 0
      %p50 = por %p48, %p49
      %p51 = scmp.ne.s32.totalorder %s40, %s43
      %p52 = scmp.eq.s32.totalorder %s14, 12
      %p53 = por %p51, %p52
      %p54 = scmp.ne.s32.totalorder %s43, %s44
      %p55 = scmp.eq.s32.totalorder %s14, 0
      %p56 = por %p54, %p55
      %p57 = scmp.ne.s32.totalorder %s43, %s44
      %p58 = scmp.eq.s32.totalorder %s15, 12
      %p59 = por %p57, %p58
      %p61 = scmp.ne.s32.totalorder %s44, %s60
      %p62 = scmp.eq.s32.totalorder %s15, 0
      %p63 = por %p61, %p62
      %s64 = ssub.s32 %s18, %s27
      %s65 = ssub.s32 %s17, %s31
      %s66 = sor.u32 %s64, %s65
      %p67 = scmp.eq.s32.totalorder %s66, 0
      %s69 = sadd.s32 %s68, 1
      %s70 = scalar_select %p67, %s68, %s69
      %p73 = pneg %p67
      %p74 = scmp.eq.s32.totalorder %s9, 12
      %p75 = por %p73, %p74
      %p76 = scmp.ne.s32.totalorder %s68, %s71
      %p77 = scmp.eq.s32.totalorder %s9, 0
      %p78 = por %p76, %p77
      %p79 = scmp.ne.s32.totalorder %s68, %s71
      %p80 = scmp.eq.s32.totalorder %s14, 12
      %p81 = por %p79, %p80
      %p82 = scmp.ne.s32.totalorder %s71, %s72
      %p83 = scmp.eq.s32.totalorder %s14, 0
      %p84 = por %p82, %p83
      %p85 = scmp.ne.s32.totalorder %s71, %s72
      %p86 = scmp.eq.s32.totalorder %s15, 12
      %p87 = por %p85, %p86
      %p89 = scmp.ne.s32.totalorder %s72, %s88
      %p90 = scmp.eq.s32.totalorder %s15, 0
      %p91 = por %p89, %p90
      %s92 = ssub.s32 %s17, %s31
      %p93 = scmp.eq.s32.totalorder %s92, 0
      %s95 = sadd.s32 %s94, 1
      %s96 = scalar_select %p93, %s94, %s95
      %p99 = pneg %p93
      %p100 = scmp.eq.s32.totalorder %s9, 12
      %p101 = por %p99, %p100
      %p102 = scmp.ne.s32.totalorder %s94, %s97
      %p103 = scmp.eq.s32.totalorder %s9, 0
      %p104 = por %p102, %p103
      %p105 = scmp.ne.s32.totalorder %s94, %s97
      %p106 = scmp.eq.s32.totalorder %s14, 12
      %p107 = por %p105, %p106
      %p108 = scmp.ne.s32.totalorder %s97, %s98
      %p109 = scmp.eq.s32.totalorder %s14, 0
      %p110 = por %p108, %p109
      %p111 = scmp.ne.s32.totalorder %s97, %s98
      %p112 = scmp.eq.s32.totalorder %s15, 12
      %p113 = por %p111, %p112
      %p115 = scmp.ne.s32.totalorder %s98, %s114
      %p116 = scmp.eq.s32.totalorder %s15, 0
      %p117 = por %p115, %p116
      %s118 = ssub.s32 %s16, %s35
      %s119 = ssub.s32 %s17, %s31
      %s120 = sor.u32 %s118, %s119
      %p121 = scmp.eq.s32.totalorder %s120, 0
      %s123 = sadd.s32 %s122, 1
      %s124 = scalar_select %p121, %s122, %s123
      %p127 = pneg %p121
      %p128 = scmp.eq.s32.totalorder %s9, 12
      %p129 = por %p127, %p128
      %p130 = scmp.ne.s32.totalorder %s122, %s125
      %p131 = scmp.eq.s32.totalorder %s9, 0
      %p132 = por %p130, %p131
      %p133 = scmp.ne.s32.totalorder %s122, %s125
      %p134 = scmp.eq.s32.totalorder %s14, 12
      %p135 = por %p133, %p134
      %p136 = scmp.ne.s32.totalorder %s125, %s126
      %p137 = scmp.eq.s32.totalorder %s14, 0
      %p138 = por %p136, %p137
      %p139 = scmp.ne.s32.totalorder %s125, %s126
      %p140 = scmp.eq.s32.totalorder %s15, 12
      %p141 = por %p139, %p140
      %p143 = scmp.ne.s32.totalorder %s126, %s142
      %p144 = scmp.eq.s32.totalorder %s15, 0
      %p145 = por %p143, %p144
      %p146 = scmp.le.s32.totalorder 1, %s9
      %p147 = scmp.lt.s32.totalorder %s9, 14
      %p148 = pnand %p146, %p147
      %p149 = pneg %p148
      // Predicated region
      $region9: #{_lambda_.17} parent=5 // pred_check
        _
      $region10: #{_lambda_.17} parent=5 // pred_check_branch
        %151 = sbr.rel (%p148) target = $region12
      $region11: #{_lambda_.17} parent=5 // pred_region
        %s152 = ssub.s32 %s9, 1
        // Predicated region
        $region13: #{_lambda_.17} parent=11 // pred_check
          %p153 = pneg %p110
        $region14: #{_lambda_.17} parent=11 // pred_check_branch
          %155 = sbr.rel (%p153) target = $region16
        $region15: #{_lambda_.17} parent=11 // pred_region
          %p156 = scmp.lt.s32.totalorder %s20, 0
          %s157 = scalar_select %p156, %s20, 0
          %s158 = scalar_lea.vmem %s2, %s157
        $region16: #{_lambda_.17} parent=11 // pred_fallthru
          _
      $region12: #{_lambda_.17} parent=5 // pred_fallthru
        _
      %p159 = scmp.lt.s32.totalorder %s9, 13
      // Predicated region
      $region17: #{_lambda_.17} parent=5 // pred_check
        %p160 = pneg %p159
      $region18: #{_lambda_.17} parent=5 // pred_check_branch
        %162 = sbr.rel (%p160) target = $region20
      $region19: #{_lambda_.17} parent=5 // pred_region
        // Predicated region
        $region21: #{_lambda_.17} parent=19 // pred_check
          %p163 = pneg %p50
        $region22: #{_lambda_.17} parent=19 // pred_check_branch
          %165 = sbr.rel (%p163) target = $region24
        $region23: #{_lambda_.17} parent=19 // pred_region
          %s166 = sand.u32 %s40, 1
          %s167 = sand.u32 %s40, 1
          %s168 = smul.addr %s167, 32
          %s169 = scalar_lea.vmem [#allocation3], %s168
          %s170 = smul.u32 2, %s16
          %s171 = smul.u32 4, %s18
          %s172 = smul.addr %s170, 52
          %s173 = sadd.s32 %s171, %s172
          %s174 = smul.addr %s173, 4
          %s175 = scalar_lea.vmem %s0, %s174
          // Predicated region
          $region25: #{_lambda_.17} parent=23 // pred_check
            _
          $region26: #{_lambda_.17} parent=23 // pred_check_branch
            %177 = sbr.rel (0) target = $region28
          $region27: #{_lambda_.17} parent=23 // pred_region
            // Predicated region
            $region29: #{_lambda_.17} parent=27 // pred_check
              _
            $region30: #{_lambda_.17} parent=27 // pred_check_branch
              %179 = sbr.rel (0) target = $region32
            $region31: #{_lambda_.17} parent=27 // pred_region
              loop: start=0, step=1, limit=1
              $region33: #{_lambda_.17} parent=31 // loop_pre_header
                _
              $region34: #{_lambda_.17} parent=31 // loop_header
                %s181 = sphi 0, %s185
                %p182 = scmp.ge.s32.totalorder %s181, 1
                %s186 = sphi %s175, %s175
                %s187 = sphi %s169, %s169
              $region35: #{_lambda_.17} parent=31 // loop_header_branch
                %184 = sbr.rel (%p182) target = $region39
              $region36: #{_lambda_.17} parent=31 // loop_body
                %v188 = vld [vmem:[%s186] sm:$0xff]
                %189 = vst [vmem:[%s187] sm:$0xff] %v188
                %v190 = vld [vmem:[%s186 + $0x8] sm:$0xff]
                %191 = vst [vmem:[%s187 + $0x8] sm:$0xff] %v190
                %v192 = vld [vmem:[%s186 + $0xd0] sm:$0xff]
                %193 = vst [vmem:[%s187 + $0x10] sm:$0xff] %v192
                %v194 = vld [vmem:[%s186 + $0xd8] sm:$0xff]
                %195 = vst [vmem:[%s187 + $0x18] sm:$0xff] %v194
              $region37: #{_lambda_.17} parent=31 // loop_footer
                %s185 = sadd.s32 1, %s181
              $region38: #{_lambda_.17} parent=31 // loop_footer_branch
                %180 = sbr.rel target = $region34
              $region39: #{_lambda_.17} parent=31 // loop_exit
                _
            $region32: #{_lambda_.17} parent=27 // pred_fallthru
              _
            // Predicated region
            $region40: #{_lambda_.17} parent=27 // pred_check
              _
            $region41: #{_lambda_.17} parent=27 // pred_check_branch
              %197 = sbr.rel target = $region43
            $region42: #{_lambda_.17} parent=27 // pred_region
              _
            $region43: #{_lambda_.17} parent=27 // pred_fallthru
              _
          $region28: #{_lambda_.17} parent=23 // pred_fallthru
            _
          %198 = vnop
        $region24: #{_lambda_.17} parent=19 // pred_fallthru
          _
        // Predicated region
        $region44: #{_lambda_.17} parent=19 // pred_check
          %p199 = pneg %p78
        $region45: #{_lambda_.17} parent=19 // pred_check_branch
          %201 = sbr.rel (%p199) target = $region47
        $region46: #{_lambda_.17} parent=19 // pred_region
          %s202 = smul.u32 64, %s18
          %p203 = scmp.lt.s32.totalorder %s202, 831
          %s204 = scalar_select %p203, %s202, 831
          %p205 = scmp.lt.s32.totalorder %s17, 0
          %s206 = scalar_select %p205, %s17, 0
          %s207 = sadd.s32 %s206, %s204
          %s208 = smul.addr %s207, 4
          %s209 = scalar_lea.vmem %s1, %s208
          %s210 = smul.u32 64, %s18
        $region47: #{_lambda_.17} parent=19 // pred_fallthru
          _
      $region20: #{_lambda_.17} parent=5 // pred_fallthru
        _
      %p211 = scmp.le.s32.totalorder 1, %s9
      %p212 = scmp.lt.s32.totalorder %s9, 14
      %p213 = pnand %p211, %p212
      %p214 = pneg %p213
      // Predicated region
      $region48: #{_lambda_.17} parent=5 // pred_check
        _
      $region49: #{_lambda_.17} parent=5 // pred_check_branch
        %216 = sbr.rel (%p213) target = $region51
      $region50: #{_lambda_.17} parent=5 // pred_region
        %s217 = ssub.s32 %s9, 1
        %s218 = sand.u32 %s43, 1
        %s219 = sand.u32 %s43, 1
        %s220 = smul.addr %s219, 32
        %s221 = scalar_lea.vmem [#allocation3], %s220
        // Predicated region
        $region52: #{_lambda_.17} parent=50 // pred_check
          %p222 = pneg %p56
        $region53: #{_lambda_.17} parent=50 // pred_check_branch
          %224 = sbr.rel (%p222) target = $region55
        $region54: #{_lambda_.17} parent=50 // pred_region
          _
        $region55: #{_lambda_.17} parent=50 // pred_fallthru
          _
        %s225 = sand.u32 %s43, 1
        %s226 = sand.u32 %s43, 1
        %s227 = smul.addr %s226, 32
        %s228 = scalar_lea.vmem [#allocation3], %s227
        %p229 = pneg %p56
        %p230 = pneg %p53
        %s231 = smul.u32 64, %s21
        %p232 = scmp.lt.s32.totalorder %s231, 831
        %s233 = scalar_select %p232, %s231, 831
        %p234 = scmp.lt.s32.totalorder %s20, 0
        %s235 = scalar_select %p234, %s20, 0
        %s236 = sadd.s32 %s235, %s233
        %s237 = smul.addr %s236, 4
        %s238 = scalar_lea.vmem %s1, %s237
        %p239 = pneg %p84
        %p240 = pneg %p81
        %p241 = scmp.lt.s32.totalorder %s20, 0
        %s242 = scalar_select %p241, %s20, 0
        %s243 = scalar_lea.vmem %s2, %s242
        %p244 = pneg %p110
        %p245 = pneg %p107
        %p246 = pneg %p138
        %p247 = pneg %p135
        %s248 = smul.u32 2, %s19
        %p249 = scmp.lt.s32.totalorder %s248, 1
        %s250 = scalar_select %p249, %s248, 1
        %p251 = scmp.lt.s32.totalorder %s20, 0
        %s252 = scalar_select %p251, %s20, 0
        %s253 = sadd.s32 %s252, %s250
        %s254 = smul.addr %s253, 8
        %s255 = scalar_lea.vmem %s3, %s254
        %s256 = smul.u32 2, %s19
        %s257 = smul.u32 4, %s21
        %s258 = smul.u32 64, %s21
        %p259 = scmp.lt.s32.totalorder %s258, 831
        %s260 = scalar_select %p259, %s258, 831
        %p261 = scmp.lt.s32.totalorder %s20, 0
        %s262 = scalar_select %p261, %s20, 0
        %s263 = sadd.s32 %s262, %s260
        %s264 = smul.addr %s263, 4
        %s265 = scalar_lea.vmem %s1, %s264
        %s266 = smul.u32 64, %s21
        %p267 = scmp.lt.s32.totalorder %s20, 0
        %s268 = scalar_select %p267, %s20, 0
        %s269 = scalar_lea.vmem %s2, %s268
        %s270 = smul.u32 2, %s19
        %p271 = scmp.lt.s32.totalorder %s270, 1
        %s272 = scalar_select %p271, %s270, 1
        %p273 = scmp.lt.s32.totalorder %s20, 0
        %s274 = scalar_select %p273, %s20, 0
        %s275 = sadd.s32 %s274, %s272
        %s276 = smul.addr %s275, 8
        %s277 = scalar_lea.vmem %s3, %s276
        %s278 = smul.u32 2, %s19
        %p280 = scmp.eq.s32.totalorder %s21, 0
        // Predicated region
        $region56: #{_lambda_.17} parent=50 // pred_check
          %p281 = pneg %p280
        $region57: #{_lambda_.17} parent=50 // pred_check_branch
          %283 = sbr.rel (%p281) target = $region59
        $region58: #{_lambda_.17} parent=50 // pred_region
          %284 = vst [vmem:[#allocation2] sm:$0xff] 0.0
          %285 = vst [vmem:[#allocation2 + $0x8] sm:$0xff] 0.0
        $region59: #{_lambda_.17} parent=50 // pred_fallthru
          _
        %v286 = vld [vmem:[#allocation2] sm:$0xff]
        %v287 = vld [vmem:[#allocation2 + $0x8] sm:$0xff]
        %v288 = vld [vmem:[%s221] sm:$0xff]
        %v289 = vld [vmem:[%s221 + $0x8] sm:$0xff]
        %v290 = vld [vmem:[%s221 + $0x10] sm:$0xff]
        %v291 = vld [vmem:[%s221 + $0x18] sm:$0xff]
        %v292 = vld [vmem:[%s265] sm:$0xf]
        %v293 = vld [vmem:[%s265 + $0x4] sm:$0xf]
        %v294 = vld [vmem:[%s265 + $0x8] sm:$0xf]
        %v295 = vld [vmem:[%s265 + $0xc] sm:$0xf]
        %v296 = vld [vmem:[%s265 + $0x10] sm:$0xf]
        %v297 = vld [vmem:[%s265 + $0x14] sm:$0xf]
        %v298 = vld [vmem:[%s265 + $0x18] sm:$0xf]
        %v299 = vld [vmem:[%s265 + $0x1c] sm:$0xf]
        %v300 = vld [vmem:[%s265 + $0x20] sm:$0xf]
        %v301 = vld [vmem:[%s265 + $0x24] sm:$0xf]
        %v302 = vld [vmem:[%s265 + $0x28] sm:$0xf]
        %v303 = vld [vmem:[%s265 + $0x2c] sm:$0xf]
        %v304 = vld [vmem:[%s265 + $0x30] sm:$0xf]
        %v305 = vld [vmem:[%s265 + $0x34] sm:$0xf]
        %v306 = vld [vmem:[%s265 + $0x38] sm:$0xf]
        %v307 = vld [vmem:[%s265 + $0x3c] sm:$0xf]
        %v308 = vld [vmem:[%s265 + $0x40] sm:$0xf]
        %v309 = vld [vmem:[%s265 + $0x44] sm:$0xf]
        %v310 = vld [vmem:[%s265 + $0x48] sm:$0xf]
        %v311 = vld [vmem:[%s265 + $0x4c] sm:$0xf]
        %v312 = vld [vmem:[%s265 + $0x50] sm:$0xf]
        %v313 = vld [vmem:[%s265 + $0x54] sm:$0xf]
        %v314 = vld [vmem:[%s265 + $0x58] sm:$0xf]
        %v315 = vld [vmem:[%s265 + $0x5c] sm:$0xf]
        %v316 = vld [vmem:[%s265 + $0x60] sm:$0xf]
        %v317 = vld [vmem:[%s265 + $0x64] sm:$0xf]
        %v318 = vld [vmem:[%s265 + $0x68] sm:$0xf]
        %v319 = vld [vmem:[%s265 + $0x6c] sm:$0xf]
        %v320 = vld [vmem:[%s265 + $0x70] sm:$0xf]
        %v321 = vld [vmem:[%s265 + $0x74] sm:$0xf]
        %v322 = vld [vmem:[%s265 + $0x78] sm:$0xf]
        %v323 = vld [vmem:[%s265 + $0x7c] sm:$0xf]
        %v324 = vld [vmem:[%s265 + $0x80] sm:$0xf]
        %v325 = vld [vmem:[%s265 + $0x84] sm:$0xf]
        %v326 = vld [vmem:[%s265 + $0x88] sm:$0xf]
        %v327 = vld [vmem:[%s265 + $0x8c] sm:$0xf]
        %v328 = vld [vmem:[%s265 + $0x90] sm:$0xf]
        %v329 = vld [vmem:[%s265 + $0x94] sm:$0xf]
        %v330 = vld [vmem:[%s265 + $0x98] sm:$0xf]
        %v331 = vld [vmem:[%s265 + $0x9c] sm:$0xf]
        %v332 = vld [vmem:[%s265 + $0xa0] sm:$0xf]
        %v333 = vld [vmem:[%s265 + $0xa4] sm:$0xf]
        %v334 = vld [vmem:[%s265 + $0xa8] sm:$0xf]
        %v335 = vld [vmem:[%s265 + $0xac] sm:$0xf]
        %v336 = vld [vmem:[%s265 + $0xb0] sm:$0xf]
        %v337 = vld [vmem:[%s265 + $0xb4] sm:$0xf]
        %v338 = vld [vmem:[%s265 + $0xb8] sm:$0xf]
        %v339 = vld [vmem:[%s265 + $0xbc] sm:$0xf]
        %v340 = vld [vmem:[%s265 + $0xc0] sm:$0xf]
        %v341 = vld [vmem:[%s265 + $0xc4] sm:$0xf]
        %v342 = vld [vmem:[%s265 + $0xc8] sm:$0xf]
        %v343 = vld [vmem:[%s265 + $0xcc] sm:$0xf]
        %v344 = vld [vmem:[%s265 + $0xd0] sm:$0xf]
        %v345 = vld [vmem:[%s265 + $0xd4] sm:$0xf]
        %v346 = vld [vmem:[%s265 + $0xd8] sm:$0xf]
        %v347 = vld [vmem:[%s265 + $0xdc] sm:$0xf]
        %v348 = vld [vmem:[%s265 + $0xe0] sm:$0xf]
        %v349 = vld [vmem:[%s265 + $0xe4] sm:$0xf]
        %v350 = vld [vmem:[%s265 + $0xe8] sm:$0xf]
        %v351 = vld [vmem:[%s265 + $0xec] sm:$0xf]
        %v352 = vld [vmem:[%s265 + $0xf0] sm:$0xf]
        %v353 = vld [vmem:[%s265 + $0xf4] sm:$0xf]
        %v354 = vld [vmem:[%s265 + $0xf8] sm:$0xf]
        %v355 = vld [vmem:[%s265 + $0xfc] sm:$0xf]
        %v360 = vunpack.c.l.b16 %v288
        %v361 = vunpack.c.h.b16 %v288
        %v362 = vunpack.c.l.b16 %v289
        %v363 = vunpack.c.h.b16 %v289
        %v364 = vunpack.c.l.b16 %v290
        %v365 = vunpack.c.h.b16 %v290
        %v366 = vunpack.c.l.b16 %v291
        %v367 = vunpack.c.h.b16 %v291
        %v368 = vpack.c.b16 %v364, %v360
        %v369 = vpack.c.b16 %v365, %v361
        %v370 = vpack.c.b16 %v366, %v362
        %v371 = vpack.c.b16 %v367, %v363
        %v440 = vunpack.c.l.b16 %v292
        %v441 = vunpack.c.l.b16 %v293
        %v442 = vunpack.c.l.b16 %v294
        %v443 = vunpack.c.l.b16 %v295
        %v444 = vunpack.c.l.b16 %v296
        %v445 = vunpack.c.l.b16 %v297
        %v446 = vunpack.c.l.b16 %v298
        %v447 = vunpack.c.l.b16 %v299
        %v448 = vunpack.c.l.b16 %v300
        %v449 = vunpack.c.l.b16 %v301
        %v450 = vunpack.c.l.b16 %v302
        %v451 = vunpack.c.l.b16 %v303
        %v452 = vunpack.c.l.b16 %v304
        %v453 = vunpack.c.l.b16 %v305
        %v454 = vunpack.c.l.b16 %v306
        %v455 = vunpack.c.l.b16 %v307
        %v456 = vunpack.c.l.b16 %v308
        %v457 = vunpack.c.l.b16 %v309
        %v458 = vunpack.c.l.b16 %v310
        %v459 = vunpack.c.l.b16 %v311
        %v460 = vunpack.c.l.b16 %v312
        %v461 = vunpack.c.l.b16 %v313
        %v462 = vunpack.c.l.b16 %v314
        %v463 = vunpack.c.l.b16 %v315
        %v464 = vunpack.c.l.b16 %v316
        %v465 = vunpack.c.l.b16 %v317
        %v466 = vunpack.c.l.b16 %v318
        %v467 = vunpack.c.l.b16 %v319
        %v468 = vunpack.c.l.b16 %v320
        %v469 = vunpack.c.l.b16 %v321
        %v470 = vunpack.c.l.b16 %v322
        %v471 = vunpack.c.l.b16 %v323
        %v472 = vunpack.c.l.b16 %v324
        %v473 = vunpack.c.l.b16 %v325
        %v474 = vunpack.c.l.b16 %v326
        %v475 = vunpack.c.l.b16 %v327
        %v476 = vunpack.c.l.b16 %v328
        %v477 = vunpack.c.l.b16 %v329
        %v478 = vunpack.c.l.b16 %v330
        %v479 = vunpack.c.l.b16 %v331
        %v480 = vunpack.c.l.b16 %v332
        %v481 = vunpack.c.l.b16 %v333
        %v482 = vunpack.c.l.b16 %v334
        %v483 = vunpack.c.l.b16 %v335
        %v484 = vunpack.c.l.b16 %v336
        %v485 = vunpack.c.l.b16 %v337
        %v486 = vunpack.c.l.b16 %v338
        %v487 = vunpack.c.l.b16 %v339
        %v488 = vunpack.c.l.b16 %v340
        %v489 = vunpack.c.l.b16 %v341
        %v490 = vunpack.c.l.b16 %v342
        %v491 = vunpack.c.l.b16 %v343
        %v492 = vunpack.c.l.b16 %v344
        %v493 = vunpack.c.l.b16 %v345
        %v494 = vunpack.c.l.b16 %v346
        %v495 = vunpack.c.l.b16 %v347
        %v496 = vunpack.c.l.b16 %v348
        %v497 = vunpack.c.l.b16 %v349
        %v498 = vunpack.c.l.b16 %v350
        %v499 = vunpack.c.l.b16 %v351
        %v500 = vunpack.c.l.b16 %v352
        %v501 = vunpack.c.l.b16 %v353
        %v502 = vunpack.c.l.b16 %v354
        %v503 = vunpack.c.l.b16 %v355
        %v504 = vpack.c.b16 %v441, %v440
        %v505 = vpack.c.b16 %v443, %v442
        %v506 = vpack.c.b16 %v445, %v444
        %v507 = vpack.c.b16 %v447, %v446
        %v508 = vpack.c.b16 %v449, %v448
        %v509 = vpack.c.b16 %v451, %v450
        %v510 = vpack.c.b16 %v453, %v452
        %v511 = vpack.c.b16 %v455, %v454
        %v512 = vpack.c.b16 %v457, %v456
        %v513 = vpack.c.b16 %v459, %v458
        %v514 = vpack.c.b16 %v461, %v460
        %v515 = vpack.c.b16 %v463, %v462
        %v516 = vpack.c.b16 %v465, %v464
        %v517 = vpack.c.b16 %v467, %v466
        %v518 = vpack.c.b16 %v469, %v468
        %v519 = vpack.c.b16 %v471, %v470
        %v520 = vpack.c.b16 %v473, %v472
        %v521 = vpack.c.b16 %v475, %v474
        %v522 = vpack.c.b16 %v477, %v476
        %v523 = vpack.c.b16 %v479, %v478
        %v524 = vpack.c.b16 %v481, %v480
        %v525 = vpack.c.b16 %v483, %v482
        %v526 = vpack.c.b16 %v485, %v484
        %v527 = vpack.c.b16 %v487, %v486
        %v528 = vpack.c.b16 %v489, %v488
        %v529 = vpack.c.b16 %v491, %v490
        %v530 = vpack.c.b16 %v493, %v492
        %v531 = vpack.c.b16 %v495, %v494
        %v532 = vpack.c.b16 %v497, %v496
        %v533 = vpack.c.b16 %v499, %v498
        %v534 = vpack.c.b16 %v501, %v500
        %v535 = vpack.c.b16 %v503, %v502
        %568 = vmatprep.subr.bf16.mxu0 0
        %569 = vmatpush1.bf16.msra.mxu0 %v511
        %570 = vmatprep.subr.bf16.mxu0 0
        %571 = vmatpush1.bf16.msra.mxu0 %v510
        %572 = vmatprep.subr.bf16.mxu0 0
        %573 = vmatpush1.bf16.msra.mxu0 %v509
        %574 = vmatprep.subr.bf16.mxu0 0
        %575 = vmatpush1.bf16.msra.mxu0 %v508
        %576 = vmatprep.subr.bf16.mxu0 0
        %577 = vmatpush1.bf16.msra.mxu0 %v507
        %578 = vmatprep.subr.bf16.mxu0 0
        %579 = vmatpush1.bf16.msra.mxu0 %v506
        %580 = vmatprep.subr.bf16.mxu0 0
        %581 = vmatpush1.bf16.msra.mxu0 %v505
        %582 = vmatprep.subr.bf16.mxu0 0
        %583 = vmatpush1.bf16.msra.mxu0 %v504
        %584 = vmatprep.subr.bf16.mxu0 0
        %585 = vmatpush2.bf16.msra.mxu0 %v519
        %586 = vmatprep.subr.bf16.mxu0 0
        %587 = vmatpush2.bf16.msra.mxu0 %v518
        %588 = vmatprep.subr.bf16.mxu0 0
        %589 = vmatpush2.bf16.msra.mxu0 %v517
        %590 = vmatprep.subr.bf16.mxu0 0
        %591 = vmatpush2.bf16.msra.mxu0 %v516
        %592 = vmatprep.subr.bf16.mxu0 0
        %593 = vmatpush2.bf16.msra.mxu0 %v515
        %594 = vmatprep.subr.bf16.mxu0 0
        %595 = vmatpush2.bf16.msra.mxu0 %v514
        %596 = vmatprep.subr.bf16.mxu0 0
        %597 = vmatpush2.bf16.msra.mxu0 %v513
        %598 = vmatprep.subr.bf16.mxu0 0
        %599 = vmatpush2.bf16.msra.mxu0 %v512
        %600 = vmatprep.mubr.bf16.mxu0 %v369
        %601 = vmatmul.mubr.bf16.gmra.mxu0 %v368
        %v602 = vpop.f32.mrf.mxu0
        %v603 = vadd.f32 0.0, %v602
        %v604 = vpop.f32.mrf.mxu0
        %v605 = vpop.f32.mrf.mxu0
        %v606 = vadd.f32 0.0, %v605
        %v607 = vpop.f32.mrf.mxu0
        %608 = vdwg.mxu0
        %609 = vmatprep.subr.bf16.mxu0 0
        %610 = vmatpush1.bf16.msra.mxu0 %v527
        %611 = vmatprep.subr.bf16.mxu0 0
        %612 = vmatpush1.bf16.msra.mxu0 %v526
        %613 = vmatprep.subr.bf16.mxu0 0
        %614 = vmatpush1.bf16.msra.mxu0 %v525
        %615 = vmatprep.subr.bf16.mxu0 0
        %616 = vmatpush1.bf16.msra.mxu0 %v524
        %617 = vmatprep.subr.bf16.mxu0 0
        %618 = vmatpush1.bf16.msra.mxu0 %v523
        %619 = vmatprep.subr.bf16.mxu0 0
        %620 = vmatpush1.bf16.msra.mxu0 %v522
        %621 = vmatprep.subr.bf16.mxu0 0
        %622 = vmatpush1.bf16.msra.mxu0 %v521
        %623 = vmatprep.subr.bf16.mxu0 0
        %624 = vmatpush1.bf16.msra.mxu0 %v520
        %625 = vmatprep.subr.bf16.mxu0 0
        %626 = vmatpush2.bf16.msra.mxu0 %v535
        %627 = vmatprep.subr.bf16.mxu0 0
        %628 = vmatpush2.bf16.msra.mxu0 %v534
        %629 = vmatprep.subr.bf16.mxu0 0
        %630 = vmatpush2.bf16.msra.mxu0 %v533
        %631 = vmatprep.subr.bf16.mxu0 0
        %632 = vmatpush2.bf16.msra.mxu0 %v532
        %633 = vmatprep.subr.bf16.mxu0 0
        %634 = vmatpush2.bf16.msra.mxu0 %v531
        %635 = vmatprep.subr.bf16.mxu0 0
        %636 = vmatpush2.bf16.msra.mxu0 %v530
        %637 = vmatprep.subr.bf16.mxu0 0
        %638 = vmatpush2.bf16.msra.mxu0 %v529
        %639 = vmatprep.subr.bf16.mxu0 0
        %640 = vmatpush2.bf16.msra.mxu0 %v528
        %641 = vmatprep.mubr.bf16.mxu0 %v371
        %642 = vmatmul.mubr.bf16.gmra.mxu0 %v370
        %v643 = vpop.f32.mrf.mxu0
        %v644 = vadd.f32 %v603, %v643
        %v645 = vpop.f32.mrf.mxu0
        %v646 = vpop.f32.mrf.mxu0
        %v647 = vadd.f32 %v606, %v646
        %v648 = vpop.f32.mrf.mxu0
        %649 = vdwg.mxu0
        %v650 = vadd.f32 %v286, %v644
        %v651 = vadd.f32 %v287, %v647
        %652 = vst [vmem:[#allocation2] sm:$0xff] %v650
        %653 = vst [vmem:[#allocation2 + $0x8] sm:$0xff] %v651
        %p654 = scmp.eq.s32.totalorder %s21, 12
        // Predicated region
        $region60: #{_lambda_.17} parent=50 // pred_check
          %p655 = pneg %p654
        $region61: #{_lambda_.17} parent=50 // pred_check_branch
          %657 = sbr.rel (%p655) target = $region63
        $region62: #{_lambda_.17} parent=50 // pred_region
          %v658 = vld [vmem:[#allocation2] sm:$0xff]
          %v659 = vld [vmem:[#allocation2 + $0x8] sm:$0xff]
          %v660 = vld [vmem:[%s269] sm:$0x1]
          %v662 = vlaneseq
          %v663 = vshrl.u32 %v662, 7
          %v664 = vsub.s32 0, %v663
          %v665 = vrot.slane %v660, %v664
          %v667 = vadd.f32 %v658, %v665
          %v668 = vadd.f32 %v659, %v665
          %669 = vst [vmem:[%s277] sm:$0xff] %v667
          %670 = vst [vmem:[%s277 + $0x8] sm:$0xff] %v668
        $region63: #{_lambda_.17} parent=50 // pred_fallthru
          _
        %s671 = smul.u32 2, %s19
        %p672 = scmp.lt.s32.totalorder %s671, 1
        %s673 = scalar_select %p672, %s671, 1
        %p674 = scmp.lt.s32.totalorder %s20, 0
        %s675 = scalar_select %p674, %s20, 0
        %s676 = sadd.s32 %s675, %s673
        %s677 = smul.addr %s676, 8
        %s678 = scalar_lea.vmem %s3, %s677
        // Predicated region
        $region64: #{_lambda_.17} parent=50 // pred_check
          %p679 = pneg %p135
        $region65: #{_lambda_.17} parent=50 // pred_check_branch
          %681 = sbr.rel (%p679) target = $region67
        $region66: #{_lambda_.17} parent=50 // pred_region
          %s682 = smul.u32 2, %s19
        $region67: #{_lambda_.17} parent=50 // pred_fallthru
          _
        // Predicated region
        $region68: #{_lambda_.17} parent=50 // pred_check
          %p683 = pneg %p135
        $region69: #{_lambda_.17} parent=50 // pred_check_branch
          %685 = sbr.rel (%p683) target = $region71
        $region70: #{_lambda_.17} parent=50 // pred_region
          %s686 = smul.u32 2, %s19
          %p687 = scmp.lt.s32.totalorder %s686, 1
          %s688 = scalar_select %p687, %s686, 1
          %p689 = scmp.lt.s32.totalorder %s20, 0
          %s690 = scalar_select %p689, %s20, 0
          %s691 = sadd.s32 %s690, %s688
          %s692 = smul.addr %s691, 8
          %s693 = scalar_lea.vmem %s3, %s692
        $region71: #{_lambda_.17} parent=50 // pred_fallthru
          _
      $region51: #{_lambda_.17} parent=5 // pred_fallthru
        _
      %p694 = scmp.le.s32.totalorder 2, %s9
      // Predicated region
      $region72: #{_lambda_.17} parent=5 // pred_check
        %p695 = pneg %p694
      $region73: #{_lambda_.17} parent=5 // pred_check_branch
        %697 = sbr.rel (%p695) target = $region75
      $region74: #{_lambda_.17} parent=5 // pred_region
        %s698 = ssub.s32 %s9, 2
      $region75: #{_lambda_.17} parent=5 // pred_fallthru
        _
    $region6: #{_lambda_.17} parent=1 // loop_footer
      %s13 = sadd.s32 1, %s9
    $region7: #{_lambda_.17} parent=1 // loop_footer_branch
      %8 = sbr.rel target = $region3
    $region8: #{_lambda_.17} parent=1 // loop_exit
      _

// kernel: _lambda_.13
$region0: #{_lambda_.13}
  #allocation0 [shape = 'u32[]', space=smem, size = 0x4, offset = 0x4, fixed_abs, tag = 'smem constant byte address 0x4 - core index']
  #allocation1 [shape = 'u32[144,128]{1,0:T(1,128)}', space=vmem, size = 0x12000, scoped, tag = 'internal scratch']
  #allocation2 [shape = 'f32[96,128]{1,0:T(8,128)}', space=vmem, size = 0xc000, scoped, tag = 'scratch operand']
  %s0 = inlined_call_operand.vmem [shape: f32[2,128,128], index: 0, kind: input, shape index: {}]
  %s1 = inlined_call_operand.vmem [shape: bf16[9,128,128], index: 1, kind: input, shape index: {}]
  %s2 = inlined_call_operand.vmem [shape: f32[1,128], index: 2, kind: input, shape index: {}]
  %s3 = inlined_call_operand.vmem [shape: f32[96,1], index: 3, kind: input, shape index: {}]
  %s4 = inlined_call_operand.vmem [shape: f32[2,128,128], index: 4, kind: output, shape index: {}]
  %s5 = sld [smem:[#allocation0]]
  $region49: #{_lambda_.13} parent=0
    _
  %s7 = ssub.s32 1, %s5
  %s8 = scalar_select 0, %s7, %s5
  loop: start=0, step=1, limit=4
  $region2: #{_lambda_.13} parent=0 // loop_pre_header
    _
  $region3: #{_lambda_.13} parent=0 // loop_header
    %s10 = sphi 0, %s14
    %p11 = scmp.ge.s32.totalorder %s10, 4
    %s20 = sphi 0, %s22
    %s23 = sphi 0, %s20
    %s24 = sphi 0, %s23
    %s40 = sphi 0, %s24
    %s44 = sphi 0, %s44
    %s46 = sphi 0, %s44
    %s47 = sphi 0, %s46
    %s61 = sphi 0, %s47
    %s65 = sphi 0, %s65
    %s67 = sphi 0, %s65
    %s68 = sphi 0, %s67
    %s82 = sphi 0, %s68
    %s86 = sphi 0, %s86
    %s88 = sphi 0, %s86
    %s89 = sphi 0, %s88
    %s103 = sphi 0, %s89
    %s109 = sphi 0, %s111
    %s112 = sphi 0, %s109
    %s113 = sphi 0, %s112
    %s129 = sphi 0, %s113
  $region4: #{_lambda_.13} parent=0 // loop_header_branch
    %13 = sbr.rel (%p11) target = $region8
  $region5: #{_lambda_.13} parent=0 // loop_body
    %s15 = ssub.s32 %s10, 1
    %s16 = ssub.s32 %s10, 2
    %s17 = sadd.s32 %s10, 1
    %s18 = ssub.s32 %s10, %s17
    %p19 = scmp.eq.s32.totalorder %s18, 0
    %s21 = sadd.s32 %s20, 1
    %s22 = scalar_select %p19, %s20, %s21
    %p25 = pneg %p19
    %p26 = scmp.eq.s32.totalorder %s10, 1
    %p27 = por %p25, %p26
    %p28 = scmp.ne.s32.totalorder %s20, %s23
    %p29 = scmp.eq.s32.totalorder %s10, 0
    %p30 = por %p28, %p29
    %p31 = scmp.ne.s32.totalorder %s20, %s23
    %p32 = scmp.eq.s32.totalorder %s15, 1
    %p33 = por %p31, %p32
    %p34 = scmp.ne.s32.totalorder %s23, %s24
    %p35 = scmp.eq.s32.totalorder %s15, 0
    %p36 = por %p34, %p35
    %p37 = scmp.ne.s32.totalorder %s23, %s24
    %p38 = scmp.eq.s32.totalorder %s16, 1
    %p39 = por %p37, %p38
    %p41 = scmp.ne.s32.totalorder %s24, %s40
    %p42 = scmp.eq.s32.totalorder %s16, 0
    %p43 = por %p41, %p42
    %s45 = sadd.s32 %s44, 1
    %p48 = scmp.eq.s32.totalorder %s10, 1
    %p49 = scmp.ne.s32.totalorder %s44, %s46
    %p50 = scmp.eq.s32.totalorder %s10, 0
    %p51 = por %p49, %p50
    %p52 = scmp.ne.s32.totalorder %s44, %s46
    %p53 = scmp.eq.s32.totalorder %s15, 1
    %p54 = por %p52, %p53
    %p55 = scmp.ne.s32.totalorder %s46, %s47
    %p56 = scmp.eq.s32.totalorder %s15, 0
    %p57 = por %p55, %p56
    %p58 = scmp.ne.s32.totalorder %s46, %s47
    %p59 = scmp.eq.s32.totalorder %s16, 1
    %p60 = por %p58, %p59
    %p62 = scmp.ne.s32.totalorder %s47, %s61
    %p63 = scmp.eq.s32.totalorder %s16, 0
    %p64 = por %p62, %p63
    %s66 = sadd.s32 %s65, 1
    %p69 = scmp.eq.s32.totalorder %s10, 1
    %p70 = scmp.ne.s32.totalorder %s65, %s67
    %p71 = scmp.eq.s32.totalorder %s10, 0
    %p72 = por %p70, %p71
    %p73 = scmp.ne.s32.totalorder %s65, %s67
    %p74 = scmp.eq.s32.totalorder %s15, 1
    %p75 = por %p73, %p74
    %p76 = scmp.ne.s32.totalorder %s67, %s68
    %p77 = scmp.eq.s32.totalorder %s15, 0
    %p78 = por %p76, %p77
    %p79 = scmp.ne.s32.totalorder %s67, %s68
    %p80 = scmp.eq.s32.totalorder %s16, 1
    %p81 = por %p79, %p80
    %p83 = scmp.ne.s32.totalorder %s68, %s82
    %p84 = scmp.eq.s32.totalorder %s16, 0
    %p85 = por %p83, %p84
    %s87 = sadd.s32 %s86, 1
    %p90 = scmp.eq.s32.totalorder %s10, 1
    %p91 = scmp.ne.s32.totalorder %s86, %s88
    %p92 = scmp.eq.s32.totalorder %s10, 0
    %p93 = por %p91, %p92
    %p94 = scmp.ne.s32.totalorder %s86, %s88
    %p95 = scmp.eq.s32.totalorder %s15, 1
    %p96 = por %p94, %p95
    %p97 = scmp.ne.s32.totalorder %s88, %s89
    %p98 = scmp.eq.s32.totalorder %s15, 0
    %p99 = por %p97, %p98
    %p100 = scmp.ne.s32.totalorder %s88, %s89
    %p101 = scmp.eq.s32.totalorder %s16, 1
    %p102 = por %p100, %p101
    %p104 = scmp.ne.s32.totalorder %s89, %s103
    %p105 = scmp.eq.s32.totalorder %s16, 0
    %p106 = por %p104, %p105
    %s107 = ssub.s32 %s10, %s17
    %p108 = scmp.eq.s32.totalorder %s107, 0
    %s110 = sadd.s32 %s109, 1
    %s111 = scalar_select %p108, %s109, %s110
    %p114 = pneg %p108
    %p115 = scmp.eq.s32.totalorder %s10, 1
    %p116 = por %p114, %p115
    %p117 = scmp.ne.s32.totalorder %s109, %s112
    %p118 = scmp.eq.s32.totalorder %s10, 0
    %p119 = por %p117, %p118
    %p120 = scmp.ne.s32.totalorder %s109, %s112
    %p121 = scmp.eq.s32.totalorder %s15, 1
    %p122 = por %p120, %p121
    %p123 = scmp.ne.s32.totalorder %s112, %s113
    %p124 = scmp.eq.s32.totalorder %s15, 0
    %p125 = por %p123, %p124
    %p126 = scmp.ne.s32.totalorder %s112, %s113
    %p127 = scmp.eq.s32.totalorder %s16, 1
    %p128 = por %p126, %p127
    %p130 = scmp.ne.s32.totalorder %s113, %s129
    %p131 = scmp.eq.s32.totalorder %s16, 0
    %p132 = por %p130, %p131
    %p133 = scmp.le.s32.totalorder 1, %s10
    %p134 = scmp.lt.s32.totalorder %s10, 3
    %p135 = pnand %p133, %p134
    %p136 = pneg %p135
    // Predicated region
    $region9: #{_lambda_.13} parent=5 // pred_check
      _
    $region10: #{_lambda_.13} parent=5 // pred_check_branch
      %138 = sbr.rel (%p135) target = $region12
    $region11: #{_lambda_.13} parent=5 // pred_region
      %s139 = ssub.s32 %s10, 1
      // Predicated region
      $region13: #{_lambda_.13} parent=11 // pred_check
        %p140 = pneg %p57
      $region14: #{_lambda_.13} parent=11 // pred_check_branch
        %142 = sbr.rel (%p140) target = $region16
      $region15: #{_lambda_.13} parent=11 // pred_region
        _
      $region16: #{_lambda_.13} parent=11 // pred_fallthru
        _
      // Predicated region
      $region17: #{_lambda_.13} parent=11 // pred_check
        %p143 = pneg %p78
      $region18: #{_lambda_.13} parent=11 // pred_check_branch
        %145 = sbr.rel (%p143) target = $region20
      $region19: #{_lambda_.13} parent=11 // pred_region
        _
      $region20: #{_lambda_.13} parent=11 // pred_fallthru
        _
      // Predicated region
      $region21: #{_lambda_.13} parent=11 // pred_check
        %p146 = pneg %p99
      $region22: #{_lambda_.13} parent=11 // pred_check_branch
        %148 = sbr.rel (%p146) target = $region24
      $region23: #{_lambda_.13} parent=11 // pred_region
        _
      $region24: #{_lambda_.13} parent=11 // pred_fallthru
        _
    $region12: #{_lambda_.13} parent=5 // pred_fallthru
      _
    %p149 = scmp.lt.s32.totalorder %s10, 2
    // Predicated region
    $region25: #{_lambda_.13} parent=5 // pred_check
      %p150 = pneg %p149
    $region26: #{_lambda_.13} parent=5 // pred_check_branch
      %152 = sbr.rel (%p150) target = $region28
    $region27: #{_lambda_.13} parent=5 // pred_region
      // Predicated region
      $region29: #{_lambda_.13} parent=27 // pred_check
        %p153 = pneg %p30
      $region30: #{_lambda_.13} parent=27 // pred_check_branch
        %155 = sbr.rel (%p153) target = $region32
      $region31: #{_lambda_.13} parent=27 // pred_region
        %p156 = scmp.lt.s32.totalorder %s10, 1
        %s157 = scalar_select %p156, %s10, 1
        %s158 = smul.addr %s157, 16
        %s159 = smul.addr %s158, 8
        %s160 = scalar_lea.vmem %s0, %s159
      $region32: #{_lambda_.13} parent=27 // pred_fallthru
        _
    $region28: #{_lambda_.13} parent=5 // pred_fallthru
      _
    %p161 = scmp.le.s32.totalorder 1, %s10
    %p162 = scmp.lt.s32.totalorder %s10, 3
    %p163 = pnand %p161, %p162
    %p164 = pneg %p163
    // Predicated region
    $region33: #{_lambda_.13} parent=5 // pred_check
      _
    $region34: #{_lambda_.13} parent=5 // pred_check_branch
      %166 = sbr.rel (%p163) target = $region36
    $region35: #{_lambda_.13} parent=5 // pred_region
      %s167 = ssub.s32 %s10, 1
      %p168 = scmp.lt.s32.totalorder %s15, 1
      %s169 = scalar_select %p168, %s15, 1
      %s170 = smul.addr %s169, 16
      %s171 = smul.addr %s170, 8
      %s172 = scalar_lea.vmem %s0, %s171
      %p173 = pneg %p36
      %p174 = pneg %p33
      %p175 = pneg %p57
      %p176 = pneg %p54
      %p177 = pneg %p78
      %p178 = pneg %p75
      %p179 = pneg %p99
      %p180 = pneg %p96
      %p181 = pneg %p125
      %p182 = pneg %p122
      %p183 = scmp.lt.s32.totalorder %s15, 1
      %s184 = scalar_select %p183, %s15, 1
      %s185 = smul.addr %s184, 16
      %s186 = smul.addr %s185, 8
      %s187 = scalar_lea.vmem %s4, %s186
      %p188 = scmp.lt.s32.totalorder %s15, 1
      %s189 = scalar_select %p188, %s15, 1
      %s190 = smul.addr %s189, 16
      %s191 = smul.addr %s190, 8
      %s192 = scalar_lea.vmem %s0, %s191
      %p193 = scmp.lt.s32.totalorder %s15, 1
      %s194 = scalar_select %p193, %s15, 1
      %s195 = smul.addr %s194, 16
      %s196 = smul.addr %s195, 8
      %s197 = scalar_lea.vmem %s4, %s196
      %v199 = vld [vmem:[%s192 + $0x6] sm:$0xff]
      %v200 = vld [vmem:[%s192 + $0xe] sm:$0xff]
      %v201 = vld [vmem:[%s192 + $0x16] sm:$0xff]
      %v202 = vld [vmem:[%s192 + $0x1e] sm:$0xff]
      %v203 = vld [vmem:[%s192 + $0x26] sm:$0xff]
      %v204 = vld [vmem:[%s192 + $0x2e] sm:$0xff]
      %v205 = vld [vmem:[%s192 + $0x36] sm:$0xff]
      %v206 = vld [vmem:[%s192 + $0x3e] sm:$0xff]
      %v207 = vld [vmem:[%s192 + $0x46] sm:$0xff]
      %v208 = vld [vmem:[%s192 + $0x4e] sm:$0xff]
      %v209 = vld [vmem:[%s192 + $0x56] sm:$0xff]
      %v210 = vld [vmem:[%s192 + $0x5e] sm:$0xff]
      %v211 = vpack.c.bf16 %v200, %v199
      %v212 = vpack.c.bf16 %v202, %v201
      %v213 = vpack.c.bf16 %v204, %v203
      %v214 = vpack.c.bf16 %v206, %v205
      %v215 = vpack.c.bf16 %v208, %v207
      %v216 = vpack.c.bf16 %v210, %v209
      %v217 = vld [vmem:[%s1] sm:$0xf]
      %v218 = vld [vmem:[%s1 + $0x4] sm:$0xf]
      %v219 = vld [vmem:[%s1 + $0x8] sm:$0xf]
      %v220 = vld [vmem:[%s1 + $0xc] sm:$0xf]
      %v221 = vld [vmem:[%s1 + $0x10] sm:$0xf]
      %v222 = vld [vmem:[%s1 + $0x14] sm:$0xf]
      %v223 = vld [vmem:[%s1 + $0x18] sm:$0xf]
      %v224 = vld [vmem:[%s1 + $0x1c] sm:$0xf]
      %v225 = vld [vmem:[%s1 + $0x20] sm:$0xf]
      %v226 = vld [vmem:[%s1 + $0x24] sm:$0xf]
      %v227 = vld [vmem:[%s1 + $0x28] sm:$0xf]
      %v228 = vld [vmem:[%s1 + $0x2c] sm:$0xf]
      %v229 = vld [vmem:[%s1 + $0x30] sm:$0xf]
      %v230 = vld [vmem:[%s1 + $0x34] sm:$0xf]
      %v231 = vld [vmem:[%s1 + $0x38] sm:$0xf]
      %v232 = vld [vmem:[%s1 + $0x3c] sm:$0xf]
      %v249 = vunpack.c.l.b16 %v217
      %v250 = vunpack.c.l.b16 %v218
      %v251 = vunpack.c.l.b16 %v219
      %v252 = vunpack.c.l.b16 %v220
      %v253 = vunpack.c.l.b16 %v221
      %v254 = vunpack.c.l.b16 %v222
      %v255 = vunpack.c.l.b16 %v223
      %v256 = vunpack.c.l.b16 %v224
      %v257 = vunpack.c.l.b16 %v225
      %v258 = vunpack.c.l.b16 %v226
      %v259 = vunpack.c.l.b16 %v227
      %v260 = vunpack.c.l.b16 %v228
      %v261 = vunpack.c.l.b16 %v229
      %v262 = vunpack.c.l.b16 %v230
      %v263 = vunpack.c.l.b16 %v231
      %v264 = vunpack.c.l.b16 %v232
      %v265 = vpack.c.b16 %v250, %v249
      %v266 = vpack.c.b16 %v252, %v251
      %v267 = vpack.c.b16 %v254, %v253
      %v268 = vpack.c.b16 %v256, %v255
      %v269 = vpack.c.b16 %v258, %v257
      %v270 = vpack.c.b16 %v260, %v259
      %v271 = vpack.c.b16 %v262, %v261
      %v272 = vpack.c.b16 %v264, %v263
      %281 = vmatprep.subr.bf16.mxu0 0
      %282 = vmatpush1.bf16.msra.mxu0 %v272
      %283 = vmatprep.subr.bf16.mxu0 0
      %284 = vmatpush1.bf16.msra.mxu0 %v271
      %285 = vmatprep.subr.bf16.mxu0 0
      %286 = vmatpush1.bf16.msra.mxu0 %v270
      %287 = vmatprep.subr.bf16.mxu0 0
      %288 = vmatpush1.bf16.msra.mxu0 %v269
      %289 = vmatprep.subr.bf16.mxu0 0
      %290 = vmatpush1.bf16.msra.mxu0 %v268
      %291 = vmatprep.subr.bf16.mxu0 0
      %292 = vmatpush1.bf16.msra.mxu0 %v267
      %293 = vmatprep.subr.bf16.mxu0 0
      %294 = vmatpush1.bf16.msra.mxu0 %v266
      %295 = vmatprep.subr.bf16.mxu0 0
      %296 = vmatpush1.bf16.msra.mxu0 %v265
      %297 = vmatprep.subr.bf16.mxu0 0
      %298 = vmatpush2.bf16.msra.mxu0 0
      %299 = vmatprep.subr.bf16.mxu0 0
      %300 = vmatpush2.bf16.msra.mxu0 0
      %301 = vmatprep.subr.bf16.mxu0 0
      %302 = vmatpush2.bf16.msra.mxu0 0
      %303 = vmatprep.subr.bf16.mxu0 0
      %304 = vmatpush2.bf16.msra.mxu0 0
      %305 = vmatprep.subr.bf16.mxu0 0
      %306 = vmatpush2.bf16.msra.mxu0 0
      %307 = vmatprep.subr.bf16.mxu0 0
      %308 = vmatpush2.bf16.msra.mxu0 0
      %309 = vmatprep.subr.bf16.mxu0 0
      %310 = vmatpush2.bf16.msra.mxu0 0
      %311 = vmatprep.subr.bf16.mxu0 0
      %312 = vmatpush2.bf16.msra.mxu0 0
      %313 = vmatprep.mubr.bf16.mxu0 0
      %314 = vmatmul.mubr.bf16.gmra.mxu0 %v211
      %v315 = vpop.f32.mrf.mxu0
      %v316 = vadd.f32 0.0, %v315
      %v317 = vpop.f32.mrf.mxu0
      %v318 = vpop.f32.mrf.mxu0
      %v319 = vadd.f32 0.0, %v318
      %v320 = vpop.f32.mrf.mxu0
      %321 = vmatprep.mubr.bf16.mxu0 0
      %322 = vmatmul.mubr.bf16.gmra.mxu0 %v212
      %v323 = vpop.f32.mrf.mxu0
      %v324 = vadd.f32 0.0, %v323
      %v325 = vpop.f32.mrf.mxu0
      %v326 = vpop.f32.mrf.mxu0
      %v327 = vadd.f32 0.0, %v326
      %v328 = vpop.f32.mrf.mxu0
      %329 = vmatprep.mubr.bf16.mxu0 0
      %330 = vmatmul.mubr.bf16.gmra.mxu0 %v213
      %v331 = vpop.f32.mrf.mxu0
      %v332 = vadd.f32 0.0, %v331
      %v333 = vpop.f32.mrf.mxu0
      %v334 = vpop.f32.mrf.mxu0
      %v335 = vadd.f32 0.0, %v334
      %v336 = vpop.f32.mrf.mxu0
      %337 = vmatprep.mubr.bf16.mxu0 0
      %338 = vmatmul.mubr.bf16.gmra.mxu0 %v214
      %v339 = vpop.f32.mrf.mxu0
      %v340 = vadd.f32 0.0, %v339
      %v341 = vpop.f32.mrf.mxu0
      %v342 = vpop.f32.mrf.mxu0
      %v343 = vadd.f32 0.0, %v342
      %v344 = vpop.f32.mrf.mxu0
      %345 = vmatprep.mubr.bf16.mxu0 0
      %346 = vmatmul.mubr.bf16.gmra.mxu0 %v215
      %v347 = vpop.f32.mrf.mxu0
      %v348 = vadd.f32 0.0, %v347
      %v349 = vpop.f32.mrf.mxu0
      %v350 = vpop.f32.mrf.mxu0
      %v351 = vadd.f32 0.0, %v350
      %v352 = vpop.f32.mrf.mxu0
      %353 = vmatprep.mubr.bf16.mxu0 0
      %354 = vmatmul.mubr.bf16.gmra.mxu0 %v216
      %v355 = vpop.f32.mrf.mxu0
      %v356 = vadd.f32 0.0, %v355
      %v357 = vpop.f32.mrf.mxu0
      %v358 = vpop.f32.mrf.mxu0
      %v359 = vadd.f32 0.0, %v358
      %v360 = vpop.f32.mrf.mxu0
      %361 = vdwg.mxu0
      %362 = vst [vmem:[#allocation2] sm:$0xff] %v316
      %363 = vst [vmem:[#allocation2 + $0x8] sm:$0xff] %v319
      %364 = vst [vmem:[#allocation2 + $0x10] sm:$0xff] %v324
      %365 = vst [vmem:[#allocation2 + $0x18] sm:$0xff] %v327
      %366 = vst [vmem:[#allocation2 + $0x20] sm:$0xff] %v332
      %367 = vst [vmem:[#allocation2 + $0x28] sm:$0xff] %v335
      %368 = vst [vmem:[#allocation2 + $0x30] sm:$0xff] %v340
      %369 = vst [vmem:[#allocation2 + $0x38] sm:$0xff] %v343
      %370 = vst [vmem:[#allocation2 + $0x40] sm:$0xff] %v348
      %371 = vst [vmem:[#allocation2 + $0x48] sm:$0xff] %v351
      %372 = vst [vmem:[#allocation2 + $0x50] sm:$0xff] %v356
      %373 = vst [vmem:[#allocation2 + $0x58] sm:$0xff] %v359
      %v374 = vld [vmem:[%s192 + $0x7] sm:$0xff]
      %v375 = vld [vmem:[%s192 + $0xf] sm:$0xff]
      %v376 = vld [vmem:[%s192 + $0x17] sm:$0xff]
      %v377 = vld [vmem:[%s192 + $0x1f] sm:$0xff]
      %v378 = vld [vmem:[%s192 + $0x27] sm:$0xff]
      %v379 = vld [vmem:[%s192 + $0x2f] sm:$0xff]
      %v380 = vld [vmem:[%s192 + $0x37] sm:$0xff]
      %v381 = vld [vmem:[%s192 + $0x3f] sm:$0xff]
      %v382 = vld [vmem:[%s192 + $0x47] sm:$0xff]
      %v383 = vld [vmem:[%s192 + $0x4f] sm:$0xff]
      %v384 = vld [vmem:[%s192 + $0x57] sm:$0xff]
      %v385 = vld [vmem:[%s192 + $0x5f] sm:$0xff]
      %v386 = vpack.c.bf16 %v375, %v374
      %v387 = vpack.c.bf16 %v377, %v376
      %v388 = vpack.c.bf16 %v379, %v378
      %v389 = vpack.c.bf16 %v381, %v380
      %v390 = vpack.c.bf16 %v383, %v382
      %v391 = vpack.c.bf16 %v385, %v384
      %s392 = scalar_lea.vmem %s1, 64
      %v393 = vld [vmem:[%s392] sm:$0xf]
      %v394 = vld [vmem:[%s392 + $0x4] sm:$0xf]
      %v395 = vld [vmem:[%s392 + $0x8] sm:$0xf]
      %v396 = vld [vmem:[%s392 + $0xc] sm:$0xf]
      %v397 = vld [vmem:[%s392 + $0x10] sm:$0xf]
      %v398 = vld [vmem:[%s392 + $0x14] sm:$0xf]
      %v399 = vld [vmem:[%s392 + $0x18] sm:$0xf]
      %v400 = vld [vmem:[%s392 + $0x1c] sm:$0xf]
      %v401 = vld [vmem:[%s392 + $0x20] sm:$0xf]
      %v402 = vld [vmem:[%s392 + $0x24] sm:$0xf]
      %v403 = vld [vmem:[%s392 + $0x28] sm:$0xf]
      %v404 = vld [vmem:[%s392 + $0x2c] sm:$0xf]
      %v405 = vld [vmem:[%s392 + $0x30] sm:$0xf]
      %v406 = vld [vmem:[%s392 + $0x34] sm:$0xf]
      %v407 = vld [vmem:[%s392 + $0x38] sm:$0xf]
      %v408 = vld [vmem:[%s392 + $0x3c] sm:$0xf]
      %v425 = vunpack.c.l.b16 %v393
      %v426 = vunpack.c.l.b16 %v394
      %v427 = vunpack.c.l.b16 %v395
      %v428 = vunpack.c.l.b16 %v396
      %v429 = vunpack.c.l.b16 %v397
      %v430 = vunpack.c.l.b16 %v398
      %v431 = vunpack.c.l.b16 %v399
      %v432 = vunpack.c.l.b16 %v400
      %v433 = vunpack.c.l.b16 %v401
      %v434 = vunpack.c.l.b16 %v402
      %v435 = vunpack.c.l.b16 %v403
      %v436 = vunpack.c.l.b16 %v404
      %v437 = vunpack.c.l.b16 %v405
      %v438 = vunpack.c.l.b16 %v406
      %v439 = vunpack.c.l.b16 %v407
      %v440 = vunpack.c.l.b16 %v408
      %v441 = vpack.c.b16 %v426, %v425
      %v442 = vpack.c.b16 %v428, %v427
      %v443 = vpack.c.b16 %v430, %v429
      %v444 = vpack.c.b16 %v432, %v431
      %v445 = vpack.c.b16 %v434, %v433
      %v446 = vpack.c.b16 %v436, %v435
      %v447 = vpack.c.b16 %v438, %v437
      %v448 = vpack.c.b16 %v440, %v439
      %457 = vmatprep.subr.bf16.mxu0 0
      %458 = vmatpush1.bf16.msra.mxu0 %v448
      %459 = vmatprep.subr.bf16.mxu0 0
      %460 = vmatpush1.bf16.msra.mxu0 %v447
      %461 = vmatprep.subr.bf16.mxu0 0
      %462 = vmatpush1.bf16.msra.mxu0 %v446
      %463 = vmatprep.subr.bf16.mxu0 0
      %464 = vmatpush1.bf16.msra.mxu0 %v445
      %465 = vmatprep.subr.bf16.mxu0 0
      %466 = vmatpush1.bf16.msra.mxu0 %v444
      %467 = vmatprep.subr.bf16.mxu0 0
      %468 = vmatpush1.bf16.msra.mxu0 %v443
      %469 = vmatprep.subr.bf16.mxu0 0
      %470 = vmatpush1.bf16.msra.mxu0 %v442
      %471 = vmatprep.subr.bf16.mxu0 0
      %472 = vmatpush1.bf16.msra.mxu0 %v441
      %473 = vmatprep.subr.bf16.mxu0 0
      %474 = vmatpush2.bf16.msra.mxu0 0
      %475 = vmatprep.subr.bf16.mxu0 0
      %476 = vmatpush2.bf16.msra.mxu0 0
      %477 = vmatprep.subr.bf16.mxu0 0
      %478 = vmatpush2.bf16.msra.mxu0 0
      %479 = vmatprep.subr.bf16.mxu0 0
      %480 = vmatpush2.bf16.msra.mxu0 0
      %481 = vmatprep.subr.bf16.mxu0 0
      %482 = vmatpush2.bf16.msra.mxu0 0
      %483 = vmatprep.subr.bf16.mxu0 0
      %484 = vmatpush2.bf16.msra.mxu0 0
      %485 = vmatprep.subr.bf16.mxu0 0
      %486 = vmatpush2.bf16.msra.mxu0 0
      %487 = vmatprep.subr.bf16.mxu0 0
      %488 = vmatpush2.bf16.msra.mxu0 0
      %489 = vmatprep.mubr.bf16.mxu0 0
      %490 = vmatmul.mubr.bf16.gmra.mxu0 %v386
      %v491 = vpop.f32.mrf.mxu0
      %v492 = vadd.f32 0.0, %v491
      %v493 = vpop.f32.mrf.mxu0
      %v494 = vpop.f32.mrf.mxu0
      %v495 = vadd.f32 0.0, %v494
      %v496 = vpop.f32.mrf.mxu0
      %497 = vmatprep.mubr.bf16.mxu0 0
      %498 = vmatmul.mubr.bf16.gmra.mxu0 %v387
      %v499 = vpop.f32.mrf.mxu0
      %v500 = vadd.f32 0.0, %v499
      %v501 = vpop.f32.mrf.mxu0
      %v502 = vpop.f32.mrf.mxu0
      %v503 = vadd.f32 0.0, %v502
      %v504 = vpop.f32.mrf.mxu0
      %505 = vmatprep.mubr.bf16.mxu0 0
      %506 = vmatmul.mubr.bf16.gmra.mxu0 %v388
      %v507 = vpop.f32.mrf.mxu0
      %v508 = vadd.f32 0.0, %v507
      %v509 = vpop.f32.mrf.mxu0
      %v510 = vpop.f32.mrf.mxu0
      %v511 = vadd.f32 0.0, %v510
      %v512 = vpop.f32.mrf.mxu0
      %513 = vmatprep.mubr.bf16.mxu0 0
      %514 = vmatmul.mubr.bf16.gmra.mxu0 %v389
      %v515 = vpop.f32.mrf.mxu0
      %v516 = vadd.f32 0.0, %v515
      %v517 = vpop.f32.mrf.mxu0
      %v518 = vpop.f32.mrf.mxu0
      %v519 = vadd.f32 0.0, %v518
      %v520 = vpop.f32.mrf.mxu0
      %521 = vmatprep.mubr.bf16.mxu0 0
      %522 = vmatmul.mubr.bf16.gmra.mxu0 %v390
      %v523 = vpop.f32.mrf.mxu0
      %v524 = vadd.f32 0.0, %v523
      %v525 = vpop.f32.mrf.mxu0
      %v526 = vpop.f32.mrf.mxu0
      %v527 = vadd.f32 0.0, %v526
      %v528 = vpop.f32.mrf.mxu0
      %529 = vmatprep.mubr.bf16.mxu0 0
      %530 = vmatmul.mubr.bf16.gmra.mxu0 %v391
      %v531 = vpop.f32.mrf.mxu0
      %v532 = vadd.f32 0.0, %v531
      %v533 = vpop.f32.mrf.mxu0
      %v534 = vpop.f32.mrf.mxu0
      %v535 = vadd.f32 0.0, %v534
      %v536 = vpop.f32.mrf.mxu0
      %537 = vdwg.mxu0
      %v538 = vld [vmem:[#allocation2] sm:$0xff]
      %v539 = vld [vmem:[#allocation2 + $0x8] sm:$0xff]
      %v540 = vld [vmem:[#allocation2 + $0x10] sm:$0xff]
      %v541 = vld [vmem:[#allocation2 + $0x18] sm:$0xff]
      %v542 = vld [vmem:[#allocation2 + $0x20] sm:$0xff]
      %v543 = vld [vmem:[#allocation2 + $0x28] sm:$0xff]
      %v544 = vld [vmem:[#allocation2 + $0x30] sm:$0xff]
      %v545 = vld [vmem:[#allocation2 + $0x38] sm:$0xff]
      %v546 = vld [vmem:[#allocation2 + $0x40] sm:$0xff]
      %v547 = vld [vmem:[#allocation2 + $0x48] sm:$0xff]
      %v548 = vld [vmem:[#allocation2 + $0x50] sm:$0xff]
      %v549 = vld [vmem:[#allocation2 + $0x58] sm:$0xff]
      %v550 = vadd.f32 %v538, %v492
      %v551 = vadd.f32 %v539, %v495
      %v552 = vadd.f32 %v540, %v500
      %v553 = vadd.f32 %v541, %v503
      %v554 = vadd.f32 %v542, %v508
      %v555 = vadd.f32 %v543, %v511
      %v556 = vadd.f32 %v544, %v516
      %v557 = vadd.f32 %v545, %v519
      %v558 = vadd.f32 %v546, %v524
      %v559 = vadd.f32 %v547, %v527
      %v560 = vadd.f32 %v548, %v532
      %v561 = vadd.f32 %v549, %v535
      %562 = vst [vmem:[#allocation2] sm:$0xff] %v550
      %563 = vst [vmem:[#allocation2 + $0x8] sm:$0xff] %v551
      %564 = vst [vmem:[#allocation2 + $0x10] sm:$0xff] %v552
      %565 = vst [vmem:[#allocation2 + $0x18] sm:$0xff] %v553
      %566 = vst [vmem:[#allocation2 + $0x20] sm:$0xff] %v554
      %567 = vst [vmem:[#allocation2 + $0x28] sm:$0xff] %v555
      %568 = vst [vmem:[#allocation2 + $0x30] sm:$0xff] %v556
      %569 = vst [vmem:[#allocation2 + $0x38] sm:$0xff] %v557
      %570 = vst [vmem:[#allocation2 + $0x40] sm:$0xff] %v558
      %571 = vst [vmem:[#allocation2 + $0x48] sm:$0xff] %v559
      %572 = vst [vmem:[#allocation2 + $0x50] sm:$0xff] %v560
      %573 = vst [vmem:[#allocation2 + $0x58] sm:$0xff] %v561
      %v574 = vld [vmem:[%s192 + $0x8] sm:$0xff]
      %v575 = vld [vmem:[%s192 + $0x10] sm:$0xff]
      %v576 = vld [vmem:[%s192 + $0x18] sm:$0xff]
      %v577 = vld [vmem:[%s192 + $0x20] sm:$0xff]
      %v578 = vld [vmem:[%s192 + $0x28] sm:$0xff]
      %v579 = vld [vmem:[%s192 + $0x30] sm:$0xff]
      %v580 = vld [vmem:[%s192 + $0x38] sm:$0xff]
      %v581 = vld [vmem:[%s192 + $0x40] sm:$0xff]
      %v582 = vld [vmem:[%s192 + $0x48] sm:$0xff]
      %v583 = vld [vmem:[%s192 + $0x50] sm:$0xff]
      %v584 = vld [vmem:[%s192 + $0x58] sm:$0xff]
      %v585 = vld [vmem:[%s192 + $0x60] sm:$0xff]
      %v586 = vpack.c.bf16 %v575, %v574
      %v587 = vpack.c.bf16 %v577, %v576
      %v588 = vpack.c.bf16 %v579, %v578
      %v589 = vpack.c.bf16 %v581, %v580
      %v590 = vpack.c.bf16 %v583, %v582
      %v591 = vpack.c.bf16 %v585, %v584
      %s592 = scalar_lea.vmem %s1, 128
      %v593 = vld [vmem:[%s592] sm:$0xf]
      %v594 = vld [vmem:[%s592 + $0x4] sm:$0xf]
      %v595 = vld [vmem:[%s592 + $0x8] sm:$0xf]
      %v596 = vld [vmem:[%s592 + $0xc] sm:$0xf]
      %v597 = vld [vmem:[%s592 + $0x10] sm:$0xf]
      %v598 = vld [vmem:[%s592 + $0x14] sm:$0xf]
      %v599 = vld [vmem:[%s592 + $0x18] sm:$0xf]
      %v600 = vld [vmem:[%s592 + $0x1c] sm:$0xf]
      %v601 = vld [vmem:[%s592 + $0x20] sm:$0xf]
      %v602 = vld [vmem:[%s592 + $0x24] sm:$0xf]
      %v603 = vld [vmem:[%s592 + $0x28] sm:$0xf]
      %v604 = vld [vmem:[%s592 + $0x2c] sm:$0xf]
      %v605 = vld [vmem:[%s592 + $0x30] sm:$0xf]
      %v606 = vld [vmem:[%s592 + $0x34] sm:$0xf]
      %v607 = vld [vmem:[%s592 + $0x38] sm:$0xf]
      %v608 = vld [vmem:[%s592 + $0x3c] sm:$0xf]
      %v625 = vunpack.c.l.b16 %v593
      %v626 = vunpack.c.l.b16 %v594
      %v627 = vunpack.c.l.b16 %v595
      %v628 = vunpack.c.l.b16 %v596
      %v629 = vunpack.c.l.b16 %v597
      %v630 = vunpack.c.l.b16 %v598
      %v631 = vunpack.c.l.b16 %v599
      %v632 = vunpack.c.l.b16 %v600
      %v633 = vunpack.c.l.b16 %v601
      %v634 = vunpack.c.l.b16 %v602
      %v635 = vunpack.c.l.b16 %v603
      %v636 = vunpack.c.l.b16 %v604
      %v637 = vunpack.c.l.b16 %v605
      %v638 = vunpack.c.l.b16 %v606
      %v639 = vunpack.c.l.b16 %v607
      %v640 = vunpack.c.l.b16 %v608
      %v641 = vpack.c.b16 %v626, %v625
      %v642 = vpack.c.b16 %v628, %v627
      %v643 = vpack.c.b16 %v630, %v629
      %v644 = vpack.c.b16 %v632, %v631
      %v645 = vpack.c.b16 %v634, %v633
      %v646 = vpack.c.b16 %v636, %v635
      %v647 = vpack.c.b16 %v638, %v637
      %v648 = vpack.c.b16 %v640, %v639
      %657 = vmatprep.subr.bf16.mxu0 0
      %658 = vmatpush1.bf16.msra.mxu0 %v648
      %659 = vmatprep.subr.bf16.mxu0 0
      %660 = vmatpush1.bf16.msra.mxu0 %v647
      %661 = vmatprep.subr.bf16.mxu0 0
      %662 = vmatpush1.bf16.msra.mxu0 %v646
      %663 = vmatprep.subr.bf16.mxu0 0
      %664 = vmatpush1.bf16.msra.mxu0 %v645
      %665 = vmatprep.subr.bf16.mxu0 0
      %666 = vmatpush1.bf16.msra.mxu0 %v644
      %667 = vmatprep.subr.bf16.mxu0 0
      %668 = vmatpush1.bf16.msra.mxu0 %v643
      %669 = vmatprep.subr.bf16.mxu0 0
      %670 = vmatpush1.bf16.msra.mxu0 %v642
      %671 = vmatprep.subr.bf16.mxu0 0
      %672 = vmatpush1.bf16.msra.mxu0 %v641
      %673 = vmatprep.subr.bf16.mxu0 0
      %674 = vmatpush2.bf16.msra.mxu0 0
      %675 = vmatprep.subr.bf16.mxu0 0
      %676 = vmatpush2.bf16.msra.mxu0 0
      %677 = vmatprep.subr.bf16.mxu0 0
      %678 = vmatpush2.bf16.msra.mxu0 0
      %679 = vmatprep.subr.bf16.mxu0 0
      %680 = vmatpush2.bf16.msra.mxu0 0
      %681 = vmatprep.subr.bf16.mxu0 0
      %682 = vmatpush2.bf16.msra.mxu0 0
      %683 = vmatprep.subr.bf16.mxu0 0
      %684 = vmatpush2.bf16.msra.mxu0 0
      %685 = vmatprep.subr.bf16.mxu0 0
      %686 = vmatpush2.bf16.msra.mxu0 0
      %687 = vmatprep.subr.bf16.mxu0 0
      %688 = vmatpush2.bf16.msra.mxu0 0
      %689 = vmatprep.mubr.bf16.mxu0 0
      %690 = vmatmul.mubr.bf16.gmra.mxu0 %v586
      %v691 = vpop.f32.mrf.mxu0
      %v692 = vadd.f32 0.0, %v691
      %v693 = vpop.f32.mrf.mxu0
      %v694 = vpop.f32.mrf.mxu0
      %v695 = vadd.f32 0.0, %v694
      %v696 = vpop.f32.mrf.mxu0
      %697 = vmatprep.mubr.bf16.mxu0 0
      %698 = vmatmul.mubr.bf16.gmra.mxu0 %v587
      %v699 = vpop.f32.mrf.mxu0
      %v700 = vadd.f32 0.0, %v699
      %v701 = vpop.f32.mrf.mxu0
      %v702 = vpop.f32.mrf.mxu0
      %v703 = vadd.f32 0.0, %v702
      %v704 = vpop.f32.mrf.mxu0
      %705 = vmatprep.mubr.bf16.mxu0 0
      %706 = vmatmul.mubr.bf16.gmra.mxu0 %v588
      %v707 = vpop.f32.mrf.mxu0
      %v708 = vadd.f32 0.0, %v707
      %v709 = vpop.f32.mrf.mxu0
      %v710 = vpop.f32.mrf.mxu0
      %v711 = vadd.f32 0.0, %v710
      %v712 = vpop.f32.mrf.mxu0
      %713 = vmatprep.mubr.bf16.mxu0 0
      %714 = vmatmul.mubr.bf16.gmra.mxu0 %v589
      %v715 = vpop.f32.mrf.mxu0
      %v716 = vadd.f32 0.0, %v715
      %v717 = vpop.f32.mrf.mxu0
      %v718 = vpop.f32.mrf.mxu0
      %v719 = vadd.f32 0.0, %v718
      %v720 = vpop.f32.mrf.mxu0
      %721 = vmatprep.mubr.bf16.mxu0 0
      %722 = vmatmul.mubr.bf16.gmra.mxu0 %v590
      %v723 = vpop.f32.mrf.mxu0
      %v724 = vadd.f32 0.0, %v723
      %v725 = vpop.f32.mrf.mxu0
      %v726 = vpop.f32.mrf.mxu0
      %v727 = vadd.f32 0.0, %v726
      %v728 = vpop.f32.mrf.mxu0
      %729 = vmatprep.mubr.bf16.mxu0 0
      %730 = vmatmul.mubr.bf16.gmra.mxu0 %v591
      %v731 = vpop.f32.mrf.mxu0
      %v732 = vadd.f32 0.0, %v731
      %v733 = vpop.f32.mrf.mxu0
      %v734 = vpop.f32.mrf.mxu0
      %v735 = vadd.f32 0.0, %v734
      %v736 = vpop.f32.mrf.mxu0
      %737 = vdwg.mxu0
      %v738 = vld [vmem:[#allocation2] sm:$0xff]
      %v739 = vld [vmem:[#allocation2 + $0x8] sm:$0xff]
      %v740 = vld [vmem:[#allocation2 + $0x10] sm:$0xff]
      %v741 = vld [vmem:[#allocation2 + $0x18] sm:$0xff]
      %v742 = vld [vmem:[#allocation2 + $0x20] sm:$0xff]
      %v743 = vld [vmem:[#allocation2 + $0x28] sm:$0xff]
      %v744 = vld [vmem:[#allocation2 + $0x30] sm:$0xff]
      %v745 = vld [vmem:[#allocation2 + $0x38] sm:$0xff]
      %v746 = vld [vmem:[#allocation2 + $0x40] sm:$0xff]
      %v747 = vld [vmem:[#allocation2 + $0x48] sm:$0xff]
      %v748 = vld [vmem:[#allocation2 + $0x50] sm:$0xff]
      %v749 = vld [vmem:[#allocation2 + $0x58] sm:$0xff]
      %v750 = vadd.f32 %v738, %v692
      %v751 = vadd.f32 %v739, %v695
      %v752 = vadd.f32 %v740, %v700
      %v753 = vadd.f32 %v741, %v703
      %v754 = vadd.f32 %v742, %v708
      %v755 = vadd.f32 %v743, %v711
      %v756 = vadd.f32 %v744, %v716
      %v757 = vadd.f32 %v745, %v719
      %v758 = vadd.f32 %v746, %v724
      %v759 = vadd.f32 %v747, %v727
      %v760 = vadd.f32 %v748, %v732
      %v761 = vadd.f32 %v749, %v735
      %762 = vst [vmem:[#allocation2] sm:$0xff] %v750
      %763 = vst [vmem:[#allocation2 + $0x8] sm:$0xff] %v751
      %764 = vst [vmem:[#allocation2 + $0x10] sm:$0xff] %v752
      %765 = vst [vmem:[#allocation2 + $0x18] sm:$0xff] %v753
      %766 = vst [vmem:[#allocation2 + $0x20] sm:$0xff] %v754
      %767 = vst [vmem:[#allocation2 + $0x28] sm:$0xff] %v755
      %768 = vst [vmem:[#allocation2 + $0x30] sm:$0xff] %v756
      %769 = vst [vmem:[#allocation2 + $0x38] sm:$0xff] %v757
      %770 = vst [vmem:[#allocation2 + $0x40] sm:$0xff] %v758
      %771 = vst [vmem:[#allocation2 + $0x48] sm:$0xff] %v759
      %772 = vst [vmem:[#allocation2 + $0x50] sm:$0xff] %v760
      %773 = vst [vmem:[#allocation2 + $0x58] sm:$0xff] %v761
      %v774 = vld [vmem:[%s192 + $0xf] sm:$0xff]
      %v775 = vld [vmem:[%s192 + $0x17] sm:$0xff]
      %v776 = vld [vmem:[%s192 + $0x1f] sm:$0xff]
      %v777 = vld [vmem:[%s192 + $0x27] sm:$0xff]
      %v778 = vld [vmem:[%s192 + $0x2f] sm:$0xff]
      %v779 = vld [vmem:[%s192 + $0x37] sm:$0xff]
      %v780 = vld [vmem:[%s192 + $0x3f] sm:$0xff]
      %v781 = vld [vmem:[%s192 + $0x47] sm:$0xff]
      %v782 = vld [vmem:[%s192 + $0x4f] sm:$0xff]
      %v783 = vld [vmem:[%s192 + $0x57] sm:$0xff]
      %v784 = vld [vmem:[%s192 + $0x5f] sm:$0xff]
      %v785 = vld [vmem:[%s192 + $0x67] sm:$0xff]
      %v786 = vpack.c.bf16 %v775, %v774
      %v787 = vpack.c.bf16 %v777, %v776
      %v788 = vpack.c.bf16 %v779, %v778
      %v789 = vpack.c.bf16 %v781, %v780
      %v790 = vpack.c.bf16 %v783, %v782
      %v791 = vpack.c.bf16 %v785, %v784
      %s792 = scalar_lea.vmem %s1, 192
      %v793 = vld [vmem:[%s792] sm:$0xf]
      %v794 = vld [vmem:[%s792 + $0x4] sm:$0xf]
      %v795 = vld [vmem:[%s792 + $0x8] sm:$0xf]
      %v796 = vld [vmem:[%s792 + $0xc] sm:$0xf]
      %v797 = vld [vmem:[%s792 + $0x10] sm:$0xf]
      %v798 = vld [vmem:[%s792 + $0x14] sm:$0xf]
      %v799 = vld [vmem:[%s792 + $0x18] sm:$0xf]
      %v800 = vld [vmem:[%s792 + $0x1c] sm:$0xf]
      %v801 = vld [vmem:[%s792 + $0x20] sm:$0xf]
      %v802 = vld [vmem:[%s792 + $0x24] sm:$0xf]
      %v803 = vld [vmem:[%s792 + $0x28] sm:$0xf]
      %v804 = vld [vmem:[%s792 + $0x2c] sm:$0xf]
      %v805 = vld [vmem:[%s792 + $0x30] sm:$0xf]
      %v806 = vld [vmem:[%s792 + $0x34] sm:$0xf]
      %v807 = vld [vmem:[%s792 + $0x38] sm:$0xf]
      %v808 = vld [vmem:[%s792 + $0x3c] sm:$0xf]
      %v825 = vunpack.c.l.b16 %v793
      %v826 = vunpack.c.l.b16 %v794
      %v827 = vunpack.c.l.b16 %v795
      %v828 = vunpack.c.l.b16 %v796
      %v829 = vunpack.c.l.b16 %v797
      %v830 = vunpack.c.l.b16 %v798
      %v831 = vunpack.c.l.b16 %v799
      %v832 = vunpack.c.l.b16 %v800
      %v833 = vunpack.c.l.b16 %v801
      %v834 = vunpack.c.l.b16 %v802
      %v835 = vunpack.c.l.b16 %v803
      %v836 = vunpack.c.l.b16 %v804
      %v837 = vunpack.c.l.b16 %v805
      %v838 = vunpack.c.l.b16 %v806
      %v839 = vunpack.c.l.b16 %v807
      %v840 = vunpack.c.l.b16 %v808
      %v841 = vpack.c.b16 %v826, %v825
      %v842 = vpack.c.b16 %v828, %v827
      %v843 = vpack.c.b16 %v830, %v829
      %v844 = vpack.c.b16 %v832, %v831
      %v845 = vpack.c.b16 %v834, %v833
      %v846 = vpack.c.b16 %v836, %v835
      %v847 = vpack.c.b16 %v838, %v837
      %v848 = vpack.c.b16 %v840, %v839
      %857 = vmatprep.subr.bf16.mxu0 0
      %858 = vmatpush1.bf16.msra.mxu0 %v848
      %859 = vmatprep.subr.bf16.mxu0 0
      %860 = vmatpush1.bf16.msra.mxu0 %v847
      %861 = vmatprep.subr.bf16.mxu0 0
      %862 = vmatpush1.bf16.msra.mxu0 %v846
      %863 = vmatprep.subr.bf16.mxu0 0
      %864 = vmatpush1.bf16.msra.mxu0 %v845
      %865 = vmatprep.subr.bf16.mxu0 0
      %866 = vmatpush1.bf16.msra.mxu0 %v844
      %867 = vmatprep.subr.bf16.mxu0 0
      %868 = vmatpush1.bf16.msra.mxu0 %v843
      %869 = vmatprep.subr.bf16.mxu0 0
      %870 = vmatpush1.bf16.msra.mxu0 %v842
      %871 = vmatprep.subr.bf16.mxu0 0
      %872 = vmatpush1.bf16.msra.mxu0 %v841
      %873 = vmatprep.subr.bf16.mxu0 0
      %874 = vmatpush2.bf16.msra.mxu0 0
      %875 = vmatprep.subr.bf16.mxu0 0
      %876 = vmatpush2.bf16.msra.mxu0 0
      %877 = vmatprep.subr.bf16.mxu0 0
      %878 = vmatpush2.bf16.msra.mxu0 0
      %879 = vmatprep.subr.bf16.mxu0 0
      %880 = vmatpush2.bf16.msra.mxu0 0
      %881 = vmatprep.subr.bf16.mxu0 0
      %882 = vmatpush2.bf16.msra.mxu0 0
      %883 = vmatprep.subr.bf16.mxu0 0
      %884 = vmatpush2.bf16.msra.mxu0 0
      %885 = vmatprep.subr.bf16.mxu0 0
      %886 = vmatpush2.bf16.msra.mxu0 0
      %887 = vmatprep.subr.bf16.mxu0 0
      %888 = vmatpush2.bf16.msra.mxu0 0
      %889 = vmatprep.mubr.bf16.mxu0 0
      %890 = vmatmul.mubr.bf16.gmra.mxu0 %v786
      %v891 = vpop.f32.mrf.mxu0
      %v892 = vadd.f32 0.0, %v891
      %v893 = vpop.f32.mrf.mxu0
      %v894 = vpop.f32.mrf.mxu0
      %v895 = vadd.f32 0.0, %v894
      %v896 = vpop.f32.mrf.mxu0
      %897 = vmatprep.mubr.bf16.mxu0 0
      %898 = vmatmul.mubr.bf16.gmra.mxu0 %v787
      %v899 = vpop.f32.mrf.mxu0
      %v900 = vadd.f32 0.0, %v899
      %v901 = vpop.f32.mrf.mxu0
      %v902 = vpop.f32.mrf.mxu0
      %v903 = vadd.f32 0.0, %v902
      %v904 = vpop.f32.mrf.mxu0
      %905 = vmatprep.mubr.bf16.mxu0 0
      %906 = vmatmul.mubr.bf16.gmra.mxu0 %v788
      %v907 = vpop.f32.mrf.mxu0
      %v908 = vadd.f32 0.0, %v907
      %v909 = vpop.f32.mrf.mxu0
      %v910 = vpop.f32.mrf.mxu0
      %v911 = vadd.f32 0.0, %v910
      %v912 = vpop.f32.mrf.mxu0
      %913 = vmatprep.mubr.bf16.mxu0 0
      %914 = vmatmul.mubr.bf16.gmra.mxu0 %v789
      %v915 = vpop.f32.mrf.mxu0
      %v916 = vadd.f32 0.0, %v915
      %v917 = vpop.f32.mrf.mxu0
      %v918 = vpop.f32.mrf.mxu0
      %v919 = vadd.f32 0.0, %v918
      %v920 = vpop.f32.mrf.mxu0
      %921 = vmatprep.mubr.bf16.mxu0 0
      %922 = vmatmul.mubr.bf16.gmra.mxu0 %v790
      %v923 = vpop.f32.mrf.mxu0
      %v924 = vadd.f32 0.0, %v923
      %v925 = vpop.f32.mrf.mxu0
      %v926 = vpop.f32.mrf.mxu0
      %v927 = vadd.f32 0.0, %v926
      %v928 = vpop.f32.mrf.mxu0
      %929 = vmatprep.mubr.bf16.mxu0 0
      %930 = vmatmul.mubr.bf16.gmra.mxu0 %v791
      %v931 = vpop.f32.mrf.mxu0
      %v932 = vadd.f32 0.0, %v931
      %v933 = vpop.f32.mrf.mxu0
      %v934 = vpop.f32.mrf.mxu0
      %v935 = vadd.f32 0.0, %v934
      %v936 = vpop.f32.mrf.mxu0
      %937 = vdwg.mxu0
      %v938 = vld [vmem:[#allocation2] sm:$0xff]
      %v939 = vld [vmem:[#allocation2 + $0x8] sm:$0xff]
      %v940 = vld [vmem:[#allocation2 + $0x10] sm:$0xff]
      %v941 = vld [vmem:[#allocation2 + $0x18] sm:$0xff]
      %v942 = vld [vmem:[#allocation2 + $0x20] sm:$0xff]
      %v943 = vld [vmem:[#allocation2 + $0x28] sm:$0xff]
      %v944 = vld [vmem:[#allocation2 + $0x30] sm:$0xff]
      %v945 = vld [vmem:[#allocation2 + $0x38] sm:$0xff]
      %v946 = vld [vmem:[#allocation2 + $0x40] sm:$0xff]
      %v947 = vld [vmem:[#allocation2 + $0x48] sm:$0xff]
      %v948 = vld [vmem:[#allocation2 + $0x50] sm:$0xff]
      %v949 = vld [vmem:[#allocation2 + $0x58] sm:$0xff]
      %v950 = vadd.f32 %v938, %v892
      %v951 = vadd.f32 %v939, %v895
      %v952 = vadd.f32 %v940, %v900
      %v953 = vadd.f32 %v941, %v903
      %v954 = vadd.f32 %v942, %v908
      %v955 = vadd.f32 %v943, %v911
      %v956 = vadd.f32 %v944, %v916
      %v957 = vadd.f32 %v945, %v919
      %v958 = vadd.f32 %v946, %v924
      %v959 = vadd.f32 %v947, %v927
      %v960 = vadd.f32 %v948, %v932
      %v961 = vadd.f32 %v949, %v935
      %962 = vst [vmem:[#allocation2] sm:$0xff] %v950
      %963 = vst [vmem:[#allocation2 + $0x8] sm:$0xff] %v951
      %964 = vst [vmem:[#allocation2 + $0x10] sm:$0xff] %v952
      %965 = vst [vmem:[#allocation2 + $0x18] sm:$0xff] %v953
      %966 = vst [vmem:[#allocation2 + $0x20] sm:$0xff] %v954
      %967 = vst [vmem:[#allocation2 + $0x28] sm:$0xff] %v955
      %968 = vst [vmem:[#allocation2 + $0x30] sm:$0xff] %v956
      %969 = vst [vmem:[#allocation2 + $0x38] sm:$0xff] %v957
      %970 = vst [vmem:[#allocation2 + $0x40] sm:$0xff] %v958
      %971 = vst [vmem:[#allocation2 + $0x48] sm:$0xff] %v959
      %972 = vst [vmem:[#allocation2 + $0x50] sm:$0xff] %v960
      %973 = vst [vmem:[#allocation2 + $0x58] sm:$0xff] %v961
      %v974 = vld [vmem:[%s192 + $0x10] sm:$0xff]
      %v975 = vld [vmem:[%s192 + $0x18] sm:$0xff]
      %v976 = vld [vmem:[%s192 + $0x20] sm:$0xff]
      %v977 = vld [vmem:[%s192 + $0x28] sm:$0xff]
      %v978 = vld [vmem:[%s192 + $0x30] sm:$0xff]
      %v979 = vld [vmem:[%s192 + $0x38] sm:$0xff]
      %v980 = vld [vmem:[%s192 + $0x40] sm:$0xff]
      %v981 = vld [vmem:[%s192 + $0x48] sm:$0xff]
      %v982 = vld [vmem:[%s192 + $0x50] sm:$0xff]
      %v983 = vld [vmem:[%s192 + $0x58] sm:$0xff]
      %v984 = vld [vmem:[%s192 + $0x60] sm:$0xff]
      %v985 = vld [vmem:[%s192 + $0x68] sm:$0xff]
      %v986 = vpack.c.bf16 %v975, %v974
      %v987 = vpack.c.bf16 %v977, %v976
      %v988 = vpack.c.bf16 %v979, %v978
      %v989 = vpack.c.bf16 %v981, %v980
      %v990 = vpack.c.bf16 %v983, %v982
      %v991 = vpack.c.bf16 %v985, %v984
      %s992 = scalar_lea.vmem %s1, 256
      %v993 = vld [vmem:[%s992] sm:$0xf]
      %v994 = vld [vmem:[%s992 + $0x4] sm:$0xf]
      %v995 = vld [vmem:[%s992 + $0x8] sm:$0xf]
      %v996 = vld [vmem:[%s992 + $0xc] sm:$0xf]
      %v997 = vld [vmem:[%s992 + $0x10] sm:$0xf]
      %v998 = vld [vmem:[%s992 + $0x14] sm:$0xf]
      %v999 = vld [vmem:[%s992 + $0x18] sm:$0xf]
      %v1000 = vld [vmem:[%s992 + $0x1c] sm:$0xf]
      %v1001 = vld [vmem:[%s992 + $0x20] sm:$0xf]
      %v1002 = vld [vmem:[%s992 + $0x24] sm:$0xf]
      %v1003 = vld [vmem:[%s992 + $0x28] sm:$0xf]
      %v1004 = vld [vmem:[%s992 + $0x2c] sm:$0xf]
      %v1005 = vld [vmem:[%s992 + $0x30] sm:$0xf]
      %v1006 = vld [vmem:[%s992 + $0x34] sm:$0xf]
      %v1007 = vld [vmem:[%s992 + $0x38] sm:$0xf]
      %v1008 = vld [vmem:[%s992 + $0x3c] sm:$0xf]
      %v1025 = vunpack.c.l.b16 %v993
      %v1026 = vunpack.c.l.b16 %v994
      %v1027 = vunpack.c.l.b16 %v995
      %v1028 = vunpack.c.l.b16 %v996
      %v1029 = vunpack.c.l.b16 %v997
      %v1030 = vunpack.c.l.b16 %v998
      %v1031 = vunpack.c.l.b16 %v999
      %v1032 = vunpack.c.l.b16 %v1000
      %v1033 = vunpack.c.l.b16 %v1001
      %v1034 = vunpack.c.l.b16 %v1002
      %v1035 = vunpack.c.l.b16 %v1003
      %v1036 = vunpack.c.l.b16 %v1004
      %v1037 = vunpack.c.l.b16 %v1005
      %v1038 = vunpack.c.l.b16 %v1006
      %v1039 = vunpack.c.l.b16 %v1007
      %v1040 = vunpack.c.l.b16 %v1008
      %v1041 = vpack.c.b16 %v1026, %v1025
      %v1042 = vpack.c.b16 %v1028, %v1027
      %v1043 = vpack.c.b16 %v1030, %v1029
      %v1044 = vpack.c.b16 %v1032, %v1031
      %v1045 = vpack.c.b16 %v1034, %v1033
      %v1046 = vpack.c.b16 %v1036, %v1035
      %v1047 = vpack.c.b16 %v1038, %v1037
      %v1048 = vpack.c.b16 %v1040, %v1039
      %1057 = vmatprep.subr.bf16.mxu0 0
      %1058 = vmatpush1.bf16.msra.mxu0 %v1048
      %1059 = vmatprep.subr.bf16.mxu0 0
      %1060 = vmatpush1.bf16.msra.mxu0 %v1047
      %1061 = vmatprep.subr.bf16.mxu0 0
      %1062 = vmatpush1.bf16.msra.mxu0 %v1046
      %1063 = vmatprep.subr.bf16.mxu0 0
      %1064 = vmatpush1.bf16.msra.mxu0 %v1045
      %1065 = vmatprep.subr.bf16.mxu0 0
      %1066 = vmatpush1.bf16.msra.mxu0 %v1044
      %1067 = vmatprep.subr.bf16.mxu0 0
      %1068 = vmatpush1.bf16.msra.mxu0 %v1043
      %1069 = vmatprep.subr.bf16.mxu0 0
      %1070 = vmatpush1.bf16.msra.mxu0 %v1042
      %1071 = vmatprep.subr.bf16.mxu0 0
      %1072 = vmatpush1.bf16.msra.mxu0 %v1041
      %1073 = vmatprep.subr.bf16.mxu0 0
      %1074 = vmatpush2.bf16.msra.mxu0 0
      %1075 = vmatprep.subr.bf16.mxu0 0
      %1076 = vmatpush2.bf16.msra.mxu0 0
      %1077 = vmatprep.subr.bf16.mxu0 0
      %1078 = vmatpush2.bf16.msra.mxu0 0
      %1079 = vmatprep.subr.bf16.mxu0 0
      %1080 = vmatpush2.bf16.msra.mxu0 0
      %1081 = vmatprep.subr.bf16.mxu0 0
      %1082 = vmatpush2.bf16.msra.mxu0 0
      %1083 = vmatprep.subr.bf16.mxu0 0
      %1084 = vmatpush2.bf16.msra.mxu0 0
      %1085 = vmatprep.subr.bf16.mxu0 0
      %1086 = vmatpush2.bf16.msra.mxu0 0
      %1087 = vmatprep.subr.bf16.mxu0 0
      %1088 = vmatpush2.bf16.msra.mxu0 0
      %1089 = vmatprep.mubr.bf16.mxu0 0
      %1090 = vmatmul.mubr.bf16.gmra.mxu0 %v986
      %v1091 = vpop.f32.mrf.mxu0
      %v1092 = vadd.f32 0.0, %v1091
      %v1093 = vpop.f32.mrf.mxu0
      %v1094 = vpop.f32.mrf.mxu0
      %v1095 = vadd.f32 0.0, %v1094
      %v1096 = vpop.f32.mrf.mxu0
      %1097 = vmatprep.mubr.bf16.mxu0 0
      %1098 = vmatmul.mubr.bf16.gmra.mxu0 %v987
      %v1099 = vpop.f32.mrf.mxu0
      %v1100 = vadd.f32 0.0, %v1099
      %v1101 = vpop.f32.mrf.mxu0
      %v1102 = vpop.f32.mrf.mxu0
      %v1103 = vadd.f32 0.0, %v1102
      %v1104 = vpop.f32.mrf.mxu0
      %1105 = vmatprep.mubr.bf16.mxu0 0
      %1106 = vmatmul.mubr.bf16.gmra.mxu0 %v988
      %v1107 = vpop.f32.mrf.mxu0
      %v1108 = vadd.f32 0.0, %v1107
      %v1109 = vpop.f32.mrf.mxu0
      %v1110 = vpop.f32.mrf.mxu0
      %v1111 = vadd.f32 0.0, %v1110
      %v1112 = vpop.f32.mrf.mxu0
      %1113 = vmatprep.mubr.bf16.mxu0 0
      %1114 = vmatmul.mubr.bf16.gmra.mxu0 %v989
      %v1115 = vpop.f32.mrf.mxu0
      %v1116 = vadd.f32 0.0, %v1115
      %v1117 = vpop.f32.mrf.mxu0
      %v1118 = vpop.f32.mrf.mxu0
      %v1119 = vadd.f32 0.0, %v1118
      %v1120 = vpop.f32.mrf.mxu0
      %1121 = vmatprep.mubr.bf16.mxu0 0
      %1122 = vmatmul.mubr.bf16.gmra.mxu0 %v990
      %v1123 = vpop.f32.mrf.mxu0
      %v1124 = vadd.f32 0.0, %v1123
      %v1125 = vpop.f32.mrf.mxu0
      %v1126 = vpop.f32.mrf.mxu0
      %v1127 = vadd.f32 0.0, %v1126
      %v1128 = vpop.f32.mrf.mxu0
      %1129 = vmatprep.mubr.bf16.mxu0 0
      %1130 = vmatmul.mubr.bf16.gmra.mxu0 %v991
      %v1131 = vpop.f32.mrf.mxu0
      %v1132 = vadd.f32 0.0, %v1131
      %v1133 = vpop.f32.mrf.mxu0
      %v1134 = vpop.f32.mrf.mxu0
      %v1135 = vadd.f32 0.0, %v1134
      %v1136 = vpop.f32.mrf.mxu0
      %1137 = vdwg.mxu0
      %v1138 = vld [vmem:[#allocation2] sm:$0xff]
      %v1139 = vld [vmem:[#allocation2 + $0x8] sm:$0xff]
      %v1140 = vld [vmem:[#allocation2 + $0x10] sm:$0xff]
      %v1141 = vld [vmem:[#allocation2 + $0x18] sm:$0xff]
      %v1142 = vld [vmem:[#allocation2 + $0x20] sm:$0xff]
      %v1143 = vld [vmem:[#allocation2 + $0x28] sm:$0xff]
      %v1144 = vld [vmem:[#allocation2 + $0x30] sm:$0xff]
      %v1145 = vld [vmem:[#allocation2 + $0x38] sm:$0xff]
      %v1146 = vld [vmem:[#allocation2 + $0x40] sm:$0xff]
      %v1147 = vld [vmem:[#allocation2 + $0x48] sm:$0xff]
      %v1148 = vld [vmem:[#allocation2 + $0x50] sm:$0xff]
      %v1149 = vld [vmem:[#allocation2 + $0x58] sm:$0xff]
      %v1150 = vadd.f32 %v1138, %v1092
      %v1151 = vadd.f32 %v1139, %v1095
      %v1152 = vadd.f32 %v1140, %v1100
      %v1153 = vadd.f32 %v1141, %v1103
      %v1154 = vadd.f32 %v1142, %v1108
      %v1155 = vadd.f32 %v1143, %v1111
      %v1156 = vadd.f32 %v1144, %v1116
      %v1157 = vadd.f32 %v1145, %v1119
      %v1158 = vadd.f32 %v1146, %v1124
      %v1159 = vadd.f32 %v1147, %v1127
      %v1160 = vadd.f32 %v1148, %v1132
      %v1161 = vadd.f32 %v1149, %v1135
      %1162 = vst [vmem:[#allocation2] sm:$0xff] %v1150
      %1163 = vst [vmem:[#allocation2 + $0x8] sm:$0xff] %v1151
      %1164 = vst [vmem:[#allocation2 + $0x10] sm:$0xff] %v1152
      %1165 = vst [vmem:[#allocation2 + $0x18] sm:$0xff] %v1153
      %1166 = vst [vmem:[#allocation2 + $0x20] sm:$0xff] %v1154
      %1167 = vst [vmem:[#allocation2 + $0x28] sm:$0xff] %v1155
      %1168 = vst [vmem:[#allocation2 + $0x30] sm:$0xff] %v1156
      %1169 = vst [vmem:[#allocation2 + $0x38] sm:$0xff] %v1157
      %1170 = vst [vmem:[#allocation2 + $0x40] sm:$0xff] %v1158
      %1171 = vst [vmem:[#allocation2 + $0x48] sm:$0xff] %v1159
      %1172 = vst [vmem:[#allocation2 + $0x50] sm:$0xff] %v1160
      %1173 = vst [vmem:[#allocation2 + $0x58] sm:$0xff] %v1161
      %v1174 = vld [vmem:[%s192 + $0x11] sm:$0xff]
      %v1175 = vld [vmem:[%s192 + $0x19] sm:$0xff]
      %v1176 = vld [vmem:[%s192 + $0x21] sm:$0xff]
      %v1177 = vld [vmem:[%s192 + $0x29] sm:$0xff]
      %v1178 = vld [vmem:[%s192 + $0x31] sm:$0xff]
      %v1179 = vld [vmem:[%s192 + $0x39] sm:$0xff]
      %v1180 = vld [vmem:[%s192 + $0x41] sm:$0xff]
      %v1181 = vld [vmem:[%s192 + $0x49] sm:$0xff]
      %v1182 = vld [vmem:[%s192 + $0x51] sm:$0xff]
      %v1183 = vld [vmem:[%s192 + $0x59] sm:$0xff]
      %v1184 = vld [vmem:[%s192 + $0x61] sm:$0xff]
      %v1185 = vld [vmem:[%s192 + $0x69] sm:$0xff]
      %v1186 = vpack.c.bf16 %v1175, %v1174
      %v1187 = vpack.c.bf16 %v1177, %v1176
      %v1188 = vpack.c.bf16 %v1179, %v1178
      %v1189 = vpack.c.bf16 %v1181, %v1180
      %v1190 = vpack.c.bf16 %v1183, %v1182
      %v1191 = vpack.c.bf16 %v1185, %v1184
      %s1192 = scalar_lea.vmem %s1, 320
      %v1193 = vld [vmem:[%s1192] sm:$0xf]
      %v1194 = vld [vmem:[%s1192 + $0x4] sm:$0xf]
      %v1195 = vld [vmem:[%s1192 + $0x8] sm:$0xf]
      %v1196 = vld [vmem:[%s1192 + $0xc] sm:$0xf]
      %v1197 = vld [vmem:[%s1192 + $0x10] sm:$0xf]
      %v1198 = vld [vmem:[%s1192 + $0x14] sm:$0xf]
      %v1199 = vld [vmem:[%s1192 + $0x18] sm:$0xf]
      %v1200 = vld [vmem:[%s1192 + $0x1c] sm:$0xf]
      %v1201 = vld [vmem:[%s1192 + $0x20] sm:$0xf]
      %v1202 = vld [vmem:[%s1192 + $0x24] sm:$0xf]
      %v1203 = vld [vmem:[%s1192 + $0x28] sm:$0xf]
      %v1204 = vld [vmem:[%s1192 + $0x2c] sm:$0xf]
      %v1205 = vld [vmem:[%s1192 + $0x30] sm:$0xf]
      %v1206 = vld [vmem:[%s1192 + $0x34] sm:$0xf]
      %v1207 = vld [vmem:[%s1192 + $0x38] sm:$0xf]
      %v1208 = vld [vmem:[%s1192 + $0x3c] sm:$0xf]
      %v1225 = vunpack.c.l.b16 %v1193
      %v1226 = vunpack.c.l.b16 %v1194
      %v1227 = vunpack.c.l.b16 %v1195
      %v1228 = vunpack.c.l.b16 %v1196
      %v1229 = vunpack.c.l.b16 %v1197
      %v1230 = vunpack.c.l.b16 %v1198
      %v1231 = vunpack.c.l.b16 %v1199
      %v1232 = vunpack.c.l.b16 %v1200
      %v1233 = vunpack.c.l.b16 %v1201
      %v1234 = vunpack.c.l.b16 %v1202
      %v1235 = vunpack.c.l.b16 %v1203
      %v1236 = vunpack.c.l.b16 %v1204
      %v1237 = vunpack.c.l.b16 %v1205
      %v1238 = vunpack.c.l.b16 %v1206
      %v1239 = vunpack.c.l.b16 %v1207
      %v1240 = vunpack.c.l.b16 %v1208
      %v1241 = vpack.c.b16 %v1226, %v1225
      %v1242 = vpack.c.b16 %v1228, %v1227
      %v1243 = vpack.c.b16 %v1230, %v1229
      %v1244 = vpack.c.b16 %v1232, %v1231
      %v1245 = vpack.c.b16 %v1234, %v1233
      %v1246 = vpack.c.b16 %v1236, %v1235
      %v1247 = vpack.c.b16 %v1238, %v1237
      %v1248 = vpack.c.b16 %v1240, %v1239
      %1257 = vmatprep.subr.bf16.mxu0 0
      %1258 = vmatpush1.bf16.msra.mxu0 %v1248
      %1259 = vmatprep.subr.bf16.mxu0 0
      %1260 = vmatpush1.bf16.msra.mxu0 %v1247
      %1261 = vmatprep.subr.bf16.mxu0 0
      %1262 = vmatpush1.bf16.msra.mxu0 %v1246
      %1263 = vmatprep.subr.bf16.mxu0 0
      %1264 = vmatpush1.bf16.msra.mxu0 %v1245
      %1265 = vmatprep.subr.bf16.mxu0 0
      %1266 = vmatpush1.bf16.msra.mxu0 %v1244
      %1267 = vmatprep.subr.bf16.mxu0 0
      %1268 = vmatpush1.bf16.msra.mxu0 %v1243
      %1269 = vmatprep.subr.bf16.mxu0 0
      %1270 = vmatpush1.bf16.msra.mxu0 %v1242
      %1271 = vmatprep.subr.bf16.mxu0 0
      %1272 = vmatpush1.bf16.msra.mxu0 %v1241
      %1273 = vmatprep.subr.bf16.mxu0 0
      %1274 = vmatpush2.bf16.msra.mxu0 0
      %1275 = vmatprep.subr.bf16.mxu0 0
      %1276 = vmatpush2.bf16.msra.mxu0 0
      %1277 = vmatprep.subr.bf16.mxu0 0
      %1278 = vmatpush2.bf16.msra.mxu0 0
      %1279 = vmatprep.subr.bf16.mxu0 0
      %1280 = vmatpush2.bf16.msra.mxu0 0
      %1281 = vmatprep.subr.bf16.mxu0 0
      %1282 = vmatpush2.bf16.msra.mxu0 0
      %1283 = vmatprep.subr.bf16.mxu0 0
      %1284 = vmatpush2.bf16.msra.mxu0 0
      %1285 = vmatprep.subr.bf16.mxu0 0
      %1286 = vmatpush2.bf16.msra.mxu0 0
      %1287 = vmatprep.subr.bf16.mxu0 0
      %1288 = vmatpush2.bf16.msra.mxu0 0
      %1289 = vmatprep.mubr.bf16.mxu0 0
      %1290 = vmatmul.mubr.bf16.gmra.mxu0 %v1186
      %v1291 = vpop.f32.mrf.mxu0
      %v1292 = vadd.f32 0.0, %v1291
      %v1293 = vpop.f32.mrf.mxu0
      %v1294 = vpop.f32.mrf.mxu0
      %v1295 = vadd.f32 0.0, %v1294
      %v1296 = vpop.f32.mrf.mxu0
      %1297 = vmatprep.mubr.bf16.mxu0 0
      %1298 = vmatmul.mubr.bf16.gmra.mxu0 %v1187
      %v1299 = vpop.f32.mrf.mxu0
      %v1300 = vadd.f32 0.0, %v1299
      %v1301 = vpop.f32.mrf.mxu0
      %v1302 = vpop.f32.mrf.mxu0
      %v1303 = vadd.f32 0.0, %v1302
      %v1304 = vpop.f32.mrf.mxu0
      %1305 = vmatprep.mubr.bf16.mxu0 0
      %1306 = vmatmul.mubr.bf16.gmra.mxu0 %v1188
      %v1307 = vpop.f32.mrf.mxu0
      %v1308 = vadd.f32 0.0, %v1307
      %v1309 = vpop.f32.mrf.mxu0
      %v1310 = vpop.f32.mrf.mxu0
      %v1311 = vadd.f32 0.0, %v1310
      %v1312 = vpop.f32.mrf.mxu0
      %1313 = vmatprep.mubr.bf16.mxu0 0
      %1314 = vmatmul.mubr.bf16.gmra.mxu0 %v1189
      %v1315 = vpop.f32.mrf.mxu0
      %v1316 = vadd.f32 0.0, %v1315
      %v1317 = vpop.f32.mrf.mxu0
      %v1318 = vpop.f32.mrf.mxu0
      %v1319 = vadd.f32 0.0, %v1318
      %v1320 = vpop.f32.mrf.mxu0
      %1321 = vmatprep.mubr.bf16.mxu0 0
      %1322 = vmatmul.mubr.bf16.gmra.mxu0 %v1190
      %v1323 = vpop.f32.mrf.mxu0
      %v1324 = vadd.f32 0.0, %v1323
      %v1325 = vpop.f32.mrf.mxu0
      %v1326 = vpop.f32.mrf.mxu0
      %v1327 = vadd.f32 0.0, %v1326
      %v1328 = vpop.f32.mrf.mxu0
      %1329 = vmatprep.mubr.bf16.mxu0 0
      %1330 = vmatmul.mubr.bf16.gmra.mxu0 %v1191
      %v1331 = vpop.f32.mrf.mxu0
      %v1332 = vadd.f32 0.0, %v1331
      %v1333 = vpop.f32.mrf.mxu0
      %v1334 = vpop.f32.mrf.mxu0
      %v1335 = vadd.f32 0.0, %v1334
      %v1336 = vpop.f32.mrf.mxu0
      %1337 = vdwg.mxu0
      %v1338 = vld [vmem:[#allocation2] sm:$0xff]
      %v1339 = vld [vmem:[#allocation2 + $0x8] sm:$0xff]
      %v1340 = vld [vmem:[#allocation2 + $0x10] sm:$0xff]
      %v1341 = vld [vmem:[#allocation2 + $0x18] sm:$0xff]
      %v1342 = vld [vmem:[#allocation2 + $0x20] sm:$0xff]
      %v1343 = vld [vmem:[#allocation2 + $0x28] sm:$0xff]
      %v1344 = vld [vmem:[#allocation2 + $0x30] sm:$0xff]
      %v1345 = vld [vmem:[#allocation2 + $0x38] sm:$0xff]
      %v1346 = vld [vmem:[#allocation2 + $0x40] sm:$0xff]
      %v1347 = vld [vmem:[#allocation2 + $0x48] sm:$0xff]
      %v1348 = vld [vmem:[#allocation2 + $0x50] sm:$0xff]
      %v1349 = vld [vmem:[#allocation2 + $0x58] sm:$0xff]
      %v1350 = vadd.f32 %v1338, %v1292
      %v1351 = vadd.f32 %v1339, %v1295
      %v1352 = vadd.f32 %v1340, %v1300
      %v1353 = vadd.f32 %v1341, %v1303
      %v1354 = vadd.f32 %v1342, %v1308
      %v1355 = vadd.f32 %v1343, %v1311
      %v1356 = vadd.f32 %v1344, %v1316
      %v1357 = vadd.f32 %v1345, %v1319
      %v1358 = vadd.f32 %v1346, %v1324
      %v1359 = vadd.f32 %v1347, %v1327
      %v1360 = vadd.f32 %v1348, %v1332
      %v1361 = vadd.f32 %v1349, %v1335
      %1362 = vst [vmem:[#allocation2] sm:$0xff] %v1350
      %1363 = vst [vmem:[#allocation2 + $0x8] sm:$0xff] %v1351
      %1364 = vst [vmem:[#allocation2 + $0x10] sm:$0xff] %v1352
      %1365 = vst [vmem:[#allocation2 + $0x18] sm:$0xff] %v1353
      %1366 = vst [vmem:[#allocation2 + $0x20] sm:$0xff] %v1354
      %1367 = vst [vmem:[#allocation2 + $0x28] sm:$0xff] %v1355
      %1368 = vst [vmem:[#allocation2 + $0x30] sm:$0xff] %v1356
      %1369 = vst [vmem:[#allocation2 + $0x38] sm:$0xff] %v1357
      %1370 = vst [vmem:[#allocation2 + $0x40] sm:$0xff] %v1358
      %1371 = vst [vmem:[#allocation2 + $0x48] sm:$0xff] %v1359
      %1372 = vst [vmem:[#allocation2 + $0x50] sm:$0xff] %v1360
      %1373 = vst [vmem:[#allocation2 + $0x58] sm:$0xff] %v1361
      %v1374 = vld [vmem:[%s192 + $0x18] sm:$0xff]
      %v1375 = vld [vmem:[%s192 + $0x20] sm:$0xff]
      %v1376 = vld [vmem:[%s192 + $0x28] sm:$0xff]
      %v1377 = vld [vmem:[%s192 + $0x30] sm:$0xff]
      %v1378 = vld [vmem:[%s192 + $0x38] sm:$0xff]
      %v1379 = vld [vmem:[%s192 + $0x40] sm:$0xff]
      %v1380 = vld [vmem:[%s192 + $0x48] sm:$0xff]
      %v1381 = vld [vmem:[%s192 + $0x50] sm:$0xff]
      %v1382 = vld [vmem:[%s192 + $0x58] sm:$0xff]
      %v1383 = vld [vmem:[%s192 + $0x60] sm:$0xff]
      %v1384 = vld [vmem:[%s192 + $0x68] sm:$0xff]
      %v1385 = vld [vmem:[%s192 + $0x70] sm:$0xff]
      %v1386 = vpack.c.bf16 %v1375, %v1374
      %v1387 = vpack.c.bf16 %v1377, %v1376
      %v1388 = vpack.c.bf16 %v1379, %v1378
      %v1389 = vpack.c.bf16 %v1381, %v1380
      %v1390 = vpack.c.bf16 %v1383, %v1382
      %v1391 = vpack.c.bf16 %v1385, %v1384
      %s1392 = scalar_lea.vmem %s1, 384
      %v1393 = vld [vmem:[%s1392] sm:$0xf]
      %v1394 = vld [vmem:[%s1392 + $0x4] sm:$0xf]
      %v1395 = vld [vmem:[%s1392 + $0x8] sm:$0xf]
      %v1396 = vld [vmem:[%s1392 + $0xc] sm:$0xf]
      %v1397 = vld [vmem:[%s1392 + $0x10] sm:$0xf]
      %v1398 = vld [vmem:[%s1392 + $0x14] sm:$0xf]
      %v1399 = vld [vmem:[%s1392 + $0x18] sm:$0xf]
      %v1400 = vld [vmem:[%s1392 + $0x1c] sm:$0xf]
      %v1401 = vld [vmem:[%s1392 + $0x20] sm:$0xf]
      %v1402 = vld [vmem:[%s1392 + $0x24] sm:$0xf]
      %v1403 = vld [vmem:[%s1392 + $0x28] sm:$0xf]
      %v1404 = vld [vmem:[%s1392 + $0x2c] sm:$0xf]
      %v1405 = vld [vmem:[%s1392 + $0x30] sm:$0xf]
      %v1406 = vld [vmem:[%s1392 + $0x34] sm:$0xf]
      %v1407 = vld [vmem:[%s1392 + $0x38] sm:$0xf]
      %v1408 = vld [vmem:[%s1392 + $0x3c] sm:$0xf]
      %v1425 = vunpack.c.l.b16 %v1393
      %v1426 = vunpack.c.l.b16 %v1394
      %v1427 = vunpack.c.l.b16 %v1395
      %v1428 = vunpack.c.l.b16 %v1396
      %v1429 = vunpack.c.l.b16 %v1397
      %v1430 = vunpack.c.l.b16 %v1398
      %v1431 = vunpack.c.l.b16 %v1399
      %v1432 = vunpack.c.l.b16 %v1400
      %v1433 = vunpack.c.l.b16 %v1401
      %v1434 = vunpack.c.l.b16 %v1402
      %v1435 = vunpack.c.l.b16 %v1403
      %v1436 = vunpack.c.l.b16 %v1404
      %v1437 = vunpack.c.l.b16 %v1405
      %v1438 = vunpack.c.l.b16 %v1406
      %v1439 = vunpack.c.l.b16 %v1407
      %v1440 = vunpack.c.l.b16 %v1408
      %v1441 = vpack.c.b16 %v1426, %v1425
      %v1442 = vpack.c.b16 %v1428, %v1427
      %v1443 = vpack.c.b16 %v1430, %v1429
      %v1444 = vpack.c.b16 %v1432, %v1431
      %v1445 = vpack.c.b16 %v1434, %v1433
      %v1446 = vpack.c.b16 %v1436, %v1435
      %v1447 = vpack.c.b16 %v1438, %v1437
      %v1448 = vpack.c.b16 %v1440, %v1439
      %1457 = vmatprep.subr.bf16.mxu0 0
      %1458 = vmatpush1.bf16.msra.mxu0 %v1448
      %1459 = vmatprep.subr.bf16.mxu0 0
      %1460 = vmatpush1.bf16.msra.mxu0 %v1447
      %1461 = vmatprep.subr.bf16.mxu0 0
      %1462 = vmatpush1.bf16.msra.mxu0 %v1446
      %1463 = vmatprep.subr.bf16.mxu0 0
      %1464 = vmatpush1.bf16.msra.mxu0 %v1445
      %1465 = vmatprep.subr.bf16.mxu0 0
      %1466 = vmatpush1.bf16.msra.mxu0 %v1444
      %1467 = vmatprep.subr.bf16.mxu0 0
      %1468 = vmatpush1.bf16.msra.mxu0 %v1443
      %1469 = vmatprep.subr.bf16.mxu0 0
      %1470 = vmatpush1.bf16.msra.mxu0 %v1442
      %1471 = vmatprep.subr.bf16.mxu0 0
      %1472 = vmatpush1.bf16.msra.mxu0 %v1441
      %1473 = vmatprep.subr.bf16.mxu0 0
      %1474 = vmatpush2.bf16.msra.mxu0 0
      %1475 = vmatprep.subr.bf16.mxu0 0
      %1476 = vmatpush2.bf16.msra.mxu0 0
      %1477 = vmatprep.subr.bf16.mxu0 0
      %1478 = vmatpush2.bf16.msra.mxu0 0
      %1479 = vmatprep.subr.bf16.mxu0 0
      %1480 = vmatpush2.bf16.msra.mxu0 0
      %1481 = vmatprep.subr.bf16.mxu0 0
      %1482 = vmatpush2.bf16.msra.mxu0 0
      %1483 = vmatprep.subr.bf16.mxu0 0
      %1484 = vmatpush2.bf16.msra.mxu0 0
      %1485 = vmatprep.subr.bf16.mxu0 0
      %1486 = vmatpush2.bf16.msra.mxu0 0
      %1487 = vmatprep.subr.bf16.mxu0 0
      %1488 = vmatpush2.bf16.msra.mxu0 0
      %1489 = vmatprep.mubr.bf16.mxu0 0
      %1490 = vmatmul.mubr.bf16.gmra.mxu0 %v1386
      %v1491 = vpop.f32.mrf.mxu0
      %v1492 = vadd.f32 0.0, %v1491
      %v1493 = vpop.f32.mrf.mxu0
      %v1494 = vpop.f32.mrf.mxu0
      %v1495 = vadd.f32 0.0, %v1494
      %v1496 = vpop.f32.mrf.mxu0
      %1497 = vmatprep.mubr.bf16.mxu0 0
      %1498 = vmatmul.mubr.bf16.gmra.mxu0 %v1387
      %v1499 = vpop.f32.mrf.mxu0
      %v1500 = vadd.f32 0.0, %v1499
      %v1501 = vpop.f32.mrf.mxu0
      %v1502 = vpop.f32.mrf.mxu0
      %v1503 = vadd.f32 0.0, %v1502
      %v1504 = vpop.f32.mrf.mxu0
      %1505 = vmatprep.mubr.bf16.mxu0 0
      %1506 = vmatmul.mubr.bf16.gmra.mxu0 %v1388
      %v1507 = vpop.f32.mrf.mxu0
      %v1508 = vadd.f32 0.0, %v1507
      %v1509 = vpop.f32.mrf.mxu0
      %v1510 = vpop.f32.mrf.mxu0
      %v1511 = vadd.f32 0.0, %v1510
      %v1512 = vpop.f32.mrf.mxu0
      %1513 = vmatprep.mubr.bf16.mxu0 0
      %1514 = vmatmul.mubr.bf16.gmra.mxu0 %v1389
      %v1515 = vpop.f32.mrf.mxu0
      %v1516 = vadd.f32 0.0, %v1515
      %v1517 = vpop.f32.mrf.mxu0
      %v1518 = vpop.f32.mrf.mxu0
      %v1519 = vadd.f32 0.0, %v1518
      %v1520 = vpop.f32.mrf.mxu0
      %1521 = vmatprep.mubr.bf16.mxu0 0
      %1522 = vmatmul.mubr.bf16.gmra.mxu0 %v1390
      %v1523 = vpop.f32.mrf.mxu0
      %v1524 = vadd.f32 0.0, %v1523
      %v1525 = vpop.f32.mrf.mxu0
      %v1526 = vpop.f32.mrf.mxu0
      %v1527 = vadd.f32 0.0, %v1526
      %v1528 = vpop.f32.mrf.mxu0
      %1529 = vmatprep.mubr.bf16.mxu0 0
      %1530 = vmatmul.mubr.bf16.gmra.mxu0 %v1391
      %v1531 = vpop.f32.mrf.mxu0
      %v1532 = vadd.f32 0.0, %v1531
      %v1533 = vpop.f32.mrf.mxu0
      %v1534 = vpop.f32.mrf.mxu0
      %v1535 = vadd.f32 0.0, %v1534
      %v1536 = vpop.f32.mrf.mxu0
      %1537 = vdwg.mxu0
      %v1538 = vld [vmem:[#allocation2] sm:$0xff]
      %v1539 = vld [vmem:[#allocation2 + $0x8] sm:$0xff]
      %v1540 = vld [vmem:[#allocation2 + $0x10] sm:$0xff]
      %v1541 = vld [vmem:[#allocation2 + $0x18] sm:$0xff]
      %v1542 = vld [vmem:[#allocation2 + $0x20] sm:$0xff]
      %v1543 = vld [vmem:[#allocation2 + $0x28] sm:$0xff]
      %v1544 = vld [vmem:[#allocation2 + $0x30] sm:$0xff]
      %v1545 = vld [vmem:[#allocation2 + $0x38] sm:$0xff]
      %v1546 = vld [vmem:[#allocation2 + $0x40] sm:$0xff]
      %v1547 = vld [vmem:[#allocation2 + $0x48] sm:$0xff]
      %v1548 = vld [vmem:[#allocation2 + $0x50] sm:$0xff]
      %v1549 = vld [vmem:[#allocation2 + $0x58] sm:$0xff]
      %v1550 = vadd.f32 %v1538, %v1492
      %v1551 = vadd.f32 %v1539, %v1495
      %v1552 = vadd.f32 %v1540, %v1500
      %v1553 = vadd.f32 %v1541, %v1503
      %v1554 = vadd.f32 %v1542, %v1508
      %v1555 = vadd.f32 %v1543, %v1511
      %v1556 = vadd.f32 %v1544, %v1516
      %v1557 = vadd.f32 %v1545, %v1519
      %v1558 = vadd.f32 %v1546, %v1524
      %v1559 = vadd.f32 %v1547, %v1527
      %v1560 = vadd.f32 %v1548, %v1532
      %v1561 = vadd.f32 %v1549, %v1535
      %1562 = vst [vmem:[#allocation2] sm:$0xff] %v1550
      %1563 = vst [vmem:[#allocation2 + $0x8] sm:$0xff] %v1551
      %1564 = vst [vmem:[#allocation2 + $0x10] sm:$0xff] %v1552
      %1565 = vst [vmem:[#allocation2 + $0x18] sm:$0xff] %v1553
      %1566 = vst [vmem:[#allocation2 + $0x20] sm:$0xff] %v1554
      %1567 = vst [vmem:[#allocation2 + $0x28] sm:$0xff] %v1555
      %1568 = vst [vmem:[#allocation2 + $0x30] sm:$0xff] %v1556
      %1569 = vst [vmem:[#allocation2 + $0x38] sm:$0xff] %v1557
      %1570 = vst [vmem:[#allocation2 + $0x40] sm:$0xff] %v1558
      %1571 = vst [vmem:[#allocation2 + $0x48] sm:$0xff] %v1559
      %1572 = vst [vmem:[#allocation2 + $0x50] sm:$0xff] %v1560
      %1573 = vst [vmem:[#allocation2 + $0x58] sm:$0xff] %v1561
      %v1574 = vld [vmem:[%s192 + $0x19] sm:$0xff]
      %v1575 = vld [vmem:[%s192 + $0x21] sm:$0xff]
      %v1576 = vld [vmem:[%s192 + $0x29] sm:$0xff]
      %v1577 = vld [vmem:[%s192 + $0x31] sm:$0xff]
      %v1578 = vld [vmem:[%s192 + $0x39] sm:$0xff]
      %v1579 = vld [vmem:[%s192 + $0x41] sm:$0xff]
      %v1580 = vld [vmem:[%s192 + $0x49] sm:$0xff]
      %v1581 = vld [vmem:[%s192 + $0x51] sm:$0xff]
      %v1582 = vld [vmem:[%s192 + $0x59] sm:$0xff]
      %v1583 = vld [vmem:[%s192 + $0x61] sm:$0xff]
      %v1584 = vld [vmem:[%s192 + $0x69] sm:$0xff]
      %v1585 = vld [vmem:[%s192 + $0x71] sm:$0xff]
      %v1586 = vpack.c.bf16 %v1575, %v1574
      %v1587 = vpack.c.bf16 %v1577, %v1576
      %v1588 = vpack.c.bf16 %v1579, %v1578
      %v1589 = vpack.c.bf16 %v1581, %v1580
      %v1590 = vpack.c.bf16 %v1583, %v1582
      %v1591 = vpack.c.bf16 %v1585, %v1584
      %s1592 = scalar_lea.vmem %s1, 448
      %v1593 = vld [vmem:[%s1592] sm:$0xf]
      %v1594 = vld [vmem:[%s1592 + $0x4] sm:$0xf]
      %v1595 = vld [vmem:[%s1592 + $0x8] sm:$0xf]
      %v1596 = vld [vmem:[%s1592 + $0xc] sm:$0xf]
      %v1597 = vld [vmem:[%s1592 + $0x10] sm:$0xf]
      %v1598 = vld [vmem:[%s1592 + $0x14] sm:$0xf]
      %v1599 = vld [vmem:[%s1592 + $0x18] sm:$0xf]
      %v1600 = vld [vmem:[%s1592 + $0x1c] sm:$0xf]
      %v1601 = vld [vmem:[%s1592 + $0x20] sm:$0xf]
      %v1602 = vld [vmem:[%s1592 + $0x24] sm:$0xf]
      %v1603 = vld [vmem:[%s1592 + $0x28] sm:$0xf]
      %v1604 = vld [vmem:[%s1592 + $0x2c] sm:$0xf]
      %v1605 = vld [vmem:[%s1592 + $0x30] sm:$0xf]
      %v1606 = vld [vmem:[%s1592 + $0x34] sm:$0xf]
      %v1607 = vld [vmem:[%s1592 + $0x38] sm:$0xf]
      %v1608 = vld [vmem:[%s1592 + $0x3c] sm:$0xf]
      %v1625 = vunpack.c.l.b16 %v1593
      %v1626 = vunpack.c.l.b16 %v1594
      %v1627 = vunpack.c.l.b16 %v1595
      %v1628 = vunpack.c.l.b16 %v1596
      %v1629 = vunpack.c.l.b16 %v1597
      %v1630 = vunpack.c.l.b16 %v1598
      %v1631 = vunpack.c.l.b16 %v1599
      %v1632 = vunpack.c.l.b16 %v1600
      %v1633 = vunpack.c.l.b16 %v1601
      %v1634 = vunpack.c.l.b16 %v1602
      %v1635 = vunpack.c.l.b16 %v1603
      %v1636 = vunpack.c.l.b16 %v1604
      %v1637 = vunpack.c.l.b16 %v1605
      %v1638 = vunpack.c.l.b16 %v1606
      %v1639 = vunpack.c.l.b16 %v1607
      %v1640 = vunpack.c.l.b16 %v1608
      %v1641 = vpack.c.b16 %v1626, %v1625
      %v1642 = vpack.c.b16 %v1628, %v1627
      %v1643 = vpack.c.b16 %v1630, %v1629
      %v1644 = vpack.c.b16 %v1632, %v1631
      %v1645 = vpack.c.b16 %v1634, %v1633
      %v1646 = vpack.c.b16 %v1636, %v1635
      %v1647 = vpack.c.b16 %v1638, %v1637
      %v1648 = vpack.c.b16 %v1640, %v1639
      %1657 = vmatprep.subr.bf16.mxu0 0
      %1658 = vmatpush1.bf16.msra.mxu0 %v1648
      %1659 = vmatprep.subr.bf16.mxu0 0
      %1660 = vmatpush1.bf16.msra.mxu0 %v1647
      %1661 = vmatprep.subr.bf16.mxu0 0
      %1662 = vmatpush1.bf16.msra.mxu0 %v1646
      %1663 = vmatprep.subr.bf16.mxu0 0
      %1664 = vmatpush1.bf16.msra.mxu0 %v1645
      %1665 = vmatprep.subr.bf16.mxu0 0
      %1666 = vmatpush1.bf16.msra.mxu0 %v1644
      %1667 = vmatprep.subr.bf16.mxu0 0
      %1668 = vmatpush1.bf16.msra.mxu0 %v1643
      %1669 = vmatprep.subr.bf16.mxu0 0
      %1670 = vmatpush1.bf16.msra.mxu0 %v1642
      %1671 = vmatprep.subr.bf16.mxu0 0
      %1672 = vmatpush1.bf16.msra.mxu0 %v1641
      %1673 = vmatprep.subr.bf16.mxu0 0
      %1674 = vmatpush2.bf16.msra.mxu0 0
      %1675 = vmatprep.subr.bf16.mxu0 0
      %1676 = vmatpush2.bf16.msra.mxu0 0
      %1677 = vmatprep.subr.bf16.mxu0 0
      %1678 = vmatpush2.bf16.msra.mxu0 0
      %1679 = vmatprep.subr.bf16.mxu0 0
      %1680 = vmatpush2.bf16.msra.mxu0 0
      %1681 = vmatprep.subr.bf16.mxu0 0
      %1682 = vmatpush2.bf16.msra.mxu0 0
      %1683 = vmatprep.subr.bf16.mxu0 0
      %1684 = vmatpush2.bf16.msra.mxu0 0
      %1685 = vmatprep.subr.bf16.mxu0 0
      %1686 = vmatpush2.bf16.msra.mxu0 0
      %1687 = vmatprep.subr.bf16.mxu0 0
      %1688 = vmatpush2.bf16.msra.mxu0 0
      %1689 = vmatprep.mubr.bf16.mxu0 0
      %1690 = vmatmul.mubr.bf16.gmra.mxu0 %v1586
      %v1691 = vpop.f32.mrf.mxu0
      %v1692 = vadd.f32 0.0, %v1691
      %v1693 = vpop.f32.mrf.mxu0
      %v1694 = vpop.f32.mrf.mxu0
      %v1695 = vadd.f32 0.0, %v1694
      %v1696 = vpop.f32.mrf.mxu0
      %1697 = vmatprep.mubr.bf16.mxu0 0
      %1698 = vmatmul.mubr.bf16.gmra.mxu0 %v1587
      %v1699 = vpop.f32.mrf.mxu0
      %v1700 = vadd.f32 0.0, %v1699
      %v1701 = vpop.f32.mrf.mxu0
      %v1702 = vpop.f32.mrf.mxu0
      %v1703 = vadd.f32 0.0, %v1702
      %v1704 = vpop.f32.mrf.mxu0
      %1705 = vmatprep.mubr.bf16.mxu0 0
      %1706 = vmatmul.mubr.bf16.gmra.mxu0 %v1588
      %v1707 = vpop.f32.mrf.mxu0
      %v1708 = vadd.f32 0.0, %v1707
      %v1709 = vpop.f32.mrf.mxu0
      %v1710 = vpop.f32.mrf.mxu0
      %v1711 = vadd.f32 0.0, %v1710
      %v1712 = vpop.f32.mrf.mxu0
      %1713 = vmatprep.mubr.bf16.mxu0 0
      %1714 = vmatmul.mubr.bf16.gmra.mxu0 %v1589
      %v1715 = vpop.f32.mrf.mxu0
      %v1716 = vadd.f32 0.0, %v1715
      %v1717 = vpop.f32.mrf.mxu0
      %v1718 = vpop.f32.mrf.mxu0
      %v1719 = vadd.f32 0.0, %v1718
      %v1720 = vpop.f32.mrf.mxu0
      %1721 = vmatprep.mubr.bf16.mxu0 0
      %1722 = vmatmul.mubr.bf16.gmra.mxu0 %v1590
      %v1723 = vpop.f32.mrf.mxu0
      %v1724 = vadd.f32 0.0, %v1723
      %v1725 = vpop.f32.mrf.mxu0
      %v1726 = vpop.f32.mrf.mxu0
      %v1727 = vadd.f32 0.0, %v1726
      %v1728 = vpop.f32.mrf.mxu0
      %1729 = vmatprep.mubr.bf16.mxu0 0
      %1730 = vmatmul.mubr.bf16.gmra.mxu0 %v1591
      %v1731 = vpop.f32.mrf.mxu0
      %v1732 = vadd.f32 0.0, %v1731
      %v1733 = vpop.f32.mrf.mxu0
      %v1734 = vpop.f32.mrf.mxu0
      %v1735 = vadd.f32 0.0, %v1734
      %v1736 = vpop.f32.mrf.mxu0
      %1737 = vdwg.mxu0
      %v1738 = vld [vmem:[#allocation2] sm:$0xff]
      %v1739 = vld [vmem:[#allocation2 + $0x8] sm:$0xff]
      %v1740 = vld [vmem:[#allocation2 + $0x10] sm:$0xff]
      %v1741 = vld [vmem:[#allocation2 + $0x18] sm:$0xff]
      %v1742 = vld [vmem:[#allocation2 + $0x20] sm:$0xff]
      %v1743 = vld [vmem:[#allocation2 + $0x28] sm:$0xff]
      %v1744 = vld [vmem:[#allocation2 + $0x30] sm:$0xff]
      %v1745 = vld [vmem:[#allocation2 + $0x38] sm:$0xff]
      %v1746 = vld [vmem:[#allocation2 + $0x40] sm:$0xff]
      %v1747 = vld [vmem:[#allocation2 + $0x48] sm:$0xff]
      %v1748 = vld [vmem:[#allocation2 + $0x50] sm:$0xff]
      %v1749 = vld [vmem:[#allocation2 + $0x58] sm:$0xff]
      %v1750 = vadd.f32 %v1738, %v1692
      %v1751 = vadd.f32 %v1739, %v1695
      %v1752 = vadd.f32 %v1740, %v1700
      %v1753 = vadd.f32 %v1741, %v1703
      %v1754 = vadd.f32 %v1742, %v1708
      %v1755 = vadd.f32 %v1743, %v1711
      %v1756 = vadd.f32 %v1744, %v1716
      %v1757 = vadd.f32 %v1745, %v1719
      %v1758 = vadd.f32 %v1746, %v1724
      %v1759 = vadd.f32 %v1747, %v1727
      %v1760 = vadd.f32 %v1748, %v1732
      %v1761 = vadd.f32 %v1749, %v1735
      %1762 = vst [vmem:[#allocation2] sm:$0xff] %v1750
      %1763 = vst [vmem:[#allocation2 + $0x8] sm:$0xff] %v1751
      %1764 = vst [vmem:[#allocation2 + $0x10] sm:$0xff] %v1752
      %1765 = vst [vmem:[#allocation2 + $0x18] sm:$0xff] %v1753
      %1766 = vst [vmem:[#allocation2 + $0x20] sm:$0xff] %v1754
      %1767 = vst [vmem:[#allocation2 + $0x28] sm:$0xff] %v1755
      %1768 = vst [vmem:[#allocation2 + $0x30] sm:$0xff] %v1756
      %1769 = vst [vmem:[#allocation2 + $0x38] sm:$0xff] %v1757
      %1770 = vst [vmem:[#allocation2 + $0x40] sm:$0xff] %v1758
      %1771 = vst [vmem:[#allocation2 + $0x48] sm:$0xff] %v1759
      %1772 = vst [vmem:[#allocation2 + $0x50] sm:$0xff] %v1760
      %1773 = vst [vmem:[#allocation2 + $0x58] sm:$0xff] %v1761
      %v1774 = vld [vmem:[%s192 + $0x1a] sm:$0xff]
      %v1775 = vld [vmem:[%s192 + $0x22] sm:$0xff]
      %v1776 = vld [vmem:[%s192 + $0x2a] sm:$0xff]
      %v1777 = vld [vmem:[%s192 + $0x32] sm:$0xff]
      %v1778 = vld [vmem:[%s192 + $0x3a] sm:$0xff]
      %v1779 = vld [vmem:[%s192 + $0x42] sm:$0xff]
      %v1780 = vld [vmem:[%s192 + $0x4a] sm:$0xff]
      %v1781 = vld [vmem:[%s192 + $0x52] sm:$0xff]
      %v1782 = vld [vmem:[%s192 + $0x5a] sm:$0xff]
      %v1783 = vld [vmem:[%s192 + $0x62] sm:$0xff]
      %v1784 = vld [vmem:[%s192 + $0x6a] sm:$0xff]
      %v1785 = vld [vmem:[%s192 + $0x72] sm:$0xff]
      %v1786 = vpack.c.bf16 %v1775, %v1774
      %v1787 = vpack.c.bf16 %v1777, %v1776
      %v1788 = vpack.c.bf16 %v1779, %v1778
      %v1789 = vpack.c.bf16 %v1781, %v1780
      %v1790 = vpack.c.bf16 %v1783, %v1782
      %v1791 = vpack.c.bf16 %v1785, %v1784
      %s1792 = scalar_lea.vmem %s1, 512
      %v1793 = vld [vmem:[%s1792] sm:$0xf]
      %v1794 = vld [vmem:[%s1792 + $0x4] sm:$0xf]
      %v1795 = vld [vmem:[%s1792 + $0x8] sm:$0xf]
      %v1796 = vld [vmem:[%s1792 + $0xc] sm:$0xf]
      %v1797 = vld [vmem:[%s1792 + $0x10] sm:$0xf]
      %v1798 = vld [vmem:[%s1792 + $0x14] sm:$0xf]
      %v1799 = vld [vmem:[%s1792 + $0x18] sm:$0xf]
      %v1800 = vld [vmem:[%s1792 + $0x1c] sm:$0xf]
      %v1801 = vld [vmem:[%s1792 + $0x20] sm:$0xf]
      %v1802 = vld [vmem:[%s1792 + $0x24] sm:$0xf]
      %v1803 = vld [vmem:[%s1792 + $0x28] sm:$0xf]
      %v1804 = vld [vmem:[%s1792 + $0x2c] sm:$0xf]
      %v1805 = vld [vmem:[%s1792 + $0x30] sm:$0xf]
      %v1806 = vld [vmem:[%s1792 + $0x34] sm:$0xf]
      %v1807 = vld [vmem:[%s1792 + $0x38] sm:$0xf]
      %v1808 = vld [vmem:[%s1792 + $0x3c] sm:$0xf]
      %v1825 = vunpack.c.l.b16 %v1793
      %v1826 = vunpack.c.l.b16 %v1794
      %v1827 = vunpack.c.l.b16 %v1795
      %v1828 = vunpack.c.l.b16 %v1796
      %v1829 = vunpack.c.l.b16 %v1797
      %v1830 = vunpack.c.l.b16 %v1798
      %v1831 = vunpack.c.l.b16 %v1799
      %v1832 = vunpack.c.l.b16 %v1800
      %v1833 = vunpack.c.l.b16 %v1801
      %v1834 = vunpack.c.l.b16 %v1802
      %v1835 = vunpack.c.l.b16 %v1803
      %v1836 = vunpack.c.l.b16 %v1804
      %v1837 = vunpack.c.l.b16 %v1805
      %v1838 = vunpack.c.l.b16 %v1806
      %v1839 = vunpack.c.l.b16 %v1807
      %v1840 = vunpack.c.l.b16 %v1808
      %v1841 = vpack.c.b16 %v1826, %v1825
      %v1842 = vpack.c.b16 %v1828, %v1827
      %v1843 = vpack.c.b16 %v1830, %v1829
      %v1844 = vpack.c.b16 %v1832, %v1831
      %v1845 = vpack.c.b16 %v1834, %v1833
      %v1846 = vpack.c.b16 %v1836, %v1835
      %v1847 = vpack.c.b16 %v1838, %v1837
      %v1848 = vpack.c.b16 %v1840, %v1839
      %1857 = vmatprep.subr.bf16.mxu0 0
      %1858 = vmatpush1.bf16.msra.mxu0 %v1848
      %1859 = vmatprep.subr.bf16.mxu0 0
      %1860 = vmatpush1.bf16.msra.mxu0 %v1847
      %1861 = vmatprep.subr.bf16.mxu0 0
      %1862 = vmatpush1.bf16.msra.mxu0 %v1846
      %1863 = vmatprep.subr.bf16.mxu0 0
      %1864 = vmatpush1.bf16.msra.mxu0 %v1845
      %1865 = vmatprep.subr.bf16.mxu0 0
      %1866 = vmatpush1.bf16.msra.mxu0 %v1844
      %1867 = vmatprep.subr.bf16.mxu0 0
      %1868 = vmatpush1.bf16.msra.mxu0 %v1843
      %1869 = vmatprep.subr.bf16.mxu0 0
      %1870 = vmatpush1.bf16.msra.mxu0 %v1842
      %1871 = vmatprep.subr.bf16.mxu0 0
      %1872 = vmatpush1.bf16.msra.mxu0 %v1841
      %1873 = vmatprep.subr.bf16.mxu0 0
      %1874 = vmatpush2.bf16.msra.mxu0 0
      %1875 = vmatprep.subr.bf16.mxu0 0
      %1876 = vmatpush2.bf16.msra.mxu0 0
      %1877 = vmatprep.subr.bf16.mxu0 0
      %1878 = vmatpush2.bf16.msra.mxu0 0
      %1879 = vmatprep.subr.bf16.mxu0 0
      %1880 = vmatpush2.bf16.msra.mxu0 0
      %1881 = vmatprep.subr.bf16.mxu0 0
      %1882 = vmatpush2.bf16.msra.mxu0 0
      %1883 = vmatprep.subr.bf16.mxu0 0
      %1884 = vmatpush2.bf16.msra.mxu0 0
      %1885 = vmatprep.subr.bf16.mxu0 0
      %1886 = vmatpush2.bf16.msra.mxu0 0
      %1887 = vmatprep.subr.bf16.mxu0 0
      %1888 = vmatpush2.bf16.msra.mxu0 0
      %1889 = vmatprep.mubr.bf16.mxu0 0
      %1890 = vmatmul.mubr.bf16.gmra.mxu0 %v1786
      %v1891 = vpop.f32.mrf.mxu0
      %v1892 = vadd.f32 0.0, %v1891
      %v1893 = vpop.f32.mrf.mxu0
      %v1894 = vpop.f32.mrf.mxu0
      %v1895 = vadd.f32 0.0, %v1894
      %v1896 = vpop.f32.mrf.mxu0
      %1897 = vmatprep.mubr.bf16.mxu0 0
      %1898 = vmatmul.mubr.bf16.gmra.mxu0 %v1787
      %v1899 = vpop.f32.mrf.mxu0
      %v1900 = vadd.f32 0.0, %v1899
      %v1901 = vpop.f32.mrf.mxu0
      %v1902 = vpop.f32.mrf.mxu0
      %v1903 = vadd.f32 0.0, %v1902
      %v1904 = vpop.f32.mrf.mxu0
      %1905 = vmatprep.mubr.bf16.mxu0 0
      %1906 = vmatmul.mubr.bf16.gmra.mxu0 %v1788
      %v1907 = vpop.f32.mrf.mxu0
      %v1908 = vadd.f32 0.0, %v1907
      %v1909 = vpop.f32.mrf.mxu0
      %v1910 = vpop.f32.mrf.mxu0
      %v1911 = vadd.f32 0.0, %v1910
      %v1912 = vpop.f32.mrf.mxu0
      %1913 = vmatprep.mubr.bf16.mxu0 0
      %1914 = vmatmul.mubr.bf16.gmra.mxu0 %v1789
      %v1915 = vpop.f32.mrf.mxu0
      %v1916 = vadd.f32 0.0, %v1915
      %v1917 = vpop.f32.mrf.mxu0
      %v1918 = vpop.f32.mrf.mxu0
      %v1919 = vadd.f32 0.0, %v1918
      %v1920 = vpop.f32.mrf.mxu0
      %1921 = vmatprep.mubr.bf16.mxu0 0
      %1922 = vmatmul.mubr.bf16.gmra.mxu0 %v1790
      %v1923 = vpop.f32.mrf.mxu0
      %v1924 = vadd.f32 0.0, %v1923
      %v1925 = vpop.f32.mrf.mxu0
      %v1926 = vpop.f32.mrf.mxu0
      %v1927 = vadd.f32 0.0, %v1926
      %v1928 = vpop.f32.mrf.mxu0
      %1929 = vmatprep.mubr.bf16.mxu0 0
      %1930 = vmatmul.mubr.bf16.gmra.mxu0 %v1791
      %v1931 = vpop.f32.mrf.mxu0
      %v1932 = vadd.f32 0.0, %v1931
      %v1933 = vpop.f32.mrf.mxu0
      %v1934 = vpop.f32.mrf.mxu0
      %v1935 = vadd.f32 0.0, %v1934
      %v1936 = vpop.f32.mrf.mxu0
      %1937 = vdwg.mxu0
      %v1938 = vld [vmem:[#allocation2] sm:$0xff]
      %v1939 = vld [vmem:[#allocation2 + $0x8] sm:$0xff]
      %v1940 = vld [vmem:[#allocation2 + $0x10] sm:$0xff]
      %v1941 = vld [vmem:[#allocation2 + $0x18] sm:$0xff]
      %v1942 = vld [vmem:[#allocation2 + $0x20] sm:$0xff]
      %v1943 = vld [vmem:[#allocation2 + $0x28] sm:$0xff]
      %v1944 = vld [vmem:[#allocation2 + $0x30] sm:$0xff]
      %v1945 = vld [vmem:[#allocation2 + $0x38] sm:$0xff]
      %v1946 = vld [vmem:[#allocation2 + $0x40] sm:$0xff]
      %v1947 = vld [vmem:[#allocation2 + $0x48] sm:$0xff]
      %v1948 = vld [vmem:[#allocation2 + $0x50] sm:$0xff]
      %v1949 = vld [vmem:[#allocation2 + $0x58] sm:$0xff]
      %v1950 = vadd.f32 %v1938, %v1892
      %v1951 = vadd.f32 %v1939, %v1895
      %v1952 = vadd.f32 %v1940, %v1900
      %v1953 = vadd.f32 %v1941, %v1903
      %v1954 = vadd.f32 %v1942, %v1908
      %v1955 = vadd.f32 %v1943, %v1911
      %v1956 = vadd.f32 %v1944, %v1916
      %v1957 = vadd.f32 %v1945, %v1919
      %v1958 = vadd.f32 %v1946, %v1924
      %v1959 = vadd.f32 %v1947, %v1927
      %v1960 = vadd.f32 %v1948, %v1932
      %v1961 = vadd.f32 %v1949, %v1935
      %1962 = vst [vmem:[#allocation2] sm:$0xff] %v1950
      %1963 = vst [vmem:[#allocation2 + $0x8] sm:$0xff] %v1951
      %1964 = vst [vmem:[#allocation2 + $0x10] sm:$0xff] %v1952
      %1965 = vst [vmem:[#allocation2 + $0x18] sm:$0xff] %v1953
      %1966 = vst [vmem:[#allocation2 + $0x20] sm:$0xff] %v1954
      %1967 = vst [vmem:[#allocation2 + $0x28] sm:$0xff] %v1955
      %1968 = vst [vmem:[#allocation2 + $0x30] sm:$0xff] %v1956
      %1969 = vst [vmem:[#allocation2 + $0x38] sm:$0xff] %v1957
      %1970 = vst [vmem:[#allocation2 + $0x40] sm:$0xff] %v1958
      %1971 = vst [vmem:[#allocation2 + $0x48] sm:$0xff] %v1959
      %1972 = vst [vmem:[#allocation2 + $0x50] sm:$0xff] %v1960
      %1973 = vst [vmem:[#allocation2 + $0x58] sm:$0xff] %v1961
      %v1974 = vld [vmem:[#allocation2] sm:$0xff]
      %v1975 = vld [vmem:[#allocation2 + $0x8] sm:$0xff]
      %v1976 = vld [vmem:[#allocation2 + $0x10] sm:$0xff]
      %v1977 = vld [vmem:[#allocation2 + $0x18] sm:$0xff]
      %v1978 = vld [vmem:[#allocation2 + $0x20] sm:$0xff]
      %v1979 = vld [vmem:[#allocation2 + $0x28] sm:$0xff]
      %v1980 = vld [vmem:[#allocation2 + $0x30] sm:$0xff]
      %v1981 = vld [vmem:[#allocation2 + $0x38] sm:$0xff]
      %v1982 = vld [vmem:[#allocation2 + $0x40] sm:$0xff]
      %v1983 = vld [vmem:[#allocation2 + $0x48] sm:$0xff]
      %v1984 = vld [vmem:[#allocation2 + $0x50] sm:$0xff]
      %v1985 = vld [vmem:[#allocation2 + $0x58] sm:$0xff]
      %v1986 = vld [vmem:[%s2] sm:$0x1]
      %v1988 = vlaneseq
      %v1989 = vshrl.u32 %v1988, 7
      %v1990 = vsub.s32 0, %v1989
      %v1991 = vrot.slane %v1986, %v1990
      %v1993 = vadd.f32 %v1974, %v1991
      %v1994 = vadd.f32 %v1975, %v1991
      %v1995 = vadd.f32 %v1976, %v1991
      %v1996 = vadd.f32 %v1977, %v1991
      %v1997 = vadd.f32 %v1978, %v1991
      %v1998 = vadd.f32 %v1979, %v1991
      %v1999 = vadd.f32 %v1980, %v1991
      %v2000 = vadd.f32 %v1981, %v1991
      %v2001 = vadd.f32 %v1982, %v1991
      %v2002 = vadd.f32 %v1983, %v1991
      %v2003 = vadd.f32 %v1984, %v1991
      %v2004 = vadd.f32 %v1985, %v1991
      %v2005 = vmax.f32 %v1993, 0.0
      %v2006 = vmax.f32 %v1994, 0.0
      %v2007 = vmax.f32 %v1995, 0.0
      %v2008 = vmax.f32 %v1996, 0.0
      %v2009 = vmax.f32 %v1997, 0.0
      %v2010 = vmax.f32 %v1998, 0.0
      %v2011 = vmax.f32 %v1999, 0.0
      %v2012 = vmax.f32 %v2000, 0.0
      %v2013 = vmax.f32 %v2001, 0.0
      %v2014 = vmax.f32 %v2002, 0.0
      %v2015 = vmax.f32 %v2003, 0.0
      %v2016 = vmax.f32 %v2004, 0.0
      %v2017 = vld [vmem:[%s3] sm:$0xff]
      %v2018 = vld [vmem:[%s3 + $0x8] sm:$0xff]
      %v2019 = vld [vmem:[%s3 + $0x10] sm:$0xff]
      %v2020 = vld [vmem:[%s3 + $0x18] sm:$0xff]
      %v2021 = vld [vmem:[%s3 + $0x20] sm:$0xff]
      %v2022 = vld [vmem:[%s3 + $0x28] sm:$0xff]
      %v2023 = vld [vmem:[%s3 + $0x30] sm:$0xff]
      %v2024 = vld [vmem:[%s3 + $0x38] sm:$0xff]
      %v2025 = vld [vmem:[%s3 + $0x40] sm:$0xff]
      %v2026 = vld [vmem:[%s3 + $0x48] sm:$0xff]
      %v2027 = vld [vmem:[%s3 + $0x50] sm:$0xff]
      %v2028 = vld [vmem:[%s3 + $0x58] sm:$0xff]
      %2030 = vset.pattern.permute.xlu0 0
      %2031 = vperm.xlu0 %2030, %v2017
      %v2032 = vpop.permute.xlu0 %2031
      %2035 = vset.pattern.permute.xlu0 0
      %2036 = vperm.xlu0 %2035, %v2018
      %v2037 = vpop.permute.xlu0 %2036
      %2040 = vset.pattern.permute.xlu0 0
      %2041 = vperm.xlu0 %2040, %v2019
      %v2042 = vpop.permute.xlu0 %2041
      %2045 = vset.pattern.permute.xlu0 0
      %2046 = vperm.xlu0 %2045, %v2020
      %v2047 = vpop.permute.xlu0 %2046
      %2050 = vset.pattern.permute.xlu0 0
      %2051 = vperm.xlu0 %2050, %v2021
      %v2052 = vpop.permute.xlu0 %2051
      %2055 = vset.pattern.permute.xlu0 0
      %2056 = vperm.xlu0 %2055, %v2022
      %v2057 = vpop.permute.xlu0 %2056
      %2060 = vset.pattern.permute.xlu0 0
      %2061 = vperm.xlu0 %2060, %v2023
      %v2062 = vpop.permute.xlu0 %2061
      %2065 = vset.pattern.permute.xlu0 0
      %2066 = vperm.xlu0 %2065, %v2024
      %v2067 = vpop.permute.xlu0 %2066
      %2070 = vset.pattern.permute.xlu0 0
      %2071 = vperm.xlu0 %2070, %v2025
      %v2072 = vpop.permute.xlu0 %2071
      %2075 = vset.pattern.permute.xlu0 0
      %2076 = vperm.xlu0 %2075, %v2026
      %v2077 = vpop.permute.xlu0 %2076
      %2080 = vset.pattern.permute.xlu0 0
      %2081 = vperm.xlu0 %2080, %v2027
      %v2082 = vpop.permute.xlu0 %2081
      %2085 = vset.pattern.permute.xlu0 0
      %2086 = vperm.xlu0 %2085, %v2028
      %v2087 = vpop.permute.xlu0 %2086
      %v2089 = vmul.f32 %v2005, %v2032
      %v2090 = vmul.f32 %v2006, %v2037
      %v2091 = vmul.f32 %v2007, %v2042
      %v2092 = vmul.f32 %v2008, %v2047
      %v2093 = vmul.f32 %v2009, %v2052
      %v2094 = vmul.f32 %v2010, %v2057
      %v2095 = vmul.f32 %v2011, %v2062
      %v2096 = vmul.f32 %v2012, %v2067
      %v2097 = vmul.f32 %v2013, %v2072
      %v2098 = vmul.f32 %v2014, %v2077
      %v2099 = vmul.f32 %v2015, %v2082
      %v2100 = vmul.f32 %v2016, %v2087
      %2101 = vst [vmem:[%s197 + $0x10] sm:$0xff] %v2089
      %2102 = vst [vmem:[%s197 + $0x18] sm:$0xff] %v2090
      %2103 = vst [vmem:[%s197 + $0x20] sm:$0xff] %v2091
      %2104 = vst [vmem:[%s197 + $0x28] sm:$0xff] %v2092
      %2105 = vst [vmem:[%s197 + $0x30] sm:$0xff] %v2093
      %2106 = vst [vmem:[%s197 + $0x38] sm:$0xff] %v2094
      %2107 = vst [vmem:[%s197 + $0x40] sm:$0xff] %v2095
      %2108 = vst [vmem:[%s197 + $0x48] sm:$0xff] %v2096
      %2109 = vst [vmem:[%s197 + $0x50] sm:$0xff] %v2097
      %2110 = vst [vmem:[%s197 + $0x58] sm:$0xff] %v2098
      %2111 = vst [vmem:[%s197 + $0x60] sm:$0xff] %v2099
      %2112 = vst [vmem:[%s197 + $0x68] sm:$0xff] %v2100
      %2113 = vst [vmem:[%s197] sm:$0xff] 0.0
      %2114 = vst [vmem:[%s197 + $0x8] sm:$0xff] 0.0
      %2115 = vst [vmem:[%s197 + $0x70] sm:$0xff] 0.0
      %2116 = vst [vmem:[%s197 + $0x78] sm:$0xff] 0.0
      %p2117 = scmp.lt.s32.totalorder %s15, 1
      %s2118 = scalar_select %p2117, %s15, 1
      %s2119 = smul.addr %s2118, 16
      %s2120 = smul.addr %s2119, 8
      %s2121 = scalar_lea.vmem %s4, %s2120
      // Predicated region
      $region37: #{_lambda_.13} parent=35 // pred_check
        %p2122 = pneg %p122
      $region38: #{_lambda_.13} parent=35 // pred_check_branch
        %2124 = sbr.rel (%p2122) target = $region40
      $region39: #{_lambda_.13} parent=35 // pred_region
        _
      $region40: #{_lambda_.13} parent=35 // pred_fallthru
        _
    $region36: #{_lambda_.13} parent=5 // pred_fallthru
      _
    %p2125 = scmp.le.s32.totalorder 2, %s10
    // Predicated region
    $region41: #{_lambda_.13} parent=5 // pred_check
      %p2126 = pneg %p2125
    $region42: #{_lambda_.13} parent=5 // pred_check_branch
      %2128 = sbr.rel (%p2126) target = $region44
    $region43: #{_lambda_.13} parent=5 // pred_region
      %s2129 = ssub.s32 %s10, 2
      // Predicated region
      $region45: #{_lambda_.13} parent=43 // pred_check
        %p2130 = pneg %p128
      $region46: #{_lambda_.13} parent=43 // pred_check_branch
        %2132 = sbr.rel (%p2130) target = $region48
      $region47: #{_lambda_.13} parent=43 // pred_region
        %p2133 = scmp.lt.s32.totalorder %s16, 1
        %s2134 = scalar_select %p2133, %s16, 1
        %s2135 = smul.addr %s2134, 16
        %s2136 = smul.addr %s2135, 8
        %s2137 = scalar_lea.vmem %s4, %s2136
      $region48: #{_lambda_.13} parent=43 // pred_fallthru
        _
    $region44: #{_lambda_.13} parent=5 // pred_fallthru
      _
  $region6: #{_lambda_.13} parent=0 // loop_footer
    %s14 = sadd.s32 1, %s10
  $region7: #{_lambda_.13} parent=0 // loop_footer_branch
    %9 = sbr.rel target = $region3
  $region8: #{_lambda_.13} parent=0 // loop_exit
    _

</llo_original>
